<compile_context>
chip_gen: v7x
topology: tpu7x:2x2x1
jax: 0.10.0
libtpu: 0.0.40
codegen_flags: <defaults>
</compile_context>

<pallas_src>
import jax
import jax.numpy as jnp
from jax import lax
from jax.experimental import pallas as pl
from jax.experimental.pallas import tpu as pltpu

D_MODEL = 512
N_HEADS = 8
D_HEAD = D_MODEL // N_HEADS
D_FF = 2048
N_LAYERS = 6
LN_EPS = 1e-5


# ----------------------------------------------------------------------------- kernel

def _layernorm(h, gamma, beta):
    mean = jnp.mean(h, axis=-1, keepdims=True)
    var = jnp.mean(jnp.square(h - mean), axis=-1, keepdims=True)  # biased var (PyTorch LN)
    return (h - mean) * lax.rsqrt(var + LN_EPS) * gamma + beta


def _fused_regressor_kernel(x_ref, in_w_ref, in_b_ref,
                            w_attn_ref, w1_ref, w2_ref, vec_ref, b1_ref,
                            out_w_ref, out_b_ref,
                            y_ref, h_ref):
    """One grid step == one encoder layer.  h_ref is the (B,512) carried activation."""
    l = pl.program_id(0)
    n_layers = pl.num_programs(0)

    # ---- input projection (only on the first grid step) ----
    @pl.when(l == 0)
    def _():
        xb = x_ref[...].astype(jnp.bfloat16)
        h_ref[...] = (jnp.dot(xb, in_w_ref[...], preferred_element_type=jnp.float32)
                      + in_b_ref[...])

    h = h_ref[...]                                     # f32 (B, 512)

    # per-layer packed vectors: rows = [b_attn, ln1_g, ln1_b, b2, ln2_g, ln2_b, 0, 0]
    vec = vec_ref[0]                                   # f32 (8, 512)
    b_attn, ln1_g, ln1_b = vec[0:1], vec[1:2], vec[2:3]
    b2, ln2_g, ln2_b = vec[3:4], vec[4:5], vec[5:6]

    # ---- self-attention, seq_len==1 collapse with pre-folded W_attn = Wv @ Wo ----
    attn = (jnp.dot(h.astype(jnp.bfloat16), w_attn_ref[0],
                    preferred_element_type=jnp.float32) + b_attn)
    s = _layernorm(h + attn, ln1_g, ln1_b)             # post-norm (norm_first=False)

    # ---- feed-forward: linear1 -> relu -> linear2 ----
    f = (jnp.dot(s.astype(jnp.bfloat16), w1_ref[0],
                 preferred_element_type=jnp.float32) + b1_ref[0])
    f = jnp.maximum(f, 0.0)
    f = (jnp.dot(f.astype(jnp.bfloat16), w2_ref[0],
                 preferred_element_type=jnp.float32) + b2)
    h_new = _layernorm(s + f, ln2_g, ln2_b)
    h_ref[...] = h_new

    # ---- output projection (only on the last grid step; lane-dense padded output) ----
    @pl.when(l == n_layers - 1)
    def _():
        y_ref[...] = (jnp.dot(h_new.astype(jnp.bfloat16), out_w_ref[...],
                              preferred_element_type=jnp.float32) + out_b_ref[...])


# ----------------------------------------------------------------------------- wrapper

def transformer_regressor(x, kp):
    """Forward pass equivalent to TransformerRegressor.forward (eval mode)."""
    B, input_dim = x.shape
    out_pad = kp["out_w"].shape[1]

    y_pad = pl.pallas_call(
        _fused_regressor_kernel,
        out_shape=jax.ShapeDtypeStruct((B, out_pad), jnp.float32),
        grid_spec=pltpu.PrefetchScalarGridSpec(
            num_scalar_prefetch=0,
            grid=(N_LAYERS,),
            in_specs=[
                pl.BlockSpec((B, input_dim), lambda l: (0, 0)),            # x (resident)
                pl.BlockSpec((input_dim, D_MODEL), lambda l: (0, 0)),      # in_w (resident)
                pl.BlockSpec((1, D_MODEL), lambda l: (0, 0)),              # in_b (resident)
                pl.BlockSpec((1, D_MODEL, D_MODEL), lambda l: (l, 0, 0)),  # W_attn (streamed)
                pl.BlockSpec((1, D_MODEL, D_FF), lambda l: (l, 0, 0)),     # w1 (streamed)
                pl.BlockSpec((1, D_FF, D_MODEL), lambda l: (l, 0, 0)),     # w2 (streamed)
                pl.BlockSpec((1, 8, D_MODEL), lambda l: (l, 0, 0)),        # packed vectors
                pl.BlockSpec((1, 1, D_FF), lambda l: (l, 0, 0)),           # b1
                pl.BlockSpec((D_MODEL, out_pad), lambda l: (0, 0)),        # out_w (resident)
                pl.BlockSpec((1, out_pad), lambda l: (0, 0)),              # out_b (resident)
            ],
            out_specs=pl.BlockSpec((B, out_pad), lambda l: (0, 0)),
            scratch_shapes=[pltpu.VMEM((B, D_MODEL), jnp.float32)],        # carried activation
        ),
        compiler_params=pltpu.CompilerParams(
            dimension_semantics=("arbitrary",),
            vmem_limit_bytes=48 << 20,       # fits v7x's 64 MiB physical VMEM
        ),
    )(x, kp["in_w"], kp["in_b"],
      kp["w_attn"], kp["w1"], kp["w2"], kp["vecs"], kp["b1"],
      kp["out_w"], kp["out_b"])

    y = y_pad[:, :kp["out_dim"]]
    return y.reshape(B, kp["num_keypoints"], kp["output_dim"])


# ----------------------------------------------------------------------------- params

def init_params(key, input_dim, num_keypoints, output_dim):
    """Master f32 parameters in PyTorch layout (same shapes as the nn.Module)."""
    ks = iter(jax.random.split(key, 4 + 8 * N_LAYERS))
    s = 0.02

    def rnd(shape):
        return (s * jax.random.normal(next(ks), shape)).astype(jnp.float32)

    params = {
        "num_keypoints": num_keypoints,
        "output_dim": output_dim,
        "in_w": rnd((D_MODEL, input_dim)),                        # nn.Linear(input_dim, 512)
        "in_b": rnd((D_MODEL,)),
        "out_w": rnd((num_keypoints * output_dim, D_MODEL)),      # nn.Linear(512, K*out)
        "out_b": rnd((num_keypoints * output_dim,)),
        "layers": [],
    }
    for _ in range(N_LAYERS):
        params["layers"].append({
            "in_proj_w": rnd((3 * D_MODEL, D_MODEL)),             # MHA q/k/v packed
            "in_proj_b": rnd((3 * D_MODEL,)),
            "out_proj_w": rnd((D_MODEL, D_MODEL)),                # MHA out_proj
            "out_proj_b": rnd((D_MODEL,)),
            "ln1_g": jnp.ones((D_MODEL,), jnp.float32),
            "ln1_b": jnp.zeros((D_MODEL,), jnp.float32),
            "w1": rnd((D_FF, D_MODEL)),                           # Linear(512, 2048)
            "b1": rnd((D_FF,)),
            "w2": rnd((D_MODEL, D_FF)),                           # Linear(2048, 512)
            "b2": rnd((D_MODEL,)),
            "ln2_g": jnp.ones((D_MODEL,), jnp.float32),
            "ln2_b": jnp.zeros((D_MODEL,), jnp.float32),
        })
    return params


def prepare_kernel_params(params):
    """Fold / pack / quantize master params into kernel-ready stacked arrays."""
    w_attn, w1, w2, vecs, b1s = [], [], [], [], []
    for lp in params["layers"]:
        wv_t = lp["in_proj_w"][2 * D_MODEL:].T                    # (512, 512) in->out
        bv = lp["in_proj_b"][2 * D_MODEL:]
        wo_t = lp["out_proj_w"].T
        bo = lp["out_proj_b"]
        wa = wv_t @ wo_t                                          # exact fold (seq_len == 1)
        ba = bv @ wo_t + bo
        w_attn.append(wa.astype(jnp.bfloat16))
        w1.append(lp["w1"].T.astype(jnp.bfloat16))                # (512, 2048)
        w2.append(lp["w2"].T.astype(jnp.bfloat16))                # (2048, 512)
        b1s.append(lp["b1"].reshape(1, D_FF))
        zeros = jnp.zeros((D_MODEL,), jnp.float32)
        vecs.append(jnp.stack([ba, lp["ln1_g"], lp["ln1_b"],
                               lp["b2"], lp["ln2_g"], lp["ln2_b"], zeros, zeros], axis=0))

    out_dim = params["num_keypoints"] * params["output_dim"]
    out_pad = max(128, ((out_dim + 127) // 128) * 128)
    out_w_pad = jnp.zeros((D_MODEL, out_pad), jnp.float32).at[:, :out_dim].set(params["out_w"].T)
    out_b_pad = jnp.zeros((1, out_pad), jnp.float32).at[:, :out_dim].set(params["out_b"])

    return {
        "in_w": params["in_w"].T.astype(jnp.bfloat16),            # (input_dim, 512)
        "in_b": params["in_b"].reshape(1, D_MODEL),
        "w_attn": jnp.stack(w_attn),                              # (6, 512, 512)  bf16
        "w1": jnp.stack(w1),                                      # (6, 512, 2048) bf16
        "w2": jnp.stack(w2),                                      # (6, 2048, 512) bf16
        "vecs": jnp.stack(vecs),                                  # (6, 8, 512)    f32
        "b1": jnp.stack(b1s),                                     # (6, 1, 2048)   f32
        "out_w": out_w_pad.astype(jnp.bfloat16),                  # (512, 128)     bf16
        "out_b": out_b_pad,                                       # (1, 128)       f32
        "out_dim": out_dim,
        "num_keypoints": params["num_keypoints"],
        "output_dim": params["output_dim"],
    }


# ----------------------------------------------------------------------------- pure-JAX reference
# Full f32 PyTorch-equivalent path (explicit q/k/softmax, no folding, no bf16).

def reference_forward(x, params):
    h = x @ params["in_w"].T + params["in_b"]                     # (B, 512)
    h = h[:, None, :]                                             # (B, 1, 512)
    B = h.shape[0]
    for lp in params["layers"]:
        wq = lp["in_proj_w"][0:D_MODEL].T
        wk = lp["in_proj_w"][D_MODEL:2 * D_MODEL].T
        wv = lp["in_proj_w"][2 * D_MODEL:].T
        bq = lp["in_proj_b"][0:D_MODEL]
        bk = lp["in_proj_b"][D_MODEL:2 * D_MODEL]
        bv = lp["in_proj_b"][2 * D_MODEL:]
        q = (h @ wq + bq).reshape(B, 1, N_HEADS, D_HEAD).transpose(0, 2, 1, 3)
        k = (h @ wk + bk).reshape(B, 1, N_HEADS, D_HEAD).transpose(0, 2, 1, 3)
        v = (h @ wv + bv).reshape(B, 1, N_HEADS, D_HEAD).transpose(0, 2, 1, 3)
        scores = jnp.einsum("bhqd,bhkd->bhqk", q, k) / jnp.sqrt(jnp.float32(D_HEAD))
        attn = jax.nn.softmax(scores, axis=-1)                    # (B,8,1,1) == 1.0
        ctx = jnp.einsum("bhqk,bhkd->bhqd", attn, v)
        ctx = ctx.transpose(0, 2, 1, 3).reshape(B, 1, D_MODEL)
        attn_out = ctx @ lp["out_proj_w"].T + lp["out_proj_b"]
        s = h + attn_out
        mean = jnp.mean(s, -1, keepdims=True)
        var = jnp.mean(jnp.square(s - mean), -1, keepdims=True)
        s = (s - mean) * lax.rsqrt(var + LN_EPS) * lp["ln1_g"] + lp["ln1_b"]
        f = jnp.maximum(s @ lp["w1"].T + lp["b1"], 0.0) @ lp["w2"].T + lp["b2"]
        t = s + f
        mean = jnp.mean(t, -1, keepdims=True)
        var = jnp.mean(jnp.square(t - mean), -1, keepdims=True)
        h = (t - mean) * lax.rsqrt(var + LN_EPS) * lp["ln2_g"] + lp["ln2_b"]
    y = h[:, 0, :] @ params["out_w"].T + params["out_b"]
    return y.reshape(-1, params["num_keypoints"], params["output_dim"])


# ----------------------------------------------------------------------------- main

if __name__ == "__main__":
    B, INPUT_DIM, NUM_KP, OUT_DIM = 8, 128, 4, 3

    root = jax.random.PRNGKey(0)
    kx, kparams = jax.random.split(root)
    x = jax.random.normal(kx, (B, INPUT_DIM), dtype=jnp.float32)

    params = init_params(kparams, INPUT_DIM, NUM_KP, OUT_DIM)
    kparams_packed = prepare_kernel_params(params)

    out = transformer_regressor(x, kparams_packed)
    out = jax.block_until_ready(out)
    assert out.shape == (B, NUM_KP, OUT_DIM), out.shape

    ref = jax.block_until_ready(reference_forward(x, params))
    # tolerance accounts for bf16 weight storage (weights quantized to bf16, f32 accumulation)
    max_err = float(jnp.max(jnp.abs(out - ref)))
    assert jnp.allclose(out, ref, atol=3e-2, rtol=3e-2), max_err

    print("KERNEL_OK")
</pallas_src>

<mosaic_0001>
module attributes {stable_mosaic.version = 11 : i64} {
  func.func @_fused_regressor_kernel(%arg0: i32, %arg1: memref<8x128xf32, #tpu.memory_space<vmem>>, %arg2: memref<128x512xbf16, #tpu.memory_space<vmem>>, %arg3: memref<1x512xf32, #tpu.memory_space<vmem>>, %arg4: memref<1x512x512xbf16, #tpu.memory_space<vmem>>, %arg5: memref<1x512x2048xbf16, #tpu.memory_space<vmem>>, %arg6: memref<1x2048x512xbf16, #tpu.memory_space<vmem>>, %arg7: memref<1x8x512xf32, #tpu.memory_space<vmem>>, %arg8: memref<1x1x2048xf32, #tpu.memory_space<vmem>>, %arg9: memref<512x128xbf16, #tpu.memory_space<vmem>>, %arg10: memref<1x128xf32, #tpu.memory_space<vmem>>, %arg11: memref<8x128xf32, #tpu.memory_space<vmem>>, %arg12: memref<8x512xf32, #tpu.memory_space<vmem>>) attributes {dimension_semantics = [#tpu.dimension_semantics<arbitrary>], iteration_bounds = array<i64: 6>, scalar_prefetch = 0 : i64, scratch_operands = 1 : i64, tpu.core_type = #tpu.core_type<tc>, window_params = [{pipeline_mode = #tpu.pipeline_mode<synchronous>, transform_indices = @transform_0, window_bounds = array<i64: 8, 128>}, {pipeline_mode = #tpu.pipeline_mode<synchronous>, transform_indices = @transform_1, window_bounds = array<i64: 128, 512>}, {pipeline_mode = #tpu.pipeline_mode<synchronous>, transform_indices = @transform_2, window_bounds = array<i64: 1, 512>}, {transform_indices = @transform_3, window_bounds = array<i64: 1, 512, 512>}, {transform_indices = @transform_4, window_bounds = array<i64: 1, 512, 2048>}, {transform_indices = @transform_5, window_bounds = array<i64: 1, 2048, 512>}, {transform_indices = @transform_6, window_bounds = array<i64: 1, 8, 512>}, {transform_indices = @transform_7, window_bounds = array<i64: 1, 1, 2048>}, {pipeline_mode = #tpu.pipeline_mode<synchronous>, transform_indices = @transform_8, window_bounds = array<i64: 512, 128>}, {pipeline_mode = #tpu.pipeline_mode<synchronous>, transform_indices = @transform_9, window_bounds = array<i64: 1, 128>}, {pipeline_mode = #tpu.pipeline_mode<synchronous>, transform_indices = @transform_10, window_bounds = array<i64: 8, 128>}]} {
    %c0_i32 = arith.constant 0 : i32
    %0 = arith.cmpi eq, %arg0, %c0_i32 : i32
    %1 = arith.extui %0 : i1 to i32
    %c0_i32_0 = arith.constant 0 : i32
    %2 = arith.cmpi ne, %1, %c0_i32_0 : i32
    scf.if %2 {
      %c0_33 = arith.constant 0 : index
      %c0_34 = arith.constant 0 : index
      %84 = vector.load %arg1[%c0_33, %c0_34] : memref<8x128xf32, #tpu.memory_space<vmem>>, vector<8x128xf32>
      %85 = arith.truncf %84 : vector<8x128xf32> to vector<8x128xbf16>
      %c0_35 = arith.constant 0 : index
      %c0_36 = arith.constant 0 : index
      %86 = vector.load %arg2[%c0_35, %c0_36] : memref<128x512xbf16, #tpu.memory_space<vmem>>, vector<128x512xbf16>
      %cst_37 = arith.constant dense<0.000000e+00> : vector<8x512xf32>
      %87 = tpu.matmul %85, %86, %cst_37 {dimension_numbers = #tpu.dot_dimension_numbers<[1], [0], [0], [1], [0, 0, 1, 1], [], []>} : vector<8x128xbf16>, vector<128x512xbf16>, vector<8x512xf32> -> vector<8x512xf32>
      %c0_38 = arith.constant 0 : index
      %c0_39 = arith.constant 0 : index
      %88 = vector.load %arg3[%c0_38, %c0_39] : memref<1x512xf32, #tpu.memory_space<vmem>>, vector<1x512xf32>
      %89 = vector.broadcast %88 : vector<1x512xf32> to vector<8x512xf32>
      %90 = arith.addf %87, %89 : vector<8x512xf32>
      %c0_40 = arith.constant 0 : index
      %c0_41 = arith.constant 0 : index
      %91 = vector.load %arg12[%c0_40, %c0_41] : memref<8x512xf32, #tpu.memory_space<vmem>>, vector<8x512xf32>
      tpu.vector_store %arg12[%c0_40, %c0_41], %90 {strides = array<i32>} : memref<8x512xf32, #tpu.memory_space<vmem>>, vector<8x512xf32>,
    } else {
    }
    %c0 = arith.constant 0 : index
    %c0_1 = arith.constant 0 : index
    %3 = vector.load %arg12[%c0, %c0_1] : memref<8x512xf32, #tpu.memory_space<vmem>>, vector<8x512xf32>
    %c0_2 = arith.constant 0 : index
    %c0_3 = arith.constant 0 : index
    %c0_4 = arith.constant 0 : index
    %4 = vector.load %arg7[%c0_2, %c0_3, %c0_4] : memref<1x8x512xf32, #tpu.memory_space<vmem>>, vector<1x8x512xf32>
    %5 = vector.shape_cast %4 : vector<1x8x512xf32> to vector<8x512xf32>
    %6 = vector.extract_strided_slice %5 {offsets = [0, 0], sizes = [1, 512], strides = [1, 1]} : vector<8x512xf32> to vector<1x512xf32>
    %7 = vector.extract_strided_slice %5 {offsets = [1, 0], sizes = [1, 512], strides = [1, 1]} : vector<8x512xf32> to vector<1x512xf32>
    %8 = vector.extract_strided_slice %5 {offsets = [2, 0], sizes = [1, 512], strides = [1, 1]} : vector<8x512xf32> to vector<1x512xf32>
    %9 = vector.extract_strided_slice %5 {offsets = [3, 0], sizes = [1, 512], strides = [1, 1]} : vector<8x512xf32> to vector<1x512xf32>
    %10 = vector.extract_strided_slice %5 {offsets = [4, 0], sizes = [1, 512], strides = [1, 1]} : vector<8x512xf32> to vector<1x512xf32>
    %11 = vector.extract_strided_slice %5 {offsets = [5, 0], sizes = [1, 512], strides = [1, 1]} : vector<8x512xf32> to vector<1x512xf32>
    %12 = arith.truncf %3 : vector<8x512xf32> to vector<8x512xbf16>
    %c0_5 = arith.constant 0 : index
    %c0_6 = arith.constant 0 : index
    %c0_7 = arith.constant 0 : index
    %13 = vector.load %arg4[%c0_5, %c0_6, %c0_7] : memref<1x512x512xbf16, #tpu.memory_space<vmem>>, vector<1x512x512xbf16>
    %14 = vector.shape_cast %13 : vector<1x512x512xbf16> to vector<512x512xbf16>
    %cst = arith.constant dense<0.000000e+00> : vector<8x512xf32>
    %15 = tpu.matmul %12, %14, %cst {dimension_numbers = #tpu.dot_dimension_numbers<[1], [0], [0], [1], [0, 0, 1, 1], [], []>} : vector<8x512xbf16>, vector<512x512xbf16>, vector<8x512xf32> -> vector<8x512xf32>
    %16 = vector.broadcast %6 : vector<1x512xf32> to vector<8x512xf32>
    %17 = arith.addf %15, %16 : vector<8x512xf32>
    %18 = arith.addf %3, %17 : vector<8x512xf32>
    %cst_8 = arith.constant dense<0.000000e+00> : vector<8xf32>
    %19 = vector.multi_reduction <add>, %18, %cst_8 [1] : vector<8x512xf32> to vector<8xf32>
    %20 = vector.shape_cast %19 : vector<8xf32> to vector<8x1xf32>
    %cst_9 = arith.constant 5.120000e+02 : f32
    %21 = vector.broadcast %cst_9 : f32 to vector<8x1xf32>
    %22 = arith.divf %20, %21 : vector<8x1xf32>
    %23 = vector.broadcast %22 : vector<8x1xf32> to vector<8x512xf32>
    %24 = arith.subf %18, %23 : vector<8x512xf32>
    %25 = arith.mulf %24, %24 : vector<8x512xf32>
    %cst_10 = arith.constant dense<0.000000e+00> : vector<8xf32>
    %26 = vector.multi_reduction <add>, %25, %cst_10 [1] : vector<8x512xf32> to vector<8xf32>
    %27 = vector.shape_cast %26 : vector<8xf32> to vector<8x1xf32>
    %cst_11 = arith.constant 5.120000e+02 : f32
    %28 = vector.broadcast %cst_11 : f32 to vector<8x1xf32>
    %29 = arith.divf %27, %28 : vector<8x1xf32>
    %30 = vector.broadcast %22 : vector<8x1xf32> to vector<8x512xf32>
    %31 = arith.subf %18, %30 : vector<8x512xf32>
    %cst_12 = arith.constant 9.99999974E-6 : f32
    %32 = vector.broadcast %cst_12 : f32 to vector<8x1xf32>
    %33 = arith.addf %29, %32 : vector<8x1xf32>
    %34 = math.rsqrt %33 : vector<8x1xf32>
    %35 = vector.broadcast %34 : vector<8x1xf32> to vector<8x512xf32>
    %36 = arith.mulf %31, %35 : vector<8x512xf32>
    %37 = vector.broadcast %7 : vector<1x512xf32> to vector<8x512xf32>
    %38 = arith.mulf %36, %37 : vector<8x512xf32>
    %39 = vector.broadcast %8 : vector<1x512xf32> to vector<8x512xf32>
    %40 = arith.addf %38, %39 : vector<8x512xf32>
    %41 = arith.truncf %40 : vector<8x512xf32> to vector<8x512xbf16>
    %c0_13 = arith.constant 0 : index
    %c0_14 = arith.constant 0 : index
    %c0_15 = arith.constant 0 : index
    %42 = vector.load %arg5[%c0_13, %c0_14, %c0_15] : memref<1x512x2048xbf16, #tpu.memory_space<vmem>>, vector<1x512x2048xbf16>
    %43 = vector.shape_cast %42 : vector<1x512x2048xbf16> to vector<512x2048xbf16>
    %cst_16 = arith.constant dense<0.000000e+00> : vector<8x2048xf32>
    %44 = tpu.matmul %41, %43, %cst_16 {dimension_numbers = #tpu.dot_dimension_numbers<[1], [0], [0], [1], [0, 0, 1, 1], [], []>} : vector<8x512xbf16>, vector<512x2048xbf16>, vector<8x2048xf32> -> vector<8x2048xf32>
    %c0_17 = arith.constant 0 : index
    %c0_18 = arith.constant 0 : index
    %c0_19 = arith.constant 0 : index
    %45 = vector.load %arg8[%c0_17, %c0_18, %c0_19] : memref<1x1x2048xf32, #tpu.memory_space<vmem>>, vector<1x1x2048xf32>
    %46 = vector.shape_cast %45 : vector<1x1x2048xf32> to vector<1x2048xf32>
    %47 = vector.broadcast %46 : vector<1x2048xf32> to vector<8x2048xf32>
    %48 = arith.addf %44, %47 : vector<8x2048xf32>
    %cst_20 = arith.constant 0.000000e+00 : f32
    %49 = vector.broadcast %cst_20 : f32 to vector<8x2048xf32>
    %50 = arith.maximumf %48, %49 : vector<8x2048xf32>
    %51 = arith.truncf %50 : vector<8x2048xf32> to vector<8x2048xbf16>
    %c0_21 = arith.constant 0 : index
    %c0_22 = arith.constant 0 : index
    %c0_23 = arith.constant 0 : index
    %52 = vector.load %arg6[%c0_21, %c0_22, %c0_23] : memref<1x2048x512xbf16, #tpu.memory_space<vmem>>, vector<1x2048x512xbf16>
    %53 = vector.shape_cast %52 : vector<1x2048x512xbf16> to vector<2048x512xbf16>
    %cst_24 = arith.constant dense<0.000000e+00> : vector<8x512xf32>
    %54 = tpu.matmul %51, %53, %cst_24 {dimension_numbers = #tpu.dot_dimension_numbers<[1], [0], [0], [1], [0, 0, 1, 1], [], []>} : vector<8x2048xbf16>, vector<2048x512xbf16>, vector<8x512xf32> -> vector<8x512xf32>
    %55 = vector.broadcast %9 : vector<1x512xf32> to vector<8x512xf32>
    %56 = arith.addf %54, %55 : vector<8x512xf32>
    %57 = arith.addf %40, %56 : vector<8x512xf32>
    %cst_25 = arith.constant dense<0.000000e+00> : vector<8xf32>
    %58 = vector.multi_reduction <add>, %57, %cst_25 [1] : vector<8x512xf32> to vector<8xf32>
    %59 = vector.shape_cast %58 : vector<8xf32> to vector<8x1xf32>
    %cst_26 = arith.constant 5.120000e+02 : f32
    %60 = vector.broadcast %cst_26 : f32 to vector<8x1xf32>
    %61 = arith.divf %59, %60 : vector<8x1xf32>
    %62 = vector.broadcast %61 : vector<8x1xf32> to vector<8x512xf32>
    %63 = arith.subf %57, %62 : vector<8x512xf32>
    %64 = arith.mulf %63, %63 : vector<8x512xf32>
    %cst_27 = arith.constant dense<0.000000e+00> : vector<8xf32>
    %65 = vector.multi_reduction <add>, %64, %cst_27 [1] : vector<8x512xf32> to vector<8xf32>
    %66 = vector.shape_cast %65 : vector<8xf32> to vector<8x1xf32>
    %cst_28 = arith.constant 5.120000e+02 : f32
    %67 = vector.broadcast %cst_28 : f32 to vector<8x1xf32>
    %68 = arith.divf %66, %67 : vector<8x1xf32>
    %69 = vector.broadcast %61 : vector<8x1xf32> to vector<8x512xf32>
    %70 = arith.subf %57, %69 : vector<8x512xf32>
    %cst_29 = arith.constant 9.99999974E-6 : f32
    %71 = vector.broadcast %cst_29 : f32 to vector<8x1xf32>
    %72 = arith.addf %68, %71 : vector<8x1xf32>
    %73 = math.rsqrt %72 : vector<8x1xf32>
    %74 = vector.broadcast %73 : vector<8x1xf32> to vector<8x512xf32>
    %75 = arith.mulf %70, %74 : vector<8x512xf32>
    %76 = vector.broadcast %10 : vector<1x512xf32> to vector<8x512xf32>
    %77 = arith.mulf %75, %76 : vector<8x512xf32>
    %78 = vector.broadcast %11 : vector<1x512xf32> to vector<8x512xf32>
    %79 = arith.addf %77, %78 : vector<8x512xf32>
    %c0_30 = arith.constant 0 : index
    %c0_31 = arith.constant 0 : index
    %80 = vector.load %arg12[%c0_30, %c0_31] : memref<8x512xf32, #tpu.memory_space<vmem>>, vector<8x512xf32>
    tpu.vector_store %arg12[%c0_30, %c0_31], %79 {strides = array<i32>} : memref<8x512xf32, #tpu.memory_space<vmem>>, vector<8x512xf32>,
    %c5_i32 = arith.constant 5 : i32
    %81 = arith.cmpi eq, %arg0, %c5_i32 : i32
    %82 = arith.extui %81 : i1 to i32
    %c0_i32_32 = arith.constant 0 : i32
    %83 = arith.cmpi ne, %82, %c0_i32_32 : i32
    scf.if %83 {
      %84 = arith.truncf %79 : vector<8x512xf32> to vector<8x512xbf16>
      %c0_33 = arith.constant 0 : index
      %c0_34 = arith.constant 0 : index
      %85 = vector.load %arg9[%c0_33, %c0_34] : memref<512x128xbf16, #tpu.memory_space<vmem>>, vector<512x128xbf16>
      %cst_35 = arith.constant dense<0.000000e+00> : vector<8x128xf32>
      %86 = tpu.matmul %84, %85, %cst_35 {dimension_numbers = #tpu.dot_dimension_numbers<[1], [0], [0], [1], [0, 0, 1, 1], [], []>} : vector<8x512xbf16>, vector<512x128xbf16>, vector<8x128xf32> -> vector<8x128xf32>
      %c0_36 = arith.constant 0 : index
      %c0_37 = arith.constant 0 : index
      %87 = vector.load %arg10[%c0_36, %c0_37] : memref<1x128xf32, #tpu.memory_space<vmem>>, vector<1x128xf32>
      %88 = vector.broadcast %87 : vector<1x128xf32> to vector<8x128xf32>
      %89 = arith.addf %86, %88 : vector<8x128xf32>
      %c0_38 = arith.constant 0 : index
      %c0_39 = arith.constant 0 : index
      %90 = vector.load %arg11[%c0_38, %c0_39] : memref<8x128xf32, #tpu.memory_space<vmem>>, vector<8x128xf32>
      tpu.vector_store %arg11[%c0_38, %c0_39], %89 {strides = array<i32>} : memref<8x128xf32, #tpu.memory_space<vmem>>, vector<8x128xf32>,
    } else {
    }
    return
  }
  func.func @transform_0(%arg0: i32) -> (i32, i32) {
    %c0_i32 = arith.constant 0 : i32
    %c0_i32_0 = arith.constant 0 : i32
    %c0_i32_1 = arith.constant 0 : i32
    return %c0_i32, %c0_i32_0 : i32, i32
  }
  func.func @transform_1(%arg0: i32) -> (i32, i32) {
    %c0_i32 = arith.constant 0 : i32
    %c0_i32_0 = arith.constant 0 : i32
    %c0_i32_1 = arith.constant 0 : i32
    return %c0_i32, %c0_i32_0 : i32, i32
  }
  func.func @transform_2(%arg0: i32) -> (i32, i32) {
    %c0_i32 = arith.constant 0 : i32
    %c0_i32_0 = arith.constant 0 : i32
    %c0_i32_1 = arith.constant 0 : i32
    return %c0_i32, %c0_i32_0 : i32, i32
  }
  func.func @transform_3(%arg0: i32) -> (i32, i32, i32) {
    %c0_i32 = arith.constant 0 : i32
    %c0_i32_0 = arith.constant 0 : i32
    %c0_i32_1 = arith.constant 0 : i32
    return %arg0, %c0_i32, %c0_i32_0 : i32, i32, i32
  }
  func.func @transform_4(%arg0: i32) -> (i32, i32, i32) {
    %c0_i32 = arith.constant 0 : i32
    %c0_i32_0 = arith.constant 0 : i32
    %c0_i32_1 = arith.constant 0 : i32
    return %arg0, %c0_i32, %c0_i32_0 : i32, i32, i32
  }
  func.func @transform_5(%arg0: i32) -> (i32, i32, i32) {
    %c0_i32 = arith.constant 0 : i32
    %c0_i32_0 = arith.constant 0 : i32
    %c0_i32_1 = arith.constant 0 : i32
    return %arg0, %c0_i32, %c0_i32_0 : i32, i32, i32
  }
  func.func @transform_6(%arg0: i32) -> (i32, i32, i32) {
    %c0_i32 = arith.constant 0 : i32
    %c0_i32_0 = arith.constant 0 : i32
    %c0_i32_1 = arith.constant 0 : i32
    return %arg0, %c0_i32, %c0_i32_0 : i32, i32, i32
  }
  func.func @transform_7(%arg0: i32) -> (i32, i32, i32) {
    %c0_i32 = arith.constant 0 : i32
    %c0_i32_0 = arith.constant 0 : i32
    %c0_i32_1 = arith.constant 0 : i32
    return %arg0, %c0_i32, %c0_i32_0 : i32, i32, i32
  }
  func.func @transform_8(%arg0: i32) -> (i32, i32) {
    %c0_i32 = arith.constant 0 : i32
    %c0_i32_0 = arith.constant 0 : i32
    %c0_i32_1 = arith.constant 0 : i32
    return %c0_i32, %c0_i32_0 : i32, i32
  }
  func.func @transform_9(%arg0: i32) -> (i32, i32) {
    %c0_i32 = arith.constant 0 : i32
    %c0_i32_0 = arith.constant 0 : i32
    %c0_i32_1 = arith.constant 0 : i32
    return %c0_i32, %c0_i32_0 : i32, i32
  }
  func.func @transform_10(%arg0: i32) -> (i32, i32) {
    %c0_i32 = arith.constant 0 : i32
    %c0_i32_0 = arith.constant 0 : i32
    %c0_i32_1 = arith.constant 0 : i32
    return %c0_i32, %c0_i32_0 : i32, i32
  }
}

</mosaic_0001>

<llo_original>
// kernel: tpu_custom_call.1
$region0: #{tpu_custom_call.1}
  #allocation0 [shape = 'u32[]', space=smem, size = 0x4, offset = 0x4, fixed_abs, tag = 'smem constant byte address 0x4 - core index']
  #allocation1 [shape = 'u32[144,128]{1,0:T(1,128)}', space=vmem, size = 0x12000, scoped, tag = 'internal scratch']
  #allocation2 [shape = 'f32[8,512]{1,0:T(8,128)}', space=vmem, size = 0x4000, scoped, tag = 'scratch operand']
  %s0 = inlined_call_operand.hbm [shape: f32[8,128], index: 0, kind: input, shape index: {}]
  %s1 = inlined_call_operand.hbm [shape: bf16[128,512], index: 1, kind: input, shape index: {}]
  %s2 = inlined_call_operand.hbm [shape: f32[1,512], index: 2, kind: input, shape index: {}]
  %s3 = inlined_call_operand.hbm [shape: bf16[6,512,512], index: 3, kind: input, shape index: {}]
  %s4 = inlined_call_operand.hbm [shape: bf16[6,512,2048], index: 4, kind: input, shape index: {}]
  %s5 = inlined_call_operand.hbm [shape: bf16[6,2048,512], index: 5, kind: input, shape index: {}]
  %s6 = inlined_call_operand.hbm [shape: f32[6,8,512], index: 6, kind: input, shape index: {}]
  %s7 = inlined_call_operand.hbm [shape: f32[6,1,2048], index: 7, kind: input, shape index: {}]
  %s8 = inlined_call_operand.hbm [shape: bf16[512,128], index: 8, kind: input, shape index: {}]
  %s9 = inlined_call_operand.hbm [shape: f32[1,128], index: 9, kind: input, shape index: {}]
  %s10 = inlined_call_operand.hbm [shape: f32[8,128], index: 10, kind: output, shape index: {}]
  %s11 = sld [smem:[#allocation0]]
  $region121: #{tpu_custom_call.1} parent=0
    _
  %s13 = ssub.s32 1, %s11
  %s14 = scalar_select 0, %s13, %s11
  $region1: #{tpu_custom_call.1} parent=0
    #allocation3 [shape = 'u8[4096]{0}', space=vmem, size = 0x1000, scoped, tag = 'input window, operand 0, single buffered']
    #allocation4 [shape = 's32[2]{0}', space=sflag, size = 0x8, scoped, tag = 'scoped memory for tpu_custom_call.1']
    #allocation5 [shape = 's32[2]{0}', space=sflag, size = 0x8, scoped, tag = 'scoped memory for tpu_custom_call.1']
    #allocation6 [shape = 'u8[131072]{0}', space=vmem, size = 0x20000, scoped, tag = 'input window, operand 1, single buffered']
    #allocation7 [shape = 's32[1]{0}', space=sflag, size = 0x4, scoped, tag = 'scoped memory for tpu_custom_call.1']
    #allocation8 [shape = 'u8[2048]{0}', space=vmem, size = 0x800, scoped, tag = 'input window, operand 2, single buffered']
    #allocation9 [shape = 'u8[1048576]{0}', space=vmem, size = 0x100000, scoped, tag = 'input window, operand 3']
    #allocation10 [shape = 's32[2]{0}', space=sflag, size = 0x8, scoped, tag = 'scoped memory for tpu_custom_call.1']
    #allocation11 [shape = 'u8[4194304]{0}', space=vmem, size = 0x400000, scoped, tag = 'input window, operand 4']
    #allocation12 [shape = 'u8[4194304]{0}', space=vmem, size = 0x400000, scoped, tag = 'input window, operand 5']
    #allocation13 [shape = 's32[2]{0}', space=sflag, size = 0x8, scoped, tag = 'scoped memory for tpu_custom_call.1']
    #allocation14 [shape = 'u8[32768]{0}', space=vmem, size = 0x8000, scoped, tag = 'input window, operand 6']
    #allocation15 [shape = 'u8[16384]{0}', space=vmem, size = 0x4000, scoped, tag = 'input window, operand 7']
    #allocation16 [shape = 's32[2]{0}', space=sflag, size = 0x8, scoped, tag = 'scoped memory for tpu_custom_call.1']
    #allocation17 [shape = 'u8[131072]{0}', space=vmem, size = 0x20000, scoped, tag = 'input window, operand 8, single buffered']
    #allocation18 [shape = 'u8[512]{0}', space=vmem, size = 0x400, scoped, tag = 'input window, operand 9, single buffered']
    #allocation19 [shape = 's32[1]{0}', space=sflag, size = 0x4, scoped, tag = 'scoped memory for tpu_custom_call.1']
    #allocation20 [shape = 'u8[4096]{0}', space=vmem, size = 0x1000, scoped, tag = 'output window, operand 0, single buffered']
    %15 = vsyncpa [#allocation4], 0
    %16 = vsyncpa [#allocation7], 0
    %17 = vsyncpa [#allocation10], 0
    %s18 = scalar_lea.sflag [#allocation10], 1
    %19 = vsyncpa %s18, 0
    %20 = vsyncpa [#allocation13], 0
    %s21 = scalar_lea.sflag [#allocation13], 1
    %22 = vsyncpa %s21, 0
    %23 = vsyncpa [#allocation16], 0
    %s24 = scalar_lea.sflag [#allocation16], 1
    %25 = vsyncpa %s24, 0
    %26 = vsyncpa [#allocation19], 0
    %27 = vsyncpa [#allocation5], 0
    loop: start=0, step=1, limit=8
    $region2: #{tpu_custom_call.1} parent=1 // loop_pre_header
      _
    $region3: #{tpu_custom_call.1} parent=1 // loop_header
      %s29 = sphi 0, %s33
      %p30 = scmp.ge.s32.totalorder %s29, 8
      %s37 = sphi 0, %s37
      %s39 = sphi 0, %s37
      %s40 = sphi 0, %s39
      %s54 = sphi 0, %s40
      %s58 = sphi 0, %s58
      %s60 = sphi 0, %s58
      %s61 = sphi 0, %s60
      %s75 = sphi 0, %s61
      %s79 = sphi 0, %s79
      %s81 = sphi 0, %s79
      %s82 = sphi 0, %s81
      %s96 = sphi 0, %s82
      %s102 = sphi 0, %s104
      %s105 = sphi 0, %s102
      %s106 = sphi 0, %s105
      %s122 = sphi 0, %s106
      %s128 = sphi 0, %s130
      %s131 = sphi 0, %s128
      %s132 = sphi 0, %s131
      %s148 = sphi 0, %s132
      %s154 = sphi 0, %s156
      %s157 = sphi 0, %s154
      %s158 = sphi 0, %s157
      %s174 = sphi 0, %s158
      %s180 = sphi 0, %s182
      %s183 = sphi 0, %s180
      %s184 = sphi 0, %s183
      %s200 = sphi 0, %s184
      %s206 = sphi 0, %s208
      %s209 = sphi 0, %s206
      %s210 = sphi 0, %s209
      %s226 = sphi 0, %s210
      %s230 = sphi 0, %s230
      %s232 = sphi 0, %s230
      %s233 = sphi 0, %s232
      %s247 = sphi 0, %s233
      %s251 = sphi 0, %s251
      %s253 = sphi 0, %s251
      %s254 = sphi 0, %s253
      %s268 = sphi 0, %s254
      %s272 = sphi 0, %s272
      %s274 = sphi 0, %s272
      %s275 = sphi 0, %s274
      %s289 = sphi 0, %s275
    $region4: #{tpu_custom_call.1} parent=1 // loop_header_branch
      %32 = sbr.rel (%p30) target = $region8
    $region5: #{tpu_custom_call.1} parent=1 // loop_body
      %s34 = ssub.s32 %s29, 1
      %s35 = ssub.s32 %s29, 2
      %s36 = sadd.s32 %s29, 1
      %s38 = sadd.s32 %s37, 1
      %p41 = scmp.eq.s32.totalorder %s29, 5
      %p42 = scmp.ne.s32.totalorder %s37, %s39
      %p43 = scmp.eq.s32.totalorder %s29, 0
      %p44 = por %p42, %p43
      %p45 = scmp.ne.s32.totalorder %s37, %s39
      %p46 = scmp.eq.s32.totalorder %s34, 5
      %p47 = por %p45, %p46
      %p48 = scmp.ne.s32.totalorder %s39, %s40
      %p49 = scmp.eq.s32.totalorder %s34, 0
      %p50 = por %p48, %p49
      %p51 = scmp.ne.s32.totalorder %s39, %s40
      %p52 = scmp.eq.s32.totalorder %s35, 5
      %p53 = por %p51, %p52
      %p55 = scmp.ne.s32.totalorder %s40, %s54
      %p56 = scmp.eq.s32.totalorder %s35, 0
      %p57 = por %p55, %p56
      %s59 = sadd.s32 %s58, 1
      %p62 = scmp.eq.s32.totalorder %s29, 5
      %p63 = scmp.ne.s32.totalorder %s58, %s60
      %p64 = scmp.eq.s32.totalorder %s29, 0
      %p65 = por %p63, %p64
      %p66 = scmp.ne.s32.totalorder %s58, %s60
      %p67 = scmp.eq.s32.totalorder %s34, 5
      %p68 = por %p66, %p67
      %p69 = scmp.ne.s32.totalorder %s60, %s61
      %p70 = scmp.eq.s32.totalorder %s34, 0
      %p71 = por %p69, %p70
      %p72 = scmp.ne.s32.totalorder %s60, %s61
      %p73 = scmp.eq.s32.totalorder %s35, 5
      %p74 = por %p72, %p73
      %p76 = scmp.ne.s32.totalorder %s61, %s75
      %p77 = scmp.eq.s32.totalorder %s35, 0
      %p78 = por %p76, %p77
      %s80 = sadd.s32 %s79, 1
      %p83 = scmp.eq.s32.totalorder %s29, 5
      %p84 = scmp.ne.s32.totalorder %s79, %s81
      %p85 = scmp.eq.s32.totalorder %s29, 0
      %p86 = por %p84, %p85
      %p87 = scmp.ne.s32.totalorder %s79, %s81
      %p88 = scmp.eq.s32.totalorder %s34, 5
      %p89 = por %p87, %p88
      %p90 = scmp.ne.s32.totalorder %s81, %s82
      %p91 = scmp.eq.s32.totalorder %s34, 0
      %p92 = por %p90, %p91
      %p93 = scmp.ne.s32.totalorder %s81, %s82
      %p94 = scmp.eq.s32.totalorder %s35, 5
      %p95 = por %p93, %p94
      %p97 = scmp.ne.s32.totalorder %s82, %s96
      %p98 = scmp.eq.s32.totalorder %s35, 0
      %p99 = por %p97, %p98
      %s100 = ssub.s32 %s29, %s36
      %p101 = scmp.eq.s32.totalorder %s100, 0
      %s103 = sadd.s32 %s102, 1
      %s104 = scalar_select %p101, %s102, %s103
      %p107 = pneg %p101
      %p108 = scmp.eq.s32.totalorder %s29, 5
      %p109 = por %p107, %p108
      %p110 = scmp.ne.s32.totalorder %s102, %s105
      %p111 = scmp.eq.s32.totalorder %s29, 0
      %p112 = por %p110, %p111
      %p113 = scmp.ne.s32.totalorder %s102, %s105
      %p114 = scmp.eq.s32.totalorder %s34, 5
      %p115 = por %p113, %p114
      %p116 = scmp.ne.s32.totalorder %s105, %s106
      %p117 = scmp.eq.s32.totalorder %s34, 0
      %p118 = por %p116, %p117
      %p119 = scmp.ne.s32.totalorder %s105, %s106
      %p120 = scmp.eq.s32.totalorder %s35, 5
      %p121 = por %p119, %p120
      %p123 = scmp.ne.s32.totalorder %s106, %s122
      %p124 = scmp.eq.s32.totalorder %s35, 0
      %p125 = por %p123, %p124
      %s126 = ssub.s32 %s29, %s36
      %p127 = scmp.eq.s32.totalorder %s126, 0
      %s129 = sadd.s32 %s128, 1
      %s130 = scalar_select %p127, %s128, %s129
      %p133 = pneg %p127
      %p134 = scmp.eq.s32.totalorder %s29, 5
      %p135 = por %p133, %p134
      %p136 = scmp.ne.s32.totalorder %s128, %s131
      %p137 = scmp.eq.s32.totalorder %s29, 0
      %p138 = por %p136, %p137
      %p139 = scmp.ne.s32.totalorder %s128, %s131
      %p140 = scmp.eq.s32.totalorder %s34, 5
      %p141 = por %p139, %p140
      %p142 = scmp.ne.s32.totalorder %s131, %s132
      %p143 = scmp.eq.s32.totalorder %s34, 0
      %p144 = por %p142, %p143
      %p145 = scmp.ne.s32.totalorder %s131, %s132
      %p146 = scmp.eq.s32.totalorder %s35, 5
      %p147 = por %p145, %p146
      %p149 = scmp.ne.s32.totalorder %s132, %s148
      %p150 = scmp.eq.s32.totalorder %s35, 0
      %p151 = por %p149, %p150
      %s152 = ssub.s32 %s29, %s36
      %p153 = scmp.eq.s32.totalorder %s152, 0
      %s155 = sadd.s32 %s154, 1
      %s156 = scalar_select %p153, %s154, %s155
      %p159 = pneg %p153
      %p160 = scmp.eq.s32.totalorder %s29, 5
      %p161 = por %p159, %p160
      %p162 = scmp.ne.s32.totalorder %s154, %s157
      %p163 = scmp.eq.s32.totalorder %s29, 0
      %p164 = por %p162, %p163
      %p165 = scmp.ne.s32.totalorder %s154, %s157
      %p166 = scmp.eq.s32.totalorder %s34, 5
      %p167 = por %p165, %p166
      %p168 = scmp.ne.s32.totalorder %s157, %s158
      %p169 = scmp.eq.s32.totalorder %s34, 0
      %p170 = por %p168, %p169
      %p171 = scmp.ne.s32.totalorder %s157, %s158
      %p172 = scmp.eq.s32.totalorder %s35, 5
      %p173 = por %p171, %p172
      %p175 = scmp.ne.s32.totalorder %s158, %s174
      %p176 = scmp.eq.s32.totalorder %s35, 0
      %p177 = por %p175, %p176
      %s178 = ssub.s32 %s29, %s36
      %p179 = scmp.eq.s32.totalorder %s178, 0
      %s181 = sadd.s32 %s180, 1
      %s182 = scalar_select %p179, %s180, %s181
      %p185 = pneg %p179
      %p186 = scmp.eq.s32.totalorder %s29, 5
      %p187 = por %p185, %p186
      %p188 = scmp.ne.s32.totalorder %s180, %s183
      %p189 = scmp.eq.s32.totalorder %s29, 0
      %p190 = por %p188, %p189
      %p191 = scmp.ne.s32.totalorder %s180, %s183
      %p192 = scmp.eq.s32.totalorder %s34, 5
      %p193 = por %p191, %p192
      %p194 = scmp.ne.s32.totalorder %s183, %s184
      %p195 = scmp.eq.s32.totalorder %s34, 0
      %p196 = por %p194, %p195
      %p197 = scmp.ne.s32.totalorder %s183, %s184
      %p198 = scmp.eq.s32.totalorder %s35, 5
      %p199 = por %p197, %p198
      %p201 = scmp.ne.s32.totalorder %s184, %s200
      %p202 = scmp.eq.s32.totalorder %s35, 0
      %p203 = por %p201, %p202
      %s204 = ssub.s32 %s29, %s36
      %p205 = scmp.eq.s32.totalorder %s204, 0
      %s207 = sadd.s32 %s206, 1
      %s208 = scalar_select %p205, %s206, %s207
      %p211 = pneg %p205
      %p212 = scmp.eq.s32.totalorder %s29, 5
      %p213 = por %p211, %p212
      %p214 = scmp.ne.s32.totalorder %s206, %s209
      %p215 = scmp.eq.s32.totalorder %s29, 0
      %p216 = por %p214, %p215
      %p217 = scmp.ne.s32.totalorder %s206, %s209
      %p218 = scmp.eq.s32.totalorder %s34, 5
      %p219 = por %p217, %p218
      %p220 = scmp.ne.s32.totalorder %s209, %s210
      %p221 = scmp.eq.s32.totalorder %s34, 0
      %p222 = por %p220, %p221
      %p223 = scmp.ne.s32.totalorder %s209, %s210
      %p224 = scmp.eq.s32.totalorder %s35, 5
      %p225 = por %p223, %p224
      %p227 = scmp.ne.s32.totalorder %s210, %s226
      %p228 = scmp.eq.s32.totalorder %s35, 0
      %p229 = por %p227, %p228
      %s231 = sadd.s32 %s230, 1
      %p234 = scmp.eq.s32.totalorder %s29, 5
      %p235 = scmp.ne.s32.totalorder %s230, %s232
      %p236 = scmp.eq.s32.totalorder %s29, 0
      %p237 = por %p235, %p236
      %p238 = scmp.ne.s32.totalorder %s230, %s232
      %p239 = scmp.eq.s32.totalorder %s34, 5
      %p240 = por %p238, %p239
      %p241 = scmp.ne.s32.totalorder %s232, %s233
      %p242 = scmp.eq.s32.totalorder %s34, 0
      %p243 = por %p241, %p242
      %p244 = scmp.ne.s32.totalorder %s232, %s233
      %p245 = scmp.eq.s32.totalorder %s35, 5
      %p246 = por %p244, %p245
      %p248 = scmp.ne.s32.totalorder %s233, %s247
      %p249 = scmp.eq.s32.totalorder %s35, 0
      %p250 = por %p248, %p249
      %s252 = sadd.s32 %s251, 1
      %p255 = scmp.eq.s32.totalorder %s29, 5
      %p256 = scmp.ne.s32.totalorder %s251, %s253
      %p257 = scmp.eq.s32.totalorder %s29, 0
      %p258 = por %p256, %p257
      %p259 = scmp.ne.s32.totalorder %s251, %s253
      %p260 = scmp.eq.s32.totalorder %s34, 5
      %p261 = por %p259, %p260
      %p262 = scmp.ne.s32.totalorder %s253, %s254
      %p263 = scmp.eq.s32.totalorder %s34, 0
      %p264 = por %p262, %p263
      %p265 = scmp.ne.s32.totalorder %s253, %s254
      %p266 = scmp.eq.s32.totalorder %s35, 5
      %p267 = por %p265, %p266
      %p269 = scmp.ne.s32.totalorder %s254, %s268
      %p270 = scmp.eq.s32.totalorder %s35, 0
      %p271 = por %p269, %p270
      %s273 = sadd.s32 %s272, 1
      %p276 = scmp.eq.s32.totalorder %s29, 5
      %p277 = scmp.ne.s32.totalorder %s272, %s274
      %p278 = scmp.eq.s32.totalorder %s29, 0
      %p279 = por %p277, %p278
      %p280 = scmp.ne.s32.totalorder %s272, %s274
      %p281 = scmp.eq.s32.totalorder %s34, 5
      %p282 = por %p280, %p281
      %p283 = scmp.ne.s32.totalorder %s274, %s275
      %p284 = scmp.eq.s32.totalorder %s34, 0
      %p285 = por %p283, %p284
      %p286 = scmp.ne.s32.totalorder %s274, %s275
      %p287 = scmp.eq.s32.totalorder %s35, 5
      %p288 = por %p286, %p287
      %p290 = scmp.ne.s32.totalorder %s275, %s289
      %p291 = scmp.eq.s32.totalorder %s35, 0
      %p292 = por %p290, %p291
      %p293 = scmp.le.s32.totalorder 1, %s29
      %p294 = scmp.lt.s32.totalorder %s29, 7
      %p295 = pnand %p293, %p294
      %p296 = pneg %p295
      // Predicated region
      $region9: #{tpu_custom_call.1} parent=5 // pred_check
        _
      $region10: #{tpu_custom_call.1} parent=5 // pred_check_branch
        %298 = sbr.rel (%p295) target = $region12
      $region11: #{tpu_custom_call.1} parent=5 // pred_region
        %s299 = ssub.s32 %s29, 1
        // Predicated region
        $region13: #{tpu_custom_call.1} parent=11 // pred_check
          %p300 = pneg %p50
        $region14: #{tpu_custom_call.1} parent=11 // pred_check_branch
          %302 = sbr.rel (%p300) target = $region16
        $region15: #{tpu_custom_call.1} parent=11 // pred_region
          %s304 = ssub.s32 128, 128
          %305 = vsyncadd [#allocation4], %s304
          %s307 = sshll.u32 [#allocation3], 4
          %s308 = int_to_ptr.vmem [resolvable:$true] %s307
          %310 = dma.hbm_to_vmem [thread:$0]  %s0, 128, %s308, [#allocation4]
        $region16: #{tpu_custom_call.1} parent=11 // pred_fallthru
          _
        // Predicated region
        $region17: #{tpu_custom_call.1} parent=11 // pred_check
          %p311 = pneg %p71
        $region18: #{tpu_custom_call.1} parent=11 // pred_check_branch
          %313 = sbr.rel (%p311) target = $region20
        $region19: #{tpu_custom_call.1} parent=11 // pred_region
          %s315 = ssub.s32 4096, 4096
          %316 = vsyncadd [#allocation7], %s315
          %s317 = sshll.u32 [#allocation6], 4
          %s318 = int_to_ptr.vmem [resolvable:$true] %s317
          %323 = dma.hbm_to_vmem [thread:$0]  %s1, 4096, %s318, [#allocation7], 256, 256, 16
        $region20: #{tpu_custom_call.1} parent=11 // pred_fallthru
          _
        // Predicated region
        $region21: #{tpu_custom_call.1} parent=11 // pred_check
          %p324 = pneg %p92
        $region22: #{tpu_custom_call.1} parent=11 // pred_check_branch
          %326 = sbr.rel (%p324) target = $region24
        $region23: #{tpu_custom_call.1} parent=11 // pred_region
          %s328 = ssub.s32 64, 64
          %329 = vsyncadd [#allocation7], %s328
          %s331 = sshll.u32 [#allocation8], 4
          %s332 = int_to_ptr.vmem [resolvable:$true] %s331
          %334 = dma.hbm_to_vmem [thread:$0]  %s2, 64, %s332, [#allocation7]
        $region24: #{tpu_custom_call.1} parent=11 // pred_fallthru
          _
        // Predicated region
        $region25: #{tpu_custom_call.1} parent=11 // pred_check
          %p335 = pneg %p243
        $region26: #{tpu_custom_call.1} parent=11 // pred_check_branch
          %337 = sbr.rel (%p335) target = $region28
        $region27: #{tpu_custom_call.1} parent=11 // pred_region
          %s339 = ssub.s32 4096, 4096
          %340 = vsyncadd [#allocation16], %s339
          %s341 = sshll.u32 [#allocation17], 4
          %s342 = int_to_ptr.vmem [resolvable:$true] %s341
          %347 = dma.hbm_to_vmem [thread:$0]  %s8, 4096, %s342, [#allocation16], 64, 64, 4
        $region28: #{tpu_custom_call.1} parent=11 // pred_fallthru
          _
        // Predicated region
        $region29: #{tpu_custom_call.1} parent=11 // pred_check
          %p348 = pneg %p264
        $region30: #{tpu_custom_call.1} parent=11 // pred_check_branch
          %350 = sbr.rel (%p348) target = $region32
        $region31: #{tpu_custom_call.1} parent=11 // pred_region
          %s352 = ssub.s32 16, 16
          %353 = vsyncadd [#allocation19], %s352
          %s355 = sshll.u32 [#allocation18], 4
          %s356 = int_to_ptr.vmem [resolvable:$true] %s355
          %358 = dma.hbm_to_vmem [thread:$0]  %s9, 16, %s356, [#allocation19]
        $region32: #{tpu_custom_call.1} parent=11 // pred_fallthru
          _
      $region12: #{tpu_custom_call.1} parent=5 // pred_fallthru
        _
      %p359 = scmp.lt.s32.totalorder %s29, 6
      // Predicated region
      $region33: #{tpu_custom_call.1} parent=5 // pred_check
        %p360 = pneg %p359
      $region34: #{tpu_custom_call.1} parent=5 // pred_check_branch
        %362 = sbr.rel (%p360) target = $region36
      $region35: #{tpu_custom_call.1} parent=5 // pred_region
        // Predicated region
        $region37: #{tpu_custom_call.1} parent=35 // pred_check
          %p363 = pneg %p112
        $region38: #{tpu_custom_call.1} parent=35 // pred_check_branch
          %365 = sbr.rel (%p363) target = $region40
        $region39: #{tpu_custom_call.1} parent=35 // pred_region
          %s366 = sand.u32 %s29, 1
          %s367 = scalar_lea.sflag [#allocation10], %s366
          %s368 = sand.u32 %s102, 1
          %s369 = smul.addr %s368, 1024
          %s370 = scalar_lea.vmem [#allocation9], %s369
          %s372 = ssub.s32 16384, 16384
          %373 = vsyncadd %s367, %s372
          %s374 = smul.addr %s29, 256
          %s375 = smul.addr %s374, 64
          %s376 = scalar_lea.hbm %s3, %s375
          %s377 = sshll.u32 %s370, 4
          %s378 = int_to_ptr.vmem [resolvable:$true] %s377
          %383 = dma.hbm_to_vmem [thread:$0]  %s376, 16384, %s378, %s367, 256, 256, 16
        $region40: #{tpu_custom_call.1} parent=35 // pred_fallthru
          _
        // Predicated region
        $region41: #{tpu_custom_call.1} parent=35 // pred_check
          %p384 = pneg %p138
        $region42: #{tpu_custom_call.1} parent=35 // pred_check_branch
          %386 = sbr.rel (%p384) target = $region44
        $region43: #{tpu_custom_call.1} parent=35 // pred_region
          %s387 = sand.u32 %s29, 1
          %s388 = scalar_lea.sflag [#allocation10], %s387
          %s389 = sand.u32 %s128, 1
          %s390 = smul.addr %s389, 4096
          %s391 = scalar_lea.vmem [#allocation11], %s390
          %s393 = ssub.s32 65536, 65536
          %394 = vsyncadd %s388, %s393
          %s395 = smul.addr %s29, 1024
          %s396 = smul.addr %s395, 64
          %s397 = scalar_lea.hbm %s4, %s396
          %s398 = sshll.u32 %s391, 4
          %s399 = int_to_ptr.vmem [resolvable:$true] %s398
          %404 = dma.hbm_to_vmem [thread:$0]  %s397, 65536, %s399, %s388, 1024, 1024, 64
        $region44: #{tpu_custom_call.1} parent=35 // pred_fallthru
          _
        // Predicated region
        $region45: #{tpu_custom_call.1} parent=35 // pred_check
          %p405 = pneg %p164
        $region46: #{tpu_custom_call.1} parent=35 // pred_check_branch
          %407 = sbr.rel (%p405) target = $region48
        $region47: #{tpu_custom_call.1} parent=35 // pred_region
          %s408 = sand.u32 %s29, 1
          %s409 = scalar_lea.sflag [#allocation13], %s408
          %s410 = sand.u32 %s154, 1
          %s411 = smul.addr %s410, 4096
          %s412 = scalar_lea.vmem [#allocation12], %s411
          %s414 = ssub.s32 65536, 65536
          %415 = vsyncadd %s409, %s414
          %s416 = smul.addr %s29, 1024
          %s417 = smul.addr %s416, 64
          %s418 = scalar_lea.hbm %s5, %s417
          %s419 = sshll.u32 %s412, 4
          %s420 = int_to_ptr.vmem [resolvable:$true] %s419
          %425 = dma.hbm_to_vmem [thread:$0]  %s418, 65536, %s420, %s409, 256, 256, 16
        $region48: #{tpu_custom_call.1} parent=35 // pred_fallthru
          _
        // Predicated region
        $region49: #{tpu_custom_call.1} parent=35 // pred_check
          %p426 = pneg %p190
        $region50: #{tpu_custom_call.1} parent=35 // pred_check_branch
          %428 = sbr.rel (%p426) target = $region52
        $region51: #{tpu_custom_call.1} parent=35 // pred_region
          %s429 = sand.u32 %s29, 1
          %s430 = scalar_lea.sflag [#allocation13], %s429
          %s431 = sand.u32 %s180, 1
          %s432 = smul.addr %s431, 32
          %s433 = scalar_lea.vmem [#allocation14], %s432
          %s435 = ssub.s32 512, 512
          %436 = vsyncadd %s430, %s435
          %s437 = smul.addr %s29, 4
          %s438 = smul.addr %s437, 128
          %s439 = scalar_lea.hbm %s6, %s438
          %s441 = sshll.u32 %s433, 4
          %s442 = int_to_ptr.vmem [resolvable:$true] %s441
          %444 = dma.hbm_to_vmem [thread:$0]  %s439, 512, %s442, %s430
        $region52: #{tpu_custom_call.1} parent=35 // pred_fallthru
          _
        // Predicated region
        $region53: #{tpu_custom_call.1} parent=35 // pred_check
          %p445 = pneg %p216
        $region54: #{tpu_custom_call.1} parent=35 // pred_check_branch
          %447 = sbr.rel (%p445) target = $region56
        $region55: #{tpu_custom_call.1} parent=35 // pred_region
          %s448 = sand.u32 %s29, 1
          %s449 = scalar_lea.sflag [#allocation16], %s448
          %s450 = sand.u32 %s206, 1
          %s451 = smul.addr %s450, 16
          %s452 = scalar_lea.vmem [#allocation15], %s451
          %s454 = ssub.s32 256, 256
          %455 = vsyncadd %s449, %s454
          %s456 = smul.addr %s29, 16
          %s457 = smul.addr %s456, 16
          %s458 = scalar_lea.hbm %s7, %s457
          %s460 = sshll.u32 %s452, 4
          %s461 = int_to_ptr.vmem [resolvable:$true] %s460
          %463 = dma.hbm_to_vmem [thread:$0]  %s458, 256, %s461, %s449
        $region56: #{tpu_custom_call.1} parent=35 // pred_fallthru
          _
      $region36: #{tpu_custom_call.1} parent=5 // pred_fallthru
        _
      %p464 = scmp.le.s32.totalorder 1, %s29
      %p465 = scmp.lt.s32.totalorder %s29, 7
      %p466 = pnand %p464, %p465
      %p467 = pneg %p466
      // Predicated region
      $region57: #{tpu_custom_call.1} parent=5 // pred_check
        _
      $region58: #{tpu_custom_call.1} parent=5 // pred_check_branch
        %469 = sbr.rel (%p466) target = $region60
      $region59: #{tpu_custom_call.1} parent=5 // pred_region
        %s470 = ssub.s32 %s29, 1
        // Predicated region
        $region61: #{tpu_custom_call.1} parent=59 // pred_check
          %p471 = pneg %p50
        $region62: #{tpu_custom_call.1} parent=59 // pred_check_branch
          %473 = sbr.rel (%p471) target = $region64
        $region63: #{tpu_custom_call.1} parent=59 // pred_region
          %474 = dma.done [#allocation4], 128
        $region64: #{tpu_custom_call.1} parent=59 // pred_fallthru
          _
        // Predicated region
        $region65: #{tpu_custom_call.1} parent=59 // pred_check
          %p475 = pneg %p71
        $region66: #{tpu_custom_call.1} parent=59 // pred_check_branch
          %477 = sbr.rel (%p475) target = $region68
        $region67: #{tpu_custom_call.1} parent=59 // pred_region
          %478 = dma.done [#allocation7], 4096
        $region68: #{tpu_custom_call.1} parent=59 // pred_fallthru
          _
        // Predicated region
        $region69: #{tpu_custom_call.1} parent=59 // pred_check
          %p479 = pneg %p92
        $region70: #{tpu_custom_call.1} parent=59 // pred_check_branch
          %481 = sbr.rel (%p479) target = $region72
        $region71: #{tpu_custom_call.1} parent=59 // pred_region
          %482 = dma.done [#allocation7], 64
        $region72: #{tpu_custom_call.1} parent=59 // pred_fallthru
          _
        %s483 = sand.u32 %s34, 1
        %s484 = scalar_lea.sflag [#allocation10], %s483
        %s485 = sand.u32 %s105, 1
        %s486 = smul.addr %s485, 1024
        %s487 = scalar_lea.vmem [#allocation9], %s486
        // Predicated region
        $region73: #{tpu_custom_call.1} parent=59 // pred_check
          %p488 = pneg %p118
        $region74: #{tpu_custom_call.1} parent=59 // pred_check_branch
          %490 = sbr.rel (%p488) target = $region76
        $region75: #{tpu_custom_call.1} parent=59 // pred_region
          %491 = dma.done %s484, 16384
        $region76: #{tpu_custom_call.1} parent=59 // pred_fallthru
          _
        %s492 = sand.u32 %s34, 1
        %s493 = scalar_lea.sflag [#allocation10], %s492
        %s494 = sand.u32 %s131, 1
        %s495 = smul.addr %s494, 4096
        %s496 = scalar_lea.vmem [#allocation11], %s495
        // Predicated region
        $region77: #{tpu_custom_call.1} parent=59 // pred_check
          %p497 = pneg %p144
        $region78: #{tpu_custom_call.1} parent=59 // pred_check_branch
          %499 = sbr.rel (%p497) target = $region80
        $region79: #{tpu_custom_call.1} parent=59 // pred_region
          %500 = dma.done %s493, 65536
        $region80: #{tpu_custom_call.1} parent=59 // pred_fallthru
          _
        %s501 = sand.u32 %s34, 1
        %s502 = scalar_lea.sflag [#allocation13], %s501
        %s503 = sand.u32 %s157, 1
        %s504 = smul.addr %s503, 4096
        %s505 = scalar_lea.vmem [#allocation12], %s504
        // Predicated region
        $region81: #{tpu_custom_call.1} parent=59 // pred_check
          %p506 = pneg %p170
        $region82: #{tpu_custom_call.1} parent=59 // pred_check_branch
          %508 = sbr.rel (%p506) target = $region84
        $region83: #{tpu_custom_call.1} parent=59 // pred_region
          %509 = dma.done %s502, 65536
        $region84: #{tpu_custom_call.1} parent=59 // pred_fallthru
          _
        %s510 = sand.u32 %s34, 1
        %s511 = scalar_lea.sflag [#allocation13], %s510
        %s512 = sand.u32 %s183, 1
        %s513 = smul.addr %s512, 32
        %s514 = scalar_lea.vmem [#allocation14], %s513
        // Predicated region
        $region85: #{tpu_custom_call.1} parent=59 // pred_check
          %p515 = pneg %p196
        $region86: #{tpu_custom_call.1} parent=59 // pred_check_branch
          %517 = sbr.rel (%p515) target = $region88
        $region87: #{tpu_custom_call.1} parent=59 // pred_region
          %518 = dma.done %s511, 512
        $region88: #{tpu_custom_call.1} parent=59 // pred_fallthru
          _
        %s519 = sand.u32 %s34, 1
        %s520 = scalar_lea.sflag [#allocation16], %s519
        %s521 = sand.u32 %s209, 1
        %s522 = smul.addr %s521, 16
        %s523 = scalar_lea.vmem [#allocation15], %s522
        // Predicated region
        $region89: #{tpu_custom_call.1} parent=59 // pred_check
          %p524 = pneg %p222
        $region90: #{tpu_custom_call.1} parent=59 // pred_check_branch
          %526 = sbr.rel (%p524) target = $region92
        $region91: #{tpu_custom_call.1} parent=59 // pred_region
          %527 = dma.done %s520, 256
        $region92: #{tpu_custom_call.1} parent=59 // pred_fallthru
          _
        // Predicated region
        $region93: #{tpu_custom_call.1} parent=59 // pred_check
          %p528 = pneg %p243
        $region94: #{tpu_custom_call.1} parent=59 // pred_check_branch
          %530 = sbr.rel (%p528) target = $region96
        $region95: #{tpu_custom_call.1} parent=59 // pred_region
          %531 = dma.done [#allocation16], 4096
        $region96: #{tpu_custom_call.1} parent=59 // pred_fallthru
          _
        // Predicated region
        $region97: #{tpu_custom_call.1} parent=59 // pred_check
          %p532 = pneg %p264
        $region98: #{tpu_custom_call.1} parent=59 // pred_check_branch
          %534 = sbr.rel (%p532) target = $region100
        $region99: #{tpu_custom_call.1} parent=59 // pred_region
          %535 = dma.done [#allocation19], 16
        $region100: #{tpu_custom_call.1} parent=59 // pred_fallthru
          _
        %p536 = pneg %p50
        %p537 = pneg %p47
        %p538 = pneg %p71
        %p539 = pneg %p68
        %p540 = pneg %p92
        %p541 = pneg %p89
        %s542 = sand.u32 %s34, 1
        %s543 = scalar_lea.sflag [#allocation10], %s542
        %s544 = sand.u32 %s105, 1
        %s545 = smul.addr %s544, 1024
        %s546 = scalar_lea.vmem [#allocation9], %s545
        %p547 = pneg %p118
        %p548 = pneg %p115
        %s549 = sand.u32 %s34, 1
        %s550 = scalar_lea.sflag [#allocation10], %s549
        %s551 = sand.u32 %s131, 1
        %s552 = smul.addr %s551, 4096
        %s553 = scalar_lea.vmem [#allocation11], %s552
        %p554 = pneg %p144
        %p555 = pneg %p141
        %s556 = sand.u32 %s34, 1
        %s557 = scalar_lea.sflag [#allocation13], %s556
        %s558 = sand.u32 %s157, 1
        %s559 = smul.addr %s558, 4096
        %s560 = scalar_lea.vmem [#allocation12], %s559
        %p561 = pneg %p170
        %p562 = pneg %p167
        %s563 = sand.u32 %s34, 1
        %s564 = scalar_lea.sflag [#allocation13], %s563
        %s565 = sand.u32 %s183, 1
        %s566 = smul.addr %s565, 32
        %s567 = scalar_lea.vmem [#allocation14], %s566
        %p568 = pneg %p196
        %p569 = pneg %p193
        %s570 = sand.u32 %s34, 1
        %s571 = scalar_lea.sflag [#allocation16], %s570
        %s572 = sand.u32 %s209, 1
        %s573 = smul.addr %s572, 16
        %s574 = scalar_lea.vmem [#allocation15], %s573
        %p575 = pneg %p222
        %p576 = pneg %p219
        %p577 = pneg %p243
        %p578 = pneg %p240
        %p579 = pneg %p264
        %p580 = pneg %p261
        %p581 = pneg %p285
        %p582 = pneg %p282
        %p584 = scmp.eq.s32.totalorder %s34, 0
        // Predicated region
        $region101: #{tpu_custom_call.1} parent=59 // pred_check
          %p585 = pneg %p584
        $region102: #{tpu_custom_call.1} parent=59 // pred_check_branch
          %587 = sbr.rel (%p585) target = $region104
        $region103: #{tpu_custom_call.1} parent=59 // pred_region
          %v588 = vld [vmem:[#allocation3] sm:$0xff]
          %v589 = vpack.c.bf16 %v588, %v588
          %v590 = vld [vmem:[#allocation6] sm:$0xff]
          %v591 = vld [vmem:[#allocation6 + $0x8] sm:$0xff]
          %v592 = vld [vmem:[#allocation6 + $0x10] sm:$0xff]
          %v593 = vld [vmem:[#allocation6 + $0x18] sm:$0xff]
          %v594 = vld [vmem:[#allocation6 + $0x20] sm:$0xff]
          %v595 = vld [vmem:[#allocation6 + $0x28] sm:$0xff]
          %v596 = vld [vmem:[#allocation6 + $0x30] sm:$0xff]
          %v597 = vld [vmem:[#allocation6 + $0x38] sm:$0xff]
          %v598 = vld [vmem:[#allocation6 + $0x40] sm:$0xff]
          %v599 = vld [vmem:[#allocation6 + $0x48] sm:$0xff]
          %v600 = vld [vmem:[#allocation6 + $0x50] sm:$0xff]
          %v601 = vld [vmem:[#allocation6 + $0x58] sm:$0xff]
          %v602 = vld [vmem:[#allocation6 + $0x60] sm:$0xff]
          %v603 = vld [vmem:[#allocation6 + $0x68] sm:$0xff]
          %v604 = vld [vmem:[#allocation6 + $0x70] sm:$0xff]
          %v605 = vld [vmem:[#allocation6 + $0x78] sm:$0xff]
          %v606 = vld [vmem:[#allocation6 + $0x80] sm:$0xff]
          %v607 = vld [vmem:[#allocation6 + $0x88] sm:$0xff]
          %v608 = vld [vmem:[#allocation6 + $0x90] sm:$0xff]
          %v609 = vld [vmem:[#allocation6 + $0x98] sm:$0xff]
          %v610 = vld [vmem:[#allocation6 + $0xa0] sm:$0xff]
          %v611 = vld [vmem:[#allocation6 + $0xa8] sm:$0xff]
          %v612 = vld [vmem:[#allocation6 + $0xb0] sm:$0xff]
          %v613 = vld [vmem:[#allocation6 + $0xb8] sm:$0xff]
          %v614 = vld [vmem:[#allocation6 + $0xc0] sm:$0xff]
          %v615 = vld [vmem:[#allocation6 + $0xc8] sm:$0xff]
          %v616 = vld [vmem:[#allocation6 + $0xd0] sm:$0xff]
          %v617 = vld [vmem:[#allocation6 + $0xd8] sm:$0xff]
          %v618 = vld [vmem:[#allocation6 + $0xe0] sm:$0xff]
          %v619 = vld [vmem:[#allocation6 + $0xe8] sm:$0xff]
          %v620 = vld [vmem:[#allocation6 + $0xf0] sm:$0xff]
          %v621 = vld [vmem:[#allocation6 + $0xf8] sm:$0xff]
          %v622 = vld [vmem:[#allocation8] sm:$0xf]
          %v624 = vlaneseq
          %v625 = vshrl.u32 %v624, 7
          %v626 = vsub.s32 0, %v625
          %v627 = vrot.slane %v622, %v626
          %v628 = vlaneseq
          %v629 = vshrl.u32 %v628, 7
          %v630 = vsub.s32 1, %v629
          %v631 = vrot.slane %v622, %v630
          %v632 = vlaneseq
          %v633 = vshrl.u32 %v632, 7
          %v634 = vsub.s32 2, %v633
          %v635 = vrot.slane %v622, %v634
          %v636 = vlaneseq
          %v637 = vshrl.u32 %v636, 7
          %v638 = vsub.s32 3, %v637
          %v639 = vrot.slane %v622, %v638
          %v676 = vunpack.c.l.b16 %v590
          %v677 = vunpack.c.h.b16 %v590
          %v678 = vunpack.c.l.b16 %v591
          %v679 = vunpack.c.h.b16 %v591
          %v680 = vunpack.c.l.b16 %v592
          %v681 = vunpack.c.h.b16 %v592
          %v682 = vunpack.c.l.b16 %v593
          %v683 = vunpack.c.h.b16 %v593
          %v684 = vunpack.c.l.b16 %v594
          %v685 = vunpack.c.h.b16 %v594
          %v686 = vunpack.c.l.b16 %v595
          %v687 = vunpack.c.h.b16 %v595
          %v688 = vunpack.c.l.b16 %v596
          %v689 = vunpack.c.h.b16 %v596
          %v690 = vunpack.c.l.b16 %v597
          %v691 = vunpack.c.h.b16 %v597
          %v692 = vunpack.c.l.b16 %v598
          %v693 = vunpack.c.h.b16 %v598
          %v694 = vunpack.c.l.b16 %v599
          %v695 = vunpack.c.h.b16 %v599
          %v696 = vunpack.c.l.b16 %v600
          %v697 = vunpack.c.h.b16 %v600
          %v698 = vunpack.c.l.b16 %v601
          %v699 = vunpack.c.h.b16 %v601
          %v700 = vunpack.c.l.b16 %v602
          %v701 = vunpack.c.h.b16 %v602
          %v702 = vunpack.c.l.b16 %v603
          %v703 = vunpack.c.h.b16 %v603
          %v704 = vunpack.c.l.b16 %v604
          %v705 = vunpack.c.h.b16 %v604
          %v706 = vunpack.c.l.b16 %v605
          %v707 = vunpack.c.h.b16 %v605
          %v708 = vunpack.c.l.b16 %v606
          %v709 = vunpack.c.h.b16 %v606
          %v710 = vunpack.c.l.b16 %v607
          %v711 = vunpack.c.h.b16 %v607
          %v712 = vunpack.c.l.b16 %v608
          %v713 = vunpack.c.h.b16 %v608
          %v714 = vunpack.c.l.b16 %v609
          %v715 = vunpack.c.h.b16 %v609
          %v716 = vunpack.c.l.b16 %v610
          %v717 = vunpack.c.h.b16 %v610
          %v718 = vunpack.c.l.b16 %v611
          %v719 = vunpack.c.h.b16 %v611
          %v720 = vunpack.c.l.b16 %v612
          %v721 = vunpack.c.h.b16 %v612
          %v722 = vunpack.c.l.b16 %v613
          %v723 = vunpack.c.h.b16 %v613
          %v724 = vunpack.c.l.b16 %v614
          %v725 = vunpack.c.h.b16 %v614
          %v726 = vunpack.c.l.b16 %v615
          %v727 = vunpack.c.h.b16 %v615
          %v728 = vunpack.c.l.b16 %v616
          %v729 = vunpack.c.h.b16 %v616
          %v730 = vunpack.c.l.b16 %v617
          %v731 = vunpack.c.h.b16 %v617
          %v732 = vunpack.c.l.b16 %v618
          %v733 = vunpack.c.h.b16 %v618
          %v734 = vunpack.c.l.b16 %v619
          %v735 = vunpack.c.h.b16 %v619
          %v736 = vunpack.c.l.b16 %v620
          %v737 = vunpack.c.h.b16 %v620
          %v738 = vunpack.c.l.b16 %v621
          %v739 = vunpack.c.h.b16 %v621
          %v740 = vpack.c.b16 %v680, %v676
          %v741 = vpack.c.b16 %v681, %v677
          %v742 = vpack.c.b16 %v682, %v678
          %v743 = vpack.c.b16 %v683, %v679
          %v744 = vpack.c.b16 %v688, %v684
          %v745 = vpack.c.b16 %v689, %v685
          %v746 = vpack.c.b16 %v690, %v686
          %v747 = vpack.c.b16 %v691, %v687
          %v748 = vpack.c.b16 %v696, %v692
          %v749 = vpack.c.b16 %v697, %v693
          %v750 = vpack.c.b16 %v698, %v694
          %v751 = vpack.c.b16 %v699, %v695
          %v752 = vpack.c.b16 %v704, %v700
          %v753 = vpack.c.b16 %v705, %v701
          %v754 = vpack.c.b16 %v706, %v702
          %v755 = vpack.c.b16 %v707, %v703
          %v756 = vpack.c.b16 %v712, %v708
          %v757 = vpack.c.b16 %v713, %v709
          %v758 = vpack.c.b16 %v714, %v710
          %v759 = vpack.c.b16 %v715, %v711
          %v760 = vpack.c.b16 %v720, %v716
          %v761 = vpack.c.b16 %v721, %v717
          %v762 = vpack.c.b16 %v722, %v718
          %v763 = vpack.c.b16 %v723, %v719
          %v764 = vpack.c.b16 %v728, %v724
          %v765 = vpack.c.b16 %v729, %v725
          %v766 = vpack.c.b16 %v730, %v726
          %v767 = vpack.c.b16 %v731, %v727
          %v768 = vpack.c.b16 %v736, %v732
          %v769 = vpack.c.b16 %v737, %v733
          %v770 = vpack.c.b16 %v738, %v734
          %v771 = vpack.c.b16 %v739, %v735
          %804 = vmatprep.subr.bf16.mxu0 %v741
          %805 = vmatpush1.bf16.msra.mxu0 %v740
          %806 = vmatprep.subr.bf16.mxu0 %v745
          %807 = vmatpush1.bf16.msra.mxu0 %v744
          %808 = vmatprep.subr.bf16.mxu0 %v749
          %809 = vmatpush1.bf16.msra.mxu0 %v748
          %810 = vmatprep.subr.bf16.mxu0 %v753
          %811 = vmatpush1.bf16.msra.mxu0 %v752
          %812 = vmatprep.subr.bf16.mxu0 %v757
          %813 = vmatpush1.bf16.msra.mxu0 %v756
          %814 = vmatprep.subr.bf16.mxu0 %v761
          %815 = vmatpush1.bf16.msra.mxu0 %v760
          %816 = vmatprep.subr.bf16.mxu0 %v765
          %817 = vmatpush1.bf16.msra.mxu0 %v764
          %818 = vmatprep.subr.bf16.mxu0 %v769
          %819 = vmatpush1.bf16.msra.mxu0 %v768
          %820 = vmatprep.subr.bf16.mxu0 0
          %821 = vmatpush1.bf16.msra.mxu0 0
          %822 = vmatprep.subr.bf16.mxu0 0
          %823 = vmatpush1.bf16.msra.mxu0 0
          %824 = vmatprep.subr.bf16.mxu0 0
          %825 = vmatpush1.bf16.msra.mxu0 0
          %826 = vmatprep.subr.bf16.mxu0 0
          %827 = vmatpush1.bf16.msra.mxu0 0
          %828 = vmatprep.subr.bf16.mxu0 0
          %829 = vmatpush1.bf16.msra.mxu0 0
          %830 = vmatprep.subr.bf16.mxu0 0
          %831 = vmatpush1.bf16.msra.mxu0 0
          %832 = vmatprep.subr.bf16.mxu0 0
          %833 = vmatpush1.bf16.msra.mxu0 0
          %834 = vmatprep.subr.bf16.mxu0 0
          %835 = vmatpush1.bf16.msra.mxu0 0
          %836 = vmatprep.mubr.bf16.mxu0 0
          %837 = vmatmul.mubr.bf16.gmra.mrb[0].mxu0 %v589
          %v838 = vpop.f32.mrb[0].mxu0
          %v839 = vadd.f32 %v627, %v838
          %v840 = vpop.f32.mrb[0].mxu0
          %v841 = vadd.f32 %v631, %v840
          %v842 = vpop.f32.mrb[0].mxu0
          %v843 = vpop.f32.mrb[0].mxu0
          %844 = vdwg.mxu0
          %845 = vmatprep.subr.bf16.mxu0 %v743
          %846 = vmatpush1.bf16.msra.mxu0 %v742
          %847 = vmatprep.subr.bf16.mxu0 %v747
          %848 = vmatpush1.bf16.msra.mxu0 %v746
          %849 = vmatprep.subr.bf16.mxu0 %v751
          %850 = vmatpush1.bf16.msra.mxu0 %v750
          %851 = vmatprep.subr.bf16.mxu0 %v755
          %852 = vmatpush1.bf16.msra.mxu0 %v754
          %853 = vmatprep.subr.bf16.mxu0 %v759
          %854 = vmatpush1.bf16.msra.mxu0 %v758
          %855 = vmatprep.subr.bf16.mxu0 %v763
          %856 = vmatpush1.bf16.msra.mxu0 %v762
          %857 = vmatprep.subr.bf16.mxu0 %v767
          %858 = vmatpush1.bf16.msra.mxu0 %v766
          %859 = vmatprep.subr.bf16.mxu0 %v771
          %860 = vmatpush1.bf16.msra.mxu0 %v770
          %861 = vmatprep.subr.bf16.mxu0 0
          %862 = vmatpush1.bf16.msra.mxu0 0
          %863 = vmatprep.subr.bf16.mxu0 0
          %864 = vmatpush1.bf16.msra.mxu0 0
          %865 = vmatprep.subr.bf16.mxu0 0
          %866 = vmatpush1.bf16.msra.mxu0 0
          %867 = vmatprep.subr.bf16.mxu0 0
          %868 = vmatpush1.bf16.msra.mxu0 0
          %869 = vmatprep.subr.bf16.mxu0 0
          %870 = vmatpush1.bf16.msra.mxu0 0
          %871 = vmatprep.subr.bf16.mxu0 0
          %872 = vmatpush1.bf16.msra.mxu0 0
          %873 = vmatprep.subr.bf16.mxu0 0
          %874 = vmatpush1.bf16.msra.mxu0 0
          %875 = vmatprep.subr.bf16.mxu0 0
          %876 = vmatpush1.bf16.msra.mxu0 0
          %877 = vmatprep.mubr.bf16.mxu0 0
          %878 = vmatmul.mubr.bf16.gmra.mrb[0].mxu0 %v589
          %v879 = vpop.f32.mrb[0].mxu0
          %v880 = vadd.f32 %v635, %v879
          %v881 = vpop.f32.mrb[0].mxu0
          %v882 = vadd.f32 %v639, %v881
          %v883 = vpop.f32.mrb[0].mxu0
          %v884 = vpop.f32.mrb[0].mxu0
          %885 = vdwg.mxu0
          %886 = vst [vmem:[#allocation2] sm:$0xff] %v839
          %887 = vst [vmem:[#allocation2 + $0x8] sm:$0xff] %v841
          %888 = vst [vmem:[#allocation2 + $0x10] sm:$0xff] %v880
          %889 = vst [vmem:[#allocation2 + $0x18] sm:$0xff] %v882
        $region104: #{tpu_custom_call.1} parent=59 // pred_fallthru
          _
        %v890 = vld [vmem:[#allocation2] sm:$0xff]
        %v891 = vld [vmem:[#allocation2 + $0x8] sm:$0xff]
        %v892 = vld [vmem:[#allocation2 + $0x10] sm:$0xff]
        %v893 = vld [vmem:[#allocation2 + $0x18] sm:$0xff]
        %v894 = vld [vmem:[%s514] sm:$0xff]
        %v895 = vld [vmem:[%s514 + $0x8] sm:$0xff]
        %v896 = vld [vmem:[%s514 + $0x10] sm:$0xff]
        %v897 = vld [vmem:[%s514 + $0x18] sm:$0xff]
        %v898 = vpack.c.bf16 %v890, %v890
        %v899 = vpack.c.bf16 %v891, %v891
        %v900 = vpack.c.bf16 %v892, %v892
        %v901 = vpack.c.bf16 %v893, %v893
        %v902 = vld [vmem:[%s487] sm:$0xff]
        %v903 = vld [vmem:[%s487 + $0x8] sm:$0xff]
        %v904 = vld [vmem:[%s487 + $0x10] sm:$0xff]
        %v905 = vld [vmem:[%s487 + $0x18] sm:$0xff]
        %v906 = vld [vmem:[%s487 + $0x20] sm:$0xff]
        %v907 = vld [vmem:[%s487 + $0x28] sm:$0xff]
        %v908 = vld [vmem:[%s487 + $0x30] sm:$0xff]
        %v909 = vld [vmem:[%s487 + $0x38] sm:$0xff]
        %v910 = vld [vmem:[%s487 + $0x40] sm:$0xff]
        %v911 = vld [vmem:[%s487 + $0x48] sm:$0xff]
        %v912 = vld [vmem:[%s487 + $0x50] sm:$0xff]
        %v913 = vld [vmem:[%s487 + $0x58] sm:$0xff]
        %v914 = vld [vmem:[%s487 + $0x60] sm:$0xff]
        %v915 = vld [vmem:[%s487 + $0x68] sm:$0xff]
        %v916 = vld [vmem:[%s487 + $0x70] sm:$0xff]
        %v917 = vld [vmem:[%s487 + $0x78] sm:$0xff]
        %v918 = vld [vmem:[%s487 + $0x80] sm:$0xff]
        %v919 = vld [vmem:[%s487 + $0x88] sm:$0xff]
        %v920 = vld [vmem:[%s487 + $0x90] sm:$0xff]
        %v921 = vld [vmem:[%s487 + $0x98] sm:$0xff]
        %v922 = vld [vmem:[%s487 + $0xa0] sm:$0xff]
        %v923 = vld [vmem:[%s487 + $0xa8] sm:$0xff]
        %v924 = vld [vmem:[%s487 + $0xb0] sm:$0xff]
        %v925 = vld [vmem:[%s487 + $0xb8] sm:$0xff]
        %v926 = vld [vmem:[%s487 + $0xc0] sm:$0xff]
        %v927 = vld [vmem:[%s487 + $0xc8] sm:$0xff]
        %v928 = vld [vmem:[%s487 + $0xd0] sm:$0xff]
        %v929 = vld [vmem:[%s487 + $0xd8] sm:$0xff]
        %v930 = vld [vmem:[%s487 + $0xe0] sm:$0xff]
        %v931 = vld [vmem:[%s487 + $0xe8] sm:$0xff]
        %v932 = vld [vmem:[%s487 + $0xf0] sm:$0xff]
        %v933 = vld [vmem:[%s487 + $0xf8] sm:$0xff]
        %v934 = vld [vmem:[%s487 + $0x100] sm:$0xff]
        %v935 = vld [vmem:[%s487 + $0x108] sm:$0xff]
        %v936 = vld [vmem:[%s487 + $0x110] sm:$0xff]
        %v937 = vld [vmem:[%s487 + $0x118] sm:$0xff]
        %v938 = vld [vmem:[%s487 + $0x120] sm:$0xff]
        %v939 = vld [vmem:[%s487 + $0x128] sm:$0xff]
        %v940 = vld [vmem:[%s487 + $0x130] sm:$0xff]
        %v941 = vld [vmem:[%s487 + $0x138] sm:$0xff]
        %v942 = vld [vmem:[%s487 + $0x140] sm:$0xff]
        %v943 = vld [vmem:[%s487 + $0x148] sm:$0xff]
        %v944 = vld [vmem:[%s487 + $0x150] sm:$0xff]
        %v945 = vld [vmem:[%s487 + $0x158] sm:$0xff]
        %v946 = vld [vmem:[%s487 + $0x160] sm:$0xff]
        %v947 = vld [vmem:[%s487 + $0x168] sm:$0xff]
        %v948 = vld [vmem:[%s487 + $0x170] sm:$0xff]
        %v949 = vld [vmem:[%s487 + $0x178] sm:$0xff]
        %v950 = vld [vmem:[%s487 + $0x180] sm:$0xff]
        %v951 = vld [vmem:[%s487 + $0x188] sm:$0xff]
        %v952 = vld [vmem:[%s487 + $0x190] sm:$0xff]
        %v953 = vld [vmem:[%s487 + $0x198] sm:$0xff]
        %v954 = vld [vmem:[%s487 + $0x1a0] sm:$0xff]
        %v955 = vld [vmem:[%s487 + $0x1a8] sm:$0xff]
        %v956 = vld [vmem:[%s487 + $0x1b0] sm:$0xff]
        %v957 = vld [vmem:[%s487 + $0x1b8] sm:$0xff]
        %v958 = vld [vmem:[%s487 + $0x1c0] sm:$0xff]
        %v959 = vld [vmem:[%s487 + $0x1c8] sm:$0xff]
        %v960 = vld [vmem:[%s487 + $0x1d0] sm:$0xff]
        %v961 = vld [vmem:[%s487 + $0x1d8] sm:$0xff]
        %v962 = vld [vmem:[%s487 + $0x1e0] sm:$0xff]
        %v963 = vld [vmem:[%s487 + $0x1e8] sm:$0xff]
        %v964 = vld [vmem:[%s487 + $0x1f0] sm:$0xff]
        %v965 = vld [vmem:[%s487 + $0x1f8] sm:$0xff]
        %v966 = vld [vmem:[%s487 + $0x200] sm:$0xff]
        %v967 = vld [vmem:[%s487 + $0x208] sm:$0xff]
        %v968 = vld [vmem:[%s487 + $0x210] sm:$0xff]
        %v969 = vld [vmem:[%s487 + $0x218] sm:$0xff]
        %v970 = vld [vmem:[%s487 + $0x220] sm:$0xff]
        %v971 = vld [vmem:[%s487 + $0x228] sm:$0xff]
        %v972 = vld [vmem:[%s487 + $0x230] sm:$0xff]
        %v973 = vld [vmem:[%s487 + $0x238] sm:$0xff]
        %v974 = vld [vmem:[%s487 + $0x240] sm:$0xff]
        %v975 = vld [vmem:[%s487 + $0x248] sm:$0xff]
        %v976 = vld [vmem:[%s487 + $0x250] sm:$0xff]
        %v977 = vld [vmem:[%s487 + $0x258] sm:$0xff]
        %v978 = vld [vmem:[%s487 + $0x260] sm:$0xff]
        %v979 = vld [vmem:[%s487 + $0x268] sm:$0xff]
        %v980 = vld [vmem:[%s487 + $0x270] sm:$0xff]
        %v981 = vld [vmem:[%s487 + $0x278] sm:$0xff]
        %v982 = vld [vmem:[%s487 + $0x280] sm:$0xff]
        %v983 = vld [vmem:[%s487 + $0x288] sm:$0xff]
        %v984 = vld [vmem:[%s487 + $0x290] sm:$0xff]
        %v985 = vld [vmem:[%s487 + $0x298] sm:$0xff]
        %v986 = vld [vmem:[%s487 + $0x2a0] sm:$0xff]
        %v987 = vld [vmem:[%s487 + $0x2a8] sm:$0xff]
        %v988 = vld [vmem:[%s487 + $0x2b0] sm:$0xff]
        %v989 = vld [vmem:[%s487 + $0x2b8] sm:$0xff]
        %v990 = vld [vmem:[%s487 + $0x2c0] sm:$0xff]
        %v991 = vld [vmem:[%s487 + $0x2c8] sm:$0xff]
        %v992 = vld [vmem:[%s487 + $0x2d0] sm:$0xff]
        %v993 = vld [vmem:[%s487 + $0x2d8] sm:$0xff]
        %v994 = vld [vmem:[%s487 + $0x2e0] sm:$0xff]
        %v995 = vld [vmem:[%s487 + $0x2e8] sm:$0xff]
        %v996 = vld [vmem:[%s487 + $0x2f0] sm:$0xff]
        %v997 = vld [vmem:[%s487 + $0x2f8] sm:$0xff]
        %v998 = vld [vmem:[%s487 + $0x300] sm:$0xff]
        %v999 = vld [vmem:[%s487 + $0x308] sm:$0xff]
        %v1000 = vld [vmem:[%s487 + $0x310] sm:$0xff]
        %v1001 = vld [vmem:[%s487 + $0x318] sm:$0xff]
        %v1002 = vld [vmem:[%s487 + $0x320] sm:$0xff]
        %v1003 = vld [vmem:[%s487 + $0x328] sm:$0xff]
        %v1004 = vld [vmem:[%s487 + $0x330] sm:$0xff]
        %v1005 = vld [vmem:[%s487 + $0x338] sm:$0xff]
        %v1006 = vld [vmem:[%s487 + $0x340] sm:$0xff]
        %v1007 = vld [vmem:[%s487 + $0x348] sm:$0xff]
        %v1008 = vld [vmem:[%s487 + $0x350] sm:$0xff]
        %v1009 = vld [vmem:[%s487 + $0x358] sm:$0xff]
        %v1010 = vld [vmem:[%s487 + $0x360] sm:$0xff]
        %v1011 = vld [vmem:[%s487 + $0x368] sm:$0xff]
        %v1012 = vld [vmem:[%s487 + $0x370] sm:$0xff]
        %v1013 = vld [vmem:[%s487 + $0x378] sm:$0xff]
        %v1014 = vld [vmem:[%s487 + $0x380] sm:$0xff]
        %v1015 = vld [vmem:[%s487 + $0x388] sm:$0xff]
        %v1016 = vld [vmem:[%s487 + $0x390] sm:$0xff]
        %v1017 = vld [vmem:[%s487 + $0x398] sm:$0xff]
        %v1018 = vld [vmem:[%s487 + $0x3a0] sm:$0xff]
        %v1019 = vld [vmem:[%s487 + $0x3a8] sm:$0xff]
        %v1020 = vld [vmem:[%s487 + $0x3b0] sm:$0xff]
        %v1021 = vld [vmem:[%s487 + $0x3b8] sm:$0xff]
        %v1022 = vld [vmem:[%s487 + $0x3c0] sm:$0xff]
        %v1023 = vld [vmem:[%s487 + $0x3c8] sm:$0xff]
        %v1024 = vld [vmem:[%s487 + $0x3d0] sm:$0xff]
        %v1025 = vld [vmem:[%s487 + $0x3d8] sm:$0xff]
        %v1026 = vld [vmem:[%s487 + $0x3e0] sm:$0xff]
        %v1027 = vld [vmem:[%s487 + $0x3e8] sm:$0xff]
        %v1028 = vld [vmem:[%s487 + $0x3f0] sm:$0xff]
        %v1029 = vld [vmem:[%s487 + $0x3f8] sm:$0xff]
        %v1030 = vlaneseq
        %v1031 = vshrl.u32 %v1030, 7
        %v1032 = vsub.s32 0, %v1031
        %v1033 = vrot.slane %v894, %v1032
        %v1034 = vlaneseq
        %v1035 = vshrl.u32 %v1034, 7
        %v1036 = vsub.s32 0, %v1035
        %v1037 = vrot.slane %v895, %v1036
        %v1038 = vlaneseq
        %v1039 = vshrl.u32 %v1038, 7
        %v1040 = vsub.s32 0, %v1039
        %v1041 = vrot.slane %v896, %v1040
        %v1042 = vlaneseq
        %v1043 = vshrl.u32 %v1042, 7
        %v1044 = vsub.s32 0, %v1043
        %v1045 = vrot.slane %v897, %v1044
        %v1174 = vunpack.c.l.b16 %v902
        %v1175 = vunpack.c.h.b16 %v902
        %v1176 = vunpack.c.l.b16 %v903
        %v1177 = vunpack.c.h.b16 %v903
        %v1178 = vunpack.c.l.b16 %v904
        %v1179 = vunpack.c.h.b16 %v904
        %v1180 = vunpack.c.l.b16 %v905
        %v1181 = vunpack.c.h.b16 %v905
        %v1182 = vunpack.c.l.b16 %v906
        %v1183 = vunpack.c.h.b16 %v906
        %v1184 = vunpack.c.l.b16 %v907
        %v1185 = vunpack.c.h.b16 %v907
        %v1186 = vunpack.c.l.b16 %v908
        %v1187 = vunpack.c.h.b16 %v908
        %v1188 = vunpack.c.l.b16 %v909
        %v1189 = vunpack.c.h.b16 %v909
        %v1190 = vunpack.c.l.b16 %v910
        %v1191 = vunpack.c.h.b16 %v910
        %v1192 = vunpack.c.l.b16 %v911
        %v1193 = vunpack.c.h.b16 %v911
        %v1194 = vunpack.c.l.b16 %v912
        %v1195 = vunpack.c.h.b16 %v912
        %v1196 = vunpack.c.l.b16 %v913
        %v1197 = vunpack.c.h.b16 %v913
        %v1198 = vunpack.c.l.b16 %v914
        %v1199 = vunpack.c.h.b16 %v914
        %v1200 = vunpack.c.l.b16 %v915
        %v1201 = vunpack.c.h.b16 %v915
        %v1202 = vunpack.c.l.b16 %v916
        %v1203 = vunpack.c.h.b16 %v916
        %v1204 = vunpack.c.l.b16 %v917
        %v1205 = vunpack.c.h.b16 %v917
        %v1206 = vunpack.c.l.b16 %v918
        %v1207 = vunpack.c.h.b16 %v918
        %v1208 = vunpack.c.l.b16 %v919
        %v1209 = vunpack.c.h.b16 %v919
        %v1210 = vunpack.c.l.b16 %v920
        %v1211 = vunpack.c.h.b16 %v920
        %v1212 = vunpack.c.l.b16 %v921
        %v1213 = vunpack.c.h.b16 %v921
        %v1214 = vunpack.c.l.b16 %v922
        %v1215 = vunpack.c.h.b16 %v922
        %v1216 = vunpack.c.l.b16 %v923
        %v1217 = vunpack.c.h.b16 %v923
        %v1218 = vunpack.c.l.b16 %v924
        %v1219 = vunpack.c.h.b16 %v924
        %v1220 = vunpack.c.l.b16 %v925
        %v1221 = vunpack.c.h.b16 %v925
        %v1222 = vunpack.c.l.b16 %v926
        %v1223 = vunpack.c.h.b16 %v926
        %v1224 = vunpack.c.l.b16 %v927
        %v1225 = vunpack.c.h.b16 %v927
        %v1226 = vunpack.c.l.b16 %v928
        %v1227 = vunpack.c.h.b16 %v928
        %v1228 = vunpack.c.l.b16 %v929
        %v1229 = vunpack.c.h.b16 %v929
        %v1230 = vunpack.c.l.b16 %v930
        %v1231 = vunpack.c.h.b16 %v930
        %v1232 = vunpack.c.l.b16 %v931
        %v1233 = vunpack.c.h.b16 %v931
        %v1234 = vunpack.c.l.b16 %v932
        %v1235 = vunpack.c.h.b16 %v932
        %v1236 = vunpack.c.l.b16 %v933
        %v1237 = vunpack.c.h.b16 %v933
        %v1238 = vunpack.c.l.b16 %v934
        %v1239 = vunpack.c.h.b16 %v934
        %v1240 = vunpack.c.l.b16 %v935
        %v1241 = vunpack.c.h.b16 %v935
        %v1242 = vunpack.c.l.b16 %v936
        %v1243 = vunpack.c.h.b16 %v936
        %v1244 = vunpack.c.l.b16 %v937
        %v1245 = vunpack.c.h.b16 %v937
        %v1246 = vunpack.c.l.b16 %v938
        %v1247 = vunpack.c.h.b16 %v938
        %v1248 = vunpack.c.l.b16 %v939
        %v1249 = vunpack.c.h.b16 %v939
        %v1250 = vunpack.c.l.b16 %v940
        %v1251 = vunpack.c.h.b16 %v940
        %v1252 = vunpack.c.l.b16 %v941
        %v1253 = vunpack.c.h.b16 %v941
        %v1254 = vunpack.c.l.b16 %v942
        %v1255 = vunpack.c.h.b16 %v942
        %v1256 = vunpack.c.l.b16 %v943
        %v1257 = vunpack.c.h.b16 %v943
        %v1258 = vunpack.c.l.b16 %v944
        %v1259 = vunpack.c.h.b16 %v944
        %v1260 = vunpack.c.l.b16 %v945
        %v1261 = vunpack.c.h.b16 %v945
        %v1262 = vunpack.c.l.b16 %v946
        %v1263 = vunpack.c.h.b16 %v946
        %v1264 = vunpack.c.l.b16 %v947
        %v1265 = vunpack.c.h.b16 %v947
        %v1266 = vunpack.c.l.b16 %v948
        %v1267 = vunpack.c.h.b16 %v948
        %v1268 = vunpack.c.l.b16 %v949
        %v1269 = vunpack.c.h.b16 %v949
        %v1270 = vunpack.c.l.b16 %v950
        %v1271 = vunpack.c.h.b16 %v950
        %v1272 = vunpack.c.l.b16 %v951
        %v1273 = vunpack.c.h.b16 %v951
        %v1274 = vunpack.c.l.b16 %v952
        %v1275 = vunpack.c.h.b16 %v952
        %v1276 = vunpack.c.l.b16 %v953
        %v1277 = vunpack.c.h.b16 %v953
        %v1278 = vunpack.c.l.b16 %v954
        %v1279 = vunpack.c.h.b16 %v954
        %v1280 = vunpack.c.l.b16 %v955
        %v1281 = vunpack.c.h.b16 %v955
        %v1282 = vunpack.c.l.b16 %v956
        %v1283 = vunpack.c.h.b16 %v956
        %v1284 = vunpack.c.l.b16 %v957
        %v1285 = vunpack.c.h.b16 %v957
        %v1286 = vunpack.c.l.b16 %v958
        %v1287 = vunpack.c.h.b16 %v958
        %v1288 = vunpack.c.l.b16 %v959
        %v1289 = vunpack.c.h.b16 %v959
        %v1290 = vunpack.c.l.b16 %v960
        %v1291 = vunpack.c.h.b16 %v960
        %v1292 = vunpack.c.l.b16 %v961
        %v1293 = vunpack.c.h.b16 %v961
        %v1294 = vunpack.c.l.b16 %v962
        %v1295 = vunpack.c.h.b16 %v962
        %v1296 = vunpack.c.l.b16 %v963
        %v1297 = vunpack.c.h.b16 %v963
        %v1298 = vunpack.c.l.b16 %v964
        %v1299 = vunpack.c.h.b16 %v964
        %v1300 = vunpack.c.l.b16 %v965
        %v1301 = vunpack.c.h.b16 %v965
        %v1302 = vunpack.c.l.b16 %v966
        %v1303 = vunpack.c.h.b16 %v966
        %v1304 = vunpack.c.l.b16 %v967
        %v1305 = vunpack.c.h.b16 %v967
        %v1306 = vunpack.c.l.b16 %v968
        %v1307 = vunpack.c.h.b16 %v968
        %v1308 = vunpack.c.l.b16 %v969
        %v1309 = vunpack.c.h.b16 %v969
        %v1310 = vunpack.c.l.b16 %v970
        %v1311 = vunpack.c.h.b16 %v970
        %v1312 = vunpack.c.l.b16 %v971
        %v1313 = vunpack.c.h.b16 %v971
        %v1314 = vunpack.c.l.b16 %v972
        %v1315 = vunpack.c.h.b16 %v972
        %v1316 = vunpack.c.l.b16 %v973
        %v1317 = vunpack.c.h.b16 %v973
        %v1318 = vunpack.c.l.b16 %v974
        %v1319 = vunpack.c.h.b16 %v974
        %v1320 = vunpack.c.l.b16 %v975
        %v1321 = vunpack.c.h.b16 %v975
        %v1322 = vunpack.c.l.b16 %v976
        %v1323 = vunpack.c.h.b16 %v976
        %v1324 = vunpack.c.l.b16 %v977
        %v1325 = vunpack.c.h.b16 %v977
        %v1326 = vunpack.c.l.b16 %v978
        %v1327 = vunpack.c.h.b16 %v978
        %v1328 = vunpack.c.l.b16 %v979
        %v1329 = vunpack.c.h.b16 %v979
        %v1330 = vunpack.c.l.b16 %v980
        %v1331 = vunpack.c.h.b16 %v980
        %v1332 = vunpack.c.l.b16 %v981
        %v1333 = vunpack.c.h.b16 %v981
        %v1334 = vunpack.c.l.b16 %v982
        %v1335 = vunpack.c.h.b16 %v982
        %v1336 = vunpack.c.l.b16 %v983
        %v1337 = vunpack.c.h.b16 %v983
        %v1338 = vunpack.c.l.b16 %v984
        %v1339 = vunpack.c.h.b16 %v984
        %v1340 = vunpack.c.l.b16 %v985
        %v1341 = vunpack.c.h.b16 %v985
        %v1342 = vunpack.c.l.b16 %v986
        %v1343 = vunpack.c.h.b16 %v986
        %v1344 = vunpack.c.l.b16 %v987
        %v1345 = vunpack.c.h.b16 %v987
        %v1346 = vunpack.c.l.b16 %v988
        %v1347 = vunpack.c.h.b16 %v988
        %v1348 = vunpack.c.l.b16 %v989
        %v1349 = vunpack.c.h.b16 %v989
        %v1350 = vunpack.c.l.b16 %v990
        %v1351 = vunpack.c.h.b16 %v990
        %v1352 = vunpack.c.l.b16 %v991
        %v1353 = vunpack.c.h.b16 %v991
        %v1354 = vunpack.c.l.b16 %v992
        %v1355 = vunpack.c.h.b16 %v992
        %v1356 = vunpack.c.l.b16 %v993
        %v1357 = vunpack.c.h.b16 %v993
        %v1358 = vunpack.c.l.b16 %v994
        %v1359 = vunpack.c.h.b16 %v994
        %v1360 = vunpack.c.l.b16 %v995
        %v1361 = vunpack.c.h.b16 %v995
        %v1362 = vunpack.c.l.b16 %v996
        %v1363 = vunpack.c.h.b16 %v996
        %v1364 = vunpack.c.l.b16 %v997
        %v1365 = vunpack.c.h.b16 %v997
        %v1366 = vunpack.c.l.b16 %v998
        %v1367 = vunpack.c.h.b16 %v998
        %v1368 = vunpack.c.l.b16 %v999
        %v1369 = vunpack.c.h.b16 %v999
        %v1370 = vunpack.c.l.b16 %v1000
        %v1371 = vunpack.c.h.b16 %v1000
        %v1372 = vunpack.c.l.b16 %v1001
        %v1373 = vunpack.c.h.b16 %v1001
        %v1374 = vunpack.c.l.b16 %v1002
        %v1375 = vunpack.c.h.b16 %v1002
        %v1376 = vunpack.c.l.b16 %v1003
        %v1377 = vunpack.c.h.b16 %v1003
        %v1378 = vunpack.c.l.b16 %v1004
        %v1379 = vunpack.c.h.b16 %v1004
        %v1380 = vunpack.c.l.b16 %v1005
        %v1381 = vunpack.c.h.b16 %v1005
        %v1382 = vunpack.c.l.b16 %v1006
        %v1383 = vunpack.c.h.b16 %v1006
        %v1384 = vunpack.c.l.b16 %v1007
        %v1385 = vunpack.c.h.b16 %v1007
        %v1386 = vunpack.c.l.b16 %v1008
        %v1387 = vunpack.c.h.b16 %v1008
        %v1388 = vunpack.c.l.b16 %v1009
        %v1389 = vunpack.c.h.b16 %v1009
        %v1390 = vunpack.c.l.b16 %v1010
        %v1391 = vunpack.c.h.b16 %v1010
        %v1392 = vunpack.c.l.b16 %v1011
        %v1393 = vunpack.c.h.b16 %v1011
        %v1394 = vunpack.c.l.b16 %v1012
        %v1395 = vunpack.c.h.b16 %v1012
        %v1396 = vunpack.c.l.b16 %v1013
        %v1397 = vunpack.c.h.b16 %v1013
        %v1398 = vunpack.c.l.b16 %v1014
        %v1399 = vunpack.c.h.b16 %v1014
        %v1400 = vunpack.c.l.b16 %v1015
        %v1401 = vunpack.c.h.b16 %v1015
        %v1402 = vunpack.c.l.b16 %v1016
        %v1403 = vunpack.c.h.b16 %v1016
        %v1404 = vunpack.c.l.b16 %v1017
        %v1405 = vunpack.c.h.b16 %v1017
        %v1406 = vunpack.c.l.b16 %v1018
        %v1407 = vunpack.c.h.b16 %v1018
        %v1408 = vunpack.c.l.b16 %v1019
        %v1409 = vunpack.c.h.b16 %v1019
        %v1410 = vunpack.c.l.b16 %v1020
        %v1411 = vunpack.c.h.b16 %v1020
        %v1412 = vunpack.c.l.b16 %v1021
        %v1413 = vunpack.c.h.b16 %v1021
        %v1414 = vunpack.c.l.b16 %v1022
        %v1415 = vunpack.c.h.b16 %v1022
        %v1416 = vunpack.c.l.b16 %v1023
        %v1417 = vunpack.c.h.b16 %v1023
        %v1418 = vunpack.c.l.b16 %v1024
        %v1419 = vunpack.c.h.b16 %v1024
        %v1420 = vunpack.c.l.b16 %v1025
        %v1421 = vunpack.c.h.b16 %v1025
        %v1422 = vunpack.c.l.b16 %v1026
        %v1423 = vunpack.c.h.b16 %v1026
        %v1424 = vunpack.c.l.b16 %v1027
        %v1425 = vunpack.c.h.b16 %v1027
        %v1426 = vunpack.c.l.b16 %v1028
        %v1427 = vunpack.c.h.b16 %v1028
        %v1428 = vunpack.c.l.b16 %v1029
        %v1429 = vunpack.c.h.b16 %v1029
        %v1430 = vpack.c.b16 %v1178, %v1174
        %v1431 = vpack.c.b16 %v1179, %v1175
        %v1432 = vpack.c.b16 %v1180, %v1176
        %v1433 = vpack.c.b16 %v1181, %v1177
        %v1434 = vpack.c.b16 %v1186, %v1182
        %v1435 = vpack.c.b16 %v1187, %v1183
        %v1436 = vpack.c.b16 %v1188, %v1184
        %v1437 = vpack.c.b16 %v1189, %v1185
        %v1438 = vpack.c.b16 %v1194, %v1190
        %v1439 = vpack.c.b16 %v1195, %v1191
        %v1440 = vpack.c.b16 %v1196, %v1192
        %v1441 = vpack.c.b16 %v1197, %v1193
        %v1442 = vpack.c.b16 %v1202, %v1198
        %v1443 = vpack.c.b16 %v1203, %v1199
        %v1444 = vpack.c.b16 %v1204, %v1200
        %v1445 = vpack.c.b16 %v1205, %v1201
        %v1446 = vpack.c.b16 %v1210, %v1206
        %v1447 = vpack.c.b16 %v1211, %v1207
        %v1448 = vpack.c.b16 %v1212, %v1208
        %v1449 = vpack.c.b16 %v1213, %v1209
        %v1450 = vpack.c.b16 %v1218, %v1214
        %v1451 = vpack.c.b16 %v1219, %v1215
        %v1452 = vpack.c.b16 %v1220, %v1216
        %v1453 = vpack.c.b16 %v1221, %v1217
        %v1454 = vpack.c.b16 %v1226, %v1222
        %v1455 = vpack.c.b16 %v1227, %v1223
        %v1456 = vpack.c.b16 %v1228, %v1224
        %v1457 = vpack.c.b16 %v1229, %v1225
        %v1458 = vpack.c.b16 %v1234, %v1230
        %v1459 = vpack.c.b16 %v1235, %v1231
        %v1460 = vpack.c.b16 %v1236, %v1232
        %v1461 = vpack.c.b16 %v1237, %v1233
        %v1462 = vpack.c.b16 %v1242, %v1238
        %v1463 = vpack.c.b16 %v1243, %v1239
        %v1464 = vpack.c.b16 %v1244, %v1240
        %v1465 = vpack.c.b16 %v1245, %v1241
        %v1466 = vpack.c.b16 %v1250, %v1246
        %v1467 = vpack.c.b16 %v1251, %v1247
        %v1468 = vpack.c.b16 %v1252, %v1248
        %v1469 = vpack.c.b16 %v1253, %v1249
        %v1470 = vpack.c.b16 %v1258, %v1254
        %v1471 = vpack.c.b16 %v1259, %v1255
        %v1472 = vpack.c.b16 %v1260, %v1256
        %v1473 = vpack.c.b16 %v1261, %v1257
        %v1474 = vpack.c.b16 %v1266, %v1262
        %v1475 = vpack.c.b16 %v1267, %v1263
        %v1476 = vpack.c.b16 %v1268, %v1264
        %v1477 = vpack.c.b16 %v1269, %v1265
        %v1478 = vpack.c.b16 %v1274, %v1270
        %v1479 = vpack.c.b16 %v1275, %v1271
        %v1480 = vpack.c.b16 %v1276, %v1272
        %v1481 = vpack.c.b16 %v1277, %v1273
        %v1482 = vpack.c.b16 %v1282, %v1278
        %v1483 = vpack.c.b16 %v1283, %v1279
        %v1484 = vpack.c.b16 %v1284, %v1280
        %v1485 = vpack.c.b16 %v1285, %v1281
        %v1486 = vpack.c.b16 %v1290, %v1286
        %v1487 = vpack.c.b16 %v1291, %v1287
        %v1488 = vpack.c.b16 %v1292, %v1288
        %v1489 = vpack.c.b16 %v1293, %v1289
        %v1490 = vpack.c.b16 %v1298, %v1294
        %v1491 = vpack.c.b16 %v1299, %v1295
        %v1492 = vpack.c.b16 %v1300, %v1296
        %v1493 = vpack.c.b16 %v1301, %v1297
        %v1494 = vpack.c.b16 %v1306, %v1302
        %v1495 = vpack.c.b16 %v1307, %v1303
        %v1496 = vpack.c.b16 %v1308, %v1304
        %v1497 = vpack.c.b16 %v1309, %v1305
        %v1498 = vpack.c.b16 %v1314, %v1310
        %v1499 = vpack.c.b16 %v1315, %v1311
        %v1500 = vpack.c.b16 %v1316, %v1312
        %v1501 = vpack.c.b16 %v1317, %v1313
        %v1502 = vpack.c.b16 %v1322, %v1318
        %v1503 = vpack.c.b16 %v1323, %v1319
        %v1504 = vpack.c.b16 %v1324, %v1320
        %v1505 = vpack.c.b16 %v1325, %v1321
        %v1506 = vpack.c.b16 %v1330, %v1326
        %v1507 = vpack.c.b16 %v1331, %v1327
        %v1508 = vpack.c.b16 %v1332, %v1328
        %v1509 = vpack.c.b16 %v1333, %v1329
        %v1510 = vpack.c.b16 %v1338, %v1334
        %v1511 = vpack.c.b16 %v1339, %v1335
        %v1512 = vpack.c.b16 %v1340, %v1336
        %v1513 = vpack.c.b16 %v1341, %v1337
        %v1514 = vpack.c.b16 %v1346, %v1342
        %v1515 = vpack.c.b16 %v1347, %v1343
        %v1516 = vpack.c.b16 %v1348, %v1344
        %v1517 = vpack.c.b16 %v1349, %v1345
        %v1518 = vpack.c.b16 %v1354, %v1350
        %v1519 = vpack.c.b16 %v1355, %v1351
        %v1520 = vpack.c.b16 %v1356, %v1352
        %v1521 = vpack.c.b16 %v1357, %v1353
        %v1522 = vpack.c.b16 %v1362, %v1358
        %v1523 = vpack.c.b16 %v1363, %v1359
        %v1524 = vpack.c.b16 %v1364, %v1360
        %v1525 = vpack.c.b16 %v1365, %v1361
        %v1526 = vpack.c.b16 %v1370, %v1366
        %v1527 = vpack.c.b16 %v1371, %v1367
        %v1528 = vpack.c.b16 %v1372, %v1368
        %v1529 = vpack.c.b16 %v1373, %v1369
        %v1530 = vpack.c.b16 %v1378, %v1374
        %v1531 = vpack.c.b16 %v1379, %v1375
        %v1532 = vpack.c.b16 %v1380, %v1376
        %v1533 = vpack.c.b16 %v1381, %v1377
        %v1534 = vpack.c.b16 %v1386, %v1382
        %v1535 = vpack.c.b16 %v1387, %v1383
        %v1536 = vpack.c.b16 %v1388, %v1384
        %v1537 = vpack.c.b16 %v1389, %v1385
        %v1538 = vpack.c.b16 %v1394, %v1390
        %v1539 = vpack.c.b16 %v1395, %v1391
        %v1540 = vpack.c.b16 %v1396, %v1392
        %v1541 = vpack.c.b16 %v1397, %v1393
        %v1542 = vpack.c.b16 %v1402, %v1398
        %v1543 = vpack.c.b16 %v1403, %v1399
        %v1544 = vpack.c.b16 %v1404, %v1400
        %v1545 = vpack.c.b16 %v1405, %v1401
        %v1546 = vpack.c.b16 %v1410, %v1406
        %v1547 = vpack.c.b16 %v1411, %v1407
        %v1548 = vpack.c.b16 %v1412, %v1408
        %v1549 = vpack.c.b16 %v1413, %v1409
        %v1550 = vpack.c.b16 %v1418, %v1414
        %v1551 = vpack.c.b16 %v1419, %v1415
        %v1552 = vpack.c.b16 %v1420, %v1416
        %v1553 = vpack.c.b16 %v1421, %v1417
        %v1554 = vpack.c.b16 %v1426, %v1422
        %v1555 = vpack.c.b16 %v1427, %v1423
        %v1556 = vpack.c.b16 %v1428, %v1424
        %v1557 = vpack.c.b16 %v1429, %v1425
        %1686 = vmatprep.subr.bf16.mxu0 %v1431
        %1687 = vmatpush1.bf16.msra.mxu0 %v1430
        %1688 = vmatprep.subr.bf16.mxu0 %v1435
        %1689 = vmatpush1.bf16.msra.mxu0 %v1434
        %1690 = vmatprep.subr.bf16.mxu0 %v1439
        %1691 = vmatpush1.bf16.msra.mxu0 %v1438
        %1692 = vmatprep.subr.bf16.mxu0 %v1443
        %1693 = vmatpush1.bf16.msra.mxu0 %v1442
        %1694 = vmatprep.subr.bf16.mxu0 %v1447
        %1695 = vmatpush1.bf16.msra.mxu0 %v1446
        %1696 = vmatprep.subr.bf16.mxu0 %v1451
        %1697 = vmatpush1.bf16.msra.mxu0 %v1450
        %1698 = vmatprep.subr.bf16.mxu0 %v1455
        %1699 = vmatpush1.bf16.msra.mxu0 %v1454
        %1700 = vmatprep.subr.bf16.mxu0 %v1459
        %1701 = vmatpush1.bf16.msra.mxu0 %v1458
        %1702 = vmatprep.subr.bf16.mxu0 %v1463
        %1703 = vmatpush1.bf16.msra.mxu0 %v1462
        %1704 = vmatprep.subr.bf16.mxu0 %v1467
        %1705 = vmatpush1.bf16.msra.mxu0 %v1466
        %1706 = vmatprep.subr.bf16.mxu0 %v1471
        %1707 = vmatpush1.bf16.msra.mxu0 %v1470
        %1708 = vmatprep.subr.bf16.mxu0 %v1475
        %1709 = vmatpush1.bf16.msra.mxu0 %v1474
        %1710 = vmatprep.subr.bf16.mxu0 %v1479
        %1711 = vmatpush1.bf16.msra.mxu0 %v1478
        %1712 = vmatprep.subr.bf16.mxu0 %v1483
        %1713 = vmatpush1.bf16.msra.mxu0 %v1482
        %1714 = vmatprep.subr.bf16.mxu0 %v1487
        %1715 = vmatpush1.bf16.msra.mxu0 %v1486
        %1716 = vmatprep.subr.bf16.mxu0 %v1491
        %1717 = vmatpush1.bf16.msra.mxu0 %v1490
        %1718 = vmatprep.mubr.bf16.mxu0 %v899
        %1719 = vmatmul.mubr.bf16.gmra.mrb[0].mxu0 %v898
        %v1720 = vpop.f32.mrb[0].mxu0
        %v1721 = vadd.f32 %v1033, %v1720
        %v1722 = vpop.f32.mrb[0].mxu0
        %v1723 = vadd.f32 %v1037, %v1722
        %v1724 = vpop.f32.mrb[0].mxu0
        %v1725 = vpop.f32.mrb[0].mxu0
        %1726 = vdwg.mxu0
        %1727 = vmatprep.subr.bf16.mxu0 %v1495
        %1728 = vmatpush1.bf16.msra.mxu0 %v1494
        %1729 = vmatprep.subr.bf16.mxu0 %v1499
        %1730 = vmatpush1.bf16.msra.mxu0 %v1498
        %1731 = vmatprep.subr.bf16.mxu0 %v1503
        %1732 = vmatpush1.bf16.msra.mxu0 %v1502
        %1733 = vmatprep.subr.bf16.mxu0 %v1507
        %1734 = vmatpush1.bf16.msra.mxu0 %v1506
        %1735 = vmatprep.subr.bf16.mxu0 %v1511
        %1736 = vmatpush1.bf16.msra.mxu0 %v1510
        %1737 = vmatprep.subr.bf16.mxu0 %v1515
        %1738 = vmatpush1.bf16.msra.mxu0 %v1514
        %1739 = vmatprep.subr.bf16.mxu0 %v1519
        %1740 = vmatpush1.bf16.msra.mxu0 %v1518
        %1741 = vmatprep.subr.bf16.mxu0 %v1523
        %1742 = vmatpush1.bf16.msra.mxu0 %v1522
        %1743 = vmatprep.subr.bf16.mxu0 %v1527
        %1744 = vmatpush1.bf16.msra.mxu0 %v1526
        %1745 = vmatprep.subr.bf16.mxu0 %v1531
        %1746 = vmatpush1.bf16.msra.mxu0 %v1530
        %1747 = vmatprep.subr.bf16.mxu0 %v1535
        %1748 = vmatpush1.bf16.msra.mxu0 %v1534
        %1749 = vmatprep.subr.bf16.mxu0 %v1539
        %1750 = vmatpush1.bf16.msra.mxu0 %v1538
        %1751 = vmatprep.subr.bf16.mxu0 %v1543
        %1752 = vmatpush1.bf16.msra.mxu0 %v1542
        %1753 = vmatprep.subr.bf16.mxu0 %v1547
        %1754 = vmatpush1.bf16.msra.mxu0 %v1546
        %1755 = vmatprep.subr.bf16.mxu0 %v1551
        %1756 = vmatpush1.bf16.msra.mxu0 %v1550
        %1757 = vmatprep.subr.bf16.mxu0 %v1555
        %1758 = vmatpush1.bf16.msra.mxu0 %v1554
        %1759 = vmatprep.mubr.bf16.mxu0 %v901
        %1760 = vmatmul.mubr.bf16.gmra.mrb[0].mxu0 %v900
        %v1761 = vpop.f32.mrb[0].mxu0
        %v1762 = vadd.f32 %v1721, %v1761
        %v1763 = vpop.f32.mrb[0].mxu0
        %v1764 = vadd.f32 %v1723, %v1763
        %v1765 = vpop.f32.mrb[0].mxu0
        %v1766 = vpop.f32.mrb[0].mxu0
        %1767 = vdwg.mxu0
        %1768 = vmatprep.subr.bf16.mxu0 %v1433
        %1769 = vmatpush1.bf16.msra.mxu0 %v1432
        %1770 = vmatprep.subr.bf16.mxu0 %v1437
        %1771 = vmatpush1.bf16.msra.mxu0 %v1436
        %1772 = vmatprep.subr.bf16.mxu0 %v1441
        %1773 = vmatpush1.bf16.msra.mxu0 %v1440
        %1774 = vmatprep.subr.bf16.mxu0 %v1445
        %1775 = vmatpush1.bf16.msra.mxu0 %v1444
        %1776 = vmatprep.subr.bf16.mxu0 %v1449
        %1777 = vmatpush1.bf16.msra.mxu0 %v1448
        %1778 = vmatprep.subr.bf16.mxu0 %v1453
        %1779 = vmatpush1.bf16.msra.mxu0 %v1452
        %1780 = vmatprep.subr.bf16.mxu0 %v1457
        %1781 = vmatpush1.bf16.msra.mxu0 %v1456
        %1782 = vmatprep.subr.bf16.mxu0 %v1461
        %1783 = vmatpush1.bf16.msra.mxu0 %v1460
        %1784 = vmatprep.subr.bf16.mxu0 %v1465
        %1785 = vmatpush1.bf16.msra.mxu0 %v1464
        %1786 = vmatprep.subr.bf16.mxu0 %v1469
        %1787 = vmatpush1.bf16.msra.mxu0 %v1468
        %1788 = vmatprep.subr.bf16.mxu0 %v1473
        %1789 = vmatpush1.bf16.msra.mxu0 %v1472
        %1790 = vmatprep.subr.bf16.mxu0 %v1477
        %1791 = vmatpush1.bf16.msra.mxu0 %v1476
        %1792 = vmatprep.subr.bf16.mxu0 %v1481
        %1793 = vmatpush1.bf16.msra.mxu0 %v1480
        %1794 = vmatprep.subr.bf16.mxu0 %v1485
        %1795 = vmatpush1.bf16.msra.mxu0 %v1484
        %1796 = vmatprep.subr.bf16.mxu0 %v1489
        %1797 = vmatpush1.bf16.msra.mxu0 %v1488
        %1798 = vmatprep.subr.bf16.mxu0 %v1493
        %1799 = vmatpush1.bf16.msra.mxu0 %v1492
        %1800 = vmatprep.mubr.bf16.mxu0 %v899
        %1801 = vmatmul.mubr.bf16.gmra.mrb[0].mxu0 %v898
        %v1802 = vpop.f32.mrb[0].mxu0
        %v1803 = vadd.f32 %v1041, %v1802
        %v1804 = vpop.f32.mrb[0].mxu0
        %v1805 = vadd.f32 %v1045, %v1804
        %v1806 = vpop.f32.mrb[0].mxu0
        %v1807 = vpop.f32.mrb[0].mxu0
        %1808 = vdwg.mxu0
        %1809 = vmatprep.subr.bf16.mxu0 %v1497
        %1810 = vmatpush1.bf16.msra.mxu0 %v1496
        %1811 = vmatprep.subr.bf16.mxu0 %v1501
        %1812 = vmatpush1.bf16.msra.mxu0 %v1500
        %1813 = vmatprep.subr.bf16.mxu0 %v1505
        %1814 = vmatpush1.bf16.msra.mxu0 %v1504
        %1815 = vmatprep.subr.bf16.mxu0 %v1509
        %1816 = vmatpush1.bf16.msra.mxu0 %v1508
        %1817 = vmatprep.subr.bf16.mxu0 %v1513
        %1818 = vmatpush1.bf16.msra.mxu0 %v1512
        %1819 = vmatprep.subr.bf16.mxu0 %v1517
        %1820 = vmatpush1.bf16.msra.mxu0 %v1516
        %1821 = vmatprep.subr.bf16.mxu0 %v1521
        %1822 = vmatpush1.bf16.msra.mxu0 %v1520
        %1823 = vmatprep.subr.bf16.mxu0 %v1525
        %1824 = vmatpush1.bf16.msra.mxu0 %v1524
        %1825 = vmatprep.subr.bf16.mxu0 %v1529
        %1826 = vmatpush1.bf16.msra.mxu0 %v1528
        %1827 = vmatprep.subr.bf16.mxu0 %v1533
        %1828 = vmatpush1.bf16.msra.mxu0 %v1532
        %1829 = vmatprep.subr.bf16.mxu0 %v1537
        %1830 = vmatpush1.bf16.msra.mxu0 %v1536
        %1831 = vmatprep.subr.bf16.mxu0 %v1541
        %1832 = vmatpush1.bf16.msra.mxu0 %v1540
        %1833 = vmatprep.subr.bf16.mxu0 %v1545
        %1834 = vmatpush1.bf16.msra.mxu0 %v1544
        %1835 = vmatprep.subr.bf16.mxu0 %v1549
        %1836 = vmatpush1.bf16.msra.mxu0 %v1548
        %1837 = vmatprep.subr.bf16.mxu0 %v1553
        %1838 = vmatpush1.bf16.msra.mxu0 %v1552
        %1839 = vmatprep.subr.bf16.mxu0 %v1557
        %1840 = vmatpush1.bf16.msra.mxu0 %v1556
        %1841 = vmatprep.mubr.bf16.mxu0 %v901
        %1842 = vmatmul.mubr.bf16.gmra.mrb[0].mxu0 %v900
        %v1843 = vpop.f32.mrb[0].mxu0
        %v1844 = vadd.f32 %v1803, %v1843
        %v1845 = vpop.f32.mrb[0].mxu0
        %v1846 = vadd.f32 %v1805, %v1845
        %v1847 = vpop.f32.mrb[0].mxu0
        %v1848 = vpop.f32.mrb[0].mxu0
        %1849 = vdwg.mxu0
        %v1850 = vadd.f32 %v890, %v1762
        %v1851 = vadd.f32 %v891, %v1764
        %v1852 = vadd.f32 %v892, %v1844
        %v1853 = vadd.f32 %v893, %v1846
        %v1854 = vadd.f32 %v1850, %v1851
        %v1855 = vadd.f32 %v1854, %v1852
        %v1856 = vadd.f32 %v1855, %v1853
        %1857 = vadd.xlane.f32.xlu0 %v1856
        %v1858 = vpop.xlane.xlu0 %1857
        %v1859 = vrcp.pop 512.0
        %v1860 = vmul.f32 %v1858, %v1859
        %v1861 = vsub.f32 %v1850, %v1860
        %v1862 = vsub.f32 %v1851, %v1860
        %v1863 = vsub.f32 %v1852, %v1860
        %v1864 = vsub.f32 %v1853, %v1860
        %v1865 = vmul.f32 %v1861, %v1861
        %v1866 = vmul.f32 %v1862, %v1862
        %v1867 = vmul.f32 %v1863, %v1863
        %v1868 = vmul.f32 %v1864, %v1864
        %v1869 = vadd.f32 %v1865, %v1866
        %v1870 = vadd.f32 %v1869, %v1867
        %v1871 = vadd.f32 %v1870, %v1868
        %1872 = vadd.xlane.f32.xlu0 %v1871
        %v1873 = vpop.xlane.xlu0 %1872
        %v1874 = vmul.f32 %v1873, %v1859
        %v1875 = vadd.f32 %v1874, 1e-05
        %v1876 = vrsqrt.pop %v1875
        %v1877 = vmul.f32 %v1861, %v1876
        %v1878 = vmul.f32 %v1862, %v1876
        %v1879 = vmul.f32 %v1863, %v1876
        %v1880 = vmul.f32 %v1864, %v1876
        %v1881 = vlaneseq
        %v1882 = vshrl.u32 %v1881, 7
        %v1883 = vsub.s32 1, %v1882
        %v1884 = vrot.slane %v894, %v1883
        %v1885 = vlaneseq
        %v1886 = vshrl.u32 %v1885, 7
        %v1887 = vsub.s32 1, %v1886
        %v1888 = vrot.slane %v895, %v1887
        %v1889 = vlaneseq
        %v1890 = vshrl.u32 %v1889, 7
        %v1891 = vsub.s32 1, %v1890
        %v1892 = vrot.slane %v896, %v1891
        %v1893 = vlaneseq
        %v1894 = vshrl.u32 %v1893, 7
        %v1895 = vsub.s32 1, %v1894
        %v1896 = vrot.slane %v897, %v1895
        %v1897 = vmul.f32 %v1877, %v1884
        %v1898 = vmul.f32 %v1878, %v1888
        %v1899 = vmul.f32 %v1879, %v1892
        %v1900 = vmul.f32 %v1880, %v1896
        %v1901 = vlaneseq
        %v1902 = vshrl.u32 %v1901, 7
        %v1903 = vsub.s32 2, %v1902
        %v1904 = vrot.slane %v894, %v1903
        %v1905 = vlaneseq
        %v1906 = vshrl.u32 %v1905, 7
        %v1907 = vsub.s32 2, %v1906
        %v1908 = vrot.slane %v895, %v1907
        %v1909 = vlaneseq
        %v1910 = vshrl.u32 %v1909, 7
        %v1911 = vsub.s32 2, %v1910
        %v1912 = vrot.slane %v896, %v1911
        %v1913 = vlaneseq
        %v1914 = vshrl.u32 %v1913, 7
        %v1915 = vsub.s32 2, %v1914
        %v1916 = vrot.slane %v897, %v1915
        %v1917 = vadd.f32 %v1897, %v1904
        %v1918 = vadd.f32 %v1898, %v1908
        %v1919 = vadd.f32 %v1899, %v1912
        %v1920 = vadd.f32 %v1900, %v1916
        %v1921 = vpack.c.bf16 %v1917, %v1917
        %v1922 = vpack.c.bf16 %v1918, %v1918
        %v1923 = vpack.c.bf16 %v1919, %v1919
        %v1924 = vpack.c.bf16 %v1920, %v1920
        %v1925 = vld [vmem:[%s496] sm:$0xff]
        %v1926 = vld [vmem:[%s496 + $0x8] sm:$0xff]
        %v1927 = vld [vmem:[%s496 + $0x10] sm:$0xff]
        %v1928 = vld [vmem:[%s496 + $0x18] sm:$0xff]
        %v1929 = vld [vmem:[%s496 + $0x20] sm:$0xff]
        %v1930 = vld [vmem:[%s496 + $0x28] sm:$0xff]
        %v1931 = vld [vmem:[%s496 + $0x30] sm:$0xff]
        %v1932 = vld [vmem:[%s496 + $0x38] sm:$0xff]
        %v1933 = vld [vmem:[%s496 + $0x40] sm:$0xff]
        %v1934 = vld [vmem:[%s496 + $0x48] sm:$0xff]
        %v1935 = vld [vmem:[%s496 + $0x50] sm:$0xff]
        %v1936 = vld [vmem:[%s496 + $0x58] sm:$0xff]
        %v1937 = vld [vmem:[%s496 + $0x60] sm:$0xff]
        %v1938 = vld [vmem:[%s496 + $0x68] sm:$0xff]
        %v1939 = vld [vmem:[%s496 + $0x70] sm:$0xff]
        %v1940 = vld [vmem:[%s496 + $0x78] sm:$0xff]
        %v1941 = vld [vmem:[%s496 + $0x80] sm:$0xff]
        %v1942 = vld [vmem:[%s496 + $0x88] sm:$0xff]
        %v1943 = vld [vmem:[%s496 + $0x90] sm:$0xff]
        %v1944 = vld [vmem:[%s496 + $0x98] sm:$0xff]
        %v1945 = vld [vmem:[%s496 + $0xa0] sm:$0xff]
        %v1946 = vld [vmem:[%s496 + $0xa8] sm:$0xff]
        %v1947 = vld [vmem:[%s496 + $0xb0] sm:$0xff]
        %v1948 = vld [vmem:[%s496 + $0xb8] sm:$0xff]
        %v1949 = vld [vmem:[%s496 + $0xc0] sm:$0xff]
        %v1950 = vld [vmem:[%s496 + $0xc8] sm:$0xff]
        %v1951 = vld [vmem:[%s496 + $0xd0] sm:$0xff]
        %v1952 = vld [vmem:[%s496 + $0xd8] sm:$0xff]
        %v1953 = vld [vmem:[%s496 + $0xe0] sm:$0xff]
        %v1954 = vld [vmem:[%s496 + $0xe8] sm:$0xff]
        %v1955 = vld [vmem:[%s496 + $0xf0] sm:$0xff]
        %v1956 = vld [vmem:[%s496 + $0xf8] sm:$0xff]
        %v1957 = vld [vmem:[%s496 + $0x100] sm:$0xff]
        %v1958 = vld [vmem:[%s496 + $0x108] sm:$0xff]
        %v1959 = vld [vmem:[%s496 + $0x110] sm:$0xff]
        %v1960 = vld [vmem:[%s496 + $0x118] sm:$0xff]
        %v1961 = vld [vmem:[%s496 + $0x120] sm:$0xff]
        %v1962 = vld [vmem:[%s496 + $0x128] sm:$0xff]
        %v1963 = vld [vmem:[%s496 + $0x130] sm:$0xff]
        %v1964 = vld [vmem:[%s496 + $0x138] sm:$0xff]
        %v1965 = vld [vmem:[%s496 + $0x140] sm:$0xff]
        %v1966 = vld [vmem:[%s496 + $0x148] sm:$0xff]
        %v1967 = vld [vmem:[%s496 + $0x150] sm:$0xff]
        %v1968 = vld [vmem:[%s496 + $0x158] sm:$0xff]
        %v1969 = vld [vmem:[%s496 + $0x160] sm:$0xff]
        %v1970 = vld [vmem:[%s496 + $0x168] sm:$0xff]
        %v1971 = vld [vmem:[%s496 + $0x170] sm:$0xff]
        %v1972 = vld [vmem:[%s496 + $0x178] sm:$0xff]
        %v1973 = vld [vmem:[%s496 + $0x180] sm:$0xff]
        %v1974 = vld [vmem:[%s496 + $0x188] sm:$0xff]
        %v1975 = vld [vmem:[%s496 + $0x190] sm:$0xff]
        %v1976 = vld [vmem:[%s496 + $0x198] sm:$0xff]
        %v1977 = vld [vmem:[%s496 + $0x1a0] sm:$0xff]
        %v1978 = vld [vmem:[%s496 + $0x1a8] sm:$0xff]
        %v1979 = vld [vmem:[%s496 + $0x1b0] sm:$0xff]
        %v1980 = vld [vmem:[%s496 + $0x1b8] sm:$0xff]
        %v1981 = vld [vmem:[%s496 + $0x1c0] sm:$0xff]
        %v1982 = vld [vmem:[%s496 + $0x1c8] sm:$0xff]
        %v1983 = vld [vmem:[%s496 + $0x1d0] sm:$0xff]
        %v1984 = vld [vmem:[%s496 + $0x1d8] sm:$0xff]
        %v1985 = vld [vmem:[%s496 + $0x1e0] sm:$0xff]
        %v1986 = vld [vmem:[%s496 + $0x1e8] sm:$0xff]
        %v1987 = vld [vmem:[%s496 + $0x1f0] sm:$0xff]
        %v1988 = vld [vmem:[%s496 + $0x1f8] sm:$0xff]
        %v1989 = vld [vmem:[%s496 + $0x200] sm:$0xff]
        %v1990 = vld [vmem:[%s496 + $0x208] sm:$0xff]
        %v1991 = vld [vmem:[%s496 + $0x210] sm:$0xff]
        %v1992 = vld [vmem:[%s496 + $0x218] sm:$0xff]
        %v1993 = vld [vmem:[%s496 + $0x220] sm:$0xff]
        %v1994 = vld [vmem:[%s496 + $0x228] sm:$0xff]
        %v1995 = vld [vmem:[%s496 + $0x230] sm:$0xff]
        %v1996 = vld [vmem:[%s496 + $0x238] sm:$0xff]
        %v1997 = vld [vmem:[%s496 + $0x240] sm:$0xff]
        %v1998 = vld [vmem:[%s496 + $0x248] sm:$0xff]
        %v1999 = vld [vmem:[%s496 + $0x250] sm:$0xff]
        %v2000 = vld [vmem:[%s496 + $0x258] sm:$0xff]
        %v2001 = vld [vmem:[%s496 + $0x260] sm:$0xff]
        %v2002 = vld [vmem:[%s496 + $0x268] sm:$0xff]
        %v2003 = vld [vmem:[%s496 + $0x270] sm:$0xff]
        %v2004 = vld [vmem:[%s496 + $0x278] sm:$0xff]
        %v2005 = vld [vmem:[%s496 + $0x280] sm:$0xff]
        %v2006 = vld [vmem:[%s496 + $0x288] sm:$0xff]
        %v2007 = vld [vmem:[%s496 + $0x290] sm:$0xff]
        %v2008 = vld [vmem:[%s496 + $0x298] sm:$0xff]
        %v2009 = vld [vmem:[%s496 + $0x2a0] sm:$0xff]
        %v2010 = vld [vmem:[%s496 + $0x2a8] sm:$0xff]
        %v2011 = vld [vmem:[%s496 + $0x2b0] sm:$0xff]
        %v2012 = vld [vmem:[%s496 + $0x2b8] sm:$0xff]
        %v2013 = vld [vmem:[%s496 + $0x2c0] sm:$0xff]
        %v2014 = vld [vmem:[%s496 + $0x2c8] sm:$0xff]
        %v2015 = vld [vmem:[%s496 + $0x2d0] sm:$0xff]
        %v2016 = vld [vmem:[%s496 + $0x2d8] sm:$0xff]
        %v2017 = vld [vmem:[%s496 + $0x2e0] sm:$0xff]
        %v2018 = vld [vmem:[%s496 + $0x2e8] sm:$0xff]
        %v2019 = vld [vmem:[%s496 + $0x2f0] sm:$0xff]
        %v2020 = vld [vmem:[%s496 + $0x2f8] sm:$0xff]
        %v2021 = vld [vmem:[%s496 + $0x300] sm:$0xff]
        %v2022 = vld [vmem:[%s496 + $0x308] sm:$0xff]
        %v2023 = vld [vmem:[%s496 + $0x310] sm:$0xff]
        %v2024 = vld [vmem:[%s496 + $0x318] sm:$0xff]
        %v2025 = vld [vmem:[%s496 + $0x320] sm:$0xff]
        %v2026 = vld [vmem:[%s496 + $0x328] sm:$0xff]
        %v2027 = vld [vmem:[%s496 + $0x330] sm:$0xff]
        %v2028 = vld [vmem:[%s496 + $0x338] sm:$0xff]
        %v2029 = vld [vmem:[%s496 + $0x340] sm:$0xff]
        %v2030 = vld [vmem:[%s496 + $0x348] sm:$0xff]
        %v2031 = vld [vmem:[%s496 + $0x350] sm:$0xff]
        %v2032 = vld [vmem:[%s496 + $0x358] sm:$0xff]
        %v2033 = vld [vmem:[%s496 + $0x360] sm:$0xff]
        %v2034 = vld [vmem:[%s496 + $0x368] sm:$0xff]
        %v2035 = vld [vmem:[%s496 + $0x370] sm:$0xff]
        %v2036 = vld [vmem:[%s496 + $0x378] sm:$0xff]
        %v2037 = vld [vmem:[%s496 + $0x380] sm:$0xff]
        %v2038 = vld [vmem:[%s496 + $0x388] sm:$0xff]
        %v2039 = vld [vmem:[%s496 + $0x390] sm:$0xff]
        %v2040 = vld [vmem:[%s496 + $0x398] sm:$0xff]
        %v2041 = vld [vmem:[%s496 + $0x3a0] sm:$0xff]
        %v2042 = vld [vmem:[%s496 + $0x3a8] sm:$0xff]
        %v2043 = vld [vmem:[%s496 + $0x3b0] sm:$0xff]
        %v2044 = vld [vmem:[%s496 + $0x3b8] sm:$0xff]
        %v2045 = vld [vmem:[%s496 + $0x3c0] sm:$0xff]
        %v2046 = vld [vmem:[%s496 + $0x3c8] sm:$0xff]
        %v2047 = vld [vmem:[%s496 + $0x3d0] sm:$0xff]
        %v2048 = vld [vmem:[%s496 + $0x3d8] sm:$0xff]
        %v2049 = vld [vmem:[%s496 + $0x3e0] sm:$0xff]
        %v2050 = vld [vmem:[%s496 + $0x3e8] sm:$0xff]
        %v2051 = vld [vmem:[%s496 + $0x3f0] sm:$0xff]
        %v2052 = vld [vmem:[%s496 + $0x3f8] sm:$0xff]
        %v2053 = vld [vmem:[%s496 + $0x400] sm:$0xff]
        %v2054 = vld [vmem:[%s496 + $0x408] sm:$0xff]
        %v2055 = vld [vmem:[%s496 + $0x410] sm:$0xff]
        %v2056 = vld [vmem:[%s496 + $0x418] sm:$0xff]
        %v2057 = vld [vmem:[%s496 + $0x420] sm:$0xff]
        %v2058 = vld [vmem:[%s496 + $0x428] sm:$0xff]
        %v2059 = vld [vmem:[%s496 + $0x430] sm:$0xff]
        %v2060 = vld [vmem:[%s496 + $0x438] sm:$0xff]
        %v2061 = vld [vmem:[%s496 + $0x440] sm:$0xff]
        %v2062 = vld [vmem:[%s496 + $0x448] sm:$0xff]
        %v2063 = vld [vmem:[%s496 + $0x450] sm:$0xff]
        %v2064 = vld [vmem:[%s496 + $0x458] sm:$0xff]
        %v2065 = vld [vmem:[%s496 + $0x460] sm:$0xff]
        %v2066 = vld [vmem:[%s496 + $0x468] sm:$0xff]
        %v2067 = vld [vmem:[%s496 + $0x470] sm:$0xff]
        %v2068 = vld [vmem:[%s496 + $0x478] sm:$0xff]
        %v2069 = vld [vmem:[%s496 + $0x480] sm:$0xff]
        %v2070 = vld [vmem:[%s496 + $0x488] sm:$0xff]
        %v2071 = vld [vmem:[%s496 + $0x490] sm:$0xff]
        %v2072 = vld [vmem:[%s496 + $0x498] sm:$0xff]
        %v2073 = vld [vmem:[%s496 + $0x4a0] sm:$0xff]
        %v2074 = vld [vmem:[%s496 + $0x4a8] sm:$0xff]
        %v2075 = vld [vmem:[%s496 + $0x4b0] sm:$0xff]
        %v2076 = vld [vmem:[%s496 + $0x4b8] sm:$0xff]
        %v2077 = vld [vmem:[%s496 + $0x4c0] sm:$0xff]
        %v2078 = vld [vmem:[%s496 + $0x4c8] sm:$0xff]
        %v2079 = vld [vmem:[%s496 + $0x4d0] sm:$0xff]
        %v2080 = vld [vmem:[%s496 + $0x4d8] sm:$0xff]
        %v2081 = vld [vmem:[%s496 + $0x4e0] sm:$0xff]
        %v2082 = vld [vmem:[%s496 + $0x4e8] sm:$0xff]
        %v2083 = vld [vmem:[%s496 + $0x4f0] sm:$0xff]
        %v2084 = vld [vmem:[%s496 + $0x4f8] sm:$0xff]
        %v2085 = vld [vmem:[%s496 + $0x500] sm:$0xff]
        %v2086 = vld [vmem:[%s496 + $0x508] sm:$0xff]
        %v2087 = vld [vmem:[%s496 + $0x510] sm:$0xff]
        %v2088 = vld [vmem:[%s496 + $0x518] sm:$0xff]
        %v2089 = vld [vmem:[%s496 + $0x520] sm:$0xff]
        %v2090 = vld [vmem:[%s496 + $0x528] sm:$0xff]
        %v2091 = vld [vmem:[%s496 + $0x530] sm:$0xff]
        %v2092 = vld [vmem:[%s496 + $0x538] sm:$0xff]
        %v2093 = vld [vmem:[%s496 + $0x540] sm:$0xff]
        %v2094 = vld [vmem:[%s496 + $0x548] sm:$0xff]
        %v2095 = vld [vmem:[%s496 + $0x550] sm:$0xff]
        %v2096 = vld [vmem:[%s496 + $0x558] sm:$0xff]
        %v2097 = vld [vmem:[%s496 + $0x560] sm:$0xff]
        %v2098 = vld [vmem:[%s496 + $0x568] sm:$0xff]
        %v2099 = vld [vmem:[%s496 + $0x570] sm:$0xff]
        %v2100 = vld [vmem:[%s496 + $0x578] sm:$0xff]
        %v2101 = vld [vmem:[%s496 + $0x580] sm:$0xff]
        %v2102 = vld [vmem:[%s496 + $0x588] sm:$0xff]
        %v2103 = vld [vmem:[%s496 + $0x590] sm:$0xff]
        %v2104 = vld [vmem:[%s496 + $0x598] sm:$0xff]
        %v2105 = vld [vmem:[%s496 + $0x5a0] sm:$0xff]
        %v2106 = vld [vmem:[%s496 + $0x5a8] sm:$0xff]
        %v2107 = vld [vmem:[%s496 + $0x5b0] sm:$0xff]
        %v2108 = vld [vmem:[%s496 + $0x5b8] sm:$0xff]
        %v2109 = vld [vmem:[%s496 + $0x5c0] sm:$0xff]
        %v2110 = vld [vmem:[%s496 + $0x5c8] sm:$0xff]
        %v2111 = vld [vmem:[%s496 + $0x5d0] sm:$0xff]
        %v2112 = vld [vmem:[%s496 + $0x5d8] sm:$0xff]
        %v2113 = vld [vmem:[%s496 + $0x5e0] sm:$0xff]
        %v2114 = vld [vmem:[%s496 + $0x5e8] sm:$0xff]
        %v2115 = vld [vmem:[%s496 + $0x5f0] sm:$0xff]
        %v2116 = vld [vmem:[%s496 + $0x5f8] sm:$0xff]
        %v2117 = vld [vmem:[%s496 + $0x600] sm:$0xff]
        %v2118 = vld [vmem:[%s496 + $0x608] sm:$0xff]
        %v2119 = vld [vmem:[%s496 + $0x610] sm:$0xff]
        %v2120 = vld [vmem:[%s496 + $0x618] sm:$0xff]
        %v2121 = vld [vmem:[%s496 + $0x620] sm:$0xff]
        %v2122 = vld [vmem:[%s496 + $0x628] sm:$0xff]
        %v2123 = vld [vmem:[%s496 + $0x630] sm:$0xff]
        %v2124 = vld [vmem:[%s496 + $0x638] sm:$0xff]
        %v2125 = vld [vmem:[%s496 + $0x640] sm:$0xff]
        %v2126 = vld [vmem:[%s496 + $0x648] sm:$0xff]
        %v2127 = vld [vmem:[%s496 + $0x650] sm:$0xff]
        %v2128 = vld [vmem:[%s496 + $0x658] sm:$0xff]
        %v2129 = vld [vmem:[%s496 + $0x660] sm:$0xff]
        %v2130 = vld [vmem:[%s496 + $0x668] sm:$0xff]
        %v2131 = vld [vmem:[%s496 + $0x670] sm:$0xff]
        %v2132 = vld [vmem:[%s496 + $0x678] sm:$0xff]
        %v2133 = vld [vmem:[%s496 + $0x680] sm:$0xff]
        %v2134 = vld [vmem:[%s496 + $0x688] sm:$0xff]
        %v2135 = vld [vmem:[%s496 + $0x690] sm:$0xff]
        %v2136 = vld [vmem:[%s496 + $0x698] sm:$0xff]
        %v2137 = vld [vmem:[%s496 + $0x6a0] sm:$0xff]
        %v2138 = vld [vmem:[%s496 + $0x6a8] sm:$0xff]
        %v2139 = vld [vmem:[%s496 + $0x6b0] sm:$0xff]
        %v2140 = vld [vmem:[%s496 + $0x6b8] sm:$0xff]
        %v2141 = vld [vmem:[%s496 + $0x6c0] sm:$0xff]
        %v2142 = vld [vmem:[%s496 + $0x6c8] sm:$0xff]
        %v2143 = vld [vmem:[%s496 + $0x6d0] sm:$0xff]
        %v2144 = vld [vmem:[%s496 + $0x6d8] sm:$0xff]
        %v2145 = vld [vmem:[%s496 + $0x6e0] sm:$0xff]
        %v2146 = vld [vmem:[%s496 + $0x6e8] sm:$0xff]
        %v2147 = vld [vmem:[%s496 + $0x6f0] sm:$0xff]
        %v2148 = vld [vmem:[%s496 + $0x6f8] sm:$0xff]
        %v2149 = vld [vmem:[%s496 + $0x700] sm:$0xff]
        %v2150 = vld [vmem:[%s496 + $0x708] sm:$0xff]
        %v2151 = vld [vmem:[%s496 + $0x710] sm:$0xff]
        %v2152 = vld [vmem:[%s496 + $0x718] sm:$0xff]
        %v2153 = vld [vmem:[%s496 + $0x720] sm:$0xff]
        %v2154 = vld [vmem:[%s496 + $0x728] sm:$0xff]
        %v2155 = vld [vmem:[%s496 + $0x730] sm:$0xff]
        %v2156 = vld [vmem:[%s496 + $0x738] sm:$0xff]
        %v2157 = vld [vmem:[%s496 + $0x740] sm:$0xff]
        %v2158 = vld [vmem:[%s496 + $0x748] sm:$0xff]
        %v2159 = vld [vmem:[%s496 + $0x750] sm:$0xff]
        %v2160 = vld [vmem:[%s496 + $0x758] sm:$0xff]
        %v2161 = vld [vmem:[%s496 + $0x760] sm:$0xff]
        %v2162 = vld [vmem:[%s496 + $0x768] sm:$0xff]
        %v2163 = vld [vmem:[%s496 + $0x770] sm:$0xff]
        %v2164 = vld [vmem:[%s496 + $0x778] sm:$0xff]
        %v2165 = vld [vmem:[%s496 + $0x780] sm:$0xff]
        %v2166 = vld [vmem:[%s496 + $0x788] sm:$0xff]
        %v2167 = vld [vmem:[%s496 + $0x790] sm:$0xff]
        %v2168 = vld [vmem:[%s496 + $0x798] sm:$0xff]
        %v2169 = vld [vmem:[%s496 + $0x7a0] sm:$0xff]
        %v2170 = vld [vmem:[%s496 + $0x7a8] sm:$0xff]
        %v2171 = vld [vmem:[%s496 + $0x7b0] sm:$0xff]
        %v2172 = vld [vmem:[%s496 + $0x7b8] sm:$0xff]
        %v2173 = vld [vmem:[%s496 + $0x7c0] sm:$0xff]
        %v2174 = vld [vmem:[%s496 + $0x7c8] sm:$0xff]
        %v2175 = vld [vmem:[%s496 + $0x7d0] sm:$0xff]
        %v2176 = vld [vmem:[%s496 + $0x7d8] sm:$0xff]
        %v2177 = vld [vmem:[%s496 + $0x7e0] sm:$0xff]
        %v2178 = vld [vmem:[%s496 + $0x7e8] sm:$0xff]
        %v2179 = vld [vmem:[%s496 + $0x7f0] sm:$0xff]
        %v2180 = vld [vmem:[%s496 + $0x7f8] sm:$0xff]
        %v2181 = vld [vmem:[%s496 + $0x800] sm:$0xff]
        %v2182 = vld [vmem:[%s496 + $0x808] sm:$0xff]
        %v2183 = vld [vmem:[%s496 + $0x810] sm:$0xff]
        %v2184 = vld [vmem:[%s496 + $0x818] sm:$0xff]
        %v2185 = vld [vmem:[%s496 + $0x820] sm:$0xff]
        %v2186 = vld [vmem:[%s496 + $0x828] sm:$0xff]
        %v2187 = vld [vmem:[%s496 + $0x830] sm:$0xff]
        %v2188 = vld [vmem:[%s496 + $0x838] sm:$0xff]
        %v2189 = vld [vmem:[%s496 + $0x840] sm:$0xff]
        %v2190 = vld [vmem:[%s496 + $0x848] sm:$0xff]
        %v2191 = vld [vmem:[%s496 + $0x850] sm:$0xff]
        %v2192 = vld [vmem:[%s496 + $0x858] sm:$0xff]
        %v2193 = vld [vmem:[%s496 + $0x860] sm:$0xff]
        %v2194 = vld [vmem:[%s496 + $0x868] sm:$0xff]
        %v2195 = vld [vmem:[%s496 + $0x870] sm:$0xff]
        %v2196 = vld [vmem:[%s496 + $0x878] sm:$0xff]
        %v2197 = vld [vmem:[%s496 + $0x880] sm:$0xff]
        %v2198 = vld [vmem:[%s496 + $0x888] sm:$0xff]
        %v2199 = vld [vmem:[%s496 + $0x890] sm:$0xff]
        %v2200 = vld [vmem:[%s496 + $0x898] sm:$0xff]
        %v2201 = vld [vmem:[%s496 + $0x8a0] sm:$0xff]
        %v2202 = vld [vmem:[%s496 + $0x8a8] sm:$0xff]
        %v2203 = vld [vmem:[%s496 + $0x8b0] sm:$0xff]
        %v2204 = vld [vmem:[%s496 + $0x8b8] sm:$0xff]
        %v2205 = vld [vmem:[%s496 + $0x8c0] sm:$0xff]
        %v2206 = vld [vmem:[%s496 + $0x8c8] sm:$0xff]
        %v2207 = vld [vmem:[%s496 + $0x8d0] sm:$0xff]
        %v2208 = vld [vmem:[%s496 + $0x8d8] sm:$0xff]
        %v2209 = vld [vmem:[%s496 + $0x8e0] sm:$0xff]
        %v2210 = vld [vmem:[%s496 + $0x8e8] sm:$0xff]
        %v2211 = vld [vmem:[%s496 + $0x8f0] sm:$0xff]
        %v2212 = vld [vmem:[%s496 + $0x8f8] sm:$0xff]
        %v2213 = vld [vmem:[%s496 + $0x900] sm:$0xff]
        %v2214 = vld [vmem:[%s496 + $0x908] sm:$0xff]
        %v2215 = vld [vmem:[%s496 + $0x910] sm:$0xff]
        %v2216 = vld [vmem:[%s496 + $0x918] sm:$0xff]
        %v2217 = vld [vmem:[%s496 + $0x920] sm:$0xff]
        %v2218 = vld [vmem:[%s496 + $0x928] sm:$0xff]
        %v2219 = vld [vmem:[%s496 + $0x930] sm:$0xff]
        %v2220 = vld [vmem:[%s496 + $0x938] sm:$0xff]
        %v2221 = vld [vmem:[%s496 + $0x940] sm:$0xff]
        %v2222 = vld [vmem:[%s496 + $0x948] sm:$0xff]
        %v2223 = vld [vmem:[%s496 + $0x950] sm:$0xff]
        %v2224 = vld [vmem:[%s496 + $0x958] sm:$0xff]
        %v2225 = vld [vmem:[%s496 + $0x960] sm:$0xff]
        %v2226 = vld [vmem:[%s496 + $0x968] sm:$0xff]
        %v2227 = vld [vmem:[%s496 + $0x970] sm:$0xff]
        %v2228 = vld [vmem:[%s496 + $0x978] sm:$0xff]
        %v2229 = vld [vmem:[%s496 + $0x980] sm:$0xff]
        %v2230 = vld [vmem:[%s496 + $0x988] sm:$0xff]
        %v2231 = vld [vmem:[%s496 + $0x990] sm:$0xff]
        %v2232 = vld [vmem:[%s496 + $0x998] sm:$0xff]
        %v2233 = vld [vmem:[%s496 + $0x9a0] sm:$0xff]
        %v2234 = vld [vmem:[%s496 + $0x9a8] sm:$0xff]
        %v2235 = vld [vmem:[%s496 + $0x9b0] sm:$0xff]
        %v2236 = vld [vmem:[%s496 + $0x9b8] sm:$0xff]
        %v2237 = vld [vmem:[%s496 + $0x9c0] sm:$0xff]
        %v2238 = vld [vmem:[%s496 + $0x9c8] sm:$0xff]
        %v2239 = vld [vmem:[%s496 + $0x9d0] sm:$0xff]
        %v2240 = vld [vmem:[%s496 + $0x9d8] sm:$0xff]
        %v2241 = vld [vmem:[%s496 + $0x9e0] sm:$0xff]
        %v2242 = vld [vmem:[%s496 + $0x9e8] sm:$0xff]
        %v2243 = vld [vmem:[%s496 + $0x9f0] sm:$0xff]
        %v2244 = vld [vmem:[%s496 + $0x9f8] sm:$0xff]
        %v2245 = vld [vmem:[%s496 + $0xa00] sm:$0xff]
        %v2246 = vld [vmem:[%s496 + $0xa08] sm:$0xff]
        %v2247 = vld [vmem:[%s496 + $0xa10] sm:$0xff]
        %v2248 = vld [vmem:[%s496 + $0xa18] sm:$0xff]
        %v2249 = vld [vmem:[%s496 + $0xa20] sm:$0xff]
        %v2250 = vld [vmem:[%s496 + $0xa28] sm:$0xff]
        %v2251 = vld [vmem:[%s496 + $0xa30] sm:$0xff]
        %v2252 = vld [vmem:[%s496 + $0xa38] sm:$0xff]
        %v2253 = vld [vmem:[%s496 + $0xa40] sm:$0xff]
        %v2254 = vld [vmem:[%s496 + $0xa48] sm:$0xff]
        %v2255 = vld [vmem:[%s496 + $0xa50] sm:$0xff]
        %v2256 = vld [vmem:[%s496 + $0xa58] sm:$0xff]
        %v2257 = vld [vmem:[%s496 + $0xa60] sm:$0xff]
        %v2258 = vld [vmem:[%s496 + $0xa68] sm:$0xff]
        %v2259 = vld [vmem:[%s496 + $0xa70] sm:$0xff]
        %v2260 = vld [vmem:[%s496 + $0xa78] sm:$0xff]
        %v2261 = vld [vmem:[%s496 + $0xa80] sm:$0xff]
        %v2262 = vld [vmem:[%s496 + $0xa88] sm:$0xff]
        %v2263 = vld [vmem:[%s496 + $0xa90] sm:$0xff]
        %v2264 = vld [vmem:[%s496 + $0xa98] sm:$0xff]
        %v2265 = vld [vmem:[%s496 + $0xaa0] sm:$0xff]
        %v2266 = vld [vmem:[%s496 + $0xaa8] sm:$0xff]
        %v2267 = vld [vmem:[%s496 + $0xab0] sm:$0xff]
        %v2268 = vld [vmem:[%s496 + $0xab8] sm:$0xff]
        %v2269 = vld [vmem:[%s496 + $0xac0] sm:$0xff]
        %v2270 = vld [vmem:[%s496 + $0xac8] sm:$0xff]
        %v2271 = vld [vmem:[%s496 + $0xad0] sm:$0xff]
        %v2272 = vld [vmem:[%s496 + $0xad8] sm:$0xff]
        %v2273 = vld [vmem:[%s496 + $0xae0] sm:$0xff]
        %v2274 = vld [vmem:[%s496 + $0xae8] sm:$0xff]
        %v2275 = vld [vmem:[%s496 + $0xaf0] sm:$0xff]
        %v2276 = vld [vmem:[%s496 + $0xaf8] sm:$0xff]
        %v2277 = vld [vmem:[%s496 + $0xb00] sm:$0xff]
        %v2278 = vld [vmem:[%s496 + $0xb08] sm:$0xff]
        %v2279 = vld [vmem:[%s496 + $0xb10] sm:$0xff]
        %v2280 = vld [vmem:[%s496 + $0xb18] sm:$0xff]
        %v2281 = vld [vmem:[%s496 + $0xb20] sm:$0xff]
        %v2282 = vld [vmem:[%s496 + $0xb28] sm:$0xff]
        %v2283 = vld [vmem:[%s496 + $0xb30] sm:$0xff]
        %v2284 = vld [vmem:[%s496 + $0xb38] sm:$0xff]
        %v2285 = vld [vmem:[%s496 + $0xb40] sm:$0xff]
        %v2286 = vld [vmem:[%s496 + $0xb48] sm:$0xff]
        %v2287 = vld [vmem:[%s496 + $0xb50] sm:$0xff]
        %v2288 = vld [vmem:[%s496 + $0xb58] sm:$0xff]
        %v2289 = vld [vmem:[%s496 + $0xb60] sm:$0xff]
        %v2290 = vld [vmem:[%s496 + $0xb68] sm:$0xff]
        %v2291 = vld [vmem:[%s496 + $0xb70] sm:$0xff]
        %v2292 = vld [vmem:[%s496 + $0xb78] sm:$0xff]
        %v2293 = vld [vmem:[%s496 + $0xb80] sm:$0xff]
        %v2294 = vld [vmem:[%s496 + $0xb88] sm:$0xff]
        %v2295 = vld [vmem:[%s496 + $0xb90] sm:$0xff]
        %v2296 = vld [vmem:[%s496 + $0xb98] sm:$0xff]
        %v2297 = vld [vmem:[%s496 + $0xba0] sm:$0xff]
        %v2298 = vld [vmem:[%s496 + $0xba8] sm:$0xff]
        %v2299 = vld [vmem:[%s496 + $0xbb0] sm:$0xff]
        %v2300 = vld [vmem:[%s496 + $0xbb8] sm:$0xff]
        %v2301 = vld [vmem:[%s496 + $0xbc0] sm:$0xff]
        %v2302 = vld [vmem:[%s496 + $0xbc8] sm:$0xff]
        %v2303 = vld [vmem:[%s496 + $0xbd0] sm:$0xff]
        %v2304 = vld [vmem:[%s496 + $0xbd8] sm:$0xff]
        %v2305 = vld [vmem:[%s496 + $0xbe0] sm:$0xff]
        %v2306 = vld [vmem:[%s496 + $0xbe8] sm:$0xff]
        %v2307 = vld [vmem:[%s496 + $0xbf0] sm:$0xff]
        %v2308 = vld [vmem:[%s496 + $0xbf8] sm:$0xff]
        %v2309 = vld [vmem:[%s496 + $0xc00] sm:$0xff]
        %v2310 = vld [vmem:[%s496 + $0xc08] sm:$0xff]
        %v2311 = vld [vmem:[%s496 + $0xc10] sm:$0xff]
        %v2312 = vld [vmem:[%s496 + $0xc18] sm:$0xff]
        %v2313 = vld [vmem:[%s496 + $0xc20] sm:$0xff]
        %v2314 = vld [vmem:[%s496 + $0xc28] sm:$0xff]
        %v2315 = vld [vmem:[%s496 + $0xc30] sm:$0xff]
        %v2316 = vld [vmem:[%s496 + $0xc38] sm:$0xff]
        %v2317 = vld [vmem:[%s496 + $0xc40] sm:$0xff]
        %v2318 = vld [vmem:[%s496 + $0xc48] sm:$0xff]
        %v2319 = vld [vmem:[%s496 + $0xc50] sm:$0xff]
        %v2320 = vld [vmem:[%s496 + $0xc58] sm:$0xff]
        %v2321 = vld [vmem:[%s496 + $0xc60] sm:$0xff]
        %v2322 = vld [vmem:[%s496 + $0xc68] sm:$0xff]
        %v2323 = vld [vmem:[%s496 + $0xc70] sm:$0xff]
        %v2324 = vld [vmem:[%s496 + $0xc78] sm:$0xff]
        %v2325 = vld [vmem:[%s496 + $0xc80] sm:$0xff]
        %v2326 = vld [vmem:[%s496 + $0xc88] sm:$0xff]
        %v2327 = vld [vmem:[%s496 + $0xc90] sm:$0xff]
        %v2328 = vld [vmem:[%s496 + $0xc98] sm:$0xff]
        %v2329 = vld [vmem:[%s496 + $0xca0] sm:$0xff]
        %v2330 = vld [vmem:[%s496 + $0xca8] sm:$0xff]
        %v2331 = vld [vmem:[%s496 + $0xcb0] sm:$0xff]
        %v2332 = vld [vmem:[%s496 + $0xcb8] sm:$0xff]
        %v2333 = vld [vmem:[%s496 + $0xcc0] sm:$0xff]
        %v2334 = vld [vmem:[%s496 + $0xcc8] sm:$0xff]
        %v2335 = vld [vmem:[%s496 + $0xcd0] sm:$0xff]
        %v2336 = vld [vmem:[%s496 + $0xcd8] sm:$0xff]
        %v2337 = vld [vmem:[%s496 + $0xce0] sm:$0xff]
        %v2338 = vld [vmem:[%s496 + $0xce8] sm:$0xff]
        %v2339 = vld [vmem:[%s496 + $0xcf0] sm:$0xff]
        %v2340 = vld [vmem:[%s496 + $0xcf8] sm:$0xff]
        %v2341 = vld [vmem:[%s496 + $0xd00] sm:$0xff]
        %v2342 = vld [vmem:[%s496 + $0xd08] sm:$0xff]
        %v2343 = vld [vmem:[%s496 + $0xd10] sm:$0xff]
        %v2344 = vld [vmem:[%s496 + $0xd18] sm:$0xff]
        %v2345 = vld [vmem:[%s496 + $0xd20] sm:$0xff]
        %v2346 = vld [vmem:[%s496 + $0xd28] sm:$0xff]
        %v2347 = vld [vmem:[%s496 + $0xd30] sm:$0xff]
        %v2348 = vld [vmem:[%s496 + $0xd38] sm:$0xff]
        %v2349 = vld [vmem:[%s496 + $0xd40] sm:$0xff]
        %v2350 = vld [vmem:[%s496 + $0xd48] sm:$0xff]
        %v2351 = vld [vmem:[%s496 + $0xd50] sm:$0xff]
        %v2352 = vld [vmem:[%s496 + $0xd58] sm:$0xff]
        %v2353 = vld [vmem:[%s496 + $0xd60] sm:$0xff]
        %v2354 = vld [vmem:[%s496 + $0xd68] sm:$0xff]
        %v2355 = vld [vmem:[%s496 + $0xd70] sm:$0xff]
        %v2356 = vld [vmem:[%s496 + $0xd78] sm:$0xff]
        %v2357 = vld [vmem:[%s496 + $0xd80] sm:$0xff]
        %v2358 = vld [vmem:[%s496 + $0xd88] sm:$0xff]
        %v2359 = vld [vmem:[%s496 + $0xd90] sm:$0xff]
        %v2360 = vld [vmem:[%s496 + $0xd98] sm:$0xff]
        %v2361 = vld [vmem:[%s496 + $0xda0] sm:$0xff]
        %v2362 = vld [vmem:[%s496 + $0xda8] sm:$0xff]
        %v2363 = vld [vmem:[%s496 + $0xdb0] sm:$0xff]
        %v2364 = vld [vmem:[%s496 + $0xdb8] sm:$0xff]
        %v2365 = vld [vmem:[%s496 + $0xdc0] sm:$0xff]
        %v2366 = vld [vmem:[%s496 + $0xdc8] sm:$0xff]
        %v2367 = vld [vmem:[%s496 + $0xdd0] sm:$0xff]
        %v2368 = vld [vmem:[%s496 + $0xdd8] sm:$0xff]
        %v2369 = vld [vmem:[%s496 + $0xde0] sm:$0xff]
        %v2370 = vld [vmem:[%s496 + $0xde8] sm:$0xff]
        %v2371 = vld [vmem:[%s496 + $0xdf0] sm:$0xff]
        %v2372 = vld [vmem:[%s496 + $0xdf8] sm:$0xff]
        %v2373 = vld [vmem:[%s496 + $0xe00] sm:$0xff]
        %v2374 = vld [vmem:[%s496 + $0xe08] sm:$0xff]
        %v2375 = vld [vmem:[%s496 + $0xe10] sm:$0xff]
        %v2376 = vld [vmem:[%s496 + $0xe18] sm:$0xff]
        %v2377 = vld [vmem:[%s496 + $0xe20] sm:$0xff]
        %v2378 = vld [vmem:[%s496 + $0xe28] sm:$0xff]
        %v2379 = vld [vmem:[%s496 + $0xe30] sm:$0xff]
        %v2380 = vld [vmem:[%s496 + $0xe38] sm:$0xff]
        %v2381 = vld [vmem:[%s496 + $0xe40] sm:$0xff]
        %v2382 = vld [vmem:[%s496 + $0xe48] sm:$0xff]
        %v2383 = vld [vmem:[%s496 + $0xe50] sm:$0xff]
        %v2384 = vld [vmem:[%s496 + $0xe58] sm:$0xff]
        %v2385 = vld [vmem:[%s496 + $0xe60] sm:$0xff]
        %v2386 = vld [vmem:[%s496 + $0xe68] sm:$0xff]
        %v2387 = vld [vmem:[%s496 + $0xe70] sm:$0xff]
        %v2388 = vld [vmem:[%s496 + $0xe78] sm:$0xff]
        %v2389 = vld [vmem:[%s496 + $0xe80] sm:$0xff]
        %v2390 = vld [vmem:[%s496 + $0xe88] sm:$0xff]
        %v2391 = vld [vmem:[%s496 + $0xe90] sm:$0xff]
        %v2392 = vld [vmem:[%s496 + $0xe98] sm:$0xff]
        %v2393 = vld [vmem:[%s496 + $0xea0] sm:$0xff]
        %v2394 = vld [vmem:[%s496 + $0xea8] sm:$0xff]
        %v2395 = vld [vmem:[%s496 + $0xeb0] sm:$0xff]
        %v2396 = vld [vmem:[%s496 + $0xeb8] sm:$0xff]
        %v2397 = vld [vmem:[%s496 + $0xec0] sm:$0xff]
        %v2398 = vld [vmem:[%s496 + $0xec8] sm:$0xff]
        %v2399 = vld [vmem:[%s496 + $0xed0] sm:$0xff]
        %v2400 = vld [vmem:[%s496 + $0xed8] sm:$0xff]
        %v2401 = vld [vmem:[%s496 + $0xee0] sm:$0xff]
        %v2402 = vld [vmem:[%s496 + $0xee8] sm:$0xff]
        %v2403 = vld [vmem:[%s496 + $0xef0] sm:$0xff]
        %v2404 = vld [vmem:[%s496 + $0xef8] sm:$0xff]
        %v2405 = vld [vmem:[%s496 + $0xf00] sm:$0xff]
        %v2406 = vld [vmem:[%s496 + $0xf08] sm:$0xff]
        %v2407 = vld [vmem:[%s496 + $0xf10] sm:$0xff]
        %v2408 = vld [vmem:[%s496 + $0xf18] sm:$0xff]
        %v2409 = vld [vmem:[%s496 + $0xf20] sm:$0xff]
        %v2410 = vld [vmem:[%s496 + $0xf28] sm:$0xff]
        %v2411 = vld [vmem:[%s496 + $0xf30] sm:$0xff]
        %v2412 = vld [vmem:[%s496 + $0xf38] sm:$0xff]
        %v2413 = vld [vmem:[%s496 + $0xf40] sm:$0xff]
        %v2414 = vld [vmem:[%s496 + $0xf48] sm:$0xff]
        %v2415 = vld [vmem:[%s496 + $0xf50] sm:$0xff]
        %v2416 = vld [vmem:[%s496 + $0xf58] sm:$0xff]
        %v2417 = vld [vmem:[%s496 + $0xf60] sm:$0xff]
        %v2418 = vld [vmem:[%s496 + $0xf68] sm:$0xff]
        %v2419 = vld [vmem:[%s496 + $0xf70] sm:$0xff]
        %v2420 = vld [vmem:[%s496 + $0xf78] sm:$0xff]
        %v2421 = vld [vmem:[%s496 + $0xf80] sm:$0xff]
        %v2422 = vld [vmem:[%s496 + $0xf88] sm:$0xff]
        %v2423 = vld [vmem:[%s496 + $0xf90] sm:$0xff]
        %v2424 = vld [vmem:[%s496 + $0xf98] sm:$0xff]
        %v2425 = vld [vmem:[%s496 + $0xfa0] sm:$0xff]
        %v2426 = vld [vmem:[%s496 + $0xfa8] sm:$0xff]
        %v2427 = vld [vmem:[%s496 + $0xfb0] sm:$0xff]
        %v2428 = vld [vmem:[%s496 + $0xfb8] sm:$0xff]
        %v2429 = vld [vmem:[%s496 + $0xfc0] sm:$0xff]
        %v2430 = vld [vmem:[%s496 + $0xfc8] sm:$0xff]
        %v2431 = vld [vmem:[%s496 + $0xfd0] sm:$0xff]
        %v2432 = vld [vmem:[%s496 + $0xfd8] sm:$0xff]
        %v2433 = vld [vmem:[%s496 + $0xfe0] sm:$0xff]
        %v2434 = vld [vmem:[%s496 + $0xfe8] sm:$0xff]
        %v2435 = vld [vmem:[%s496 + $0xff0] sm:$0xff]
        %v2436 = vld [vmem:[%s496 + $0xff8] sm:$0xff]
        %v2437 = vld [vmem:[%s523] sm:$0xff]
        %v2438 = vld [vmem:[%s523 + $0x8] sm:$0xff]
        %v2441 = vlaneseq
        %v2442 = vshrl.u32 %v2441, 7
        %v2443 = vsub.s32 0, %v2442
        %v2444 = vrot.slane %v2437, %v2443
        %v2445 = vlaneseq
        %v2446 = vshrl.u32 %v2445, 7
        %v2447 = vsub.s32 1, %v2446
        %v2448 = vrot.slane %v2437, %v2447
        %v2449 = vlaneseq
        %v2450 = vshrl.u32 %v2449, 7
        %v2451 = vsub.s32 2, %v2450
        %v2452 = vrot.slane %v2437, %v2451
        %v2453 = vlaneseq
        %v2454 = vshrl.u32 %v2453, 7
        %v2455 = vsub.s32 3, %v2454
        %v2456 = vrot.slane %v2437, %v2455
        %v2457 = vlaneseq
        %v2458 = vshrl.u32 %v2457, 7
        %v2459 = vsub.s32 4, %v2458
        %v2460 = vrot.slane %v2437, %v2459
        %v2461 = vlaneseq
        %v2462 = vshrl.u32 %v2461, 7
        %v2463 = vsub.s32 5, %v2462
        %v2464 = vrot.slane %v2437, %v2463
        %v2465 = vlaneseq
        %v2466 = vshrl.u32 %v2465, 7
        %v2467 = vsub.s32 6, %v2466
        %v2468 = vrot.slane %v2437, %v2467
        %v2469 = vlaneseq
        %v2470 = vshrl.u32 %v2469, 7
        %v2471 = vsub.s32 7, %v2470
        %v2472 = vrot.slane %v2437, %v2471
        %v2473 = vlaneseq
        %v2474 = vshrl.u32 %v2473, 7
        %v2475 = vsub.s32 0, %v2474
        %v2476 = vrot.slane %v2438, %v2475
        %v2477 = vlaneseq
        %v2478 = vshrl.u32 %v2477, 7
        %v2479 = vsub.s32 1, %v2478
        %v2480 = vrot.slane %v2438, %v2479
        %v2481 = vlaneseq
        %v2482 = vshrl.u32 %v2481, 7
        %v2483 = vsub.s32 2, %v2482
        %v2484 = vrot.slane %v2438, %v2483
        %v2485 = vlaneseq
        %v2486 = vshrl.u32 %v2485, 7
        %v2487 = vsub.s32 3, %v2486
        %v2488 = vrot.slane %v2438, %v2487
        %v2489 = vlaneseq
        %v2490 = vshrl.u32 %v2489, 7
        %v2491 = vsub.s32 4, %v2490
        %v2492 = vrot.slane %v2438, %v2491
        %v2493 = vlaneseq
        %v2494 = vshrl.u32 %v2493, 7
        %v2495 = vsub.s32 5, %v2494
        %v2496 = vrot.slane %v2438, %v2495
        %v2497 = vlaneseq
        %v2498 = vshrl.u32 %v2497, 7
        %v2499 = vsub.s32 6, %v2498
        %v2500 = vrot.slane %v2438, %v2499
        %v2501 = vlaneseq
        %v2502 = vshrl.u32 %v2501, 7
        %v2503 = vsub.s32 7, %v2502
        %v2504 = vrot.slane %v2438, %v2503
        %v3033 = vunpack.c.l.b16 %v1925
        %v3034 = vunpack.c.h.b16 %v1925
        %v3035 = vunpack.c.l.b16 %v1926
        %v3036 = vunpack.c.h.b16 %v1926
        %v3037 = vunpack.c.l.b16 %v1927
        %v3038 = vunpack.c.h.b16 %v1927
        %v3039 = vunpack.c.l.b16 %v1928
        %v3040 = vunpack.c.h.b16 %v1928
        %v3041 = vunpack.c.l.b16 %v1929
        %v3042 = vunpack.c.h.b16 %v1929
        %v3043 = vunpack.c.l.b16 %v1930
        %v3044 = vunpack.c.h.b16 %v1930
        %v3045 = vunpack.c.l.b16 %v1931
        %v3046 = vunpack.c.h.b16 %v1931
        %v3047 = vunpack.c.l.b16 %v1932
        %v3048 = vunpack.c.h.b16 %v1932
        %v3049 = vunpack.c.l.b16 %v1933
        %v3050 = vunpack.c.h.b16 %v1933
        %v3051 = vunpack.c.l.b16 %v1934
        %v3052 = vunpack.c.h.b16 %v1934
        %v3053 = vunpack.c.l.b16 %v1935
        %v3054 = vunpack.c.h.b16 %v1935
        %v3055 = vunpack.c.l.b16 %v1936
        %v3056 = vunpack.c.h.b16 %v1936
        %v3057 = vunpack.c.l.b16 %v1937
        %v3058 = vunpack.c.h.b16 %v1937
        %v3059 = vunpack.c.l.b16 %v1938
        %v3060 = vunpack.c.h.b16 %v1938
        %v3061 = vunpack.c.l.b16 %v1939
        %v3062 = vunpack.c.h.b16 %v1939
        %v3063 = vunpack.c.l.b16 %v1940
        %v3064 = vunpack.c.h.b16 %v1940
        %v3065 = vunpack.c.l.b16 %v1941
        %v3066 = vunpack.c.h.b16 %v1941
        %v3067 = vunpack.c.l.b16 %v1942
        %v3068 = vunpack.c.h.b16 %v1942
        %v3069 = vunpack.c.l.b16 %v1943
        %v3070 = vunpack.c.h.b16 %v1943
        %v3071 = vunpack.c.l.b16 %v1944
        %v3072 = vunpack.c.h.b16 %v1944
        %v3073 = vunpack.c.l.b16 %v1945
        %v3074 = vunpack.c.h.b16 %v1945
        %v3075 = vunpack.c.l.b16 %v1946
        %v3076 = vunpack.c.h.b16 %v1946
        %v3077 = vunpack.c.l.b16 %v1947
        %v3078 = vunpack.c.h.b16 %v1947
        %v3079 = vunpack.c.l.b16 %v1948
        %v3080 = vunpack.c.h.b16 %v1948
        %v3081 = vunpack.c.l.b16 %v1949
        %v3082 = vunpack.c.h.b16 %v1949
        %v3083 = vunpack.c.l.b16 %v1950
        %v3084 = vunpack.c.h.b16 %v1950
        %v3085 = vunpack.c.l.b16 %v1951
        %v3086 = vunpack.c.h.b16 %v1951
        %v3087 = vunpack.c.l.b16 %v1952
        %v3088 = vunpack.c.h.b16 %v1952
        %v3089 = vunpack.c.l.b16 %v1953
        %v3090 = vunpack.c.h.b16 %v1953
        %v3091 = vunpack.c.l.b16 %v1954
        %v3092 = vunpack.c.h.b16 %v1954
        %v3093 = vunpack.c.l.b16 %v1955
        %v3094 = vunpack.c.h.b16 %v1955
        %v3095 = vunpack.c.l.b16 %v1956
        %v3096 = vunpack.c.h.b16 %v1956
        %v3097 = vunpack.c.l.b16 %v1957
        %v3098 = vunpack.c.h.b16 %v1957
        %v3099 = vunpack.c.l.b16 %v1958
        %v3100 = vunpack.c.h.b16 %v1958
        %v3101 = vunpack.c.l.b16 %v1959
        %v3102 = vunpack.c.h.b16 %v1959
        %v3103 = vunpack.c.l.b16 %v1960
        %v3104 = vunpack.c.h.b16 %v1960
        %v3105 = vunpack.c.l.b16 %v1961
        %v3106 = vunpack.c.h.b16 %v1961
        %v3107 = vunpack.c.l.b16 %v1962
        %v3108 = vunpack.c.h.b16 %v1962
        %v3109 = vunpack.c.l.b16 %v1963
        %v3110 = vunpack.c.h.b16 %v1963
        %v3111 = vunpack.c.l.b16 %v1964
        %v3112 = vunpack.c.h.b16 %v1964
        %v3113 = vunpack.c.l.b16 %v1965
        %v3114 = vunpack.c.h.b16 %v1965
        %v3115 = vunpack.c.l.b16 %v1966
        %v3116 = vunpack.c.h.b16 %v1966
        %v3117 = vunpack.c.l.b16 %v1967
        %v3118 = vunpack.c.h.b16 %v1967
        %v3119 = vunpack.c.l.b16 %v1968
        %v3120 = vunpack.c.h.b16 %v1968
        %v3121 = vunpack.c.l.b16 %v1969
        %v3122 = vunpack.c.h.b16 %v1969
        %v3123 = vunpack.c.l.b16 %v1970
        %v3124 = vunpack.c.h.b16 %v1970
        %v3125 = vunpack.c.l.b16 %v1971
        %v3126 = vunpack.c.h.b16 %v1971
        %v3127 = vunpack.c.l.b16 %v1972
        %v3128 = vunpack.c.h.b16 %v1972
        %v3129 = vunpack.c.l.b16 %v1973
        %v3130 = vunpack.c.h.b16 %v1973
        %v3131 = vunpack.c.l.b16 %v1974
        %v3132 = vunpack.c.h.b16 %v1974
        %v3133 = vunpack.c.l.b16 %v1975
        %v3134 = vunpack.c.h.b16 %v1975
        %v3135 = vunpack.c.l.b16 %v1976
        %v3136 = vunpack.c.h.b16 %v1976
        %v3137 = vunpack.c.l.b16 %v1977
        %v3138 = vunpack.c.h.b16 %v1977
        %v3139 = vunpack.c.l.b16 %v1978
        %v3140 = vunpack.c.h.b16 %v1978
        %v3141 = vunpack.c.l.b16 %v1979
        %v3142 = vunpack.c.h.b16 %v1979
        %v3143 = vunpack.c.l.b16 %v1980
        %v3144 = vunpack.c.h.b16 %v1980
        %v3145 = vunpack.c.l.b16 %v1981
        %v3146 = vunpack.c.h.b16 %v1981
        %v3147 = vunpack.c.l.b16 %v1982
        %v3148 = vunpack.c.h.b16 %v1982
        %v3149 = vunpack.c.l.b16 %v1983
        %v3150 = vunpack.c.h.b16 %v1983
        %v3151 = vunpack.c.l.b16 %v1984
        %v3152 = vunpack.c.h.b16 %v1984
        %v3153 = vunpack.c.l.b16 %v1985
        %v3154 = vunpack.c.h.b16 %v1985
        %v3155 = vunpack.c.l.b16 %v1986
        %v3156 = vunpack.c.h.b16 %v1986
        %v3157 = vunpack.c.l.b16 %v1987
        %v3158 = vunpack.c.h.b16 %v1987
        %v3159 = vunpack.c.l.b16 %v1988
        %v3160 = vunpack.c.h.b16 %v1988
        %v3161 = vunpack.c.l.b16 %v1989
        %v3162 = vunpack.c.h.b16 %v1989
        %v3163 = vunpack.c.l.b16 %v1990
        %v3164 = vunpack.c.h.b16 %v1990
        %v3165 = vunpack.c.l.b16 %v1991
        %v3166 = vunpack.c.h.b16 %v1991
        %v3167 = vunpack.c.l.b16 %v1992
        %v3168 = vunpack.c.h.b16 %v1992
        %v3169 = vunpack.c.l.b16 %v1993
        %v3170 = vunpack.c.h.b16 %v1993
        %v3171 = vunpack.c.l.b16 %v1994
        %v3172 = vunpack.c.h.b16 %v1994
        %v3173 = vunpack.c.l.b16 %v1995
        %v3174 = vunpack.c.h.b16 %v1995
        %v3175 = vunpack.c.l.b16 %v1996
        %v3176 = vunpack.c.h.b16 %v1996
        %v3177 = vunpack.c.l.b16 %v1997
        %v3178 = vunpack.c.h.b16 %v1997
        %v3179 = vunpack.c.l.b16 %v1998
        %v3180 = vunpack.c.h.b16 %v1998
        %v3181 = vunpack.c.l.b16 %v1999
        %v3182 = vunpack.c.h.b16 %v1999
        %v3183 = vunpack.c.l.b16 %v2000
        %v3184 = vunpack.c.h.b16 %v2000
        %v3185 = vunpack.c.l.b16 %v2001
        %v3186 = vunpack.c.h.b16 %v2001
        %v3187 = vunpack.c.l.b16 %v2002
        %v3188 = vunpack.c.h.b16 %v2002
        %v3189 = vunpack.c.l.b16 %v2003
        %v3190 = vunpack.c.h.b16 %v2003
        %v3191 = vunpack.c.l.b16 %v2004
        %v3192 = vunpack.c.h.b16 %v2004
        %v3193 = vunpack.c.l.b16 %v2005
        %v3194 = vunpack.c.h.b16 %v2005
        %v3195 = vunpack.c.l.b16 %v2006
        %v3196 = vunpack.c.h.b16 %v2006
        %v3197 = vunpack.c.l.b16 %v2007
        %v3198 = vunpack.c.h.b16 %v2007
        %v3199 = vunpack.c.l.b16 %v2008
        %v3200 = vunpack.c.h.b16 %v2008
        %v3201 = vunpack.c.l.b16 %v2009
        %v3202 = vunpack.c.h.b16 %v2009
        %v3203 = vunpack.c.l.b16 %v2010
        %v3204 = vunpack.c.h.b16 %v2010
        %v3205 = vunpack.c.l.b16 %v2011
        %v3206 = vunpack.c.h.b16 %v2011
        %v3207 = vunpack.c.l.b16 %v2012
        %v3208 = vunpack.c.h.b16 %v2012
        %v3209 = vunpack.c.l.b16 %v2013
        %v3210 = vunpack.c.h.b16 %v2013
        %v3211 = vunpack.c.l.b16 %v2014
        %v3212 = vunpack.c.h.b16 %v2014
        %v3213 = vunpack.c.l.b16 %v2015
        %v3214 = vunpack.c.h.b16 %v2015
        %v3215 = vunpack.c.l.b16 %v2016
        %v3216 = vunpack.c.h.b16 %v2016
        %v3217 = vunpack.c.l.b16 %v2017
        %v3218 = vunpack.c.h.b16 %v2017
        %v3219 = vunpack.c.l.b16 %v2018
        %v3220 = vunpack.c.h.b16 %v2018
        %v3221 = vunpack.c.l.b16 %v2019
        %v3222 = vunpack.c.h.b16 %v2019
        %v3223 = vunpack.c.l.b16 %v2020
        %v3224 = vunpack.c.h.b16 %v2020
        %v3225 = vunpack.c.l.b16 %v2021
        %v3226 = vunpack.c.h.b16 %v2021
        %v3227 = vunpack.c.l.b16 %v2022
        %v3228 = vunpack.c.h.b16 %v2022
        %v3229 = vunpack.c.l.b16 %v2023
        %v3230 = vunpack.c.h.b16 %v2023
        %v3231 = vunpack.c.l.b16 %v2024
        %v3232 = vunpack.c.h.b16 %v2024
        %v3233 = vunpack.c.l.b16 %v2025
        %v3234 = vunpack.c.h.b16 %v2025
        %v3235 = vunpack.c.l.b16 %v2026
        %v3236 = vunpack.c.h.b16 %v2026
        %v3237 = vunpack.c.l.b16 %v2027
        %v3238 = vunpack.c.h.b16 %v2027
        %v3239 = vunpack.c.l.b16 %v2028
        %v3240 = vunpack.c.h.b16 %v2028
        %v3241 = vunpack.c.l.b16 %v2029
        %v3242 = vunpack.c.h.b16 %v2029
        %v3243 = vunpack.c.l.b16 %v2030
        %v3244 = vunpack.c.h.b16 %v2030
        %v3245 = vunpack.c.l.b16 %v2031
        %v3246 = vunpack.c.h.b16 %v2031
        %v3247 = vunpack.c.l.b16 %v2032
        %v3248 = vunpack.c.h.b16 %v2032
        %v3249 = vunpack.c.l.b16 %v2033
        %v3250 = vunpack.c.h.b16 %v2033
        %v3251 = vunpack.c.l.b16 %v2034
        %v3252 = vunpack.c.h.b16 %v2034
        %v3253 = vunpack.c.l.b16 %v2035
        %v3254 = vunpack.c.h.b16 %v2035
        %v3255 = vunpack.c.l.b16 %v2036
        %v3256 = vunpack.c.h.b16 %v2036
        %v3257 = vunpack.c.l.b16 %v2037
        %v3258 = vunpack.c.h.b16 %v2037
        %v3259 = vunpack.c.l.b16 %v2038
        %v3260 = vunpack.c.h.b16 %v2038
        %v3261 = vunpack.c.l.b16 %v2039
        %v3262 = vunpack.c.h.b16 %v2039
        %v3263 = vunpack.c.l.b16 %v2040
        %v3264 = vunpack.c.h.b16 %v2040
        %v3265 = vunpack.c.l.b16 %v2041
        %v3266 = vunpack.c.h.b16 %v2041
        %v3267 = vunpack.c.l.b16 %v2042
        %v3268 = vunpack.c.h.b16 %v2042
        %v3269 = vunpack.c.l.b16 %v2043
        %v3270 = vunpack.c.h.b16 %v2043
        %v3271 = vunpack.c.l.b16 %v2044
        %v3272 = vunpack.c.h.b16 %v2044
        %v3273 = vunpack.c.l.b16 %v2045
        %v3274 = vunpack.c.h.b16 %v2045
        %v3275 = vunpack.c.l.b16 %v2046
        %v3276 = vunpack.c.h.b16 %v2046
        %v3277 = vunpack.c.l.b16 %v2047
        %v3278 = vunpack.c.h.b16 %v2047
        %v3279 = vunpack.c.l.b16 %v2048
        %v3280 = vunpack.c.h.b16 %v2048
        %v3281 = vunpack.c.l.b16 %v2049
        %v3282 = vunpack.c.h.b16 %v2049
        %v3283 = vunpack.c.l.b16 %v2050
        %v3284 = vunpack.c.h.b16 %v2050
        %v3285 = vunpack.c.l.b16 %v2051
        %v3286 = vunpack.c.h.b16 %v2051
        %v3287 = vunpack.c.l.b16 %v2052
        %v3288 = vunpack.c.h.b16 %v2052
        %v3289 = vunpack.c.l.b16 %v2053
        %v3290 = vunpack.c.h.b16 %v2053
        %v3291 = vunpack.c.l.b16 %v2054
        %v3292 = vunpack.c.h.b16 %v2054
        %v3293 = vunpack.c.l.b16 %v2055
        %v3294 = vunpack.c.h.b16 %v2055
        %v3295 = vunpack.c.l.b16 %v2056
        %v3296 = vunpack.c.h.b16 %v2056
        %v3297 = vunpack.c.l.b16 %v2057
        %v3298 = vunpack.c.h.b16 %v2057
        %v3299 = vunpack.c.l.b16 %v2058
        %v3300 = vunpack.c.h.b16 %v2058
        %v3301 = vunpack.c.l.b16 %v2059
        %v3302 = vunpack.c.h.b16 %v2059
        %v3303 = vunpack.c.l.b16 %v2060
        %v3304 = vunpack.c.h.b16 %v2060
        %v3305 = vunpack.c.l.b16 %v2061
        %v3306 = vunpack.c.h.b16 %v2061
        %v3307 = vunpack.c.l.b16 %v2062
        %v3308 = vunpack.c.h.b16 %v2062
        %v3309 = vunpack.c.l.b16 %v2063
        %v3310 = vunpack.c.h.b16 %v2063
        %v3311 = vunpack.c.l.b16 %v2064
        %v3312 = vunpack.c.h.b16 %v2064
        %v3313 = vunpack.c.l.b16 %v2065
        %v3314 = vunpack.c.h.b16 %v2065
        %v3315 = vunpack.c.l.b16 %v2066
        %v3316 = vunpack.c.h.b16 %v2066
        %v3317 = vunpack.c.l.b16 %v2067
        %v3318 = vunpack.c.h.b16 %v2067
        %v3319 = vunpack.c.l.b16 %v2068
        %v3320 = vunpack.c.h.b16 %v2068
        %v3321 = vunpack.c.l.b16 %v2069
        %v3322 = vunpack.c.h.b16 %v2069
        %v3323 = vunpack.c.l.b16 %v2070
        %v3324 = vunpack.c.h.b16 %v2070
        %v3325 = vunpack.c.l.b16 %v2071
        %v3326 = vunpack.c.h.b16 %v2071
        %v3327 = vunpack.c.l.b16 %v2072
        %v3328 = vunpack.c.h.b16 %v2072
        %v3329 = vunpack.c.l.b16 %v2073
        %v3330 = vunpack.c.h.b16 %v2073
        %v3331 = vunpack.c.l.b16 %v2074
        %v3332 = vunpack.c.h.b16 %v2074
        %v3333 = vunpack.c.l.b16 %v2075
        %v3334 = vunpack.c.h.b16 %v2075
        %v3335 = vunpack.c.l.b16 %v2076
        %v3336 = vunpack.c.h.b16 %v2076
        %v3337 = vunpack.c.l.b16 %v2077
        %v3338 = vunpack.c.h.b16 %v2077
        %v3339 = vunpack.c.l.b16 %v2078
        %v3340 = vunpack.c.h.b16 %v2078
        %v3341 = vunpack.c.l.b16 %v2079
        %v3342 = vunpack.c.h.b16 %v2079
        %v3343 = vunpack.c.l.b16 %v2080
        %v3344 = vunpack.c.h.b16 %v2080
        %v3345 = vunpack.c.l.b16 %v2081
        %v3346 = vunpack.c.h.b16 %v2081
        %v3347 = vunpack.c.l.b16 %v2082
        %v3348 = vunpack.c.h.b16 %v2082
        %v3349 = vunpack.c.l.b16 %v2083
        %v3350 = vunpack.c.h.b16 %v2083
        %v3351 = vunpack.c.l.b16 %v2084
        %v3352 = vunpack.c.h.b16 %v2084
        %v3353 = vunpack.c.l.b16 %v2085
        %v3354 = vunpack.c.h.b16 %v2085
        %v3355 = vunpack.c.l.b16 %v2086
        %v3356 = vunpack.c.h.b16 %v2086
        %v3357 = vunpack.c.l.b16 %v2087
        %v3358 = vunpack.c.h.b16 %v2087
        %v3359 = vunpack.c.l.b16 %v2088
        %v3360 = vunpack.c.h.b16 %v2088
        %v3361 = vunpack.c.l.b16 %v2089
        %v3362 = vunpack.c.h.b16 %v2089
        %v3363 = vunpack.c.l.b16 %v2090
        %v3364 = vunpack.c.h.b16 %v2090
        %v3365 = vunpack.c.l.b16 %v2091
        %v3366 = vunpack.c.h.b16 %v2091
        %v3367 = vunpack.c.l.b16 %v2092
        %v3368 = vunpack.c.h.b16 %v2092
        %v3369 = vunpack.c.l.b16 %v2093
        %v3370 = vunpack.c.h.b16 %v2093
        %v3371 = vunpack.c.l.b16 %v2094
        %v3372 = vunpack.c.h.b16 %v2094
        %v3373 = vunpack.c.l.b16 %v2095
        %v3374 = vunpack.c.h.b16 %v2095
        %v3375 = vunpack.c.l.b16 %v2096
        %v3376 = vunpack.c.h.b16 %v2096
        %v3377 = vunpack.c.l.b16 %v2097
        %v3378 = vunpack.c.h.b16 %v2097
        %v3379 = vunpack.c.l.b16 %v2098
        %v3380 = vunpack.c.h.b16 %v2098
        %v3381 = vunpack.c.l.b16 %v2099
        %v3382 = vunpack.c.h.b16 %v2099
        %v3383 = vunpack.c.l.b16 %v2100
        %v3384 = vunpack.c.h.b16 %v2100
        %v3385 = vunpack.c.l.b16 %v2101
        %v3386 = vunpack.c.h.b16 %v2101
        %v3387 = vunpack.c.l.b16 %v2102
        %v3388 = vunpack.c.h.b16 %v2102
        %v3389 = vunpack.c.l.b16 %v2103
        %v3390 = vunpack.c.h.b16 %v2103
        %v3391 = vunpack.c.l.b16 %v2104
        %v3392 = vunpack.c.h.b16 %v2104
        %v3393 = vunpack.c.l.b16 %v2105
        %v3394 = vunpack.c.h.b16 %v2105
        %v3395 = vunpack.c.l.b16 %v2106
        %v3396 = vunpack.c.h.b16 %v2106
        %v3397 = vunpack.c.l.b16 %v2107
        %v3398 = vunpack.c.h.b16 %v2107
        %v3399 = vunpack.c.l.b16 %v2108
        %v3400 = vunpack.c.h.b16 %v2108
        %v3401 = vunpack.c.l.b16 %v2109
        %v3402 = vunpack.c.h.b16 %v2109
        %v3403 = vunpack.c.l.b16 %v2110
        %v3404 = vunpack.c.h.b16 %v2110
        %v3405 = vunpack.c.l.b16 %v2111
        %v3406 = vunpack.c.h.b16 %v2111
        %v3407 = vunpack.c.l.b16 %v2112
        %v3408 = vunpack.c.h.b16 %v2112
        %v3409 = vunpack.c.l.b16 %v2113
        %v3410 = vunpack.c.h.b16 %v2113
        %v3411 = vunpack.c.l.b16 %v2114
        %v3412 = vunpack.c.h.b16 %v2114
        %v3413 = vunpack.c.l.b16 %v2115
        %v3414 = vunpack.c.h.b16 %v2115
        %v3415 = vunpack.c.l.b16 %v2116
        %v3416 = vunpack.c.h.b16 %v2116
        %v3417 = vunpack.c.l.b16 %v2117
        %v3418 = vunpack.c.h.b16 %v2117
        %v3419 = vunpack.c.l.b16 %v2118
        %v3420 = vunpack.c.h.b16 %v2118
        %v3421 = vunpack.c.l.b16 %v2119
        %v3422 = vunpack.c.h.b16 %v2119
        %v3423 = vunpack.c.l.b16 %v2120
        %v3424 = vunpack.c.h.b16 %v2120
        %v3425 = vunpack.c.l.b16 %v2121
        %v3426 = vunpack.c.h.b16 %v2121
        %v3427 = vunpack.c.l.b16 %v2122
        %v3428 = vunpack.c.h.b16 %v2122
        %v3429 = vunpack.c.l.b16 %v2123
        %v3430 = vunpack.c.h.b16 %v2123
        %v3431 = vunpack.c.l.b16 %v2124
        %v3432 = vunpack.c.h.b16 %v2124
        %v3433 = vunpack.c.l.b16 %v2125
        %v3434 = vunpack.c.h.b16 %v2125
        %v3435 = vunpack.c.l.b16 %v2126
        %v3436 = vunpack.c.h.b16 %v2126
        %v3437 = vunpack.c.l.b16 %v2127
        %v3438 = vunpack.c.h.b16 %v2127
        %v3439 = vunpack.c.l.b16 %v2128
        %v3440 = vunpack.c.h.b16 %v2128
        %v3441 = vunpack.c.l.b16 %v2129
        %v3442 = vunpack.c.h.b16 %v2129
        %v3443 = vunpack.c.l.b16 %v2130
        %v3444 = vunpack.c.h.b16 %v2130
        %v3445 = vunpack.c.l.b16 %v2131
        %v3446 = vunpack.c.h.b16 %v2131
        %v3447 = vunpack.c.l.b16 %v2132
        %v3448 = vunpack.c.h.b16 %v2132
        %v3449 = vunpack.c.l.b16 %v2133
        %v3450 = vunpack.c.h.b16 %v2133
        %v3451 = vunpack.c.l.b16 %v2134
        %v3452 = vunpack.c.h.b16 %v2134
        %v3453 = vunpack.c.l.b16 %v2135
        %v3454 = vunpack.c.h.b16 %v2135
        %v3455 = vunpack.c.l.b16 %v2136
        %v3456 = vunpack.c.h.b16 %v2136
        %v3457 = vunpack.c.l.b16 %v2137
        %v3458 = vunpack.c.h.b16 %v2137
        %v3459 = vunpack.c.l.b16 %v2138
        %v3460 = vunpack.c.h.b16 %v2138
        %v3461 = vunpack.c.l.b16 %v2139
        %v3462 = vunpack.c.h.b16 %v2139
        %v3463 = vunpack.c.l.b16 %v2140
        %v3464 = vunpack.c.h.b16 %v2140
        %v3465 = vunpack.c.l.b16 %v2141
        %v3466 = vunpack.c.h.b16 %v2141
        %v3467 = vunpack.c.l.b16 %v2142
        %v3468 = vunpack.c.h.b16 %v2142
        %v3469 = vunpack.c.l.b16 %v2143
        %v3470 = vunpack.c.h.b16 %v2143
        %v3471 = vunpack.c.l.b16 %v2144
        %v3472 = vunpack.c.h.b16 %v2144
        %v3473 = vunpack.c.l.b16 %v2145
        %v3474 = vunpack.c.h.b16 %v2145
        %v3475 = vunpack.c.l.b16 %v2146
        %v3476 = vunpack.c.h.b16 %v2146
        %v3477 = vunpack.c.l.b16 %v2147
        %v3478 = vunpack.c.h.b16 %v2147
        %v3479 = vunpack.c.l.b16 %v2148
        %v3480 = vunpack.c.h.b16 %v2148
        %v3481 = vunpack.c.l.b16 %v2149
        %v3482 = vunpack.c.h.b16 %v2149
        %v3483 = vunpack.c.l.b16 %v2150
        %v3484 = vunpack.c.h.b16 %v2150
        %v3485 = vunpack.c.l.b16 %v2151
        %v3486 = vunpack.c.h.b16 %v2151
        %v3487 = vunpack.c.l.b16 %v2152
        %v3488 = vunpack.c.h.b16 %v2152
        %v3489 = vunpack.c.l.b16 %v2153
        %v3490 = vunpack.c.h.b16 %v2153
        %v3491 = vunpack.c.l.b16 %v2154
        %v3492 = vunpack.c.h.b16 %v2154
        %v3493 = vunpack.c.l.b16 %v2155
        %v3494 = vunpack.c.h.b16 %v2155
        %v3495 = vunpack.c.l.b16 %v2156
        %v3496 = vunpack.c.h.b16 %v2156
        %v3497 = vunpack.c.l.b16 %v2157
        %v3498 = vunpack.c.h.b16 %v2157
        %v3499 = vunpack.c.l.b16 %v2158
        %v3500 = vunpack.c.h.b16 %v2158
        %v3501 = vunpack.c.l.b16 %v2159
        %v3502 = vunpack.c.h.b16 %v2159
        %v3503 = vunpack.c.l.b16 %v2160
        %v3504 = vunpack.c.h.b16 %v2160
        %v3505 = vunpack.c.l.b16 %v2161
        %v3506 = vunpack.c.h.b16 %v2161
        %v3507 = vunpack.c.l.b16 %v2162
        %v3508 = vunpack.c.h.b16 %v2162
        %v3509 = vunpack.c.l.b16 %v2163
        %v3510 = vunpack.c.h.b16 %v2163
        %v3511 = vunpack.c.l.b16 %v2164
        %v3512 = vunpack.c.h.b16 %v2164
        %v3513 = vunpack.c.l.b16 %v2165
        %v3514 = vunpack.c.h.b16 %v2165
        %v3515 = vunpack.c.l.b16 %v2166
        %v3516 = vunpack.c.h.b16 %v2166
        %v3517 = vunpack.c.l.b16 %v2167
        %v3518 = vunpack.c.h.b16 %v2167
        %v3519 = vunpack.c.l.b16 %v2168
        %v3520 = vunpack.c.h.b16 %v2168
        %v3521 = vunpack.c.l.b16 %v2169
        %v3522 = vunpack.c.h.b16 %v2169
        %v3523 = vunpack.c.l.b16 %v2170
        %v3524 = vunpack.c.h.b16 %v2170
        %v3525 = vunpack.c.l.b16 %v2171
        %v3526 = vunpack.c.h.b16 %v2171
        %v3527 = vunpack.c.l.b16 %v2172
        %v3528 = vunpack.c.h.b16 %v2172
        %v3529 = vunpack.c.l.b16 %v2173
        %v3530 = vunpack.c.h.b16 %v2173
        %v3531 = vunpack.c.l.b16 %v2174
        %v3532 = vunpack.c.h.b16 %v2174
        %v3533 = vunpack.c.l.b16 %v2175
        %v3534 = vunpack.c.h.b16 %v2175
        %v3535 = vunpack.c.l.b16 %v2176
        %v3536 = vunpack.c.h.b16 %v2176
        %v3537 = vunpack.c.l.b16 %v2177
        %v3538 = vunpack.c.h.b16 %v2177
        %v3539 = vunpack.c.l.b16 %v2178
        %v3540 = vunpack.c.h.b16 %v2178
        %v3541 = vunpack.c.l.b16 %v2179
        %v3542 = vunpack.c.h.b16 %v2179
        %v3543 = vunpack.c.l.b16 %v2180
        %v3544 = vunpack.c.h.b16 %v2180
        %v3545 = vunpack.c.l.b16 %v2181
        %v3546 = vunpack.c.h.b16 %v2181
        %v3547 = vunpack.c.l.b16 %v2182
        %v3548 = vunpack.c.h.b16 %v2182
        %v3549 = vunpack.c.l.b16 %v2183
        %v3550 = vunpack.c.h.b16 %v2183
        %v3551 = vunpack.c.l.b16 %v2184
        %v3552 = vunpack.c.h.b16 %v2184
        %v3553 = vunpack.c.l.b16 %v2185
        %v3554 = vunpack.c.h.b16 %v2185
        %v3555 = vunpack.c.l.b16 %v2186
        %v3556 = vunpack.c.h.b16 %v2186
        %v3557 = vunpack.c.l.b16 %v2187
        %v3558 = vunpack.c.h.b16 %v2187
        %v3559 = vunpack.c.l.b16 %v2188
        %v3560 = vunpack.c.h.b16 %v2188
        %v3561 = vunpack.c.l.b16 %v2189
        %v3562 = vunpack.c.h.b16 %v2189
        %v3563 = vunpack.c.l.b16 %v2190
        %v3564 = vunpack.c.h.b16 %v2190
        %v3565 = vunpack.c.l.b16 %v2191
        %v3566 = vunpack.c.h.b16 %v2191
        %v3567 = vunpack.c.l.b16 %v2192
        %v3568 = vunpack.c.h.b16 %v2192
        %v3569 = vunpack.c.l.b16 %v2193
        %v3570 = vunpack.c.h.b16 %v2193
        %v3571 = vunpack.c.l.b16 %v2194
        %v3572 = vunpack.c.h.b16 %v2194
        %v3573 = vunpack.c.l.b16 %v2195
        %v3574 = vunpack.c.h.b16 %v2195
        %v3575 = vunpack.c.l.b16 %v2196
        %v3576 = vunpack.c.h.b16 %v2196
        %v3577 = vunpack.c.l.b16 %v2197
        %v3578 = vunpack.c.h.b16 %v2197
        %v3579 = vunpack.c.l.b16 %v2198
        %v3580 = vunpack.c.h.b16 %v2198
        %v3581 = vunpack.c.l.b16 %v2199
        %v3582 = vunpack.c.h.b16 %v2199
        %v3583 = vunpack.c.l.b16 %v2200
        %v3584 = vunpack.c.h.b16 %v2200
        %v3585 = vunpack.c.l.b16 %v2201
        %v3586 = vunpack.c.h.b16 %v2201
        %v3587 = vunpack.c.l.b16 %v2202
        %v3588 = vunpack.c.h.b16 %v2202
        %v3589 = vunpack.c.l.b16 %v2203
        %v3590 = vunpack.c.h.b16 %v2203
        %v3591 = vunpack.c.l.b16 %v2204
        %v3592 = vunpack.c.h.b16 %v2204
        %v3593 = vunpack.c.l.b16 %v2205
        %v3594 = vunpack.c.h.b16 %v2205
        %v3595 = vunpack.c.l.b16 %v2206
        %v3596 = vunpack.c.h.b16 %v2206
        %v3597 = vunpack.c.l.b16 %v2207
        %v3598 = vunpack.c.h.b16 %v2207
        %v3599 = vunpack.c.l.b16 %v2208
        %v3600 = vunpack.c.h.b16 %v2208
        %v3601 = vunpack.c.l.b16 %v2209
        %v3602 = vunpack.c.h.b16 %v2209
        %v3603 = vunpack.c.l.b16 %v2210
        %v3604 = vunpack.c.h.b16 %v2210
        %v3605 = vunpack.c.l.b16 %v2211
        %v3606 = vunpack.c.h.b16 %v2211
        %v3607 = vunpack.c.l.b16 %v2212
        %v3608 = vunpack.c.h.b16 %v2212
        %v3609 = vunpack.c.l.b16 %v2213
        %v3610 = vunpack.c.h.b16 %v2213
        %v3611 = vunpack.c.l.b16 %v2214
        %v3612 = vunpack.c.h.b16 %v2214
        %v3613 = vunpack.c.l.b16 %v2215
        %v3614 = vunpack.c.h.b16 %v2215
        %v3615 = vunpack.c.l.b16 %v2216
        %v3616 = vunpack.c.h.b16 %v2216
        %v3617 = vunpack.c.l.b16 %v2217
        %v3618 = vunpack.c.h.b16 %v2217
        %v3619 = vunpack.c.l.b16 %v2218
        %v3620 = vunpack.c.h.b16 %v2218
        %v3621 = vunpack.c.l.b16 %v2219
        %v3622 = vunpack.c.h.b16 %v2219
        %v3623 = vunpack.c.l.b16 %v2220
        %v3624 = vunpack.c.h.b16 %v2220
        %v3625 = vunpack.c.l.b16 %v2221
        %v3626 = vunpack.c.h.b16 %v2221
        %v3627 = vunpack.c.l.b16 %v2222
        %v3628 = vunpack.c.h.b16 %v2222
        %v3629 = vunpack.c.l.b16 %v2223
        %v3630 = vunpack.c.h.b16 %v2223
        %v3631 = vunpack.c.l.b16 %v2224
        %v3632 = vunpack.c.h.b16 %v2224
        %v3633 = vunpack.c.l.b16 %v2225
        %v3634 = vunpack.c.h.b16 %v2225
        %v3635 = vunpack.c.l.b16 %v2226
        %v3636 = vunpack.c.h.b16 %v2226
        %v3637 = vunpack.c.l.b16 %v2227
        %v3638 = vunpack.c.h.b16 %v2227
        %v3639 = vunpack.c.l.b16 %v2228
        %v3640 = vunpack.c.h.b16 %v2228
        %v3641 = vunpack.c.l.b16 %v2229
        %v3642 = vunpack.c.h.b16 %v2229
        %v3643 = vunpack.c.l.b16 %v2230
        %v3644 = vunpack.c.h.b16 %v2230
        %v3645 = vunpack.c.l.b16 %v2231
        %v3646 = vunpack.c.h.b16 %v2231
        %v3647 = vunpack.c.l.b16 %v2232
        %v3648 = vunpack.c.h.b16 %v2232
        %v3649 = vunpack.c.l.b16 %v2233
        %v3650 = vunpack.c.h.b16 %v2233
        %v3651 = vunpack.c.l.b16 %v2234
        %v3652 = vunpack.c.h.b16 %v2234
        %v3653 = vunpack.c.l.b16 %v2235
        %v3654 = vunpack.c.h.b16 %v2235
        %v3655 = vunpack.c.l.b16 %v2236
        %v3656 = vunpack.c.h.b16 %v2236
        %v3657 = vunpack.c.l.b16 %v2237
        %v3658 = vunpack.c.h.b16 %v2237
        %v3659 = vunpack.c.l.b16 %v2238
        %v3660 = vunpack.c.h.b16 %v2238
        %v3661 = vunpack.c.l.b16 %v2239
        %v3662 = vunpack.c.h.b16 %v2239
        %v3663 = vunpack.c.l.b16 %v2240
        %v3664 = vunpack.c.h.b16 %v2240
        %v3665 = vunpack.c.l.b16 %v2241
        %v3666 = vunpack.c.h.b16 %v2241
        %v3667 = vunpack.c.l.b16 %v2242
        %v3668 = vunpack.c.h.b16 %v2242
        %v3669 = vunpack.c.l.b16 %v2243
        %v3670 = vunpack.c.h.b16 %v2243
        %v3671 = vunpack.c.l.b16 %v2244
        %v3672 = vunpack.c.h.b16 %v2244
        %v3673 = vunpack.c.l.b16 %v2245
        %v3674 = vunpack.c.h.b16 %v2245
        %v3675 = vunpack.c.l.b16 %v2246
        %v3676 = vunpack.c.h.b16 %v2246
        %v3677 = vunpack.c.l.b16 %v2247
        %v3678 = vunpack.c.h.b16 %v2247
        %v3679 = vunpack.c.l.b16 %v2248
        %v3680 = vunpack.c.h.b16 %v2248
        %v3681 = vunpack.c.l.b16 %v2249
        %v3682 = vunpack.c.h.b16 %v2249
        %v3683 = vunpack.c.l.b16 %v2250
        %v3684 = vunpack.c.h.b16 %v2250
        %v3685 = vunpack.c.l.b16 %v2251
        %v3686 = vunpack.c.h.b16 %v2251
        %v3687 = vunpack.c.l.b16 %v2252
        %v3688 = vunpack.c.h.b16 %v2252
        %v3689 = vunpack.c.l.b16 %v2253
        %v3690 = vunpack.c.h.b16 %v2253
        %v3691 = vunpack.c.l.b16 %v2254
        %v3692 = vunpack.c.h.b16 %v2254
        %v3693 = vunpack.c.l.b16 %v2255
        %v3694 = vunpack.c.h.b16 %v2255
        %v3695 = vunpack.c.l.b16 %v2256
        %v3696 = vunpack.c.h.b16 %v2256
        %v3697 = vunpack.c.l.b16 %v2257
        %v3698 = vunpack.c.h.b16 %v2257
        %v3699 = vunpack.c.l.b16 %v2258
        %v3700 = vunpack.c.h.b16 %v2258
        %v3701 = vunpack.c.l.b16 %v2259
        %v3702 = vunpack.c.h.b16 %v2259
        %v3703 = vunpack.c.l.b16 %v2260
        %v3704 = vunpack.c.h.b16 %v2260
        %v3705 = vunpack.c.l.b16 %v2261
        %v3706 = vunpack.c.h.b16 %v2261
        %v3707 = vunpack.c.l.b16 %v2262
        %v3708 = vunpack.c.h.b16 %v2262
        %v3709 = vunpack.c.l.b16 %v2263
        %v3710 = vunpack.c.h.b16 %v2263
        %v3711 = vunpack.c.l.b16 %v2264
        %v3712 = vunpack.c.h.b16 %v2264
        %v3713 = vunpack.c.l.b16 %v2265
        %v3714 = vunpack.c.h.b16 %v2265
        %v3715 = vunpack.c.l.b16 %v2266
        %v3716 = vunpack.c.h.b16 %v2266
        %v3717 = vunpack.c.l.b16 %v2267
        %v3718 = vunpack.c.h.b16 %v2267
        %v3719 = vunpack.c.l.b16 %v2268
        %v3720 = vunpack.c.h.b16 %v2268
        %v3721 = vunpack.c.l.b16 %v2269
        %v3722 = vunpack.c.h.b16 %v2269
        %v3723 = vunpack.c.l.b16 %v2270
        %v3724 = vunpack.c.h.b16 %v2270
        %v3725 = vunpack.c.l.b16 %v2271
        %v3726 = vunpack.c.h.b16 %v2271
        %v3727 = vunpack.c.l.b16 %v2272
        %v3728 = vunpack.c.h.b16 %v2272
        %v3729 = vunpack.c.l.b16 %v2273
        %v3730 = vunpack.c.h.b16 %v2273
        %v3731 = vunpack.c.l.b16 %v2274
        %v3732 = vunpack.c.h.b16 %v2274
        %v3733 = vunpack.c.l.b16 %v2275
        %v3734 = vunpack.c.h.b16 %v2275
        %v3735 = vunpack.c.l.b16 %v2276
        %v3736 = vunpack.c.h.b16 %v2276
        %v3737 = vunpack.c.l.b16 %v2277
        %v3738 = vunpack.c.h.b16 %v2277
        %v3739 = vunpack.c.l.b16 %v2278
        %v3740 = vunpack.c.h.b16 %v2278
        %v3741 = vunpack.c.l.b16 %v2279
        %v3742 = vunpack.c.h.b16 %v2279
        %v3743 = vunpack.c.l.b16 %v2280
        %v3744 = vunpack.c.h.b16 %v2280
        %v3745 = vunpack.c.l.b16 %v2281
        %v3746 = vunpack.c.h.b16 %v2281
        %v3747 = vunpack.c.l.b16 %v2282
        %v3748 = vunpack.c.h.b16 %v2282
        %v3749 = vunpack.c.l.b16 %v2283
        %v3750 = vunpack.c.h.b16 %v2283
        %v3751 = vunpack.c.l.b16 %v2284
        %v3752 = vunpack.c.h.b16 %v2284
        %v3753 = vunpack.c.l.b16 %v2285
        %v3754 = vunpack.c.h.b16 %v2285
        %v3755 = vunpack.c.l.b16 %v2286
        %v3756 = vunpack.c.h.b16 %v2286
        %v3757 = vunpack.c.l.b16 %v2287
        %v3758 = vunpack.c.h.b16 %v2287
        %v3759 = vunpack.c.l.b16 %v2288
        %v3760 = vunpack.c.h.b16 %v2288
        %v3761 = vunpack.c.l.b16 %v2289
        %v3762 = vunpack.c.h.b16 %v2289
        %v3763 = vunpack.c.l.b16 %v2290
        %v3764 = vunpack.c.h.b16 %v2290
        %v3765 = vunpack.c.l.b16 %v2291
        %v3766 = vunpack.c.h.b16 %v2291
        %v3767 = vunpack.c.l.b16 %v2292
        %v3768 = vunpack.c.h.b16 %v2292
        %v3769 = vunpack.c.l.b16 %v2293
        %v3770 = vunpack.c.h.b16 %v2293
        %v3771 = vunpack.c.l.b16 %v2294
        %v3772 = vunpack.c.h.b16 %v2294
        %v3773 = vunpack.c.l.b16 %v2295
        %v3774 = vunpack.c.h.b16 %v2295
        %v3775 = vunpack.c.l.b16 %v2296
        %v3776 = vunpack.c.h.b16 %v2296
        %v3777 = vunpack.c.l.b16 %v2297
        %v3778 = vunpack.c.h.b16 %v2297
        %v3779 = vunpack.c.l.b16 %v2298
        %v3780 = vunpack.c.h.b16 %v2298
        %v3781 = vunpack.c.l.b16 %v2299
        %v3782 = vunpack.c.h.b16 %v2299
        %v3783 = vunpack.c.l.b16 %v2300
        %v3784 = vunpack.c.h.b16 %v2300
        %v3785 = vunpack.c.l.b16 %v2301
        %v3786 = vunpack.c.h.b16 %v2301
        %v3787 = vunpack.c.l.b16 %v2302
        %v3788 = vunpack.c.h.b16 %v2302
        %v3789 = vunpack.c.l.b16 %v2303
        %v3790 = vunpack.c.h.b16 %v2303
        %v3791 = vunpack.c.l.b16 %v2304
        %v3792 = vunpack.c.h.b16 %v2304
        %v3793 = vunpack.c.l.b16 %v2305
        %v3794 = vunpack.c.h.b16 %v2305
        %v3795 = vunpack.c.l.b16 %v2306
        %v3796 = vunpack.c.h.b16 %v2306
        %v3797 = vunpack.c.l.b16 %v2307
        %v3798 = vunpack.c.h.b16 %v2307
        %v3799 = vunpack.c.l.b16 %v2308
        %v3800 = vunpack.c.h.b16 %v2308
        %v3801 = vunpack.c.l.b16 %v2309
        %v3802 = vunpack.c.h.b16 %v2309
        %v3803 = vunpack.c.l.b16 %v2310
        %v3804 = vunpack.c.h.b16 %v2310
        %v3805 = vunpack.c.l.b16 %v2311
        %v3806 = vunpack.c.h.b16 %v2311
        %v3807 = vunpack.c.l.b16 %v2312
        %v3808 = vunpack.c.h.b16 %v2312
        %v3809 = vunpack.c.l.b16 %v2313
        %v3810 = vunpack.c.h.b16 %v2313
        %v3811 = vunpack.c.l.b16 %v2314
        %v3812 = vunpack.c.h.b16 %v2314
        %v3813 = vunpack.c.l.b16 %v2315
        %v3814 = vunpack.c.h.b16 %v2315
        %v3815 = vunpack.c.l.b16 %v2316
        %v3816 = vunpack.c.h.b16 %v2316
        %v3817 = vunpack.c.l.b16 %v2317
        %v3818 = vunpack.c.h.b16 %v2317
        %v3819 = vunpack.c.l.b16 %v2318
        %v3820 = vunpack.c.h.b16 %v2318
        %v3821 = vunpack.c.l.b16 %v2319
        %v3822 = vunpack.c.h.b16 %v2319
        %v3823 = vunpack.c.l.b16 %v2320
        %v3824 = vunpack.c.h.b16 %v2320
        %v3825 = vunpack.c.l.b16 %v2321
        %v3826 = vunpack.c.h.b16 %v2321
        %v3827 = vunpack.c.l.b16 %v2322
        %v3828 = vunpack.c.h.b16 %v2322
        %v3829 = vunpack.c.l.b16 %v2323
        %v3830 = vunpack.c.h.b16 %v2323
        %v3831 = vunpack.c.l.b16 %v2324
        %v3832 = vunpack.c.h.b16 %v2324
        %v3833 = vunpack.c.l.b16 %v2325
        %v3834 = vunpack.c.h.b16 %v2325
        %v3835 = vunpack.c.l.b16 %v2326
        %v3836 = vunpack.c.h.b16 %v2326
        %v3837 = vunpack.c.l.b16 %v2327
        %v3838 = vunpack.c.h.b16 %v2327
        %v3839 = vunpack.c.l.b16 %v2328
        %v3840 = vunpack.c.h.b16 %v2328
        %v3841 = vunpack.c.l.b16 %v2329
        %v3842 = vunpack.c.h.b16 %v2329
        %v3843 = vunpack.c.l.b16 %v2330
        %v3844 = vunpack.c.h.b16 %v2330
        %v3845 = vunpack.c.l.b16 %v2331
        %v3846 = vunpack.c.h.b16 %v2331
        %v3847 = vunpack.c.l.b16 %v2332
        %v3848 = vunpack.c.h.b16 %v2332
        %v3849 = vunpack.c.l.b16 %v2333
        %v3850 = vunpack.c.h.b16 %v2333
        %v3851 = vunpack.c.l.b16 %v2334
        %v3852 = vunpack.c.h.b16 %v2334
        %v3853 = vunpack.c.l.b16 %v2335
        %v3854 = vunpack.c.h.b16 %v2335
        %v3855 = vunpack.c.l.b16 %v2336
        %v3856 = vunpack.c.h.b16 %v2336
        %v3857 = vunpack.c.l.b16 %v2337
        %v3858 = vunpack.c.h.b16 %v2337
        %v3859 = vunpack.c.l.b16 %v2338
        %v3860 = vunpack.c.h.b16 %v2338
        %v3861 = vunpack.c.l.b16 %v2339
        %v3862 = vunpack.c.h.b16 %v2339
        %v3863 = vunpack.c.l.b16 %v2340
        %v3864 = vunpack.c.h.b16 %v2340
        %v3865 = vunpack.c.l.b16 %v2341
        %v3866 = vunpack.c.h.b16 %v2341
        %v3867 = vunpack.c.l.b16 %v2342
        %v3868 = vunpack.c.h.b16 %v2342
        %v3869 = vunpack.c.l.b16 %v2343
        %v3870 = vunpack.c.h.b16 %v2343
        %v3871 = vunpack.c.l.b16 %v2344
        %v3872 = vunpack.c.h.b16 %v2344
        %v3873 = vunpack.c.l.b16 %v2345
        %v3874 = vunpack.c.h.b16 %v2345
        %v3875 = vunpack.c.l.b16 %v2346
        %v3876 = vunpack.c.h.b16 %v2346
        %v3877 = vunpack.c.l.b16 %v2347
        %v3878 = vunpack.c.h.b16 %v2347
        %v3879 = vunpack.c.l.b16 %v2348
        %v3880 = vunpack.c.h.b16 %v2348
        %v3881 = vunpack.c.l.b16 %v2349
        %v3882 = vunpack.c.h.b16 %v2349
        %v3883 = vunpack.c.l.b16 %v2350
        %v3884 = vunpack.c.h.b16 %v2350
        %v3885 = vunpack.c.l.b16 %v2351
        %v3886 = vunpack.c.h.b16 %v2351
        %v3887 = vunpack.c.l.b16 %v2352
        %v3888 = vunpack.c.h.b16 %v2352
        %v3889 = vunpack.c.l.b16 %v2353
        %v3890 = vunpack.c.h.b16 %v2353
        %v3891 = vunpack.c.l.b16 %v2354
        %v3892 = vunpack.c.h.b16 %v2354
        %v3893 = vunpack.c.l.b16 %v2355
        %v3894 = vunpack.c.h.b16 %v2355
        %v3895 = vunpack.c.l.b16 %v2356
        %v3896 = vunpack.c.h.b16 %v2356
        %v3897 = vunpack.c.l.b16 %v2357
        %v3898 = vunpack.c.h.b16 %v2357
        %v3899 = vunpack.c.l.b16 %v2358
        %v3900 = vunpack.c.h.b16 %v2358
        %v3901 = vunpack.c.l.b16 %v2359
        %v3902 = vunpack.c.h.b16 %v2359
        %v3903 = vunpack.c.l.b16 %v2360
        %v3904 = vunpack.c.h.b16 %v2360
        %v3905 = vunpack.c.l.b16 %v2361
        %v3906 = vunpack.c.h.b16 %v2361
        %v3907 = vunpack.c.l.b16 %v2362
        %v3908 = vunpack.c.h.b16 %v2362
        %v3909 = vunpack.c.l.b16 %v2363
        %v3910 = vunpack.c.h.b16 %v2363
        %v3911 = vunpack.c.l.b16 %v2364
        %v3912 = vunpack.c.h.b16 %v2364
        %v3913 = vunpack.c.l.b16 %v2365
        %v3914 = vunpack.c.h.b16 %v2365
        %v3915 = vunpack.c.l.b16 %v2366
        %v3916 = vunpack.c.h.b16 %v2366
        %v3917 = vunpack.c.l.b16 %v2367
        %v3918 = vunpack.c.h.b16 %v2367
        %v3919 = vunpack.c.l.b16 %v2368
        %v3920 = vunpack.c.h.b16 %v2368
        %v3921 = vunpack.c.l.b16 %v2369
        %v3922 = vunpack.c.h.b16 %v2369
        %v3923 = vunpack.c.l.b16 %v2370
        %v3924 = vunpack.c.h.b16 %v2370
        %v3925 = vunpack.c.l.b16 %v2371
        %v3926 = vunpack.c.h.b16 %v2371
        %v3927 = vunpack.c.l.b16 %v2372
        %v3928 = vunpack.c.h.b16 %v2372
        %v3929 = vunpack.c.l.b16 %v2373
        %v3930 = vunpack.c.h.b16 %v2373
        %v3931 = vunpack.c.l.b16 %v2374
        %v3932 = vunpack.c.h.b16 %v2374
        %v3933 = vunpack.c.l.b16 %v2375
        %v3934 = vunpack.c.h.b16 %v2375
        %v3935 = vunpack.c.l.b16 %v2376
        %v3936 = vunpack.c.h.b16 %v2376
        %v3937 = vunpack.c.l.b16 %v2377
        %v3938 = vunpack.c.h.b16 %v2377
        %v3939 = vunpack.c.l.b16 %v2378
        %v3940 = vunpack.c.h.b16 %v2378
        %v3941 = vunpack.c.l.b16 %v2379
        %v3942 = vunpack.c.h.b16 %v2379
        %v3943 = vunpack.c.l.b16 %v2380
        %v3944 = vunpack.c.h.b16 %v2380
        %v3945 = vunpack.c.l.b16 %v2381
        %v3946 = vunpack.c.h.b16 %v2381
        %v3947 = vunpack.c.l.b16 %v2382
        %v3948 = vunpack.c.h.b16 %v2382
        %v3949 = vunpack.c.l.b16 %v2383
        %v3950 = vunpack.c.h.b16 %v2383
        %v3951 = vunpack.c.l.b16 %v2384
        %v3952 = vunpack.c.h.b16 %v2384
        %v3953 = vunpack.c.l.b16 %v2385
        %v3954 = vunpack.c.h.b16 %v2385
        %v3955 = vunpack.c.l.b16 %v2386
        %v3956 = vunpack.c.h.b16 %v2386
        %v3957 = vunpack.c.l.b16 %v2387
        %v3958 = vunpack.c.h.b16 %v2387
        %v3959 = vunpack.c.l.b16 %v2388
        %v3960 = vunpack.c.h.b16 %v2388
        %v3961 = vunpack.c.l.b16 %v2389
        %v3962 = vunpack.c.h.b16 %v2389
        %v3963 = vunpack.c.l.b16 %v2390
        %v3964 = vunpack.c.h.b16 %v2390
        %v3965 = vunpack.c.l.b16 %v2391
        %v3966 = vunpack.c.h.b16 %v2391
        %v3967 = vunpack.c.l.b16 %v2392
        %v3968 = vunpack.c.h.b16 %v2392
        %v3969 = vunpack.c.l.b16 %v2393
        %v3970 = vunpack.c.h.b16 %v2393
        %v3971 = vunpack.c.l.b16 %v2394
        %v3972 = vunpack.c.h.b16 %v2394
        %v3973 = vunpack.c.l.b16 %v2395
        %v3974 = vunpack.c.h.b16 %v2395
        %v3975 = vunpack.c.l.b16 %v2396
        %v3976 = vunpack.c.h.b16 %v2396
        %v3977 = vunpack.c.l.b16 %v2397
        %v3978 = vunpack.c.h.b16 %v2397
        %v3979 = vunpack.c.l.b16 %v2398
        %v3980 = vunpack.c.h.b16 %v2398
        %v3981 = vunpack.c.l.b16 %v2399
        %v3982 = vunpack.c.h.b16 %v2399
        %v3983 = vunpack.c.l.b16 %v2400
        %v3984 = vunpack.c.h.b16 %v2400
        %v3985 = vunpack.c.l.b16 %v2401
        %v3986 = vunpack.c.h.b16 %v2401
        %v3987 = vunpack.c.l.b16 %v2402
        %v3988 = vunpack.c.h.b16 %v2402
        %v3989 = vunpack.c.l.b16 %v2403
        %v3990 = vunpack.c.h.b16 %v2403
        %v3991 = vunpack.c.l.b16 %v2404
        %v3992 = vunpack.c.h.b16 %v2404
        %v3993 = vunpack.c.l.b16 %v2405
        %v3994 = vunpack.c.h.b16 %v2405
        %v3995 = vunpack.c.l.b16 %v2406
        %v3996 = vunpack.c.h.b16 %v2406
        %v3997 = vunpack.c.l.b16 %v2407
        %v3998 = vunpack.c.h.b16 %v2407
        %v3999 = vunpack.c.l.b16 %v2408
        %v4000 = vunpack.c.h.b16 %v2408
        %v4001 = vunpack.c.l.b16 %v2409
        %v4002 = vunpack.c.h.b16 %v2409
        %v4003 = vunpack.c.l.b16 %v2410
        %v4004 = vunpack.c.h.b16 %v2410
        %v4005 = vunpack.c.l.b16 %v2411
        %v4006 = vunpack.c.h.b16 %v2411
        %v4007 = vunpack.c.l.b16 %v2412
        %v4008 = vunpack.c.h.b16 %v2412
        %v4009 = vunpack.c.l.b16 %v2413
        %v4010 = vunpack.c.h.b16 %v2413
        %v4011 = vunpack.c.l.b16 %v2414
        %v4012 = vunpack.c.h.b16 %v2414
        %v4013 = vunpack.c.l.b16 %v2415
        %v4014 = vunpack.c.h.b16 %v2415
        %v4015 = vunpack.c.l.b16 %v2416
        %v4016 = vunpack.c.h.b16 %v2416
        %v4017 = vunpack.c.l.b16 %v2417
        %v4018 = vunpack.c.h.b16 %v2417
        %v4019 = vunpack.c.l.b16 %v2418
        %v4020 = vunpack.c.h.b16 %v2418
        %v4021 = vunpack.c.l.b16 %v2419
        %v4022 = vunpack.c.h.b16 %v2419
        %v4023 = vunpack.c.l.b16 %v2420
        %v4024 = vunpack.c.h.b16 %v2420
        %v4025 = vunpack.c.l.b16 %v2421
        %v4026 = vunpack.c.h.b16 %v2421
        %v4027 = vunpack.c.l.b16 %v2422
        %v4028 = vunpack.c.h.b16 %v2422
        %v4029 = vunpack.c.l.b16 %v2423
        %v4030 = vunpack.c.h.b16 %v2423
        %v4031 = vunpack.c.l.b16 %v2424
        %v4032 = vunpack.c.h.b16 %v2424
        %v4033 = vunpack.c.l.b16 %v2425
        %v4034 = vunpack.c.h.b16 %v2425
        %v4035 = vunpack.c.l.b16 %v2426
        %v4036 = vunpack.c.h.b16 %v2426
        %v4037 = vunpack.c.l.b16 %v2427
        %v4038 = vunpack.c.h.b16 %v2427
        %v4039 = vunpack.c.l.b16 %v2428
        %v4040 = vunpack.c.h.b16 %v2428
        %v4041 = vunpack.c.l.b16 %v2429
        %v4042 = vunpack.c.h.b16 %v2429
        %v4043 = vunpack.c.l.b16 %v2430
        %v4044 = vunpack.c.h.b16 %v2430
        %v4045 = vunpack.c.l.b16 %v2431
        %v4046 = vunpack.c.h.b16 %v2431
        %v4047 = vunpack.c.l.b16 %v2432
        %v4048 = vunpack.c.h.b16 %v2432
        %v4049 = vunpack.c.l.b16 %v2433
        %v4050 = vunpack.c.h.b16 %v2433
        %v4051 = vunpack.c.l.b16 %v2434
        %v4052 = vunpack.c.h.b16 %v2434
        %v4053 = vunpack.c.l.b16 %v2435
        %v4054 = vunpack.c.h.b16 %v2435
        %v4055 = vunpack.c.l.b16 %v2436
        %v4056 = vunpack.c.h.b16 %v2436
        %v4057 = vpack.c.b16 %v3049, %v3033
        %v4058 = vpack.c.b16 %v3050, %v3034
        %v4059 = vpack.c.b16 %v3051, %v3035
        %v4060 = vpack.c.b16 %v3052, %v3036
        %v4061 = vpack.c.b16 %v3053, %v3037
        %v4062 = vpack.c.b16 %v3054, %v3038
        %v4063 = vpack.c.b16 %v3055, %v3039
        %v4064 = vpack.c.b16 %v3056, %v3040
        %v4065 = vpack.c.b16 %v3057, %v3041
        %v4066 = vpack.c.b16 %v3058, %v3042
        %v4067 = vpack.c.b16 %v3059, %v3043
        %v4068 = vpack.c.b16 %v3060, %v3044
        %v4069 = vpack.c.b16 %v3061, %v3045
        %v4070 = vpack.c.b16 %v3062, %v3046
        %v4071 = vpack.c.b16 %v3063, %v3047
        %v4072 = vpack.c.b16 %v3064, %v3048
        %v4073 = vpack.c.b16 %v3081, %v3065
        %v4074 = vpack.c.b16 %v3082, %v3066
        %v4075 = vpack.c.b16 %v3083, %v3067
        %v4076 = vpack.c.b16 %v3084, %v3068
        %v4077 = vpack.c.b16 %v3085, %v3069
        %v4078 = vpack.c.b16 %v3086, %v3070
        %v4079 = vpack.c.b16 %v3087, %v3071
        %v4080 = vpack.c.b16 %v3088, %v3072
        %v4081 = vpack.c.b16 %v3089, %v3073
        %v4082 = vpack.c.b16 %v3090, %v3074
        %v4083 = vpack.c.b16 %v3091, %v3075
        %v4084 = vpack.c.b16 %v3092, %v3076
        %v4085 = vpack.c.b16 %v3093, %v3077
        %v4086 = vpack.c.b16 %v3094, %v3078
        %v4087 = vpack.c.b16 %v3095, %v3079
        %v4088 = vpack.c.b16 %v3096, %v3080
        %v4089 = vpack.c.b16 %v3113, %v3097
        %v4090 = vpack.c.b16 %v3114, %v3098
        %v4091 = vpack.c.b16 %v3115, %v3099
        %v4092 = vpack.c.b16 %v3116, %v3100
        %v4093 = vpack.c.b16 %v3117, %v3101
        %v4094 = vpack.c.b16 %v3118, %v3102
        %v4095 = vpack.c.b16 %v3119, %v3103
        %v4096 = vpack.c.b16 %v3120, %v3104
        %v4097 = vpack.c.b16 %v3121, %v3105
        %v4098 = vpack.c.b16 %v3122, %v3106
        %v4099 = vpack.c.b16 %v3123, %v3107
        %v4100 = vpack.c.b16 %v3124, %v3108
        %v4101 = vpack.c.b16 %v3125, %v3109
        %v4102 = vpack.c.b16 %v3126, %v3110
        %v4103 = vpack.c.b16 %v3127, %v3111
        %v4104 = vpack.c.b16 %v3128, %v3112
        %v4105 = vpack.c.b16 %v3145, %v3129
        %v4106 = vpack.c.b16 %v3146, %v3130
        %v4107 = vpack.c.b16 %v3147, %v3131
        %v4108 = vpack.c.b16 %v3148, %v3132
        %v4109 = vpack.c.b16 %v3149, %v3133
        %v4110 = vpack.c.b16 %v3150, %v3134
        %v4111 = vpack.c.b16 %v3151, %v3135
        %v4112 = vpack.c.b16 %v3152, %v3136
        %v4113 = vpack.c.b16 %v3153, %v3137
        %v4114 = vpack.c.b16 %v3154, %v3138
        %v4115 = vpack.c.b16 %v3155, %v3139
        %v4116 = vpack.c.b16 %v3156, %v3140
        %v4117 = vpack.c.b16 %v3157, %v3141
        %v4118 = vpack.c.b16 %v3158, %v3142
        %v4119 = vpack.c.b16 %v3159, %v3143
        %v4120 = vpack.c.b16 %v3160, %v3144
        %v4121 = vpack.c.b16 %v3177, %v3161
        %v4122 = vpack.c.b16 %v3178, %v3162
        %v4123 = vpack.c.b16 %v3179, %v3163
        %v4124 = vpack.c.b16 %v3180, %v3164
        %v4125 = vpack.c.b16 %v3181, %v3165
        %v4126 = vpack.c.b16 %v3182, %v3166
        %v4127 = vpack.c.b16 %v3183, %v3167
        %v4128 = vpack.c.b16 %v3184, %v3168
        %v4129 = vpack.c.b16 %v3185, %v3169
        %v4130 = vpack.c.b16 %v3186, %v3170
        %v4131 = vpack.c.b16 %v3187, %v3171
        %v4132 = vpack.c.b16 %v3188, %v3172
        %v4133 = vpack.c.b16 %v3189, %v3173
        %v4134 = vpack.c.b16 %v3190, %v3174
        %v4135 = vpack.c.b16 %v3191, %v3175
        %v4136 = vpack.c.b16 %v3192, %v3176
        %v4137 = vpack.c.b16 %v3209, %v3193
        %v4138 = vpack.c.b16 %v3210, %v3194
        %v4139 = vpack.c.b16 %v3211, %v3195
        %v4140 = vpack.c.b16 %v3212, %v3196
        %v4141 = vpack.c.b16 %v3213, %v3197
        %v4142 = vpack.c.b16 %v3214, %v3198
        %v4143 = vpack.c.b16 %v3215, %v3199
        %v4144 = vpack.c.b16 %v3216, %v3200
        %v4145 = vpack.c.b16 %v3217, %v3201
        %v4146 = vpack.c.b16 %v3218, %v3202
        %v4147 = vpack.c.b16 %v3219, %v3203
        %v4148 = vpack.c.b16 %v3220, %v3204
        %v4149 = vpack.c.b16 %v3221, %v3205
        %v4150 = vpack.c.b16 %v3222, %v3206
        %v4151 = vpack.c.b16 %v3223, %v3207
        %v4152 = vpack.c.b16 %v3224, %v3208
        %v4153 = vpack.c.b16 %v3241, %v3225
        %v4154 = vpack.c.b16 %v3242, %v3226
        %v4155 = vpack.c.b16 %v3243, %v3227
        %v4156 = vpack.c.b16 %v3244, %v3228
        %v4157 = vpack.c.b16 %v3245, %v3229
        %v4158 = vpack.c.b16 %v3246, %v3230
        %v4159 = vpack.c.b16 %v3247, %v3231
        %v4160 = vpack.c.b16 %v3248, %v3232
        %v4161 = vpack.c.b16 %v3249, %v3233
        %v4162 = vpack.c.b16 %v3250, %v3234
        %v4163 = vpack.c.b16 %v3251, %v3235
        %v4164 = vpack.c.b16 %v3252, %v3236
        %v4165 = vpack.c.b16 %v3253, %v3237
        %v4166 = vpack.c.b16 %v3254, %v3238
        %v4167 = vpack.c.b16 %v3255, %v3239
        %v4168 = vpack.c.b16 %v3256, %v3240
        %v4169 = vpack.c.b16 %v3273, %v3257
        %v4170 = vpack.c.b16 %v3274, %v3258
        %v4171 = vpack.c.b16 %v3275, %v3259
        %v4172 = vpack.c.b16 %v3276, %v3260
        %v4173 = vpack.c.b16 %v3277, %v3261
        %v4174 = vpack.c.b16 %v3278, %v3262
        %v4175 = vpack.c.b16 %v3279, %v3263
        %v4176 = vpack.c.b16 %v3280, %v3264
        %v4177 = vpack.c.b16 %v3281, %v3265
        %v4178 = vpack.c.b16 %v3282, %v3266
        %v4179 = vpack.c.b16 %v3283, %v3267
        %v4180 = vpack.c.b16 %v3284, %v3268
        %v4181 = vpack.c.b16 %v3285, %v3269
        %v4182 = vpack.c.b16 %v3286, %v3270
        %v4183 = vpack.c.b16 %v3287, %v3271
        %v4184 = vpack.c.b16 %v3288, %v3272
        %v4185 = vpack.c.b16 %v3305, %v3289
        %v4186 = vpack.c.b16 %v3306, %v3290
        %v4187 = vpack.c.b16 %v3307, %v3291
        %v4188 = vpack.c.b16 %v3308, %v3292
        %v4189 = vpack.c.b16 %v3309, %v3293
        %v4190 = vpack.c.b16 %v3310, %v3294
        %v4191 = vpack.c.b16 %v3311, %v3295
        %v4192 = vpack.c.b16 %v3312, %v3296
        %v4193 = vpack.c.b16 %v3313, %v3297
        %v4194 = vpack.c.b16 %v3314, %v3298
        %v4195 = vpack.c.b16 %v3315, %v3299
        %v4196 = vpack.c.b16 %v3316, %v3300
        %v4197 = vpack.c.b16 %v3317, %v3301
        %v4198 = vpack.c.b16 %v3318, %v3302
        %v4199 = vpack.c.b16 %v3319, %v3303
        %v4200 = vpack.c.b16 %v3320, %v3304
        %v4201 = vpack.c.b16 %v3337, %v3321
        %v4202 = vpack.c.b16 %v3338, %v3322
        %v4203 = vpack.c.b16 %v3339, %v3323
        %v4204 = vpack.c.b16 %v3340, %v3324
        %v4205 = vpack.c.b16 %v3341, %v3325
        %v4206 = vpack.c.b16 %v3342, %v3326
        %v4207 = vpack.c.b16 %v3343, %v3327
        %v4208 = vpack.c.b16 %v3344, %v3328
        %v4209 = vpack.c.b16 %v3345, %v3329
        %v4210 = vpack.c.b16 %v3346, %v3330
        %v4211 = vpack.c.b16 %v3347, %v3331
        %v4212 = vpack.c.b16 %v3348, %v3332
        %v4213 = vpack.c.b16 %v3349, %v3333
        %v4214 = vpack.c.b16 %v3350, %v3334
        %v4215 = vpack.c.b16 %v3351, %v3335
        %v4216 = vpack.c.b16 %v3352, %v3336
        %v4217 = vpack.c.b16 %v3369, %v3353
        %v4218 = vpack.c.b16 %v3370, %v3354
        %v4219 = vpack.c.b16 %v3371, %v3355
        %v4220 = vpack.c.b16 %v3372, %v3356
        %v4221 = vpack.c.b16 %v3373, %v3357
        %v4222 = vpack.c.b16 %v3374, %v3358
        %v4223 = vpack.c.b16 %v3375, %v3359
        %v4224 = vpack.c.b16 %v3376, %v3360
        %v4225 = vpack.c.b16 %v3377, %v3361
        %v4226 = vpack.c.b16 %v3378, %v3362
        %v4227 = vpack.c.b16 %v3379, %v3363
        %v4228 = vpack.c.b16 %v3380, %v3364
        %v4229 = vpack.c.b16 %v3381, %v3365
        %v4230 = vpack.c.b16 %v3382, %v3366
        %v4231 = vpack.c.b16 %v3383, %v3367
        %v4232 = vpack.c.b16 %v3384, %v3368
        %v4233 = vpack.c.b16 %v3401, %v3385
        %v4234 = vpack.c.b16 %v3402, %v3386
        %v4235 = vpack.c.b16 %v3403, %v3387
        %v4236 = vpack.c.b16 %v3404, %v3388
        %v4237 = vpack.c.b16 %v3405, %v3389
        %v4238 = vpack.c.b16 %v3406, %v3390
        %v4239 = vpack.c.b16 %v3407, %v3391
        %v4240 = vpack.c.b16 %v3408, %v3392
        %v4241 = vpack.c.b16 %v3409, %v3393
        %v4242 = vpack.c.b16 %v3410, %v3394
        %v4243 = vpack.c.b16 %v3411, %v3395
        %v4244 = vpack.c.b16 %v3412, %v3396
        %v4245 = vpack.c.b16 %v3413, %v3397
        %v4246 = vpack.c.b16 %v3414, %v3398
        %v4247 = vpack.c.b16 %v3415, %v3399
        %v4248 = vpack.c.b16 %v3416, %v3400
        %v4249 = vpack.c.b16 %v3433, %v3417
        %v4250 = vpack.c.b16 %v3434, %v3418
        %v4251 = vpack.c.b16 %v3435, %v3419
        %v4252 = vpack.c.b16 %v3436, %v3420
        %v4253 = vpack.c.b16 %v3437, %v3421
        %v4254 = vpack.c.b16 %v3438, %v3422
        %v4255 = vpack.c.b16 %v3439, %v3423
        %v4256 = vpack.c.b16 %v3440, %v3424
        %v4257 = vpack.c.b16 %v3441, %v3425
        %v4258 = vpack.c.b16 %v3442, %v3426
        %v4259 = vpack.c.b16 %v3443, %v3427
        %v4260 = vpack.c.b16 %v3444, %v3428
        %v4261 = vpack.c.b16 %v3445, %v3429
        %v4262 = vpack.c.b16 %v3446, %v3430
        %v4263 = vpack.c.b16 %v3447, %v3431
        %v4264 = vpack.c.b16 %v3448, %v3432
        %v4265 = vpack.c.b16 %v3465, %v3449
        %v4266 = vpack.c.b16 %v3466, %v3450
        %v4267 = vpack.c.b16 %v3467, %v3451
        %v4268 = vpack.c.b16 %v3468, %v3452
        %v4269 = vpack.c.b16 %v3469, %v3453
        %v4270 = vpack.c.b16 %v3470, %v3454
        %v4271 = vpack.c.b16 %v3471, %v3455
        %v4272 = vpack.c.b16 %v3472, %v3456
        %v4273 = vpack.c.b16 %v3473, %v3457
        %v4274 = vpack.c.b16 %v3474, %v3458
        %v4275 = vpack.c.b16 %v3475, %v3459
        %v4276 = vpack.c.b16 %v3476, %v3460
        %v4277 = vpack.c.b16 %v3477, %v3461
        %v4278 = vpack.c.b16 %v3478, %v3462
        %v4279 = vpack.c.b16 %v3479, %v3463
        %v4280 = vpack.c.b16 %v3480, %v3464
        %v4281 = vpack.c.b16 %v3497, %v3481
        %v4282 = vpack.c.b16 %v3498, %v3482
        %v4283 = vpack.c.b16 %v3499, %v3483
        %v4284 = vpack.c.b16 %v3500, %v3484
        %v4285 = vpack.c.b16 %v3501, %v3485
        %v4286 = vpack.c.b16 %v3502, %v3486
        %v4287 = vpack.c.b16 %v3503, %v3487
        %v4288 = vpack.c.b16 %v3504, %v3488
        %v4289 = vpack.c.b16 %v3505, %v3489
        %v4290 = vpack.c.b16 %v3506, %v3490
        %v4291 = vpack.c.b16 %v3507, %v3491
        %v4292 = vpack.c.b16 %v3508, %v3492
        %v4293 = vpack.c.b16 %v3509, %v3493
        %v4294 = vpack.c.b16 %v3510, %v3494
        %v4295 = vpack.c.b16 %v3511, %v3495
        %v4296 = vpack.c.b16 %v3512, %v3496
        %v4297 = vpack.c.b16 %v3529, %v3513
        %v4298 = vpack.c.b16 %v3530, %v3514
        %v4299 = vpack.c.b16 %v3531, %v3515
        %v4300 = vpack.c.b16 %v3532, %v3516
        %v4301 = vpack.c.b16 %v3533, %v3517
        %v4302 = vpack.c.b16 %v3534, %v3518
        %v4303 = vpack.c.b16 %v3535, %v3519
        %v4304 = vpack.c.b16 %v3536, %v3520
        %v4305 = vpack.c.b16 %v3537, %v3521
        %v4306 = vpack.c.b16 %v3538, %v3522
        %v4307 = vpack.c.b16 %v3539, %v3523
        %v4308 = vpack.c.b16 %v3540, %v3524
        %v4309 = vpack.c.b16 %v3541, %v3525
        %v4310 = vpack.c.b16 %v3542, %v3526
        %v4311 = vpack.c.b16 %v3543, %v3527
        %v4312 = vpack.c.b16 %v3544, %v3528
        %v4313 = vpack.c.b16 %v3561, %v3545
        %v4314 = vpack.c.b16 %v3562, %v3546
        %v4315 = vpack.c.b16 %v3563, %v3547
        %v4316 = vpack.c.b16 %v3564, %v3548
        %v4317 = vpack.c.b16 %v3565, %v3549
        %v4318 = vpack.c.b16 %v3566, %v3550
        %v4319 = vpack.c.b16 %v3567, %v3551
        %v4320 = vpack.c.b16 %v3568, %v3552
        %v4321 = vpack.c.b16 %v3569, %v3553
        %v4322 = vpack.c.b16 %v3570, %v3554
        %v4323 = vpack.c.b16 %v3571, %v3555
        %v4324 = vpack.c.b16 %v3572, %v3556
        %v4325 = vpack.c.b16 %v3573, %v3557
        %v4326 = vpack.c.b16 %v3574, %v3558
        %v4327 = vpack.c.b16 %v3575, %v3559
        %v4328 = vpack.c.b16 %v3576, %v3560
        %v4329 = vpack.c.b16 %v3593, %v3577
        %v4330 = vpack.c.b16 %v3594, %v3578
        %v4331 = vpack.c.b16 %v3595, %v3579
        %v4332 = vpack.c.b16 %v3596, %v3580
        %v4333 = vpack.c.b16 %v3597, %v3581
        %v4334 = vpack.c.b16 %v3598, %v3582
        %v4335 = vpack.c.b16 %v3599, %v3583
        %v4336 = vpack.c.b16 %v3600, %v3584
        %v4337 = vpack.c.b16 %v3601, %v3585
        %v4338 = vpack.c.b16 %v3602, %v3586
        %v4339 = vpack.c.b16 %v3603, %v3587
        %v4340 = vpack.c.b16 %v3604, %v3588
        %v4341 = vpack.c.b16 %v3605, %v3589
        %v4342 = vpack.c.b16 %v3606, %v3590
        %v4343 = vpack.c.b16 %v3607, %v3591
        %v4344 = vpack.c.b16 %v3608, %v3592
        %v4345 = vpack.c.b16 %v3625, %v3609
        %v4346 = vpack.c.b16 %v3626, %v3610
        %v4347 = vpack.c.b16 %v3627, %v3611
        %v4348 = vpack.c.b16 %v3628, %v3612
        %v4349 = vpack.c.b16 %v3629, %v3613
        %v4350 = vpack.c.b16 %v3630, %v3614
        %v4351 = vpack.c.b16 %v3631, %v3615
        %v4352 = vpack.c.b16 %v3632, %v3616
        %v4353 = vpack.c.b16 %v3633, %v3617
        %v4354 = vpack.c.b16 %v3634, %v3618
        %v4355 = vpack.c.b16 %v3635, %v3619
        %v4356 = vpack.c.b16 %v3636, %v3620
        %v4357 = vpack.c.b16 %v3637, %v3621
        %v4358 = vpack.c.b16 %v3638, %v3622
        %v4359 = vpack.c.b16 %v3639, %v3623
        %v4360 = vpack.c.b16 %v3640, %v3624
        %v4361 = vpack.c.b16 %v3657, %v3641
        %v4362 = vpack.c.b16 %v3658, %v3642
        %v4363 = vpack.c.b16 %v3659, %v3643
        %v4364 = vpack.c.b16 %v3660, %v3644
        %v4365 = vpack.c.b16 %v3661, %v3645
        %v4366 = vpack.c.b16 %v3662, %v3646
        %v4367 = vpack.c.b16 %v3663, %v3647
        %v4368 = vpack.c.b16 %v3664, %v3648
        %v4369 = vpack.c.b16 %v3665, %v3649
        %v4370 = vpack.c.b16 %v3666, %v3650
        %v4371 = vpack.c.b16 %v3667, %v3651
        %v4372 = vpack.c.b16 %v3668, %v3652
        %v4373 = vpack.c.b16 %v3669, %v3653
        %v4374 = vpack.c.b16 %v3670, %v3654
        %v4375 = vpack.c.b16 %v3671, %v3655
        %v4376 = vpack.c.b16 %v3672, %v3656
        %v4377 = vpack.c.b16 %v3689, %v3673
        %v4378 = vpack.c.b16 %v3690, %v3674
        %v4379 = vpack.c.b16 %v3691, %v3675
        %v4380 = vpack.c.b16 %v3692, %v3676
        %v4381 = vpack.c.b16 %v3693, %v3677
        %v4382 = vpack.c.b16 %v3694, %v3678
        %v4383 = vpack.c.b16 %v3695, %v3679
        %v4384 = vpack.c.b16 %v3696, %v3680
        %v4385 = vpack.c.b16 %v3697, %v3681
        %v4386 = vpack.c.b16 %v3698, %v3682
        %v4387 = vpack.c.b16 %v3699, %v3683
        %v4388 = vpack.c.b16 %v3700, %v3684
        %v4389 = vpack.c.b16 %v3701, %v3685
        %v4390 = vpack.c.b16 %v3702, %v3686
        %v4391 = vpack.c.b16 %v3703, %v3687
        %v4392 = vpack.c.b16 %v3704, %v3688
        %v4393 = vpack.c.b16 %v3721, %v3705
        %v4394 = vpack.c.b16 %v3722, %v3706
        %v4395 = vpack.c.b16 %v3723, %v3707
        %v4396 = vpack.c.b16 %v3724, %v3708
        %v4397 = vpack.c.b16 %v3725, %v3709
        %v4398 = vpack.c.b16 %v3726, %v3710
        %v4399 = vpack.c.b16 %v3727, %v3711
        %v4400 = vpack.c.b16 %v3728, %v3712
        %v4401 = vpack.c.b16 %v3729, %v3713
        %v4402 = vpack.c.b16 %v3730, %v3714
        %v4403 = vpack.c.b16 %v3731, %v3715
        %v4404 = vpack.c.b16 %v3732, %v3716
        %v4405 = vpack.c.b16 %v3733, %v3717
        %v4406 = vpack.c.b16 %v3734, %v3718
        %v4407 = vpack.c.b16 %v3735, %v3719
        %v4408 = vpack.c.b16 %v3736, %v3720
        %v4409 = vpack.c.b16 %v3753, %v3737
        %v4410 = vpack.c.b16 %v3754, %v3738
        %v4411 = vpack.c.b16 %v3755, %v3739
        %v4412 = vpack.c.b16 %v3756, %v3740
        %v4413 = vpack.c.b16 %v3757, %v3741
        %v4414 = vpack.c.b16 %v3758, %v3742
        %v4415 = vpack.c.b16 %v3759, %v3743
        %v4416 = vpack.c.b16 %v3760, %v3744
        %v4417 = vpack.c.b16 %v3761, %v3745
        %v4418 = vpack.c.b16 %v3762, %v3746
        %v4419 = vpack.c.b16 %v3763, %v3747
        %v4420 = vpack.c.b16 %v3764, %v3748
        %v4421 = vpack.c.b16 %v3765, %v3749
        %v4422 = vpack.c.b16 %v3766, %v3750
        %v4423 = vpack.c.b16 %v3767, %v3751
        %v4424 = vpack.c.b16 %v3768, %v3752
        %v4425 = vpack.c.b16 %v3785, %v3769
        %v4426 = vpack.c.b16 %v3786, %v3770
        %v4427 = vpack.c.b16 %v3787, %v3771
        %v4428 = vpack.c.b16 %v3788, %v3772
        %v4429 = vpack.c.b16 %v3789, %v3773
        %v4430 = vpack.c.b16 %v3790, %v3774
        %v4431 = vpack.c.b16 %v3791, %v3775
        %v4432 = vpack.c.b16 %v3792, %v3776
        %v4433 = vpack.c.b16 %v3793, %v3777
        %v4434 = vpack.c.b16 %v3794, %v3778
        %v4435 = vpack.c.b16 %v3795, %v3779
        %v4436 = vpack.c.b16 %v3796, %v3780
        %v4437 = vpack.c.b16 %v3797, %v3781
        %v4438 = vpack.c.b16 %v3798, %v3782
        %v4439 = vpack.c.b16 %v3799, %v3783
        %v4440 = vpack.c.b16 %v3800, %v3784
        %v4441 = vpack.c.b16 %v3817, %v3801
        %v4442 = vpack.c.b16 %v3818, %v3802
        %v4443 = vpack.c.b16 %v3819, %v3803
        %v4444 = vpack.c.b16 %v3820, %v3804
        %v4445 = vpack.c.b16 %v3821, %v3805
        %v4446 = vpack.c.b16 %v3822, %v3806
        %v4447 = vpack.c.b16 %v3823, %v3807
        %v4448 = vpack.c.b16 %v3824, %v3808
        %v4449 = vpack.c.b16 %v3825, %v3809
        %v4450 = vpack.c.b16 %v3826, %v3810
        %v4451 = vpack.c.b16 %v3827, %v3811
        %v4452 = vpack.c.b16 %v3828, %v3812
        %v4453 = vpack.c.b16 %v3829, %v3813
        %v4454 = vpack.c.b16 %v3830, %v3814
        %v4455 = vpack.c.b16 %v3831, %v3815
        %v4456 = vpack.c.b16 %v3832, %v3816
        %v4457 = vpack.c.b16 %v3849, %v3833
        %v4458 = vpack.c.b16 %v3850, %v3834
        %v4459 = vpack.c.b16 %v3851, %v3835
        %v4460 = vpack.c.b16 %v3852, %v3836
        %v4461 = vpack.c.b16 %v3853, %v3837
        %v4462 = vpack.c.b16 %v3854, %v3838
        %v4463 = vpack.c.b16 %v3855, %v3839
        %v4464 = vpack.c.b16 %v3856, %v3840
        %v4465 = vpack.c.b16 %v3857, %v3841
        %v4466 = vpack.c.b16 %v3858, %v3842
        %v4467 = vpack.c.b16 %v3859, %v3843
        %v4468 = vpack.c.b16 %v3860, %v3844
        %v4469 = vpack.c.b16 %v3861, %v3845
        %v4470 = vpack.c.b16 %v3862, %v3846
        %v4471 = vpack.c.b16 %v3863, %v3847
        %v4472 = vpack.c.b16 %v3864, %v3848
        %v4473 = vpack.c.b16 %v3881, %v3865
        %v4474 = vpack.c.b16 %v3882, %v3866
        %v4475 = vpack.c.b16 %v3883, %v3867
        %v4476 = vpack.c.b16 %v3884, %v3868
        %v4477 = vpack.c.b16 %v3885, %v3869
        %v4478 = vpack.c.b16 %v3886, %v3870
        %v4479 = vpack.c.b16 %v3887, %v3871
        %v4480 = vpack.c.b16 %v3888, %v3872
        %v4481 = vpack.c.b16 %v3889, %v3873
        %v4482 = vpack.c.b16 %v3890, %v3874
        %v4483 = vpack.c.b16 %v3891, %v3875
        %v4484 = vpack.c.b16 %v3892, %v3876
        %v4485 = vpack.c.b16 %v3893, %v3877
        %v4486 = vpack.c.b16 %v3894, %v3878
        %v4487 = vpack.c.b16 %v3895, %v3879
        %v4488 = vpack.c.b16 %v3896, %v3880
        %v4489 = vpack.c.b16 %v3913, %v3897
        %v4490 = vpack.c.b16 %v3914, %v3898
        %v4491 = vpack.c.b16 %v3915, %v3899
        %v4492 = vpack.c.b16 %v3916, %v3900
        %v4493 = vpack.c.b16 %v3917, %v3901
        %v4494 = vpack.c.b16 %v3918, %v3902
        %v4495 = vpack.c.b16 %v3919, %v3903
        %v4496 = vpack.c.b16 %v3920, %v3904
        %v4497 = vpack.c.b16 %v3921, %v3905
        %v4498 = vpack.c.b16 %v3922, %v3906
        %v4499 = vpack.c.b16 %v3923, %v3907
        %v4500 = vpack.c.b16 %v3924, %v3908
        %v4501 = vpack.c.b16 %v3925, %v3909
        %v4502 = vpack.c.b16 %v3926, %v3910
        %v4503 = vpack.c.b16 %v3927, %v3911
        %v4504 = vpack.c.b16 %v3928, %v3912
        %v4505 = vpack.c.b16 %v3945, %v3929
        %v4506 = vpack.c.b16 %v3946, %v3930
        %v4507 = vpack.c.b16 %v3947, %v3931
        %v4508 = vpack.c.b16 %v3948, %v3932
        %v4509 = vpack.c.b16 %v3949, %v3933
        %v4510 = vpack.c.b16 %v3950, %v3934
        %v4511 = vpack.c.b16 %v3951, %v3935
        %v4512 = vpack.c.b16 %v3952, %v3936
        %v4513 = vpack.c.b16 %v3953, %v3937
        %v4514 = vpack.c.b16 %v3954, %v3938
        %v4515 = vpack.c.b16 %v3955, %v3939
        %v4516 = vpack.c.b16 %v3956, %v3940
        %v4517 = vpack.c.b16 %v3957, %v3941
        %v4518 = vpack.c.b16 %v3958, %v3942
        %v4519 = vpack.c.b16 %v3959, %v3943
        %v4520 = vpack.c.b16 %v3960, %v3944
        %v4521 = vpack.c.b16 %v3977, %v3961
        %v4522 = vpack.c.b16 %v3978, %v3962
        %v4523 = vpack.c.b16 %v3979, %v3963
        %v4524 = vpack.c.b16 %v3980, %v3964
        %v4525 = vpack.c.b16 %v3981, %v3965
        %v4526 = vpack.c.b16 %v3982, %v3966
        %v4527 = vpack.c.b16 %v3983, %v3967
        %v4528 = vpack.c.b16 %v3984, %v3968
        %v4529 = vpack.c.b16 %v3985, %v3969
        %v4530 = vpack.c.b16 %v3986, %v3970
        %v4531 = vpack.c.b16 %v3987, %v3971
        %v4532 = vpack.c.b16 %v3988, %v3972
        %v4533 = vpack.c.b16 %v3989, %v3973
        %v4534 = vpack.c.b16 %v3990, %v3974
        %v4535 = vpack.c.b16 %v3991, %v3975
        %v4536 = vpack.c.b16 %v3992, %v3976
        %v4537 = vpack.c.b16 %v4009, %v3993
        %v4538 = vpack.c.b16 %v4010, %v3994
        %v4539 = vpack.c.b16 %v4011, %v3995
        %v4540 = vpack.c.b16 %v4012, %v3996
        %v4541 = vpack.c.b16 %v4013, %v3997
        %v4542 = vpack.c.b16 %v4014, %v3998
        %v4543 = vpack.c.b16 %v4015, %v3999
        %v4544 = vpack.c.b16 %v4016, %v4000
        %v4545 = vpack.c.b16 %v4017, %v4001
        %v4546 = vpack.c.b16 %v4018, %v4002
        %v4547 = vpack.c.b16 %v4019, %v4003
        %v4548 = vpack.c.b16 %v4020, %v4004
        %v4549 = vpack.c.b16 %v4021, %v4005
        %v4550 = vpack.c.b16 %v4022, %v4006
        %v4551 = vpack.c.b16 %v4023, %v4007
        %v4552 = vpack.c.b16 %v4024, %v4008
        %v4553 = vpack.c.b16 %v4041, %v4025
        %v4554 = vpack.c.b16 %v4042, %v4026
        %v4555 = vpack.c.b16 %v4043, %v4027
        %v4556 = vpack.c.b16 %v4044, %v4028
        %v4557 = vpack.c.b16 %v4045, %v4029
        %v4558 = vpack.c.b16 %v4046, %v4030
        %v4559 = vpack.c.b16 %v4047, %v4031
        %v4560 = vpack.c.b16 %v4048, %v4032
        %v4561 = vpack.c.b16 %v4049, %v4033
        %v4562 = vpack.c.b16 %v4050, %v4034
        %v4563 = vpack.c.b16 %v4051, %v4035
        %v4564 = vpack.c.b16 %v4052, %v4036
        %v4565 = vpack.c.b16 %v4053, %v4037
        %v4566 = vpack.c.b16 %v4054, %v4038
        %v4567 = vpack.c.b16 %v4055, %v4039
        %v4568 = vpack.c.b16 %v4056, %v4040
        %5081 = vmatprep.subr.bf16.mxu0 %v4058
        %5082 = vmatpush1.bf16.msra.mxu0 %v4057
        %5083 = vmatprep.subr.bf16.mxu0 %v4074
        %5084 = vmatpush1.bf16.msra.mxu0 %v4073
        %5085 = vmatprep.subr.bf16.mxu0 %v4090
        %5086 = vmatpush1.bf16.msra.mxu0 %v4089
        %5087 = vmatprep.subr.bf16.mxu0 %v4106
        %5088 = vmatpush1.bf16.msra.mxu0 %v4105
        %5089 = vmatprep.subr.bf16.mxu0 %v4122
        %5090 = vmatpush1.bf16.msra.mxu0 %v4121
        %5091 = vmatprep.subr.bf16.mxu0 %v4138
        %5092 = vmatpush1.bf16.msra.mxu0 %v4137
        %5093 = vmatprep.subr.bf16.mxu0 %v4154
        %5094 = vmatpush1.bf16.msra.mxu0 %v4153
        %5095 = vmatprep.subr.bf16.mxu0 %v4170
        %5096 = vmatpush1.bf16.msra.mxu0 %v4169
        %5097 = vmatprep.subr.bf16.mxu0 %v4186
        %5098 = vmatpush1.bf16.msra.mxu0 %v4185
        %5099 = vmatprep.subr.bf16.mxu0 %v4202
        %5100 = vmatpush1.bf16.msra.mxu0 %v4201
        %5101 = vmatprep.subr.bf16.mxu0 %v4218
        %5102 = vmatpush1.bf16.msra.mxu0 %v4217
        %5103 = vmatprep.subr.bf16.mxu0 %v4234
        %5104 = vmatpush1.bf16.msra.mxu0 %v4233
        %5105 = vmatprep.subr.bf16.mxu0 %v4250
        %5106 = vmatpush1.bf16.msra.mxu0 %v4249
        %5107 = vmatprep.subr.bf16.mxu0 %v4266
        %5108 = vmatpush1.bf16.msra.mxu0 %v4265
        %5109 = vmatprep.subr.bf16.mxu0 %v4282
        %5110 = vmatpush1.bf16.msra.mxu0 %v4281
        %5111 = vmatprep.subr.bf16.mxu0 %v4298
        %5112 = vmatpush1.bf16.msra.mxu0 %v4297
        %5113 = vmatprep.mubr.bf16.mxu0 %v1922
        %5114 = vmatmul.mubr.bf16.gmra.mrb[0].mxu0 %v1921
        %v5115 = vpop.f32.mrb[0].mxu0
        %v5116 = vadd.f32 %v2444, %v5115
        %v5117 = vpop.f32.mrb[0].mxu0
        %v5118 = vadd.f32 %v2448, %v5117
        %v5119 = vpop.f32.mrb[0].mxu0
        %v5120 = vpop.f32.mrb[0].mxu0
        %5121 = vdwg.mxu0
        %5122 = vmatprep.subr.bf16.mxu0 %v4314
        %5123 = vmatpush1.bf16.msra.mxu0 %v4313
        %5124 = vmatprep.subr.bf16.mxu0 %v4330
        %5125 = vmatpush1.bf16.msra.mxu0 %v4329
        %5126 = vmatprep.subr.bf16.mxu0 %v4346
        %5127 = vmatpush1.bf16.msra.mxu0 %v4345
        %5128 = vmatprep.subr.bf16.mxu0 %v4362
        %5129 = vmatpush1.bf16.msra.mxu0 %v4361
        %5130 = vmatprep.subr.bf16.mxu0 %v4378
        %5131 = vmatpush1.bf16.msra.mxu0 %v4377
        %5132 = vmatprep.subr.bf16.mxu0 %v4394
        %5133 = vmatpush1.bf16.msra.mxu0 %v4393
        %5134 = vmatprep.subr.bf16.mxu0 %v4410
        %5135 = vmatpush1.bf16.msra.mxu0 %v4409
        %5136 = vmatprep.subr.bf16.mxu0 %v4426
        %5137 = vmatpush1.bf16.msra.mxu0 %v4425
        %5138 = vmatprep.subr.bf16.mxu0 %v4442
        %5139 = vmatpush1.bf16.msra.mxu0 %v4441
        %5140 = vmatprep.subr.bf16.mxu0 %v4458
        %5141 = vmatpush1.bf16.msra.mxu0 %v4457
        %5142 = vmatprep.subr.bf16.mxu0 %v4474
        %5143 = vmatpush1.bf16.msra.mxu0 %v4473
        %5144 = vmatprep.subr.bf16.mxu0 %v4490
        %5145 = vmatpush1.bf16.msra.mxu0 %v4489
        %5146 = vmatprep.subr.bf16.mxu0 %v4506
        %5147 = vmatpush1.bf16.msra.mxu0 %v4505
        %5148 = vmatprep.subr.bf16.mxu0 %v4522
        %5149 = vmatpush1.bf16.msra.mxu0 %v4521
        %5150 = vmatprep.subr.bf16.mxu0 %v4538
        %5151 = vmatpush1.bf16.msra.mxu0 %v4537
        %5152 = vmatprep.subr.bf16.mxu0 %v4554
        %5153 = vmatpush1.bf16.msra.mxu0 %v4553
        %5154 = vmatprep.mubr.bf16.mxu0 %v1924
        %5155 = vmatmul.mubr.bf16.gmra.mrb[0].mxu0 %v1923
        %v5156 = vpop.f32.mrb[0].mxu0
        %v5157 = vadd.f32 %v5116, %v5156
        %v5158 = vpop.f32.mrb[0].mxu0
        %v5159 = vadd.f32 %v5118, %v5158
        %v5160 = vpop.f32.mrb[0].mxu0
        %v5161 = vpop.f32.mrb[0].mxu0
        %5162 = vdwg.mxu0
        %5163 = vmatprep.subr.bf16.mxu0 %v4060
        %5164 = vmatpush1.bf16.msra.mxu0 %v4059
        %5165 = vmatprep.subr.bf16.mxu0 %v4076
        %5166 = vmatpush1.bf16.msra.mxu0 %v4075
        %5167 = vmatprep.subr.bf16.mxu0 %v4092
        %5168 = vmatpush1.bf16.msra.mxu0 %v4091
        %5169 = vmatprep.subr.bf16.mxu0 %v4108
        %5170 = vmatpush1.bf16.msra.mxu0 %v4107
        %5171 = vmatprep.subr.bf16.mxu0 %v4124
        %5172 = vmatpush1.bf16.msra.mxu0 %v4123
        %5173 = vmatprep.subr.bf16.mxu0 %v4140
        %5174 = vmatpush1.bf16.msra.mxu0 %v4139
        %5175 = vmatprep.subr.bf16.mxu0 %v4156
        %5176 = vmatpush1.bf16.msra.mxu0 %v4155
        %5177 = vmatprep.subr.bf16.mxu0 %v4172
        %5178 = vmatpush1.bf16.msra.mxu0 %v4171
        %5179 = vmatprep.subr.bf16.mxu0 %v4188
        %5180 = vmatpush1.bf16.msra.mxu0 %v4187
        %5181 = vmatprep.subr.bf16.mxu0 %v4204
        %5182 = vmatpush1.bf16.msra.mxu0 %v4203
        %5183 = vmatprep.subr.bf16.mxu0 %v4220
        %5184 = vmatpush1.bf16.msra.mxu0 %v4219
        %5185 = vmatprep.subr.bf16.mxu0 %v4236
        %5186 = vmatpush1.bf16.msra.mxu0 %v4235
        %5187 = vmatprep.subr.bf16.mxu0 %v4252
        %5188 = vmatpush1.bf16.msra.mxu0 %v4251
        %5189 = vmatprep.subr.bf16.mxu0 %v4268
        %5190 = vmatpush1.bf16.msra.mxu0 %v4267
        %5191 = vmatprep.subr.bf16.mxu0 %v4284
        %5192 = vmatpush1.bf16.msra.mxu0 %v4283
        %5193 = vmatprep.subr.bf16.mxu0 %v4300
        %5194 = vmatpush1.bf16.msra.mxu0 %v4299
        %5195 = vmatprep.mubr.bf16.mxu0 %v1922
        %5196 = vmatmul.mubr.bf16.gmra.mrb[0].mxu0 %v1921
        %v5197 = vpop.f32.mrb[0].mxu0
        %v5198 = vadd.f32 %v2452, %v5197
        %v5199 = vpop.f32.mrb[0].mxu0
        %v5200 = vadd.f32 %v2456, %v5199
        %v5201 = vpop.f32.mrb[0].mxu0
        %v5202 = vpop.f32.mrb[0].mxu0
        %5203 = vdwg.mxu0
        %5204 = vmatprep.subr.bf16.mxu0 %v4316
        %5205 = vmatpush1.bf16.msra.mxu0 %v4315
        %5206 = vmatprep.subr.bf16.mxu0 %v4332
        %5207 = vmatpush1.bf16.msra.mxu0 %v4331
        %5208 = vmatprep.subr.bf16.mxu0 %v4348
        %5209 = vmatpush1.bf16.msra.mxu0 %v4347
        %5210 = vmatprep.subr.bf16.mxu0 %v4364
        %5211 = vmatpush1.bf16.msra.mxu0 %v4363
        %5212 = vmatprep.subr.bf16.mxu0 %v4380
        %5213 = vmatpush1.bf16.msra.mxu0 %v4379
        %5214 = vmatprep.subr.bf16.mxu0 %v4396
        %5215 = vmatpush1.bf16.msra.mxu0 %v4395
        %5216 = vmatprep.subr.bf16.mxu0 %v4412
        %5217 = vmatpush1.bf16.msra.mxu0 %v4411
        %5218 = vmatprep.subr.bf16.mxu0 %v4428
        %5219 = vmatpush1.bf16.msra.mxu0 %v4427
        %5220 = vmatprep.subr.bf16.mxu0 %v4444
        %5221 = vmatpush1.bf16.msra.mxu0 %v4443
        %5222 = vmatprep.subr.bf16.mxu0 %v4460
        %5223 = vmatpush1.bf16.msra.mxu0 %v4459
        %5224 = vmatprep.subr.bf16.mxu0 %v4476
        %5225 = vmatpush1.bf16.msra.mxu0 %v4475
        %5226 = vmatprep.subr.bf16.mxu0 %v4492
        %5227 = vmatpush1.bf16.msra.mxu0 %v4491
        %5228 = vmatprep.subr.bf16.mxu0 %v4508
        %5229 = vmatpush1.bf16.msra.mxu0 %v4507
        %5230 = vmatprep.subr.bf16.mxu0 %v4524
        %5231 = vmatpush1.bf16.msra.mxu0 %v4523
        %5232 = vmatprep.subr.bf16.mxu0 %v4540
        %5233 = vmatpush1.bf16.msra.mxu0 %v4539
        %5234 = vmatprep.subr.bf16.mxu0 %v4556
        %5235 = vmatpush1.bf16.msra.mxu0 %v4555
        %5236 = vmatprep.mubr.bf16.mxu0 %v1924
        %5237 = vmatmul.mubr.bf16.gmra.mrb[0].mxu0 %v1923
        %v5238 = vpop.f32.mrb[0].mxu0
        %v5239 = vadd.f32 %v5198, %v5238
        %v5240 = vpop.f32.mrb[0].mxu0
        %v5241 = vadd.f32 %v5200, %v5240
        %v5242 = vpop.f32.mrb[0].mxu0
        %v5243 = vpop.f32.mrb[0].mxu0
        %5244 = vdwg.mxu0
        %5245 = vmatprep.subr.bf16.mxu0 %v4062
        %5246 = vmatpush1.bf16.msra.mxu0 %v4061
        %5247 = vmatprep.subr.bf16.mxu0 %v4078
        %5248 = vmatpush1.bf16.msra.mxu0 %v4077
        %5249 = vmatprep.subr.bf16.mxu0 %v4094
        %5250 = vmatpush1.bf16.msra.mxu0 %v4093
        %5251 = vmatprep.subr.bf16.mxu0 %v4110
        %5252 = vmatpush1.bf16.msra.mxu0 %v4109
        %5253 = vmatprep.subr.bf16.mxu0 %v4126
        %5254 = vmatpush1.bf16.msra.mxu0 %v4125
        %5255 = vmatprep.subr.bf16.mxu0 %v4142
        %5256 = vmatpush1.bf16.msra.mxu0 %v4141
        %5257 = vmatprep.subr.bf16.mxu0 %v4158
        %5258 = vmatpush1.bf16.msra.mxu0 %v4157
        %5259 = vmatprep.subr.bf16.mxu0 %v4174
        %5260 = vmatpush1.bf16.msra.mxu0 %v4173
        %5261 = vmatprep.subr.bf16.mxu0 %v4190
        %5262 = vmatpush1.bf16.msra.mxu0 %v4189
        %5263 = vmatprep.subr.bf16.mxu0 %v4206
        %5264 = vmatpush1.bf16.msra.mxu0 %v4205
        %5265 = vmatprep.subr.bf16.mxu0 %v4222
        %5266 = vmatpush1.bf16.msra.mxu0 %v4221
        %5267 = vmatprep.subr.bf16.mxu0 %v4238
        %5268 = vmatpush1.bf16.msra.mxu0 %v4237
        %5269 = vmatprep.subr.bf16.mxu0 %v4254
        %5270 = vmatpush1.bf16.msra.mxu0 %v4253
        %5271 = vmatprep.subr.bf16.mxu0 %v4270
        %5272 = vmatpush1.bf16.msra.mxu0 %v4269
        %5273 = vmatprep.subr.bf16.mxu0 %v4286
        %5274 = vmatpush1.bf16.msra.mxu0 %v4285
        %5275 = vmatprep.subr.bf16.mxu0 %v4302
        %5276 = vmatpush1.bf16.msra.mxu0 %v4301
        %5277 = vmatprep.mubr.bf16.mxu0 %v1922
        %5278 = vmatmul.mubr.bf16.gmra.mrb[0].mxu0 %v1921
        %v5279 = vpop.f32.mrb[0].mxu0
        %v5280 = vadd.f32 %v2460, %v5279
        %v5281 = vpop.f32.mrb[0].mxu0
        %v5282 = vadd.f32 %v2464, %v5281
        %v5283 = vpop.f32.mrb[0].mxu0
        %v5284 = vpop.f32.mrb[0].mxu0
        %5285 = vdwg.mxu0
        %5286 = vmatprep.subr.bf16.mxu0 %v4318
        %5287 = vmatpush1.bf16.msra.mxu0 %v4317
        %5288 = vmatprep.subr.bf16.mxu0 %v4334
        %5289 = vmatpush1.bf16.msra.mxu0 %v4333
        %5290 = vmatprep.subr.bf16.mxu0 %v4350
        %5291 = vmatpush1.bf16.msra.mxu0 %v4349
        %5292 = vmatprep.subr.bf16.mxu0 %v4366
        %5293 = vmatpush1.bf16.msra.mxu0 %v4365
        %5294 = vmatprep.subr.bf16.mxu0 %v4382
        %5295 = vmatpush1.bf16.msra.mxu0 %v4381
        %5296 = vmatprep.subr.bf16.mxu0 %v4398
        %5297 = vmatpush1.bf16.msra.mxu0 %v4397
        %5298 = vmatprep.subr.bf16.mxu0 %v4414
        %5299 = vmatpush1.bf16.msra.mxu0 %v4413
        %5300 = vmatprep.subr.bf16.mxu0 %v4430
        %5301 = vmatpush1.bf16.msra.mxu0 %v4429
        %5302 = vmatprep.subr.bf16.mxu0 %v4446
        %5303 = vmatpush1.bf16.msra.mxu0 %v4445
        %5304 = vmatprep.subr.bf16.mxu0 %v4462
        %5305 = vmatpush1.bf16.msra.mxu0 %v4461
        %5306 = vmatprep.subr.bf16.mxu0 %v4478
        %5307 = vmatpush1.bf16.msra.mxu0 %v4477
        %5308 = vmatprep.subr.bf16.mxu0 %v4494
        %5309 = vmatpush1.bf16.msra.mxu0 %v4493
        %5310 = vmatprep.subr.bf16.mxu0 %v4510
        %5311 = vmatpush1.bf16.msra.mxu0 %v4509
        %5312 = vmatprep.subr.bf16.mxu0 %v4526
        %5313 = vmatpush1.bf16.msra.mxu0 %v4525
        %5314 = vmatprep.subr.bf16.mxu0 %v4542
        %5315 = vmatpush1.bf16.msra.mxu0 %v4541
        %5316 = vmatprep.subr.bf16.mxu0 %v4558
        %5317 = vmatpush1.bf16.msra.mxu0 %v4557
        %5318 = vmatprep.mubr.bf16.mxu0 %v1924
        %5319 = vmatmul.mubr.bf16.gmra.mrb[0].mxu0 %v1923
        %v5320 = vpop.f32.mrb[0].mxu0
        %v5321 = vadd.f32 %v5280, %v5320
        %v5322 = vpop.f32.mrb[0].mxu0
        %v5323 = vadd.f32 %v5282, %v5322
        %v5324 = vpop.f32.mrb[0].mxu0
        %v5325 = vpop.f32.mrb[0].mxu0
        %5326 = vdwg.mxu0
        %5327 = vmatprep.subr.bf16.mxu0 %v4064
        %5328 = vmatpush1.bf16.msra.mxu0 %v4063
        %5329 = vmatprep.subr.bf16.mxu0 %v4080
        %5330 = vmatpush1.bf16.msra.mxu0 %v4079
        %5331 = vmatprep.subr.bf16.mxu0 %v4096
        %5332 = vmatpush1.bf16.msra.mxu0 %v4095
        %5333 = vmatprep.subr.bf16.mxu0 %v4112
        %5334 = vmatpush1.bf16.msra.mxu0 %v4111
        %5335 = vmatprep.subr.bf16.mxu0 %v4128
        %5336 = vmatpush1.bf16.msra.mxu0 %v4127
        %5337 = vmatprep.subr.bf16.mxu0 %v4144
        %5338 = vmatpush1.bf16.msra.mxu0 %v4143
        %5339 = vmatprep.subr.bf16.mxu0 %v4160
        %5340 = vmatpush1.bf16.msra.mxu0 %v4159
        %5341 = vmatprep.subr.bf16.mxu0 %v4176
        %5342 = vmatpush1.bf16.msra.mxu0 %v4175
        %5343 = vmatprep.subr.bf16.mxu0 %v4192
        %5344 = vmatpush1.bf16.msra.mxu0 %v4191
        %5345 = vmatprep.subr.bf16.mxu0 %v4208
        %5346 = vmatpush1.bf16.msra.mxu0 %v4207
        %5347 = vmatprep.subr.bf16.mxu0 %v4224
        %5348 = vmatpush1.bf16.msra.mxu0 %v4223
        %5349 = vmatprep.subr.bf16.mxu0 %v4240
        %5350 = vmatpush1.bf16.msra.mxu0 %v4239
        %5351 = vmatprep.subr.bf16.mxu0 %v4256
        %5352 = vmatpush1.bf16.msra.mxu0 %v4255
        %5353 = vmatprep.subr.bf16.mxu0 %v4272
        %5354 = vmatpush1.bf16.msra.mxu0 %v4271
        %5355 = vmatprep.subr.bf16.mxu0 %v4288
        %5356 = vmatpush1.bf16.msra.mxu0 %v4287
        %5357 = vmatprep.subr.bf16.mxu0 %v4304
        %5358 = vmatpush1.bf16.msra.mxu0 %v4303
        %5359 = vmatprep.mubr.bf16.mxu0 %v1922
        %5360 = vmatmul.mubr.bf16.gmra.mrb[0].mxu0 %v1921
        %v5361 = vpop.f32.mrb[0].mxu0
        %v5362 = vadd.f32 %v2468, %v5361
        %v5363 = vpop.f32.mrb[0].mxu0
        %v5364 = vadd.f32 %v2472, %v5363
        %v5365 = vpop.f32.mrb[0].mxu0
        %v5366 = vpop.f32.mrb[0].mxu0
        %5367 = vdwg.mxu0
        %5368 = vmatprep.subr.bf16.mxu0 %v4320
        %5369 = vmatpush1.bf16.msra.mxu0 %v4319
        %5370 = vmatprep.subr.bf16.mxu0 %v4336
        %5371 = vmatpush1.bf16.msra.mxu0 %v4335
        %5372 = vmatprep.subr.bf16.mxu0 %v4352
        %5373 = vmatpush1.bf16.msra.mxu0 %v4351
        %5374 = vmatprep.subr.bf16.mxu0 %v4368
        %5375 = vmatpush1.bf16.msra.mxu0 %v4367
        %5376 = vmatprep.subr.bf16.mxu0 %v4384
        %5377 = vmatpush1.bf16.msra.mxu0 %v4383
        %5378 = vmatprep.subr.bf16.mxu0 %v4400
        %5379 = vmatpush1.bf16.msra.mxu0 %v4399
        %5380 = vmatprep.subr.bf16.mxu0 %v4416
        %5381 = vmatpush1.bf16.msra.mxu0 %v4415
        %5382 = vmatprep.subr.bf16.mxu0 %v4432
        %5383 = vmatpush1.bf16.msra.mxu0 %v4431
        %5384 = vmatprep.subr.bf16.mxu0 %v4448
        %5385 = vmatpush1.bf16.msra.mxu0 %v4447
        %5386 = vmatprep.subr.bf16.mxu0 %v4464
        %5387 = vmatpush1.bf16.msra.mxu0 %v4463
        %5388 = vmatprep.subr.bf16.mxu0 %v4480
        %5389 = vmatpush1.bf16.msra.mxu0 %v4479
        %5390 = vmatprep.subr.bf16.mxu0 %v4496
        %5391 = vmatpush1.bf16.msra.mxu0 %v4495
        %5392 = vmatprep.subr.bf16.mxu0 %v4512
        %5393 = vmatpush1.bf16.msra.mxu0 %v4511
        %5394 = vmatprep.subr.bf16.mxu0 %v4528
        %5395 = vmatpush1.bf16.msra.mxu0 %v4527
        %5396 = vmatprep.subr.bf16.mxu0 %v4544
        %5397 = vmatpush1.bf16.msra.mxu0 %v4543
        %5398 = vmatprep.subr.bf16.mxu0 %v4560
        %5399 = vmatpush1.bf16.msra.mxu0 %v4559
        %5400 = vmatprep.mubr.bf16.mxu0 %v1924
        %5401 = vmatmul.mubr.bf16.gmra.mrb[0].mxu0 %v1923
        %v5402 = vpop.f32.mrb[0].mxu0
        %v5403 = vadd.f32 %v5362, %v5402
        %v5404 = vpop.f32.mrb[0].mxu0
        %v5405 = vadd.f32 %v5364, %v5404
        %v5406 = vpop.f32.mrb[0].mxu0
        %v5407 = vpop.f32.mrb[0].mxu0
        %5408 = vdwg.mxu0
        %5409 = vmatprep.subr.bf16.mxu0 %v4066
        %5410 = vmatpush1.bf16.msra.mxu0 %v4065
        %5411 = vmatprep.subr.bf16.mxu0 %v4082
        %5412 = vmatpush1.bf16.msra.mxu0 %v4081
        %5413 = vmatprep.subr.bf16.mxu0 %v4098
        %5414 = vmatpush1.bf16.msra.mxu0 %v4097
        %5415 = vmatprep.subr.bf16.mxu0 %v4114
        %5416 = vmatpush1.bf16.msra.mxu0 %v4113
        %5417 = vmatprep.subr.bf16.mxu0 %v4130
        %5418 = vmatpush1.bf16.msra.mxu0 %v4129
        %5419 = vmatprep.subr.bf16.mxu0 %v4146
        %5420 = vmatpush1.bf16.msra.mxu0 %v4145
        %5421 = vmatprep.subr.bf16.mxu0 %v4162
        %5422 = vmatpush1.bf16.msra.mxu0 %v4161
        %5423 = vmatprep.subr.bf16.mxu0 %v4178
        %5424 = vmatpush1.bf16.msra.mxu0 %v4177
        %5425 = vmatprep.subr.bf16.mxu0 %v4194
        %5426 = vmatpush1.bf16.msra.mxu0 %v4193
        %5427 = vmatprep.subr.bf16.mxu0 %v4210
        %5428 = vmatpush1.bf16.msra.mxu0 %v4209
        %5429 = vmatprep.subr.bf16.mxu0 %v4226
        %5430 = vmatpush1.bf16.msra.mxu0 %v4225
        %5431 = vmatprep.subr.bf16.mxu0 %v4242
        %5432 = vmatpush1.bf16.msra.mxu0 %v4241
        %5433 = vmatprep.subr.bf16.mxu0 %v4258
        %5434 = vmatpush1.bf16.msra.mxu0 %v4257
        %5435 = vmatprep.subr.bf16.mxu0 %v4274
        %5436 = vmatpush1.bf16.msra.mxu0 %v4273
        %5437 = vmatprep.subr.bf16.mxu0 %v4290
        %5438 = vmatpush1.bf16.msra.mxu0 %v4289
        %5439 = vmatprep.subr.bf16.mxu0 %v4306
        %5440 = vmatpush1.bf16.msra.mxu0 %v4305
        %5441 = vmatprep.mubr.bf16.mxu0 %v1922
        %5442 = vmatmul.mubr.bf16.gmra.mrb[0].mxu0 %v1921
        %v5443 = vpop.f32.mrb[0].mxu0
        %v5444 = vadd.f32 %v2476, %v5443
        %v5445 = vpop.f32.mrb[0].mxu0
        %v5446 = vadd.f32 %v2480, %v5445
        %v5447 = vpop.f32.mrb[0].mxu0
        %v5448 = vpop.f32.mrb[0].mxu0
        %5449 = vdwg.mxu0
        %5450 = vmatprep.subr.bf16.mxu0 %v4322
        %5451 = vmatpush1.bf16.msra.mxu0 %v4321
        %5452 = vmatprep.subr.bf16.mxu0 %v4338
        %5453 = vmatpush1.bf16.msra.mxu0 %v4337
        %5454 = vmatprep.subr.bf16.mxu0 %v4354
        %5455 = vmatpush1.bf16.msra.mxu0 %v4353
        %5456 = vmatprep.subr.bf16.mxu0 %v4370
        %5457 = vmatpush1.bf16.msra.mxu0 %v4369
        %5458 = vmatprep.subr.bf16.mxu0 %v4386
        %5459 = vmatpush1.bf16.msra.mxu0 %v4385
        %5460 = vmatprep.subr.bf16.mxu0 %v4402
        %5461 = vmatpush1.bf16.msra.mxu0 %v4401
        %5462 = vmatprep.subr.bf16.mxu0 %v4418
        %5463 = vmatpush1.bf16.msra.mxu0 %v4417
        %5464 = vmatprep.subr.bf16.mxu0 %v4434
        %5465 = vmatpush1.bf16.msra.mxu0 %v4433
        %5466 = vmatprep.subr.bf16.mxu0 %v4450
        %5467 = vmatpush1.bf16.msra.mxu0 %v4449
        %5468 = vmatprep.subr.bf16.mxu0 %v4466
        %5469 = vmatpush1.bf16.msra.mxu0 %v4465
        %5470 = vmatprep.subr.bf16.mxu0 %v4482
        %5471 = vmatpush1.bf16.msra.mxu0 %v4481
        %5472 = vmatprep.subr.bf16.mxu0 %v4498
        %5473 = vmatpush1.bf16.msra.mxu0 %v4497
        %5474 = vmatprep.subr.bf16.mxu0 %v4514
        %5475 = vmatpush1.bf16.msra.mxu0 %v4513
        %5476 = vmatprep.subr.bf16.mxu0 %v4530
        %5477 = vmatpush1.bf16.msra.mxu0 %v4529
        %5478 = vmatprep.subr.bf16.mxu0 %v4546
        %5479 = vmatpush1.bf16.msra.mxu0 %v4545
        %5480 = vmatprep.subr.bf16.mxu0 %v4562
        %5481 = vmatpush1.bf16.msra.mxu0 %v4561
        %5482 = vmatprep.mubr.bf16.mxu0 %v1924
        %5483 = vmatmul.mubr.bf16.gmra.mrb[0].mxu0 %v1923
        %v5484 = vpop.f32.mrb[0].mxu0
        %v5485 = vadd.f32 %v5444, %v5484
        %v5486 = vpop.f32.mrb[0].mxu0
        %v5487 = vadd.f32 %v5446, %v5486
        %v5488 = vpop.f32.mrb[0].mxu0
        %v5489 = vpop.f32.mrb[0].mxu0
        %5490 = vdwg.mxu0
        %5491 = vmatprep.subr.bf16.mxu0 %v4068
        %5492 = vmatpush1.bf16.msra.mxu0 %v4067
        %5493 = vmatprep.subr.bf16.mxu0 %v4084
        %5494 = vmatpush1.bf16.msra.mxu0 %v4083
        %5495 = vmatprep.subr.bf16.mxu0 %v4100
        %5496 = vmatpush1.bf16.msra.mxu0 %v4099
        %5497 = vmatprep.subr.bf16.mxu0 %v4116
        %5498 = vmatpush1.bf16.msra.mxu0 %v4115
        %5499 = vmatprep.subr.bf16.mxu0 %v4132
        %5500 = vmatpush1.bf16.msra.mxu0 %v4131
        %5501 = vmatprep.subr.bf16.mxu0 %v4148
        %5502 = vmatpush1.bf16.msra.mxu0 %v4147
        %5503 = vmatprep.subr.bf16.mxu0 %v4164
        %5504 = vmatpush1.bf16.msra.mxu0 %v4163
        %5505 = vmatprep.subr.bf16.mxu0 %v4180
        %5506 = vmatpush1.bf16.msra.mxu0 %v4179
        %5507 = vmatprep.subr.bf16.mxu0 %v4196
        %5508 = vmatpush1.bf16.msra.mxu0 %v4195
        %5509 = vmatprep.subr.bf16.mxu0 %v4212
        %5510 = vmatpush1.bf16.msra.mxu0 %v4211
        %5511 = vmatprep.subr.bf16.mxu0 %v4228
        %5512 = vmatpush1.bf16.msra.mxu0 %v4227
        %5513 = vmatprep.subr.bf16.mxu0 %v4244
        %5514 = vmatpush1.bf16.msra.mxu0 %v4243
        %5515 = vmatprep.subr.bf16.mxu0 %v4260
        %5516 = vmatpush1.bf16.msra.mxu0 %v4259
        %5517 = vmatprep.subr.bf16.mxu0 %v4276
        %5518 = vmatpush1.bf16.msra.mxu0 %v4275
        %5519 = vmatprep.subr.bf16.mxu0 %v4292
        %5520 = vmatpush1.bf16.msra.mxu0 %v4291
        %5521 = vmatprep.subr.bf16.mxu0 %v4308
        %5522 = vmatpush1.bf16.msra.mxu0 %v4307
        %5523 = vmatprep.mubr.bf16.mxu0 %v1922
        %5524 = vmatmul.mubr.bf16.gmra.mrb[0].mxu0 %v1921
        %v5525 = vpop.f32.mrb[0].mxu0
        %v5526 = vadd.f32 %v2484, %v5525
        %v5527 = vpop.f32.mrb[0].mxu0
        %v5528 = vadd.f32 %v2488, %v5527
        %v5529 = vpop.f32.mrb[0].mxu0
        %v5530 = vpop.f32.mrb[0].mxu0
        %5531 = vdwg.mxu0
        %5532 = vmatprep.subr.bf16.mxu0 %v4324
        %5533 = vmatpush1.bf16.msra.mxu0 %v4323
        %5534 = vmatprep.subr.bf16.mxu0 %v4340
        %5535 = vmatpush1.bf16.msra.mxu0 %v4339
        %5536 = vmatprep.subr.bf16.mxu0 %v4356
        %5537 = vmatpush1.bf16.msra.mxu0 %v4355
        %5538 = vmatprep.subr.bf16.mxu0 %v4372
        %5539 = vmatpush1.bf16.msra.mxu0 %v4371
        %5540 = vmatprep.subr.bf16.mxu0 %v4388
        %5541 = vmatpush1.bf16.msra.mxu0 %v4387
        %5542 = vmatprep.subr.bf16.mxu0 %v4404
        %5543 = vmatpush1.bf16.msra.mxu0 %v4403
        %5544 = vmatprep.subr.bf16.mxu0 %v4420
        %5545 = vmatpush1.bf16.msra.mxu0 %v4419
        %5546 = vmatprep.subr.bf16.mxu0 %v4436
        %5547 = vmatpush1.bf16.msra.mxu0 %v4435
        %5548 = vmatprep.subr.bf16.mxu0 %v4452
        %5549 = vmatpush1.bf16.msra.mxu0 %v4451
        %5550 = vmatprep.subr.bf16.mxu0 %v4468
        %5551 = vmatpush1.bf16.msra.mxu0 %v4467
        %5552 = vmatprep.subr.bf16.mxu0 %v4484
        %5553 = vmatpush1.bf16.msra.mxu0 %v4483
        %5554 = vmatprep.subr.bf16.mxu0 %v4500
        %5555 = vmatpush1.bf16.msra.mxu0 %v4499
        %5556 = vmatprep.subr.bf16.mxu0 %v4516
        %5557 = vmatpush1.bf16.msra.mxu0 %v4515
        %5558 = vmatprep.subr.bf16.mxu0 %v4532
        %5559 = vmatpush1.bf16.msra.mxu0 %v4531
        %5560 = vmatprep.subr.bf16.mxu0 %v4548
        %5561 = vmatpush1.bf16.msra.mxu0 %v4547
        %5562 = vmatprep.subr.bf16.mxu0 %v4564
        %5563 = vmatpush1.bf16.msra.mxu0 %v4563
        %5564 = vmatprep.mubr.bf16.mxu0 %v1924
        %5565 = vmatmul.mubr.bf16.gmra.mrb[0].mxu0 %v1923
        %v5566 = vpop.f32.mrb[0].mxu0
        %v5567 = vadd.f32 %v5526, %v5566
        %v5568 = vpop.f32.mrb[0].mxu0
        %v5569 = vadd.f32 %v5528, %v5568
        %v5570 = vpop.f32.mrb[0].mxu0
        %v5571 = vpop.f32.mrb[0].mxu0
        %5572 = vdwg.mxu0
        %5573 = vmatprep.subr.bf16.mxu0 %v4070
        %5574 = vmatpush1.bf16.msra.mxu0 %v4069
        %5575 = vmatprep.subr.bf16.mxu0 %v4086
        %5576 = vmatpush1.bf16.msra.mxu0 %v4085
        %5577 = vmatprep.subr.bf16.mxu0 %v4102
        %5578 = vmatpush1.bf16.msra.mxu0 %v4101
        %5579 = vmatprep.subr.bf16.mxu0 %v4118
        %5580 = vmatpush1.bf16.msra.mxu0 %v4117
        %5581 = vmatprep.subr.bf16.mxu0 %v4134
        %5582 = vmatpush1.bf16.msra.mxu0 %v4133
        %5583 = vmatprep.subr.bf16.mxu0 %v4150
        %5584 = vmatpush1.bf16.msra.mxu0 %v4149
        %5585 = vmatprep.subr.bf16.mxu0 %v4166
        %5586 = vmatpush1.bf16.msra.mxu0 %v4165
        %5587 = vmatprep.subr.bf16.mxu0 %v4182
        %5588 = vmatpush1.bf16.msra.mxu0 %v4181
        %5589 = vmatprep.subr.bf16.mxu0 %v4198
        %5590 = vmatpush1.bf16.msra.mxu0 %v4197
        %5591 = vmatprep.subr.bf16.mxu0 %v4214
        %5592 = vmatpush1.bf16.msra.mxu0 %v4213
        %5593 = vmatprep.subr.bf16.mxu0 %v4230
        %5594 = vmatpush1.bf16.msra.mxu0 %v4229
        %5595 = vmatprep.subr.bf16.mxu0 %v4246
        %5596 = vmatpush1.bf16.msra.mxu0 %v4245
        %5597 = vmatprep.subr.bf16.mxu0 %v4262
        %5598 = vmatpush1.bf16.msra.mxu0 %v4261
        %5599 = vmatprep.subr.bf16.mxu0 %v4278
        %5600 = vmatpush1.bf16.msra.mxu0 %v4277
        %5601 = vmatprep.subr.bf16.mxu0 %v4294
        %5602 = vmatpush1.bf16.msra.mxu0 %v4293
        %5603 = vmatprep.subr.bf16.mxu0 %v4310
        %5604 = vmatpush1.bf16.msra.mxu0 %v4309
        %5605 = vmatprep.mubr.bf16.mxu0 %v1922
        %5606 = vmatmul.mubr.bf16.gmra.mrb[0].mxu0 %v1921
        %v5607 = vpop.f32.mrb[0].mxu0
        %v5608 = vadd.f32 %v2492, %v5607
        %v5609 = vpop.f32.mrb[0].mxu0
        %v5610 = vadd.f32 %v2496, %v5609
        %v5611 = vpop.f32.mrb[0].mxu0
        %v5612 = vpop.f32.mrb[0].mxu0
        %5613 = vdwg.mxu0
        %5614 = vmatprep.subr.bf16.mxu0 %v4326
        %5615 = vmatpush1.bf16.msra.mxu0 %v4325
        %5616 = vmatprep.subr.bf16.mxu0 %v4342
        %5617 = vmatpush1.bf16.msra.mxu0 %v4341
        %5618 = vmatprep.subr.bf16.mxu0 %v4358
        %5619 = vmatpush1.bf16.msra.mxu0 %v4357
        %5620 = vmatprep.subr.bf16.mxu0 %v4374
        %5621 = vmatpush1.bf16.msra.mxu0 %v4373
        %5622 = vmatprep.subr.bf16.mxu0 %v4390
        %5623 = vmatpush1.bf16.msra.mxu0 %v4389
        %5624 = vmatprep.subr.bf16.mxu0 %v4406
        %5625 = vmatpush1.bf16.msra.mxu0 %v4405
        %5626 = vmatprep.subr.bf16.mxu0 %v4422
        %5627 = vmatpush1.bf16.msra.mxu0 %v4421
        %5628 = vmatprep.subr.bf16.mxu0 %v4438
        %5629 = vmatpush1.bf16.msra.mxu0 %v4437
        %5630 = vmatprep.subr.bf16.mxu0 %v4454
        %5631 = vmatpush1.bf16.msra.mxu0 %v4453
        %5632 = vmatprep.subr.bf16.mxu0 %v4470
        %5633 = vmatpush1.bf16.msra.mxu0 %v4469
        %5634 = vmatprep.subr.bf16.mxu0 %v4486
        %5635 = vmatpush1.bf16.msra.mxu0 %v4485
        %5636 = vmatprep.subr.bf16.mxu0 %v4502
        %5637 = vmatpush1.bf16.msra.mxu0 %v4501
        %5638 = vmatprep.subr.bf16.mxu0 %v4518
        %5639 = vmatpush1.bf16.msra.mxu0 %v4517
        %5640 = vmatprep.subr.bf16.mxu0 %v4534
        %5641 = vmatpush1.bf16.msra.mxu0 %v4533
        %5642 = vmatprep.subr.bf16.mxu0 %v4550
        %5643 = vmatpush1.bf16.msra.mxu0 %v4549
        %5644 = vmatprep.subr.bf16.mxu0 %v4566
        %5645 = vmatpush1.bf16.msra.mxu0 %v4565
        %5646 = vmatprep.mubr.bf16.mxu0 %v1924
        %5647 = vmatmul.mubr.bf16.gmra.mrb[0].mxu0 %v1923
        %v5648 = vpop.f32.mrb[0].mxu0
        %v5649 = vadd.f32 %v5608, %v5648
        %v5650 = vpop.f32.mrb[0].mxu0
        %v5651 = vadd.f32 %v5610, %v5650
        %v5652 = vpop.f32.mrb[0].mxu0
        %v5653 = vpop.f32.mrb[0].mxu0
        %5654 = vdwg.mxu0
        %5655 = vmatprep.subr.bf16.mxu0 %v4072
        %5656 = vmatpush1.bf16.msra.mxu0 %v4071
        %5657 = vmatprep.subr.bf16.mxu0 %v4088
        %5658 = vmatpush1.bf16.msra.mxu0 %v4087
        %5659 = vmatprep.subr.bf16.mxu0 %v4104
        %5660 = vmatpush1.bf16.msra.mxu0 %v4103
        %5661 = vmatprep.subr.bf16.mxu0 %v4120
        %5662 = vmatpush1.bf16.msra.mxu0 %v4119
        %5663 = vmatprep.subr.bf16.mxu0 %v4136
        %5664 = vmatpush1.bf16.msra.mxu0 %v4135
        %5665 = vmatprep.subr.bf16.mxu0 %v4152
        %5666 = vmatpush1.bf16.msra.mxu0 %v4151
        %5667 = vmatprep.subr.bf16.mxu0 %v4168
        %5668 = vmatpush1.bf16.msra.mxu0 %v4167
        %5669 = vmatprep.subr.bf16.mxu0 %v4184
        %5670 = vmatpush1.bf16.msra.mxu0 %v4183
        %5671 = vmatprep.subr.bf16.mxu0 %v4200
        %5672 = vmatpush1.bf16.msra.mxu0 %v4199
        %5673 = vmatprep.subr.bf16.mxu0 %v4216
        %5674 = vmatpush1.bf16.msra.mxu0 %v4215
        %5675 = vmatprep.subr.bf16.mxu0 %v4232
        %5676 = vmatpush1.bf16.msra.mxu0 %v4231
        %5677 = vmatprep.subr.bf16.mxu0 %v4248
        %5678 = vmatpush1.bf16.msra.mxu0 %v4247
        %5679 = vmatprep.subr.bf16.mxu0 %v4264
        %5680 = vmatpush1.bf16.msra.mxu0 %v4263
        %5681 = vmatprep.subr.bf16.mxu0 %v4280
        %5682 = vmatpush1.bf16.msra.mxu0 %v4279
        %5683 = vmatprep.subr.bf16.mxu0 %v4296
        %5684 = vmatpush1.bf16.msra.mxu0 %v4295
        %5685 = vmatprep.subr.bf16.mxu0 %v4312
        %5686 = vmatpush1.bf16.msra.mxu0 %v4311
        %5687 = vmatprep.mubr.bf16.mxu0 %v1922
        %5688 = vmatmul.mubr.bf16.gmra.mrb[0].mxu0 %v1921
        %v5689 = vpop.f32.mrb[0].mxu0
        %v5690 = vadd.f32 %v2500, %v5689
        %v5691 = vpop.f32.mrb[0].mxu0
        %v5692 = vadd.f32 %v2504, %v5691
        %v5693 = vpop.f32.mrb[0].mxu0
        %v5694 = vpop.f32.mrb[0].mxu0
        %5695 = vdwg.mxu0
        %5696 = vmatprep.subr.bf16.mxu0 %v4328
        %5697 = vmatpush1.bf16.msra.mxu0 %v4327
        %5698 = vmatprep.subr.bf16.mxu0 %v4344
        %5699 = vmatpush1.bf16.msra.mxu0 %v4343
        %5700 = vmatprep.subr.bf16.mxu0 %v4360
        %5701 = vmatpush1.bf16.msra.mxu0 %v4359
        %5702 = vmatprep.subr.bf16.mxu0 %v4376
        %5703 = vmatpush1.bf16.msra.mxu0 %v4375
        %5704 = vmatprep.subr.bf16.mxu0 %v4392
        %5705 = vmatpush1.bf16.msra.mxu0 %v4391
        %5706 = vmatprep.subr.bf16.mxu0 %v4408
        %5707 = vmatpush1.bf16.msra.mxu0 %v4407
        %5708 = vmatprep.subr.bf16.mxu0 %v4424
        %5709 = vmatpush1.bf16.msra.mxu0 %v4423
        %5710 = vmatprep.subr.bf16.mxu0 %v4440
        %5711 = vmatpush1.bf16.msra.mxu0 %v4439
        %5712 = vmatprep.subr.bf16.mxu0 %v4456
        %5713 = vmatpush1.bf16.msra.mxu0 %v4455
        %5714 = vmatprep.subr.bf16.mxu0 %v4472
        %5715 = vmatpush1.bf16.msra.mxu0 %v4471
        %5716 = vmatprep.subr.bf16.mxu0 %v4488
        %5717 = vmatpush1.bf16.msra.mxu0 %v4487
        %5718 = vmatprep.subr.bf16.mxu0 %v4504
        %5719 = vmatpush1.bf16.msra.mxu0 %v4503
        %5720 = vmatprep.subr.bf16.mxu0 %v4520
        %5721 = vmatpush1.bf16.msra.mxu0 %v4519
        %5722 = vmatprep.subr.bf16.mxu0 %v4536
        %5723 = vmatpush1.bf16.msra.mxu0 %v4535
        %5724 = vmatprep.subr.bf16.mxu0 %v4552
        %5725 = vmatpush1.bf16.msra.mxu0 %v4551
        %5726 = vmatprep.subr.bf16.mxu0 %v4568
        %5727 = vmatpush1.bf16.msra.mxu0 %v4567
        %5728 = vmatprep.mubr.bf16.mxu0 %v1924
        %5729 = vmatmul.mubr.bf16.gmra.mrb[0].mxu0 %v1923
        %v5730 = vpop.f32.mrb[0].mxu0
        %v5731 = vadd.f32 %v5690, %v5730
        %v5732 = vpop.f32.mrb[0].mxu0
        %v5733 = vadd.f32 %v5692, %v5732
        %v5734 = vpop.f32.mrb[0].mxu0
        %v5735 = vpop.f32.mrb[0].mxu0
        %5736 = vdwg.mxu0
        %v5737 = vmax.f32 %v5157, 0.0
        %v5738 = vmax.f32 %v5159, 0.0
        %v5739 = vmax.f32 %v5239, 0.0
        %v5740 = vmax.f32 %v5241, 0.0
        %v5741 = vmax.f32 %v5321, 0.0
        %v5742 = vmax.f32 %v5323, 0.0
        %v5743 = vmax.f32 %v5403, 0.0
        %v5744 = vmax.f32 %v5405, 0.0
        %v5745 = vmax.f32 %v5485, 0.0
        %v5746 = vmax.f32 %v5487, 0.0
        %v5747 = vmax.f32 %v5567, 0.0
        %v5748 = vmax.f32 %v5569, 0.0
        %v5749 = vmax.f32 %v5649, 0.0
        %v5750 = vmax.f32 %v5651, 0.0
        %v5751 = vmax.f32 %v5731, 0.0
        %v5752 = vmax.f32 %v5733, 0.0
        %v5753 = vpack.c.bf16 %v5737, %v5737
        %v5754 = vpack.c.bf16 %v5738, %v5738
        %v5755 = vpack.c.bf16 %v5739, %v5739
        %v5756 = vpack.c.bf16 %v5740, %v5740
        %v5757 = vpack.c.bf16 %v5741, %v5741
        %v5758 = vpack.c.bf16 %v5742, %v5742
        %v5759 = vpack.c.bf16 %v5743, %v5743
        %v5760 = vpack.c.bf16 %v5744, %v5744
        %v5761 = vpack.c.bf16 %v5745, %v5745
        %v5762 = vpack.c.bf16 %v5746, %v5746
        %v5763 = vpack.c.bf16 %v5747, %v5747
        %v5764 = vpack.c.bf16 %v5748, %v5748
        %v5765 = vpack.c.bf16 %v5749, %v5749
        %v5766 = vpack.c.bf16 %v5750, %v5750
        %v5767 = vpack.c.bf16 %v5751, %v5751
        %v5768 = vpack.c.bf16 %v5752, %v5752
        %v5769 = vld [vmem:[%s505] sm:$0xff]
        %v5770 = vld [vmem:[%s505 + $0x8] sm:$0xff]
        %v5771 = vld [vmem:[%s505 + $0x10] sm:$0xff]
        %v5772 = vld [vmem:[%s505 + $0x18] sm:$0xff]
        %v5773 = vld [vmem:[%s505 + $0x20] sm:$0xff]
        %v5774 = vld [vmem:[%s505 + $0x28] sm:$0xff]
        %v5775 = vld [vmem:[%s505 + $0x30] sm:$0xff]
        %v5776 = vld [vmem:[%s505 + $0x38] sm:$0xff]
        %v5777 = vld [vmem:[%s505 + $0x40] sm:$0xff]
        %v5778 = vld [vmem:[%s505 + $0x48] sm:$0xff]
        %v5779 = vld [vmem:[%s505 + $0x50] sm:$0xff]
        %v5780 = vld [vmem:[%s505 + $0x58] sm:$0xff]
        %v5781 = vld [vmem:[%s505 + $0x60] sm:$0xff]
        %v5782 = vld [vmem:[%s505 + $0x68] sm:$0xff]
        %v5783 = vld [vmem:[%s505 + $0x70] sm:$0xff]
        %v5784 = vld [vmem:[%s505 + $0x78] sm:$0xff]
        %v5785 = vld [vmem:[%s505 + $0x80] sm:$0xff]
        %v5786 = vld [vmem:[%s505 + $0x88] sm:$0xff]
        %v5787 = vld [vmem:[%s505 + $0x90] sm:$0xff]
        %v5788 = vld [vmem:[%s505 + $0x98] sm:$0xff]
        %v5789 = vld [vmem:[%s505 + $0xa0] sm:$0xff]
        %v5790 = vld [vmem:[%s505 + $0xa8] sm:$0xff]
        %v5791 = vld [vmem:[%s505 + $0xb0] sm:$0xff]
        %v5792 = vld [vmem:[%s505 + $0xb8] sm:$0xff]
        %v5793 = vld [vmem:[%s505 + $0xc0] sm:$0xff]
        %v5794 = vld [vmem:[%s505 + $0xc8] sm:$0xff]
        %v5795 = vld [vmem:[%s505 + $0xd0] sm:$0xff]
        %v5796 = vld [vmem:[%s505 + $0xd8] sm:$0xff]
        %v5797 = vld [vmem:[%s505 + $0xe0] sm:$0xff]
        %v5798 = vld [vmem:[%s505 + $0xe8] sm:$0xff]
        %v5799 = vld [vmem:[%s505 + $0xf0] sm:$0xff]
        %v5800 = vld [vmem:[%s505 + $0xf8] sm:$0xff]
        %v5801 = vld [vmem:[%s505 + $0x100] sm:$0xff]
        %v5802 = vld [vmem:[%s505 + $0x108] sm:$0xff]
        %v5803 = vld [vmem:[%s505 + $0x110] sm:$0xff]
        %v5804 = vld [vmem:[%s505 + $0x118] sm:$0xff]
        %v5805 = vld [vmem:[%s505 + $0x120] sm:$0xff]
        %v5806 = vld [vmem:[%s505 + $0x128] sm:$0xff]
        %v5807 = vld [vmem:[%s505 + $0x130] sm:$0xff]
        %v5808 = vld [vmem:[%s505 + $0x138] sm:$0xff]
        %v5809 = vld [vmem:[%s505 + $0x140] sm:$0xff]
        %v5810 = vld [vmem:[%s505 + $0x148] sm:$0xff]
        %v5811 = vld [vmem:[%s505 + $0x150] sm:$0xff]
        %v5812 = vld [vmem:[%s505 + $0x158] sm:$0xff]
        %v5813 = vld [vmem:[%s505 + $0x160] sm:$0xff]
        %v5814 = vld [vmem:[%s505 + $0x168] sm:$0xff]
        %v5815 = vld [vmem:[%s505 + $0x170] sm:$0xff]
        %v5816 = vld [vmem:[%s505 + $0x178] sm:$0xff]
        %v5817 = vld [vmem:[%s505 + $0x180] sm:$0xff]
        %v5818 = vld [vmem:[%s505 + $0x188] sm:$0xff]
        %v5819 = vld [vmem:[%s505 + $0x190] sm:$0xff]
        %v5820 = vld [vmem:[%s505 + $0x198] sm:$0xff]
        %v5821 = vld [vmem:[%s505 + $0x1a0] sm:$0xff]
        %v5822 = vld [vmem:[%s505 + $0x1a8] sm:$0xff]
        %v5823 = vld [vmem:[%s505 + $0x1b0] sm:$0xff]
        %v5824 = vld [vmem:[%s505 + $0x1b8] sm:$0xff]
        %v5825 = vld [vmem:[%s505 + $0x1c0] sm:$0xff]
        %v5826 = vld [vmem:[%s505 + $0x1c8] sm:$0xff]
        %v5827 = vld [vmem:[%s505 + $0x1d0] sm:$0xff]
        %v5828 = vld [vmem:[%s505 + $0x1d8] sm:$0xff]
        %v5829 = vld [vmem:[%s505 + $0x1e0] sm:$0xff]
        %v5830 = vld [vmem:[%s505 + $0x1e8] sm:$0xff]
        %v5831 = vld [vmem:[%s505 + $0x1f0] sm:$0xff]
        %v5832 = vld [vmem:[%s505 + $0x1f8] sm:$0xff]
        %v5833 = vld [vmem:[%s505 + $0x200] sm:$0xff]
        %v5834 = vld [vmem:[%s505 + $0x208] sm:$0xff]
        %v5835 = vld [vmem:[%s505 + $0x210] sm:$0xff]
        %v5836 = vld [vmem:[%s505 + $0x218] sm:$0xff]
        %v5837 = vld [vmem:[%s505 + $0x220] sm:$0xff]
        %v5838 = vld [vmem:[%s505 + $0x228] sm:$0xff]
        %v5839 = vld [vmem:[%s505 + $0x230] sm:$0xff]
        %v5840 = vld [vmem:[%s505 + $0x238] sm:$0xff]
        %v5841 = vld [vmem:[%s505 + $0x240] sm:$0xff]
        %v5842 = vld [vmem:[%s505 + $0x248] sm:$0xff]
        %v5843 = vld [vmem:[%s505 + $0x250] sm:$0xff]
        %v5844 = vld [vmem:[%s505 + $0x258] sm:$0xff]
        %v5845 = vld [vmem:[%s505 + $0x260] sm:$0xff]
        %v5846 = vld [vmem:[%s505 + $0x268] sm:$0xff]
        %v5847 = vld [vmem:[%s505 + $0x270] sm:$0xff]
        %v5848 = vld [vmem:[%s505 + $0x278] sm:$0xff]
        %v5849 = vld [vmem:[%s505 + $0x280] sm:$0xff]
        %v5850 = vld [vmem:[%s505 + $0x288] sm:$0xff]
        %v5851 = vld [vmem:[%s505 + $0x290] sm:$0xff]
        %v5852 = vld [vmem:[%s505 + $0x298] sm:$0xff]
        %v5853 = vld [vmem:[%s505 + $0x2a0] sm:$0xff]
        %v5854 = vld [vmem:[%s505 + $0x2a8] sm:$0xff]
        %v5855 = vld [vmem:[%s505 + $0x2b0] sm:$0xff]
        %v5856 = vld [vmem:[%s505 + $0x2b8] sm:$0xff]
        %v5857 = vld [vmem:[%s505 + $0x2c0] sm:$0xff]
        %v5858 = vld [vmem:[%s505 + $0x2c8] sm:$0xff]
        %v5859 = vld [vmem:[%s505 + $0x2d0] sm:$0xff]
        %v5860 = vld [vmem:[%s505 + $0x2d8] sm:$0xff]
        %v5861 = vld [vmem:[%s505 + $0x2e0] sm:$0xff]
        %v5862 = vld [vmem:[%s505 + $0x2e8] sm:$0xff]
        %v5863 = vld [vmem:[%s505 + $0x2f0] sm:$0xff]
        %v5864 = vld [vmem:[%s505 + $0x2f8] sm:$0xff]
        %v5865 = vld [vmem:[%s505 + $0x300] sm:$0xff]
        %v5866 = vld [vmem:[%s505 + $0x308] sm:$0xff]
        %v5867 = vld [vmem:[%s505 + $0x310] sm:$0xff]
        %v5868 = vld [vmem:[%s505 + $0x318] sm:$0xff]
        %v5869 = vld [vmem:[%s505 + $0x320] sm:$0xff]
        %v5870 = vld [vmem:[%s505 + $0x328] sm:$0xff]
        %v5871 = vld [vmem:[%s505 + $0x330] sm:$0xff]
        %v5872 = vld [vmem:[%s505 + $0x338] sm:$0xff]
        %v5873 = vld [vmem:[%s505 + $0x340] sm:$0xff]
        %v5874 = vld [vmem:[%s505 + $0x348] sm:$0xff]
        %v5875 = vld [vmem:[%s505 + $0x350] sm:$0xff]
        %v5876 = vld [vmem:[%s505 + $0x358] sm:$0xff]
        %v5877 = vld [vmem:[%s505 + $0x360] sm:$0xff]
        %v5878 = vld [vmem:[%s505 + $0x368] sm:$0xff]
        %v5879 = vld [vmem:[%s505 + $0x370] sm:$0xff]
        %v5880 = vld [vmem:[%s505 + $0x378] sm:$0xff]
        %v5881 = vld [vmem:[%s505 + $0x380] sm:$0xff]
        %v5882 = vld [vmem:[%s505 + $0x388] sm:$0xff]
        %v5883 = vld [vmem:[%s505 + $0x390] sm:$0xff]
        %v5884 = vld [vmem:[%s505 + $0x398] sm:$0xff]
        %v5885 = vld [vmem:[%s505 + $0x3a0] sm:$0xff]
        %v5886 = vld [vmem:[%s505 + $0x3a8] sm:$0xff]
        %v5887 = vld [vmem:[%s505 + $0x3b0] sm:$0xff]
        %v5888 = vld [vmem:[%s505 + $0x3b8] sm:$0xff]
        %v5889 = vld [vmem:[%s505 + $0x3c0] sm:$0xff]
        %v5890 = vld [vmem:[%s505 + $0x3c8] sm:$0xff]
        %v5891 = vld [vmem:[%s505 + $0x3d0] sm:$0xff]
        %v5892 = vld [vmem:[%s505 + $0x3d8] sm:$0xff]
        %v5893 = vld [vmem:[%s505 + $0x3e0] sm:$0xff]
        %v5894 = vld [vmem:[%s505 + $0x3e8] sm:$0xff]
        %v5895 = vld [vmem:[%s505 + $0x3f0] sm:$0xff]
        %v5896 = vld [vmem:[%s505 + $0x3f8] sm:$0xff]
        %v5897 = vld [vmem:[%s505 + $0x400] sm:$0xff]
        %v5898 = vld [vmem:[%s505 + $0x408] sm:$0xff]
        %v5899 = vld [vmem:[%s505 + $0x410] sm:$0xff]
        %v5900 = vld [vmem:[%s505 + $0x418] sm:$0xff]
        %v5901 = vld [vmem:[%s505 + $0x420] sm:$0xff]
        %v5902 = vld [vmem:[%s505 + $0x428] sm:$0xff]
        %v5903 = vld [vmem:[%s505 + $0x430] sm:$0xff]
        %v5904 = vld [vmem:[%s505 + $0x438] sm:$0xff]
        %v5905 = vld [vmem:[%s505 + $0x440] sm:$0xff]
        %v5906 = vld [vmem:[%s505 + $0x448] sm:$0xff]
        %v5907 = vld [vmem:[%s505 + $0x450] sm:$0xff]
        %v5908 = vld [vmem:[%s505 + $0x458] sm:$0xff]
        %v5909 = vld [vmem:[%s505 + $0x460] sm:$0xff]
        %v5910 = vld [vmem:[%s505 + $0x468] sm:$0xff]
        %v5911 = vld [vmem:[%s505 + $0x470] sm:$0xff]
        %v5912 = vld [vmem:[%s505 + $0x478] sm:$0xff]
        %v5913 = vld [vmem:[%s505 + $0x480] sm:$0xff]
        %v5914 = vld [vmem:[%s505 + $0x488] sm:$0xff]
        %v5915 = vld [vmem:[%s505 + $0x490] sm:$0xff]
        %v5916 = vld [vmem:[%s505 + $0x498] sm:$0xff]
        %v5917 = vld [vmem:[%s505 + $0x4a0] sm:$0xff]
        %v5918 = vld [vmem:[%s505 + $0x4a8] sm:$0xff]
        %v5919 = vld [vmem:[%s505 + $0x4b0] sm:$0xff]
        %v5920 = vld [vmem:[%s505 + $0x4b8] sm:$0xff]
        %v5921 = vld [vmem:[%s505 + $0x4c0] sm:$0xff]
        %v5922 = vld [vmem:[%s505 + $0x4c8] sm:$0xff]
        %v5923 = vld [vmem:[%s505 + $0x4d0] sm:$0xff]
        %v5924 = vld [vmem:[%s505 + $0x4d8] sm:$0xff]
        %v5925 = vld [vmem:[%s505 + $0x4e0] sm:$0xff]
        %v5926 = vld [vmem:[%s505 + $0x4e8] sm:$0xff]
        %v5927 = vld [vmem:[%s505 + $0x4f0] sm:$0xff]
        %v5928 = vld [vmem:[%s505 + $0x4f8] sm:$0xff]
        %v5929 = vld [vmem:[%s505 + $0x500] sm:$0xff]
        %v5930 = vld [vmem:[%s505 + $0x508] sm:$0xff]
        %v5931 = vld [vmem:[%s505 + $0x510] sm:$0xff]
        %v5932 = vld [vmem:[%s505 + $0x518] sm:$0xff]
        %v5933 = vld [vmem:[%s505 + $0x520] sm:$0xff]
        %v5934 = vld [vmem:[%s505 + $0x528] sm:$0xff]
        %v5935 = vld [vmem:[%s505 + $0x530] sm:$0xff]
        %v5936 = vld [vmem:[%s505 + $0x538] sm:$0xff]
        %v5937 = vld [vmem:[%s505 + $0x540] sm:$0xff]
        %v5938 = vld [vmem:[%s505 + $0x548] sm:$0xff]
        %v5939 = vld [vmem:[%s505 + $0x550] sm:$0xff]
        %v5940 = vld [vmem:[%s505 + $0x558] sm:$0xff]
        %v5941 = vld [vmem:[%s505 + $0x560] sm:$0xff]
        %v5942 = vld [vmem:[%s505 + $0x568] sm:$0xff]
        %v5943 = vld [vmem:[%s505 + $0x570] sm:$0xff]
        %v5944 = vld [vmem:[%s505 + $0x578] sm:$0xff]
        %v5945 = vld [vmem:[%s505 + $0x580] sm:$0xff]
        %v5946 = vld [vmem:[%s505 + $0x588] sm:$0xff]
        %v5947 = vld [vmem:[%s505 + $0x590] sm:$0xff]
        %v5948 = vld [vmem:[%s505 + $0x598] sm:$0xff]
        %v5949 = vld [vmem:[%s505 + $0x5a0] sm:$0xff]
        %v5950 = vld [vmem:[%s505 + $0x5a8] sm:$0xff]
        %v5951 = vld [vmem:[%s505 + $0x5b0] sm:$0xff]
        %v5952 = vld [vmem:[%s505 + $0x5b8] sm:$0xff]
        %v5953 = vld [vmem:[%s505 + $0x5c0] sm:$0xff]
        %v5954 = vld [vmem:[%s505 + $0x5c8] sm:$0xff]
        %v5955 = vld [vmem:[%s505 + $0x5d0] sm:$0xff]
        %v5956 = vld [vmem:[%s505 + $0x5d8] sm:$0xff]
        %v5957 = vld [vmem:[%s505 + $0x5e0] sm:$0xff]
        %v5958 = vld [vmem:[%s505 + $0x5e8] sm:$0xff]
        %v5959 = vld [vmem:[%s505 + $0x5f0] sm:$0xff]
        %v5960 = vld [vmem:[%s505 + $0x5f8] sm:$0xff]
        %v5961 = vld [vmem:[%s505 + $0x600] sm:$0xff]
        %v5962 = vld [vmem:[%s505 + $0x608] sm:$0xff]
        %v5963 = vld [vmem:[%s505 + $0x610] sm:$0xff]
        %v5964 = vld [vmem:[%s505 + $0x618] sm:$0xff]
        %v5965 = vld [vmem:[%s505 + $0x620] sm:$0xff]
        %v5966 = vld [vmem:[%s505 + $0x628] sm:$0xff]
        %v5967 = vld [vmem:[%s505 + $0x630] sm:$0xff]
        %v5968 = vld [vmem:[%s505 + $0x638] sm:$0xff]
        %v5969 = vld [vmem:[%s505 + $0x640] sm:$0xff]
        %v5970 = vld [vmem:[%s505 + $0x648] sm:$0xff]
        %v5971 = vld [vmem:[%s505 + $0x650] sm:$0xff]
        %v5972 = vld [vmem:[%s505 + $0x658] sm:$0xff]
        %v5973 = vld [vmem:[%s505 + $0x660] sm:$0xff]
        %v5974 = vld [vmem:[%s505 + $0x668] sm:$0xff]
        %v5975 = vld [vmem:[%s505 + $0x670] sm:$0xff]
        %v5976 = vld [vmem:[%s505 + $0x678] sm:$0xff]
        %v5977 = vld [vmem:[%s505 + $0x680] sm:$0xff]
        %v5978 = vld [vmem:[%s505 + $0x688] sm:$0xff]
        %v5979 = vld [vmem:[%s505 + $0x690] sm:$0xff]
        %v5980 = vld [vmem:[%s505 + $0x698] sm:$0xff]
        %v5981 = vld [vmem:[%s505 + $0x6a0] sm:$0xff]
        %v5982 = vld [vmem:[%s505 + $0x6a8] sm:$0xff]
        %v5983 = vld [vmem:[%s505 + $0x6b0] sm:$0xff]
        %v5984 = vld [vmem:[%s505 + $0x6b8] sm:$0xff]
        %v5985 = vld [vmem:[%s505 + $0x6c0] sm:$0xff]
        %v5986 = vld [vmem:[%s505 + $0x6c8] sm:$0xff]
        %v5987 = vld [vmem:[%s505 + $0x6d0] sm:$0xff]
        %v5988 = vld [vmem:[%s505 + $0x6d8] sm:$0xff]
        %v5989 = vld [vmem:[%s505 + $0x6e0] sm:$0xff]
        %v5990 = vld [vmem:[%s505 + $0x6e8] sm:$0xff]
        %v5991 = vld [vmem:[%s505 + $0x6f0] sm:$0xff]
        %v5992 = vld [vmem:[%s505 + $0x6f8] sm:$0xff]
        %v5993 = vld [vmem:[%s505 + $0x700] sm:$0xff]
        %v5994 = vld [vmem:[%s505 + $0x708] sm:$0xff]
        %v5995 = vld [vmem:[%s505 + $0x710] sm:$0xff]
        %v5996 = vld [vmem:[%s505 + $0x718] sm:$0xff]
        %v5997 = vld [vmem:[%s505 + $0x720] sm:$0xff]
        %v5998 = vld [vmem:[%s505 + $0x728] sm:$0xff]
        %v5999 = vld [vmem:[%s505 + $0x730] sm:$0xff]
        %v6000 = vld [vmem:[%s505 + $0x738] sm:$0xff]
        %v6001 = vld [vmem:[%s505 + $0x740] sm:$0xff]
        %v6002 = vld [vmem:[%s505 + $0x748] sm:$0xff]
        %v6003 = vld [vmem:[%s505 + $0x750] sm:$0xff]
        %v6004 = vld [vmem:[%s505 + $0x758] sm:$0xff]
        %v6005 = vld [vmem:[%s505 + $0x760] sm:$0xff]
        %v6006 = vld [vmem:[%s505 + $0x768] sm:$0xff]
        %v6007 = vld [vmem:[%s505 + $0x770] sm:$0xff]
        %v6008 = vld [vmem:[%s505 + $0x778] sm:$0xff]
        %v6009 = vld [vmem:[%s505 + $0x780] sm:$0xff]
        %v6010 = vld [vmem:[%s505 + $0x788] sm:$0xff]
        %v6011 = vld [vmem:[%s505 + $0x790] sm:$0xff]
        %v6012 = vld [vmem:[%s505 + $0x798] sm:$0xff]
        %v6013 = vld [vmem:[%s505 + $0x7a0] sm:$0xff]
        %v6014 = vld [vmem:[%s505 + $0x7a8] sm:$0xff]
        %v6015 = vld [vmem:[%s505 + $0x7b0] sm:$0xff]
        %v6016 = vld [vmem:[%s505 + $0x7b8] sm:$0xff]
        %v6017 = vld [vmem:[%s505 + $0x7c0] sm:$0xff]
        %v6018 = vld [vmem:[%s505 + $0x7c8] sm:$0xff]
        %v6019 = vld [vmem:[%s505 + $0x7d0] sm:$0xff]
        %v6020 = vld [vmem:[%s505 + $0x7d8] sm:$0xff]
        %v6021 = vld [vmem:[%s505 + $0x7e0] sm:$0xff]
        %v6022 = vld [vmem:[%s505 + $0x7e8] sm:$0xff]
        %v6023 = vld [vmem:[%s505 + $0x7f0] sm:$0xff]
        %v6024 = vld [vmem:[%s505 + $0x7f8] sm:$0xff]
        %v6025 = vld [vmem:[%s505 + $0x800] sm:$0xff]
        %v6026 = vld [vmem:[%s505 + $0x808] sm:$0xff]
        %v6027 = vld [vmem:[%s505 + $0x810] sm:$0xff]
        %v6028 = vld [vmem:[%s505 + $0x818] sm:$0xff]
        %v6029 = vld [vmem:[%s505 + $0x820] sm:$0xff]
        %v6030 = vld [vmem:[%s505 + $0x828] sm:$0xff]
        %v6031 = vld [vmem:[%s505 + $0x830] sm:$0xff]
        %v6032 = vld [vmem:[%s505 + $0x838] sm:$0xff]
        %v6033 = vld [vmem:[%s505 + $0x840] sm:$0xff]
        %v6034 = vld [vmem:[%s505 + $0x848] sm:$0xff]
        %v6035 = vld [vmem:[%s505 + $0x850] sm:$0xff]
        %v6036 = vld [vmem:[%s505 + $0x858] sm:$0xff]
        %v6037 = vld [vmem:[%s505 + $0x860] sm:$0xff]
        %v6038 = vld [vmem:[%s505 + $0x868] sm:$0xff]
        %v6039 = vld [vmem:[%s505 + $0x870] sm:$0xff]
        %v6040 = vld [vmem:[%s505 + $0x878] sm:$0xff]
        %v6041 = vld [vmem:[%s505 + $0x880] sm:$0xff]
        %v6042 = vld [vmem:[%s505 + $0x888] sm:$0xff]
        %v6043 = vld [vmem:[%s505 + $0x890] sm:$0xff]
        %v6044 = vld [vmem:[%s505 + $0x898] sm:$0xff]
        %v6045 = vld [vmem:[%s505 + $0x8a0] sm:$0xff]
        %v6046 = vld [vmem:[%s505 + $0x8a8] sm:$0xff]
        %v6047 = vld [vmem:[%s505 + $0x8b0] sm:$0xff]
        %v6048 = vld [vmem:[%s505 + $0x8b8] sm:$0xff]
        %v6049 = vld [vmem:[%s505 + $0x8c0] sm:$0xff]
        %v6050 = vld [vmem:[%s505 + $0x8c8] sm:$0xff]
        %v6051 = vld [vmem:[%s505 + $0x8d0] sm:$0xff]
        %v6052 = vld [vmem:[%s505 + $0x8d8] sm:$0xff]
        %v6053 = vld [vmem:[%s505 + $0x8e0] sm:$0xff]
        %v6054 = vld [vmem:[%s505 + $0x8e8] sm:$0xff]
        %v6055 = vld [vmem:[%s505 + $0x8f0] sm:$0xff]
        %v6056 = vld [vmem:[%s505 + $0x8f8] sm:$0xff]
        %v6057 = vld [vmem:[%s505 + $0x900] sm:$0xff]
        %v6058 = vld [vmem:[%s505 + $0x908] sm:$0xff]
        %v6059 = vld [vmem:[%s505 + $0x910] sm:$0xff]
        %v6060 = vld [vmem:[%s505 + $0x918] sm:$0xff]
        %v6061 = vld [vmem:[%s505 + $0x920] sm:$0xff]
        %v6062 = vld [vmem:[%s505 + $0x928] sm:$0xff]
        %v6063 = vld [vmem:[%s505 + $0x930] sm:$0xff]
        %v6064 = vld [vmem:[%s505 + $0x938] sm:$0xff]
        %v6065 = vld [vmem:[%s505 + $0x940] sm:$0xff]
        %v6066 = vld [vmem:[%s505 + $0x948] sm:$0xff]
        %v6067 = vld [vmem:[%s505 + $0x950] sm:$0xff]
        %v6068 = vld [vmem:[%s505 + $0x958] sm:$0xff]
        %v6069 = vld [vmem:[%s505 + $0x960] sm:$0xff]
        %v6070 = vld [vmem:[%s505 + $0x968] sm:$0xff]
        %v6071 = vld [vmem:[%s505 + $0x970] sm:$0xff]
        %v6072 = vld [vmem:[%s505 + $0x978] sm:$0xff]
        %v6073 = vld [vmem:[%s505 + $0x980] sm:$0xff]
        %v6074 = vld [vmem:[%s505 + $0x988] sm:$0xff]
        %v6075 = vld [vmem:[%s505 + $0x990] sm:$0xff]
        %v6076 = vld [vmem:[%s505 + $0x998] sm:$0xff]
        %v6077 = vld [vmem:[%s505 + $0x9a0] sm:$0xff]
        %v6078 = vld [vmem:[%s505 + $0x9a8] sm:$0xff]
        %v6079 = vld [vmem:[%s505 + $0x9b0] sm:$0xff]
        %v6080 = vld [vmem:[%s505 + $0x9b8] sm:$0xff]
        %v6081 = vld [vmem:[%s505 + $0x9c0] sm:$0xff]
        %v6082 = vld [vmem:[%s505 + $0x9c8] sm:$0xff]
        %v6083 = vld [vmem:[%s505 + $0x9d0] sm:$0xff]
        %v6084 = vld [vmem:[%s505 + $0x9d8] sm:$0xff]
        %v6085 = vld [vmem:[%s505 + $0x9e0] sm:$0xff]
        %v6086 = vld [vmem:[%s505 + $0x9e8] sm:$0xff]
        %v6087 = vld [vmem:[%s505 + $0x9f0] sm:$0xff]
        %v6088 = vld [vmem:[%s505 + $0x9f8] sm:$0xff]
        %v6089 = vld [vmem:[%s505 + $0xa00] sm:$0xff]
        %v6090 = vld [vmem:[%s505 + $0xa08] sm:$0xff]
        %v6091 = vld [vmem:[%s505 + $0xa10] sm:$0xff]
        %v6092 = vld [vmem:[%s505 + $0xa18] sm:$0xff]
        %v6093 = vld [vmem:[%s505 + $0xa20] sm:$0xff]
        %v6094 = vld [vmem:[%s505 + $0xa28] sm:$0xff]
        %v6095 = vld [vmem:[%s505 + $0xa30] sm:$0xff]
        %v6096 = vld [vmem:[%s505 + $0xa38] sm:$0xff]
        %v6097 = vld [vmem:[%s505 + $0xa40] sm:$0xff]
        %v6098 = vld [vmem:[%s505 + $0xa48] sm:$0xff]
        %v6099 = vld [vmem:[%s505 + $0xa50] sm:$0xff]
        %v6100 = vld [vmem:[%s505 + $0xa58] sm:$0xff]
        %v6101 = vld [vmem:[%s505 + $0xa60] sm:$0xff]
        %v6102 = vld [vmem:[%s505 + $0xa68] sm:$0xff]
        %v6103 = vld [vmem:[%s505 + $0xa70] sm:$0xff]
        %v6104 = vld [vmem:[%s505 + $0xa78] sm:$0xff]
        %v6105 = vld [vmem:[%s505 + $0xa80] sm:$0xff]
        %v6106 = vld [vmem:[%s505 + $0xa88] sm:$0xff]
        %v6107 = vld [vmem:[%s505 + $0xa90] sm:$0xff]
        %v6108 = vld [vmem:[%s505 + $0xa98] sm:$0xff]
        %v6109 = vld [vmem:[%s505 + $0xaa0] sm:$0xff]
        %v6110 = vld [vmem:[%s505 + $0xaa8] sm:$0xff]
        %v6111 = vld [vmem:[%s505 + $0xab0] sm:$0xff]
        %v6112 = vld [vmem:[%s505 + $0xab8] sm:$0xff]
        %v6113 = vld [vmem:[%s505 + $0xac0] sm:$0xff]
        %v6114 = vld [vmem:[%s505 + $0xac8] sm:$0xff]
        %v6115 = vld [vmem:[%s505 + $0xad0] sm:$0xff]
        %v6116 = vld [vmem:[%s505 + $0xad8] sm:$0xff]
        %v6117 = vld [vmem:[%s505 + $0xae0] sm:$0xff]
        %v6118 = vld [vmem:[%s505 + $0xae8] sm:$0xff]
        %v6119 = vld [vmem:[%s505 + $0xaf0] sm:$0xff]
        %v6120 = vld [vmem:[%s505 + $0xaf8] sm:$0xff]
        %v6121 = vld [vmem:[%s505 + $0xb00] sm:$0xff]
        %v6122 = vld [vmem:[%s505 + $0xb08] sm:$0xff]
        %v6123 = vld [vmem:[%s505 + $0xb10] sm:$0xff]
        %v6124 = vld [vmem:[%s505 + $0xb18] sm:$0xff]
        %v6125 = vld [vmem:[%s505 + $0xb20] sm:$0xff]
        %v6126 = vld [vmem:[%s505 + $0xb28] sm:$0xff]
        %v6127 = vld [vmem:[%s505 + $0xb30] sm:$0xff]
        %v6128 = vld [vmem:[%s505 + $0xb38] sm:$0xff]
        %v6129 = vld [vmem:[%s505 + $0xb40] sm:$0xff]
        %v6130 = vld [vmem:[%s505 + $0xb48] sm:$0xff]
        %v6131 = vld [vmem:[%s505 + $0xb50] sm:$0xff]
        %v6132 = vld [vmem:[%s505 + $0xb58] sm:$0xff]
        %v6133 = vld [vmem:[%s505 + $0xb60] sm:$0xff]
        %v6134 = vld [vmem:[%s505 + $0xb68] sm:$0xff]
        %v6135 = vld [vmem:[%s505 + $0xb70] sm:$0xff]
        %v6136 = vld [vmem:[%s505 + $0xb78] sm:$0xff]
        %v6137 = vld [vmem:[%s505 + $0xb80] sm:$0xff]
        %v6138 = vld [vmem:[%s505 + $0xb88] sm:$0xff]
        %v6139 = vld [vmem:[%s505 + $0xb90] sm:$0xff]
        %v6140 = vld [vmem:[%s505 + $0xb98] sm:$0xff]
        %v6141 = vld [vmem:[%s505 + $0xba0] sm:$0xff]
        %v6142 = vld [vmem:[%s505 + $0xba8] sm:$0xff]
        %v6143 = vld [vmem:[%s505 + $0xbb0] sm:$0xff]
        %v6144 = vld [vmem:[%s505 + $0xbb8] sm:$0xff]
        %v6145 = vld [vmem:[%s505 + $0xbc0] sm:$0xff]
        %v6146 = vld [vmem:[%s505 + $0xbc8] sm:$0xff]
        %v6147 = vld [vmem:[%s505 + $0xbd0] sm:$0xff]
        %v6148 = vld [vmem:[%s505 + $0xbd8] sm:$0xff]
        %v6149 = vld [vmem:[%s505 + $0xbe0] sm:$0xff]
        %v6150 = vld [vmem:[%s505 + $0xbe8] sm:$0xff]
        %v6151 = vld [vmem:[%s505 + $0xbf0] sm:$0xff]
        %v6152 = vld [vmem:[%s505 + $0xbf8] sm:$0xff]
        %v6153 = vld [vmem:[%s505 + $0xc00] sm:$0xff]
        %v6154 = vld [vmem:[%s505 + $0xc08] sm:$0xff]
        %v6155 = vld [vmem:[%s505 + $0xc10] sm:$0xff]
        %v6156 = vld [vmem:[%s505 + $0xc18] sm:$0xff]
        %v6157 = vld [vmem:[%s505 + $0xc20] sm:$0xff]
        %v6158 = vld [vmem:[%s505 + $0xc28] sm:$0xff]
        %v6159 = vld [vmem:[%s505 + $0xc30] sm:$0xff]
        %v6160 = vld [vmem:[%s505 + $0xc38] sm:$0xff]
        %v6161 = vld [vmem:[%s505 + $0xc40] sm:$0xff]
        %v6162 = vld [vmem:[%s505 + $0xc48] sm:$0xff]
        %v6163 = vld [vmem:[%s505 + $0xc50] sm:$0xff]
        %v6164 = vld [vmem:[%s505 + $0xc58] sm:$0xff]
        %v6165 = vld [vmem:[%s505 + $0xc60] sm:$0xff]
        %v6166 = vld [vmem:[%s505 + $0xc68] sm:$0xff]
        %v6167 = vld [vmem:[%s505 + $0xc70] sm:$0xff]
        %v6168 = vld [vmem:[%s505 + $0xc78] sm:$0xff]
        %v6169 = vld [vmem:[%s505 + $0xc80] sm:$0xff]
        %v6170 = vld [vmem:[%s505 + $0xc88] sm:$0xff]
        %v6171 = vld [vmem:[%s505 + $0xc90] sm:$0xff]
        %v6172 = vld [vmem:[%s505 + $0xc98] sm:$0xff]
        %v6173 = vld [vmem:[%s505 + $0xca0] sm:$0xff]
        %v6174 = vld [vmem:[%s505 + $0xca8] sm:$0xff]
        %v6175 = vld [vmem:[%s505 + $0xcb0] sm:$0xff]
        %v6176 = vld [vmem:[%s505 + $0xcb8] sm:$0xff]
        %v6177 = vld [vmem:[%s505 + $0xcc0] sm:$0xff]
        %v6178 = vld [vmem:[%s505 + $0xcc8] sm:$0xff]
        %v6179 = vld [vmem:[%s505 + $0xcd0] sm:$0xff]
        %v6180 = vld [vmem:[%s505 + $0xcd8] sm:$0xff]
        %v6181 = vld [vmem:[%s505 + $0xce0] sm:$0xff]
        %v6182 = vld [vmem:[%s505 + $0xce8] sm:$0xff]
        %v6183 = vld [vmem:[%s505 + $0xcf0] sm:$0xff]
        %v6184 = vld [vmem:[%s505 + $0xcf8] sm:$0xff]
        %v6185 = vld [vmem:[%s505 + $0xd00] sm:$0xff]
        %v6186 = vld [vmem:[%s505 + $0xd08] sm:$0xff]
        %v6187 = vld [vmem:[%s505 + $0xd10] sm:$0xff]
        %v6188 = vld [vmem:[%s505 + $0xd18] sm:$0xff]
        %v6189 = vld [vmem:[%s505 + $0xd20] sm:$0xff]
        %v6190 = vld [vmem:[%s505 + $0xd28] sm:$0xff]
        %v6191 = vld [vmem:[%s505 + $0xd30] sm:$0xff]
        %v6192 = vld [vmem:[%s505 + $0xd38] sm:$0xff]
        %v6193 = vld [vmem:[%s505 + $0xd40] sm:$0xff]
        %v6194 = vld [vmem:[%s505 + $0xd48] sm:$0xff]
        %v6195 = vld [vmem:[%s505 + $0xd50] sm:$0xff]
        %v6196 = vld [vmem:[%s505 + $0xd58] sm:$0xff]
        %v6197 = vld [vmem:[%s505 + $0xd60] sm:$0xff]
        %v6198 = vld [vmem:[%s505 + $0xd68] sm:$0xff]
        %v6199 = vld [vmem:[%s505 + $0xd70] sm:$0xff]
        %v6200 = vld [vmem:[%s505 + $0xd78] sm:$0xff]
        %v6201 = vld [vmem:[%s505 + $0xd80] sm:$0xff]
        %v6202 = vld [vmem:[%s505 + $0xd88] sm:$0xff]
        %v6203 = vld [vmem:[%s505 + $0xd90] sm:$0xff]
        %v6204 = vld [vmem:[%s505 + $0xd98] sm:$0xff]
        %v6205 = vld [vmem:[%s505 + $0xda0] sm:$0xff]
        %v6206 = vld [vmem:[%s505 + $0xda8] sm:$0xff]
        %v6207 = vld [vmem:[%s505 + $0xdb0] sm:$0xff]
        %v6208 = vld [vmem:[%s505 + $0xdb8] sm:$0xff]
        %v6209 = vld [vmem:[%s505 + $0xdc0] sm:$0xff]
        %v6210 = vld [vmem:[%s505 + $0xdc8] sm:$0xff]
        %v6211 = vld [vmem:[%s505 + $0xdd0] sm:$0xff]
        %v6212 = vld [vmem:[%s505 + $0xdd8] sm:$0xff]
        %v6213 = vld [vmem:[%s505 + $0xde0] sm:$0xff]
        %v6214 = vld [vmem:[%s505 + $0xde8] sm:$0xff]
        %v6215 = vld [vmem:[%s505 + $0xdf0] sm:$0xff]
        %v6216 = vld [vmem:[%s505 + $0xdf8] sm:$0xff]
        %v6217 = vld [vmem:[%s505 + $0xe00] sm:$0xff]
        %v6218 = vld [vmem:[%s505 + $0xe08] sm:$0xff]
        %v6219 = vld [vmem:[%s505 + $0xe10] sm:$0xff]
        %v6220 = vld [vmem:[%s505 + $0xe18] sm:$0xff]
        %v6221 = vld [vmem:[%s505 + $0xe20] sm:$0xff]
        %v6222 = vld [vmem:[%s505 + $0xe28] sm:$0xff]
        %v6223 = vld [vmem:[%s505 + $0xe30] sm:$0xff]
        %v6224 = vld [vmem:[%s505 + $0xe38] sm:$0xff]
        %v6225 = vld [vmem:[%s505 + $0xe40] sm:$0xff]
        %v6226 = vld [vmem:[%s505 + $0xe48] sm:$0xff]
        %v6227 = vld [vmem:[%s505 + $0xe50] sm:$0xff]
        %v6228 = vld [vmem:[%s505 + $0xe58] sm:$0xff]
        %v6229 = vld [vmem:[%s505 + $0xe60] sm:$0xff]
        %v6230 = vld [vmem:[%s505 + $0xe68] sm:$0xff]
        %v6231 = vld [vmem:[%s505 + $0xe70] sm:$0xff]
        %v6232 = vld [vmem:[%s505 + $0xe78] sm:$0xff]
        %v6233 = vld [vmem:[%s505 + $0xe80] sm:$0xff]
        %v6234 = vld [vmem:[%s505 + $0xe88] sm:$0xff]
        %v6235 = vld [vmem:[%s505 + $0xe90] sm:$0xff]
        %v6236 = vld [vmem:[%s505 + $0xe98] sm:$0xff]
        %v6237 = vld [vmem:[%s505 + $0xea0] sm:$0xff]
        %v6238 = vld [vmem:[%s505 + $0xea8] sm:$0xff]
        %v6239 = vld [vmem:[%s505 + $0xeb0] sm:$0xff]
        %v6240 = vld [vmem:[%s505 + $0xeb8] sm:$0xff]
        %v6241 = vld [vmem:[%s505 + $0xec0] sm:$0xff]
        %v6242 = vld [vmem:[%s505 + $0xec8] sm:$0xff]
        %v6243 = vld [vmem:[%s505 + $0xed0] sm:$0xff]
        %v6244 = vld [vmem:[%s505 + $0xed8] sm:$0xff]
        %v6245 = vld [vmem:[%s505 + $0xee0] sm:$0xff]
        %v6246 = vld [vmem:[%s505 + $0xee8] sm:$0xff]
        %v6247 = vld [vmem:[%s505 + $0xef0] sm:$0xff]
        %v6248 = vld [vmem:[%s505 + $0xef8] sm:$0xff]
        %v6249 = vld [vmem:[%s505 + $0xf00] sm:$0xff]
        %v6250 = vld [vmem:[%s505 + $0xf08] sm:$0xff]
        %v6251 = vld [vmem:[%s505 + $0xf10] sm:$0xff]
        %v6252 = vld [vmem:[%s505 + $0xf18] sm:$0xff]
        %v6253 = vld [vmem:[%s505 + $0xf20] sm:$0xff]
        %v6254 = vld [vmem:[%s505 + $0xf28] sm:$0xff]
        %v6255 = vld [vmem:[%s505 + $0xf30] sm:$0xff]
        %v6256 = vld [vmem:[%s505 + $0xf38] sm:$0xff]
        %v6257 = vld [vmem:[%s505 + $0xf40] sm:$0xff]
        %v6258 = vld [vmem:[%s505 + $0xf48] sm:$0xff]
        %v6259 = vld [vmem:[%s505 + $0xf50] sm:$0xff]
        %v6260 = vld [vmem:[%s505 + $0xf58] sm:$0xff]
        %v6261 = vld [vmem:[%s505 + $0xf60] sm:$0xff]
        %v6262 = vld [vmem:[%s505 + $0xf68] sm:$0xff]
        %v6263 = vld [vmem:[%s505 + $0xf70] sm:$0xff]
        %v6264 = vld [vmem:[%s505 + $0xf78] sm:$0xff]
        %v6265 = vld [vmem:[%s505 + $0xf80] sm:$0xff]
        %v6266 = vld [vmem:[%s505 + $0xf88] sm:$0xff]
        %v6267 = vld [vmem:[%s505 + $0xf90] sm:$0xff]
        %v6268 = vld [vmem:[%s505 + $0xf98] sm:$0xff]
        %v6269 = vld [vmem:[%s505 + $0xfa0] sm:$0xff]
        %v6270 = vld [vmem:[%s505 + $0xfa8] sm:$0xff]
        %v6271 = vld [vmem:[%s505 + $0xfb0] sm:$0xff]
        %v6272 = vld [vmem:[%s505 + $0xfb8] sm:$0xff]
        %v6273 = vld [vmem:[%s505 + $0xfc0] sm:$0xff]
        %v6274 = vld [vmem:[%s505 + $0xfc8] sm:$0xff]
        %v6275 = vld [vmem:[%s505 + $0xfd0] sm:$0xff]
        %v6276 = vld [vmem:[%s505 + $0xfd8] sm:$0xff]
        %v6277 = vld [vmem:[%s505 + $0xfe0] sm:$0xff]
        %v6278 = vld [vmem:[%s505 + $0xfe8] sm:$0xff]
        %v6279 = vld [vmem:[%s505 + $0xff0] sm:$0xff]
        %v6280 = vld [vmem:[%s505 + $0xff8] sm:$0xff]
        %v6281 = vlaneseq
        %v6282 = vshrl.u32 %v6281, 7
        %v6283 = vsub.s32 3, %v6282
        %v6284 = vrot.slane %v894, %v6283
        %v6285 = vlaneseq
        %v6286 = vshrl.u32 %v6285, 7
        %v6287 = vsub.s32 3, %v6286
        %v6288 = vrot.slane %v895, %v6287
        %v6289 = vlaneseq
        %v6290 = vshrl.u32 %v6289, 7
        %v6291 = vsub.s32 3, %v6290
        %v6292 = vrot.slane %v896, %v6291
        %v6293 = vlaneseq
        %v6294 = vshrl.u32 %v6293, 7
        %v6295 = vsub.s32 3, %v6294
        %v6296 = vrot.slane %v897, %v6295
        %v6809 = vunpack.c.l.b16 %v5769
        %v6810 = vunpack.c.h.b16 %v5769
        %v6811 = vunpack.c.l.b16 %v5770
        %v6812 = vunpack.c.h.b16 %v5770
        %v6813 = vunpack.c.l.b16 %v5771
        %v6814 = vunpack.c.h.b16 %v5771
        %v6815 = vunpack.c.l.b16 %v5772
        %v6816 = vunpack.c.h.b16 %v5772
        %v6817 = vunpack.c.l.b16 %v5773
        %v6818 = vunpack.c.h.b16 %v5773
        %v6819 = vunpack.c.l.b16 %v5774
        %v6820 = vunpack.c.h.b16 %v5774
        %v6821 = vunpack.c.l.b16 %v5775
        %v6822 = vunpack.c.h.b16 %v5775
        %v6823 = vunpack.c.l.b16 %v5776
        %v6824 = vunpack.c.h.b16 %v5776
        %v6825 = vunpack.c.l.b16 %v5777
        %v6826 = vunpack.c.h.b16 %v5777
        %v6827 = vunpack.c.l.b16 %v5778
        %v6828 = vunpack.c.h.b16 %v5778
        %v6829 = vunpack.c.l.b16 %v5779
        %v6830 = vunpack.c.h.b16 %v5779
        %v6831 = vunpack.c.l.b16 %v5780
        %v6832 = vunpack.c.h.b16 %v5780
        %v6833 = vunpack.c.l.b16 %v5781
        %v6834 = vunpack.c.h.b16 %v5781
        %v6835 = vunpack.c.l.b16 %v5782
        %v6836 = vunpack.c.h.b16 %v5782
        %v6837 = vunpack.c.l.b16 %v5783
        %v6838 = vunpack.c.h.b16 %v5783
        %v6839 = vunpack.c.l.b16 %v5784
        %v6840 = vunpack.c.h.b16 %v5784
        %v6841 = vunpack.c.l.b16 %v5785
        %v6842 = vunpack.c.h.b16 %v5785
        %v6843 = vunpack.c.l.b16 %v5786
        %v6844 = vunpack.c.h.b16 %v5786
        %v6845 = vunpack.c.l.b16 %v5787
        %v6846 = vunpack.c.h.b16 %v5787
        %v6847 = vunpack.c.l.b16 %v5788
        %v6848 = vunpack.c.h.b16 %v5788
        %v6849 = vunpack.c.l.b16 %v5789
        %v6850 = vunpack.c.h.b16 %v5789
        %v6851 = vunpack.c.l.b16 %v5790
        %v6852 = vunpack.c.h.b16 %v5790
        %v6853 = vunpack.c.l.b16 %v5791
        %v6854 = vunpack.c.h.b16 %v5791
        %v6855 = vunpack.c.l.b16 %v5792
        %v6856 = vunpack.c.h.b16 %v5792
        %v6857 = vunpack.c.l.b16 %v5793
        %v6858 = vunpack.c.h.b16 %v5793
        %v6859 = vunpack.c.l.b16 %v5794
        %v6860 = vunpack.c.h.b16 %v5794
        %v6861 = vunpack.c.l.b16 %v5795
        %v6862 = vunpack.c.h.b16 %v5795
        %v6863 = vunpack.c.l.b16 %v5796
        %v6864 = vunpack.c.h.b16 %v5796
        %v6865 = vunpack.c.l.b16 %v5797
        %v6866 = vunpack.c.h.b16 %v5797
        %v6867 = vunpack.c.l.b16 %v5798
        %v6868 = vunpack.c.h.b16 %v5798
        %v6869 = vunpack.c.l.b16 %v5799
        %v6870 = vunpack.c.h.b16 %v5799
        %v6871 = vunpack.c.l.b16 %v5800
        %v6872 = vunpack.c.h.b16 %v5800
        %v6873 = vunpack.c.l.b16 %v5801
        %v6874 = vunpack.c.h.b16 %v5801
        %v6875 = vunpack.c.l.b16 %v5802
        %v6876 = vunpack.c.h.b16 %v5802
        %v6877 = vunpack.c.l.b16 %v5803
        %v6878 = vunpack.c.h.b16 %v5803
        %v6879 = vunpack.c.l.b16 %v5804
        %v6880 = vunpack.c.h.b16 %v5804
        %v6881 = vunpack.c.l.b16 %v5805
        %v6882 = vunpack.c.h.b16 %v5805
        %v6883 = vunpack.c.l.b16 %v5806
        %v6884 = vunpack.c.h.b16 %v5806
        %v6885 = vunpack.c.l.b16 %v5807
        %v6886 = vunpack.c.h.b16 %v5807
        %v6887 = vunpack.c.l.b16 %v5808
        %v6888 = vunpack.c.h.b16 %v5808
        %v6889 = vunpack.c.l.b16 %v5809
        %v6890 = vunpack.c.h.b16 %v5809
        %v6891 = vunpack.c.l.b16 %v5810
        %v6892 = vunpack.c.h.b16 %v5810
        %v6893 = vunpack.c.l.b16 %v5811
        %v6894 = vunpack.c.h.b16 %v5811
        %v6895 = vunpack.c.l.b16 %v5812
        %v6896 = vunpack.c.h.b16 %v5812
        %v6897 = vunpack.c.l.b16 %v5813
        %v6898 = vunpack.c.h.b16 %v5813
        %v6899 = vunpack.c.l.b16 %v5814
        %v6900 = vunpack.c.h.b16 %v5814
        %v6901 = vunpack.c.l.b16 %v5815
        %v6902 = vunpack.c.h.b16 %v5815
        %v6903 = vunpack.c.l.b16 %v5816
        %v6904 = vunpack.c.h.b16 %v5816
        %v6905 = vunpack.c.l.b16 %v5817
        %v6906 = vunpack.c.h.b16 %v5817
        %v6907 = vunpack.c.l.b16 %v5818
        %v6908 = vunpack.c.h.b16 %v5818
        %v6909 = vunpack.c.l.b16 %v5819
        %v6910 = vunpack.c.h.b16 %v5819
        %v6911 = vunpack.c.l.b16 %v5820
        %v6912 = vunpack.c.h.b16 %v5820
        %v6913 = vunpack.c.l.b16 %v5821
        %v6914 = vunpack.c.h.b16 %v5821
        %v6915 = vunpack.c.l.b16 %v5822
        %v6916 = vunpack.c.h.b16 %v5822
        %v6917 = vunpack.c.l.b16 %v5823
        %v6918 = vunpack.c.h.b16 %v5823
        %v6919 = vunpack.c.l.b16 %v5824
        %v6920 = vunpack.c.h.b16 %v5824
        %v6921 = vunpack.c.l.b16 %v5825
        %v6922 = vunpack.c.h.b16 %v5825
        %v6923 = vunpack.c.l.b16 %v5826
        %v6924 = vunpack.c.h.b16 %v5826
        %v6925 = vunpack.c.l.b16 %v5827
        %v6926 = vunpack.c.h.b16 %v5827
        %v6927 = vunpack.c.l.b16 %v5828
        %v6928 = vunpack.c.h.b16 %v5828
        %v6929 = vunpack.c.l.b16 %v5829
        %v6930 = vunpack.c.h.b16 %v5829
        %v6931 = vunpack.c.l.b16 %v5830
        %v6932 = vunpack.c.h.b16 %v5830
        %v6933 = vunpack.c.l.b16 %v5831
        %v6934 = vunpack.c.h.b16 %v5831
        %v6935 = vunpack.c.l.b16 %v5832
        %v6936 = vunpack.c.h.b16 %v5832
        %v6937 = vunpack.c.l.b16 %v5833
        %v6938 = vunpack.c.h.b16 %v5833
        %v6939 = vunpack.c.l.b16 %v5834
        %v6940 = vunpack.c.h.b16 %v5834
        %v6941 = vunpack.c.l.b16 %v5835
        %v6942 = vunpack.c.h.b16 %v5835
        %v6943 = vunpack.c.l.b16 %v5836
        %v6944 = vunpack.c.h.b16 %v5836
        %v6945 = vunpack.c.l.b16 %v5837
        %v6946 = vunpack.c.h.b16 %v5837
        %v6947 = vunpack.c.l.b16 %v5838
        %v6948 = vunpack.c.h.b16 %v5838
        %v6949 = vunpack.c.l.b16 %v5839
        %v6950 = vunpack.c.h.b16 %v5839
        %v6951 = vunpack.c.l.b16 %v5840
        %v6952 = vunpack.c.h.b16 %v5840
        %v6953 = vunpack.c.l.b16 %v5841
        %v6954 = vunpack.c.h.b16 %v5841
        %v6955 = vunpack.c.l.b16 %v5842
        %v6956 = vunpack.c.h.b16 %v5842
        %v6957 = vunpack.c.l.b16 %v5843
        %v6958 = vunpack.c.h.b16 %v5843
        %v6959 = vunpack.c.l.b16 %v5844
        %v6960 = vunpack.c.h.b16 %v5844
        %v6961 = vunpack.c.l.b16 %v5845
        %v6962 = vunpack.c.h.b16 %v5845
        %v6963 = vunpack.c.l.b16 %v5846
        %v6964 = vunpack.c.h.b16 %v5846
        %v6965 = vunpack.c.l.b16 %v5847
        %v6966 = vunpack.c.h.b16 %v5847
        %v6967 = vunpack.c.l.b16 %v5848
        %v6968 = vunpack.c.h.b16 %v5848
        %v6969 = vunpack.c.l.b16 %v5849
        %v6970 = vunpack.c.h.b16 %v5849
        %v6971 = vunpack.c.l.b16 %v5850
        %v6972 = vunpack.c.h.b16 %v5850
        %v6973 = vunpack.c.l.b16 %v5851
        %v6974 = vunpack.c.h.b16 %v5851
        %v6975 = vunpack.c.l.b16 %v5852
        %v6976 = vunpack.c.h.b16 %v5852
        %v6977 = vunpack.c.l.b16 %v5853
        %v6978 = vunpack.c.h.b16 %v5853
        %v6979 = vunpack.c.l.b16 %v5854
        %v6980 = vunpack.c.h.b16 %v5854
        %v6981 = vunpack.c.l.b16 %v5855
        %v6982 = vunpack.c.h.b16 %v5855
        %v6983 = vunpack.c.l.b16 %v5856
        %v6984 = vunpack.c.h.b16 %v5856
        %v6985 = vunpack.c.l.b16 %v5857
        %v6986 = vunpack.c.h.b16 %v5857
        %v6987 = vunpack.c.l.b16 %v5858
        %v6988 = vunpack.c.h.b16 %v5858
        %v6989 = vunpack.c.l.b16 %v5859
        %v6990 = vunpack.c.h.b16 %v5859
        %v6991 = vunpack.c.l.b16 %v5860
        %v6992 = vunpack.c.h.b16 %v5860
        %v6993 = vunpack.c.l.b16 %v5861
        %v6994 = vunpack.c.h.b16 %v5861
        %v6995 = vunpack.c.l.b16 %v5862
        %v6996 = vunpack.c.h.b16 %v5862
        %v6997 = vunpack.c.l.b16 %v5863
        %v6998 = vunpack.c.h.b16 %v5863
        %v6999 = vunpack.c.l.b16 %v5864
        %v7000 = vunpack.c.h.b16 %v5864
        %v7001 = vunpack.c.l.b16 %v5865
        %v7002 = vunpack.c.h.b16 %v5865
        %v7003 = vunpack.c.l.b16 %v5866
        %v7004 = vunpack.c.h.b16 %v5866
        %v7005 = vunpack.c.l.b16 %v5867
        %v7006 = vunpack.c.h.b16 %v5867
        %v7007 = vunpack.c.l.b16 %v5868
        %v7008 = vunpack.c.h.b16 %v5868
        %v7009 = vunpack.c.l.b16 %v5869
        %v7010 = vunpack.c.h.b16 %v5869
        %v7011 = vunpack.c.l.b16 %v5870
        %v7012 = vunpack.c.h.b16 %v5870
        %v7013 = vunpack.c.l.b16 %v5871
        %v7014 = vunpack.c.h.b16 %v5871
        %v7015 = vunpack.c.l.b16 %v5872
        %v7016 = vunpack.c.h.b16 %v5872
        %v7017 = vunpack.c.l.b16 %v5873
        %v7018 = vunpack.c.h.b16 %v5873
        %v7019 = vunpack.c.l.b16 %v5874
        %v7020 = vunpack.c.h.b16 %v5874
        %v7021 = vunpack.c.l.b16 %v5875
        %v7022 = vunpack.c.h.b16 %v5875
        %v7023 = vunpack.c.l.b16 %v5876
        %v7024 = vunpack.c.h.b16 %v5876
        %v7025 = vunpack.c.l.b16 %v5877
        %v7026 = vunpack.c.h.b16 %v5877
        %v7027 = vunpack.c.l.b16 %v5878
        %v7028 = vunpack.c.h.b16 %v5878
        %v7029 = vunpack.c.l.b16 %v5879
        %v7030 = vunpack.c.h.b16 %v5879
        %v7031 = vunpack.c.l.b16 %v5880
        %v7032 = vunpack.c.h.b16 %v5880
        %v7033 = vunpack.c.l.b16 %v5881
        %v7034 = vunpack.c.h.b16 %v5881
        %v7035 = vunpack.c.l.b16 %v5882
        %v7036 = vunpack.c.h.b16 %v5882
        %v7037 = vunpack.c.l.b16 %v5883
        %v7038 = vunpack.c.h.b16 %v5883
        %v7039 = vunpack.c.l.b16 %v5884
        %v7040 = vunpack.c.h.b16 %v5884
        %v7041 = vunpack.c.l.b16 %v5885
        %v7042 = vunpack.c.h.b16 %v5885
        %v7043 = vunpack.c.l.b16 %v5886
        %v7044 = vunpack.c.h.b16 %v5886
        %v7045 = vunpack.c.l.b16 %v5887
        %v7046 = vunpack.c.h.b16 %v5887
        %v7047 = vunpack.c.l.b16 %v5888
        %v7048 = vunpack.c.h.b16 %v5888
        %v7049 = vunpack.c.l.b16 %v5889
        %v7050 = vunpack.c.h.b16 %v5889
        %v7051 = vunpack.c.l.b16 %v5890
        %v7052 = vunpack.c.h.b16 %v5890
        %v7053 = vunpack.c.l.b16 %v5891
        %v7054 = vunpack.c.h.b16 %v5891
        %v7055 = vunpack.c.l.b16 %v5892
        %v7056 = vunpack.c.h.b16 %v5892
        %v7057 = vunpack.c.l.b16 %v5893
        %v7058 = vunpack.c.h.b16 %v5893
        %v7059 = vunpack.c.l.b16 %v5894
        %v7060 = vunpack.c.h.b16 %v5894
        %v7061 = vunpack.c.l.b16 %v5895
        %v7062 = vunpack.c.h.b16 %v5895
        %v7063 = vunpack.c.l.b16 %v5896
        %v7064 = vunpack.c.h.b16 %v5896
        %v7065 = vunpack.c.l.b16 %v5897
        %v7066 = vunpack.c.h.b16 %v5897
        %v7067 = vunpack.c.l.b16 %v5898
        %v7068 = vunpack.c.h.b16 %v5898
        %v7069 = vunpack.c.l.b16 %v5899
        %v7070 = vunpack.c.h.b16 %v5899
        %v7071 = vunpack.c.l.b16 %v5900
        %v7072 = vunpack.c.h.b16 %v5900
        %v7073 = vunpack.c.l.b16 %v5901
        %v7074 = vunpack.c.h.b16 %v5901
        %v7075 = vunpack.c.l.b16 %v5902
        %v7076 = vunpack.c.h.b16 %v5902
        %v7077 = vunpack.c.l.b16 %v5903
        %v7078 = vunpack.c.h.b16 %v5903
        %v7079 = vunpack.c.l.b16 %v5904
        %v7080 = vunpack.c.h.b16 %v5904
        %v7081 = vunpack.c.l.b16 %v5905
        %v7082 = vunpack.c.h.b16 %v5905
        %v7083 = vunpack.c.l.b16 %v5906
        %v7084 = vunpack.c.h.b16 %v5906
        %v7085 = vunpack.c.l.b16 %v5907
        %v7086 = vunpack.c.h.b16 %v5907
        %v7087 = vunpack.c.l.b16 %v5908
        %v7088 = vunpack.c.h.b16 %v5908
        %v7089 = vunpack.c.l.b16 %v5909
        %v7090 = vunpack.c.h.b16 %v5909
        %v7091 = vunpack.c.l.b16 %v5910
        %v7092 = vunpack.c.h.b16 %v5910
        %v7093 = vunpack.c.l.b16 %v5911
        %v7094 = vunpack.c.h.b16 %v5911
        %v7095 = vunpack.c.l.b16 %v5912
        %v7096 = vunpack.c.h.b16 %v5912
        %v7097 = vunpack.c.l.b16 %v5913
        %v7098 = vunpack.c.h.b16 %v5913
        %v7099 = vunpack.c.l.b16 %v5914
        %v7100 = vunpack.c.h.b16 %v5914
        %v7101 = vunpack.c.l.b16 %v5915
        %v7102 = vunpack.c.h.b16 %v5915
        %v7103 = vunpack.c.l.b16 %v5916
        %v7104 = vunpack.c.h.b16 %v5916
        %v7105 = vunpack.c.l.b16 %v5917
        %v7106 = vunpack.c.h.b16 %v5917
        %v7107 = vunpack.c.l.b16 %v5918
        %v7108 = vunpack.c.h.b16 %v5918
        %v7109 = vunpack.c.l.b16 %v5919
        %v7110 = vunpack.c.h.b16 %v5919
        %v7111 = vunpack.c.l.b16 %v5920
        %v7112 = vunpack.c.h.b16 %v5920
        %v7113 = vunpack.c.l.b16 %v5921
        %v7114 = vunpack.c.h.b16 %v5921
        %v7115 = vunpack.c.l.b16 %v5922
        %v7116 = vunpack.c.h.b16 %v5922
        %v7117 = vunpack.c.l.b16 %v5923
        %v7118 = vunpack.c.h.b16 %v5923
        %v7119 = vunpack.c.l.b16 %v5924
        %v7120 = vunpack.c.h.b16 %v5924
        %v7121 = vunpack.c.l.b16 %v5925
        %v7122 = vunpack.c.h.b16 %v5925
        %v7123 = vunpack.c.l.b16 %v5926
        %v7124 = vunpack.c.h.b16 %v5926
        %v7125 = vunpack.c.l.b16 %v5927
        %v7126 = vunpack.c.h.b16 %v5927
        %v7127 = vunpack.c.l.b16 %v5928
        %v7128 = vunpack.c.h.b16 %v5928
        %v7129 = vunpack.c.l.b16 %v5929
        %v7130 = vunpack.c.h.b16 %v5929
        %v7131 = vunpack.c.l.b16 %v5930
        %v7132 = vunpack.c.h.b16 %v5930
        %v7133 = vunpack.c.l.b16 %v5931
        %v7134 = vunpack.c.h.b16 %v5931
        %v7135 = vunpack.c.l.b16 %v5932
        %v7136 = vunpack.c.h.b16 %v5932
        %v7137 = vunpack.c.l.b16 %v5933
        %v7138 = vunpack.c.h.b16 %v5933
        %v7139 = vunpack.c.l.b16 %v5934
        %v7140 = vunpack.c.h.b16 %v5934
        %v7141 = vunpack.c.l.b16 %v5935
        %v7142 = vunpack.c.h.b16 %v5935
        %v7143 = vunpack.c.l.b16 %v5936
        %v7144 = vunpack.c.h.b16 %v5936
        %v7145 = vunpack.c.l.b16 %v5937
        %v7146 = vunpack.c.h.b16 %v5937
        %v7147 = vunpack.c.l.b16 %v5938
        %v7148 = vunpack.c.h.b16 %v5938
        %v7149 = vunpack.c.l.b16 %v5939
        %v7150 = vunpack.c.h.b16 %v5939
        %v7151 = vunpack.c.l.b16 %v5940
        %v7152 = vunpack.c.h.b16 %v5940
        %v7153 = vunpack.c.l.b16 %v5941
        %v7154 = vunpack.c.h.b16 %v5941
        %v7155 = vunpack.c.l.b16 %v5942
        %v7156 = vunpack.c.h.b16 %v5942
        %v7157 = vunpack.c.l.b16 %v5943
        %v7158 = vunpack.c.h.b16 %v5943
        %v7159 = vunpack.c.l.b16 %v5944
        %v7160 = vunpack.c.h.b16 %v5944
        %v7161 = vunpack.c.l.b16 %v5945
        %v7162 = vunpack.c.h.b16 %v5945
        %v7163 = vunpack.c.l.b16 %v5946
        %v7164 = vunpack.c.h.b16 %v5946
        %v7165 = vunpack.c.l.b16 %v5947
        %v7166 = vunpack.c.h.b16 %v5947
        %v7167 = vunpack.c.l.b16 %v5948
        %v7168 = vunpack.c.h.b16 %v5948
        %v7169 = vunpack.c.l.b16 %v5949
        %v7170 = vunpack.c.h.b16 %v5949
        %v7171 = vunpack.c.l.b16 %v5950
        %v7172 = vunpack.c.h.b16 %v5950
        %v7173 = vunpack.c.l.b16 %v5951
        %v7174 = vunpack.c.h.b16 %v5951
        %v7175 = vunpack.c.l.b16 %v5952
        %v7176 = vunpack.c.h.b16 %v5952
        %v7177 = vunpack.c.l.b16 %v5953
        %v7178 = vunpack.c.h.b16 %v5953
        %v7179 = vunpack.c.l.b16 %v5954
        %v7180 = vunpack.c.h.b16 %v5954
        %v7181 = vunpack.c.l.b16 %v5955
        %v7182 = vunpack.c.h.b16 %v5955
        %v7183 = vunpack.c.l.b16 %v5956
        %v7184 = vunpack.c.h.b16 %v5956
        %v7185 = vunpack.c.l.b16 %v5957
        %v7186 = vunpack.c.h.b16 %v5957
        %v7187 = vunpack.c.l.b16 %v5958
        %v7188 = vunpack.c.h.b16 %v5958
        %v7189 = vunpack.c.l.b16 %v5959
        %v7190 = vunpack.c.h.b16 %v5959
        %v7191 = vunpack.c.l.b16 %v5960
        %v7192 = vunpack.c.h.b16 %v5960
        %v7193 = vunpack.c.l.b16 %v5961
        %v7194 = vunpack.c.h.b16 %v5961
        %v7195 = vunpack.c.l.b16 %v5962
        %v7196 = vunpack.c.h.b16 %v5962
        %v7197 = vunpack.c.l.b16 %v5963
        %v7198 = vunpack.c.h.b16 %v5963
        %v7199 = vunpack.c.l.b16 %v5964
        %v7200 = vunpack.c.h.b16 %v5964
        %v7201 = vunpack.c.l.b16 %v5965
        %v7202 = vunpack.c.h.b16 %v5965
        %v7203 = vunpack.c.l.b16 %v5966
        %v7204 = vunpack.c.h.b16 %v5966
        %v7205 = vunpack.c.l.b16 %v5967
        %v7206 = vunpack.c.h.b16 %v5967
        %v7207 = vunpack.c.l.b16 %v5968
        %v7208 = vunpack.c.h.b16 %v5968
        %v7209 = vunpack.c.l.b16 %v5969
        %v7210 = vunpack.c.h.b16 %v5969
        %v7211 = vunpack.c.l.b16 %v5970
        %v7212 = vunpack.c.h.b16 %v5970
        %v7213 = vunpack.c.l.b16 %v5971
        %v7214 = vunpack.c.h.b16 %v5971
        %v7215 = vunpack.c.l.b16 %v5972
        %v7216 = vunpack.c.h.b16 %v5972
        %v7217 = vunpack.c.l.b16 %v5973
        %v7218 = vunpack.c.h.b16 %v5973
        %v7219 = vunpack.c.l.b16 %v5974
        %v7220 = vunpack.c.h.b16 %v5974
        %v7221 = vunpack.c.l.b16 %v5975
        %v7222 = vunpack.c.h.b16 %v5975
        %v7223 = vunpack.c.l.b16 %v5976
        %v7224 = vunpack.c.h.b16 %v5976
        %v7225 = vunpack.c.l.b16 %v5977
        %v7226 = vunpack.c.h.b16 %v5977
        %v7227 = vunpack.c.l.b16 %v5978
        %v7228 = vunpack.c.h.b16 %v5978
        %v7229 = vunpack.c.l.b16 %v5979
        %v7230 = vunpack.c.h.b16 %v5979
        %v7231 = vunpack.c.l.b16 %v5980
        %v7232 = vunpack.c.h.b16 %v5980
        %v7233 = vunpack.c.l.b16 %v5981
        %v7234 = vunpack.c.h.b16 %v5981
        %v7235 = vunpack.c.l.b16 %v5982
        %v7236 = vunpack.c.h.b16 %v5982
        %v7237 = vunpack.c.l.b16 %v5983
        %v7238 = vunpack.c.h.b16 %v5983
        %v7239 = vunpack.c.l.b16 %v5984
        %v7240 = vunpack.c.h.b16 %v5984
        %v7241 = vunpack.c.l.b16 %v5985
        %v7242 = vunpack.c.h.b16 %v5985
        %v7243 = vunpack.c.l.b16 %v5986
        %v7244 = vunpack.c.h.b16 %v5986
        %v7245 = vunpack.c.l.b16 %v5987
        %v7246 = vunpack.c.h.b16 %v5987
        %v7247 = vunpack.c.l.b16 %v5988
        %v7248 = vunpack.c.h.b16 %v5988
        %v7249 = vunpack.c.l.b16 %v5989
        %v7250 = vunpack.c.h.b16 %v5989
        %v7251 = vunpack.c.l.b16 %v5990
        %v7252 = vunpack.c.h.b16 %v5990
        %v7253 = vunpack.c.l.b16 %v5991
        %v7254 = vunpack.c.h.b16 %v5991
        %v7255 = vunpack.c.l.b16 %v5992
        %v7256 = vunpack.c.h.b16 %v5992
        %v7257 = vunpack.c.l.b16 %v5993
        %v7258 = vunpack.c.h.b16 %v5993
        %v7259 = vunpack.c.l.b16 %v5994
        %v7260 = vunpack.c.h.b16 %v5994
        %v7261 = vunpack.c.l.b16 %v5995
        %v7262 = vunpack.c.h.b16 %v5995
        %v7263 = vunpack.c.l.b16 %v5996
        %v7264 = vunpack.c.h.b16 %v5996
        %v7265 = vunpack.c.l.b16 %v5997
        %v7266 = vunpack.c.h.b16 %v5997
        %v7267 = vunpack.c.l.b16 %v5998
        %v7268 = vunpack.c.h.b16 %v5998
        %v7269 = vunpack.c.l.b16 %v5999
        %v7270 = vunpack.c.h.b16 %v5999
        %v7271 = vunpack.c.l.b16 %v6000
        %v7272 = vunpack.c.h.b16 %v6000
        %v7273 = vunpack.c.l.b16 %v6001
        %v7274 = vunpack.c.h.b16 %v6001
        %v7275 = vunpack.c.l.b16 %v6002
        %v7276 = vunpack.c.h.b16 %v6002
        %v7277 = vunpack.c.l.b16 %v6003
        %v7278 = vunpack.c.h.b16 %v6003
        %v7279 = vunpack.c.l.b16 %v6004
        %v7280 = vunpack.c.h.b16 %v6004
        %v7281 = vunpack.c.l.b16 %v6005
        %v7282 = vunpack.c.h.b16 %v6005
        %v7283 = vunpack.c.l.b16 %v6006
        %v7284 = vunpack.c.h.b16 %v6006
        %v7285 = vunpack.c.l.b16 %v6007
        %v7286 = vunpack.c.h.b16 %v6007
        %v7287 = vunpack.c.l.b16 %v6008
        %v7288 = vunpack.c.h.b16 %v6008
        %v7289 = vunpack.c.l.b16 %v6009
        %v7290 = vunpack.c.h.b16 %v6009
        %v7291 = vunpack.c.l.b16 %v6010
        %v7292 = vunpack.c.h.b16 %v6010
        %v7293 = vunpack.c.l.b16 %v6011
        %v7294 = vunpack.c.h.b16 %v6011
        %v7295 = vunpack.c.l.b16 %v6012
        %v7296 = vunpack.c.h.b16 %v6012
        %v7297 = vunpack.c.l.b16 %v6013
        %v7298 = vunpack.c.h.b16 %v6013
        %v7299 = vunpack.c.l.b16 %v6014
        %v7300 = vunpack.c.h.b16 %v6014
        %v7301 = vunpack.c.l.b16 %v6015
        %v7302 = vunpack.c.h.b16 %v6015
        %v7303 = vunpack.c.l.b16 %v6016
        %v7304 = vunpack.c.h.b16 %v6016
        %v7305 = vunpack.c.l.b16 %v6017
        %v7306 = vunpack.c.h.b16 %v6017
        %v7307 = vunpack.c.l.b16 %v6018
        %v7308 = vunpack.c.h.b16 %v6018
        %v7309 = vunpack.c.l.b16 %v6019
        %v7310 = vunpack.c.h.b16 %v6019
        %v7311 = vunpack.c.l.b16 %v6020
        %v7312 = vunpack.c.h.b16 %v6020
        %v7313 = vunpack.c.l.b16 %v6021
        %v7314 = vunpack.c.h.b16 %v6021
        %v7315 = vunpack.c.l.b16 %v6022
        %v7316 = vunpack.c.h.b16 %v6022
        %v7317 = vunpack.c.l.b16 %v6023
        %v7318 = vunpack.c.h.b16 %v6023
        %v7319 = vunpack.c.l.b16 %v6024
        %v7320 = vunpack.c.h.b16 %v6024
        %v7321 = vunpack.c.l.b16 %v6025
        %v7322 = vunpack.c.h.b16 %v6025
        %v7323 = vunpack.c.l.b16 %v6026
        %v7324 = vunpack.c.h.b16 %v6026
        %v7325 = vunpack.c.l.b16 %v6027
        %v7326 = vunpack.c.h.b16 %v6027
        %v7327 = vunpack.c.l.b16 %v6028
        %v7328 = vunpack.c.h.b16 %v6028
        %v7329 = vunpack.c.l.b16 %v6029
        %v7330 = vunpack.c.h.b16 %v6029
        %v7331 = vunpack.c.l.b16 %v6030
        %v7332 = vunpack.c.h.b16 %v6030
        %v7333 = vunpack.c.l.b16 %v6031
        %v7334 = vunpack.c.h.b16 %v6031
        %v7335 = vunpack.c.l.b16 %v6032
        %v7336 = vunpack.c.h.b16 %v6032
        %v7337 = vunpack.c.l.b16 %v6033
        %v7338 = vunpack.c.h.b16 %v6033
        %v7339 = vunpack.c.l.b16 %v6034
        %v7340 = vunpack.c.h.b16 %v6034
        %v7341 = vunpack.c.l.b16 %v6035
        %v7342 = vunpack.c.h.b16 %v6035
        %v7343 = vunpack.c.l.b16 %v6036
        %v7344 = vunpack.c.h.b16 %v6036
        %v7345 = vunpack.c.l.b16 %v6037
        %v7346 = vunpack.c.h.b16 %v6037
        %v7347 = vunpack.c.l.b16 %v6038
        %v7348 = vunpack.c.h.b16 %v6038
        %v7349 = vunpack.c.l.b16 %v6039
        %v7350 = vunpack.c.h.b16 %v6039
        %v7351 = vunpack.c.l.b16 %v6040
        %v7352 = vunpack.c.h.b16 %v6040
        %v7353 = vunpack.c.l.b16 %v6041
        %v7354 = vunpack.c.h.b16 %v6041
        %v7355 = vunpack.c.l.b16 %v6042
        %v7356 = vunpack.c.h.b16 %v6042
        %v7357 = vunpack.c.l.b16 %v6043
        %v7358 = vunpack.c.h.b16 %v6043
        %v7359 = vunpack.c.l.b16 %v6044
        %v7360 = vunpack.c.h.b16 %v6044
        %v7361 = vunpack.c.l.b16 %v6045
        %v7362 = vunpack.c.h.b16 %v6045
        %v7363 = vunpack.c.l.b16 %v6046
        %v7364 = vunpack.c.h.b16 %v6046
        %v7365 = vunpack.c.l.b16 %v6047
        %v7366 = vunpack.c.h.b16 %v6047
        %v7367 = vunpack.c.l.b16 %v6048
        %v7368 = vunpack.c.h.b16 %v6048
        %v7369 = vunpack.c.l.b16 %v6049
        %v7370 = vunpack.c.h.b16 %v6049
        %v7371 = vunpack.c.l.b16 %v6050
        %v7372 = vunpack.c.h.b16 %v6050
        %v7373 = vunpack.c.l.b16 %v6051
        %v7374 = vunpack.c.h.b16 %v6051
        %v7375 = vunpack.c.l.b16 %v6052
        %v7376 = vunpack.c.h.b16 %v6052
        %v7377 = vunpack.c.l.b16 %v6053
        %v7378 = vunpack.c.h.b16 %v6053
        %v7379 = vunpack.c.l.b16 %v6054
        %v7380 = vunpack.c.h.b16 %v6054
        %v7381 = vunpack.c.l.b16 %v6055
        %v7382 = vunpack.c.h.b16 %v6055
        %v7383 = vunpack.c.l.b16 %v6056
        %v7384 = vunpack.c.h.b16 %v6056
        %v7385 = vunpack.c.l.b16 %v6057
        %v7386 = vunpack.c.h.b16 %v6057
        %v7387 = vunpack.c.l.b16 %v6058
        %v7388 = vunpack.c.h.b16 %v6058
        %v7389 = vunpack.c.l.b16 %v6059
        %v7390 = vunpack.c.h.b16 %v6059
        %v7391 = vunpack.c.l.b16 %v6060
        %v7392 = vunpack.c.h.b16 %v6060
        %v7393 = vunpack.c.l.b16 %v6061
        %v7394 = vunpack.c.h.b16 %v6061
        %v7395 = vunpack.c.l.b16 %v6062
        %v7396 = vunpack.c.h.b16 %v6062
        %v7397 = vunpack.c.l.b16 %v6063
        %v7398 = vunpack.c.h.b16 %v6063
        %v7399 = vunpack.c.l.b16 %v6064
        %v7400 = vunpack.c.h.b16 %v6064
        %v7401 = vunpack.c.l.b16 %v6065
        %v7402 = vunpack.c.h.b16 %v6065
        %v7403 = vunpack.c.l.b16 %v6066
        %v7404 = vunpack.c.h.b16 %v6066
        %v7405 = vunpack.c.l.b16 %v6067
        %v7406 = vunpack.c.h.b16 %v6067
        %v7407 = vunpack.c.l.b16 %v6068
        %v7408 = vunpack.c.h.b16 %v6068
        %v7409 = vunpack.c.l.b16 %v6069
        %v7410 = vunpack.c.h.b16 %v6069
        %v7411 = vunpack.c.l.b16 %v6070
        %v7412 = vunpack.c.h.b16 %v6070
        %v7413 = vunpack.c.l.b16 %v6071
        %v7414 = vunpack.c.h.b16 %v6071
        %v7415 = vunpack.c.l.b16 %v6072
        %v7416 = vunpack.c.h.b16 %v6072
        %v7417 = vunpack.c.l.b16 %v6073
        %v7418 = vunpack.c.h.b16 %v6073
        %v7419 = vunpack.c.l.b16 %v6074
        %v7420 = vunpack.c.h.b16 %v6074
        %v7421 = vunpack.c.l.b16 %v6075
        %v7422 = vunpack.c.h.b16 %v6075
        %v7423 = vunpack.c.l.b16 %v6076
        %v7424 = vunpack.c.h.b16 %v6076
        %v7425 = vunpack.c.l.b16 %v6077
        %v7426 = vunpack.c.h.b16 %v6077
        %v7427 = vunpack.c.l.b16 %v6078
        %v7428 = vunpack.c.h.b16 %v6078
        %v7429 = vunpack.c.l.b16 %v6079
        %v7430 = vunpack.c.h.b16 %v6079
        %v7431 = vunpack.c.l.b16 %v6080
        %v7432 = vunpack.c.h.b16 %v6080
        %v7433 = vunpack.c.l.b16 %v6081
        %v7434 = vunpack.c.h.b16 %v6081
        %v7435 = vunpack.c.l.b16 %v6082
        %v7436 = vunpack.c.h.b16 %v6082
        %v7437 = vunpack.c.l.b16 %v6083
        %v7438 = vunpack.c.h.b16 %v6083
        %v7439 = vunpack.c.l.b16 %v6084
        %v7440 = vunpack.c.h.b16 %v6084
        %v7441 = vunpack.c.l.b16 %v6085
        %v7442 = vunpack.c.h.b16 %v6085
        %v7443 = vunpack.c.l.b16 %v6086
        %v7444 = vunpack.c.h.b16 %v6086
        %v7445 = vunpack.c.l.b16 %v6087
        %v7446 = vunpack.c.h.b16 %v6087
        %v7447 = vunpack.c.l.b16 %v6088
        %v7448 = vunpack.c.h.b16 %v6088
        %v7449 = vunpack.c.l.b16 %v6089
        %v7450 = vunpack.c.h.b16 %v6089
        %v7451 = vunpack.c.l.b16 %v6090
        %v7452 = vunpack.c.h.b16 %v6090
        %v7453 = vunpack.c.l.b16 %v6091
        %v7454 = vunpack.c.h.b16 %v6091
        %v7455 = vunpack.c.l.b16 %v6092
        %v7456 = vunpack.c.h.b16 %v6092
        %v7457 = vunpack.c.l.b16 %v6093
        %v7458 = vunpack.c.h.b16 %v6093
        %v7459 = vunpack.c.l.b16 %v6094
        %v7460 = vunpack.c.h.b16 %v6094
        %v7461 = vunpack.c.l.b16 %v6095
        %v7462 = vunpack.c.h.b16 %v6095
        %v7463 = vunpack.c.l.b16 %v6096
        %v7464 = vunpack.c.h.b16 %v6096
        %v7465 = vunpack.c.l.b16 %v6097
        %v7466 = vunpack.c.h.b16 %v6097
        %v7467 = vunpack.c.l.b16 %v6098
        %v7468 = vunpack.c.h.b16 %v6098
        %v7469 = vunpack.c.l.b16 %v6099
        %v7470 = vunpack.c.h.b16 %v6099
        %v7471 = vunpack.c.l.b16 %v6100
        %v7472 = vunpack.c.h.b16 %v6100
        %v7473 = vunpack.c.l.b16 %v6101
        %v7474 = vunpack.c.h.b16 %v6101
        %v7475 = vunpack.c.l.b16 %v6102
        %v7476 = vunpack.c.h.b16 %v6102
        %v7477 = vunpack.c.l.b16 %v6103
        %v7478 = vunpack.c.h.b16 %v6103
        %v7479 = vunpack.c.l.b16 %v6104
        %v7480 = vunpack.c.h.b16 %v6104
        %v7481 = vunpack.c.l.b16 %v6105
        %v7482 = vunpack.c.h.b16 %v6105
        %v7483 = vunpack.c.l.b16 %v6106
        %v7484 = vunpack.c.h.b16 %v6106
        %v7485 = vunpack.c.l.b16 %v6107
        %v7486 = vunpack.c.h.b16 %v6107
        %v7487 = vunpack.c.l.b16 %v6108
        %v7488 = vunpack.c.h.b16 %v6108
        %v7489 = vunpack.c.l.b16 %v6109
        %v7490 = vunpack.c.h.b16 %v6109
        %v7491 = vunpack.c.l.b16 %v6110
        %v7492 = vunpack.c.h.b16 %v6110
        %v7493 = vunpack.c.l.b16 %v6111
        %v7494 = vunpack.c.h.b16 %v6111
        %v7495 = vunpack.c.l.b16 %v6112
        %v7496 = vunpack.c.h.b16 %v6112
        %v7497 = vunpack.c.l.b16 %v6113
        %v7498 = vunpack.c.h.b16 %v6113
        %v7499 = vunpack.c.l.b16 %v6114
        %v7500 = vunpack.c.h.b16 %v6114
        %v7501 = vunpack.c.l.b16 %v6115
        %v7502 = vunpack.c.h.b16 %v6115
        %v7503 = vunpack.c.l.b16 %v6116
        %v7504 = vunpack.c.h.b16 %v6116
        %v7505 = vunpack.c.l.b16 %v6117
        %v7506 = vunpack.c.h.b16 %v6117
        %v7507 = vunpack.c.l.b16 %v6118
        %v7508 = vunpack.c.h.b16 %v6118
        %v7509 = vunpack.c.l.b16 %v6119
        %v7510 = vunpack.c.h.b16 %v6119
        %v7511 = vunpack.c.l.b16 %v6120
        %v7512 = vunpack.c.h.b16 %v6120
        %v7513 = vunpack.c.l.b16 %v6121
        %v7514 = vunpack.c.h.b16 %v6121
        %v7515 = vunpack.c.l.b16 %v6122
        %v7516 = vunpack.c.h.b16 %v6122
        %v7517 = vunpack.c.l.b16 %v6123
        %v7518 = vunpack.c.h.b16 %v6123
        %v7519 = vunpack.c.l.b16 %v6124
        %v7520 = vunpack.c.h.b16 %v6124
        %v7521 = vunpack.c.l.b16 %v6125
        %v7522 = vunpack.c.h.b16 %v6125
        %v7523 = vunpack.c.l.b16 %v6126
        %v7524 = vunpack.c.h.b16 %v6126
        %v7525 = vunpack.c.l.b16 %v6127
        %v7526 = vunpack.c.h.b16 %v6127
        %v7527 = vunpack.c.l.b16 %v6128
        %v7528 = vunpack.c.h.b16 %v6128
        %v7529 = vunpack.c.l.b16 %v6129
        %v7530 = vunpack.c.h.b16 %v6129
        %v7531 = vunpack.c.l.b16 %v6130
        %v7532 = vunpack.c.h.b16 %v6130
        %v7533 = vunpack.c.l.b16 %v6131
        %v7534 = vunpack.c.h.b16 %v6131
        %v7535 = vunpack.c.l.b16 %v6132
        %v7536 = vunpack.c.h.b16 %v6132
        %v7537 = vunpack.c.l.b16 %v6133
        %v7538 = vunpack.c.h.b16 %v6133
        %v7539 = vunpack.c.l.b16 %v6134
        %v7540 = vunpack.c.h.b16 %v6134
        %v7541 = vunpack.c.l.b16 %v6135
        %v7542 = vunpack.c.h.b16 %v6135
        %v7543 = vunpack.c.l.b16 %v6136
        %v7544 = vunpack.c.h.b16 %v6136
        %v7545 = vunpack.c.l.b16 %v6137
        %v7546 = vunpack.c.h.b16 %v6137
        %v7547 = vunpack.c.l.b16 %v6138
        %v7548 = vunpack.c.h.b16 %v6138
        %v7549 = vunpack.c.l.b16 %v6139
        %v7550 = vunpack.c.h.b16 %v6139
        %v7551 = vunpack.c.l.b16 %v6140
        %v7552 = vunpack.c.h.b16 %v6140
        %v7553 = vunpack.c.l.b16 %v6141
        %v7554 = vunpack.c.h.b16 %v6141
        %v7555 = vunpack.c.l.b16 %v6142
        %v7556 = vunpack.c.h.b16 %v6142
        %v7557 = vunpack.c.l.b16 %v6143
        %v7558 = vunpack.c.h.b16 %v6143
        %v7559 = vunpack.c.l.b16 %v6144
        %v7560 = vunpack.c.h.b16 %v6144
        %v7561 = vunpack.c.l.b16 %v6145
        %v7562 = vunpack.c.h.b16 %v6145
        %v7563 = vunpack.c.l.b16 %v6146
        %v7564 = vunpack.c.h.b16 %v6146
        %v7565 = vunpack.c.l.b16 %v6147
        %v7566 = vunpack.c.h.b16 %v6147
        %v7567 = vunpack.c.l.b16 %v6148
        %v7568 = vunpack.c.h.b16 %v6148
        %v7569 = vunpack.c.l.b16 %v6149
        %v7570 = vunpack.c.h.b16 %v6149
        %v7571 = vunpack.c.l.b16 %v6150
        %v7572 = vunpack.c.h.b16 %v6150
        %v7573 = vunpack.c.l.b16 %v6151
        %v7574 = vunpack.c.h.b16 %v6151
        %v7575 = vunpack.c.l.b16 %v6152
        %v7576 = vunpack.c.h.b16 %v6152
        %v7577 = vunpack.c.l.b16 %v6153
        %v7578 = vunpack.c.h.b16 %v6153
        %v7579 = vunpack.c.l.b16 %v6154
        %v7580 = vunpack.c.h.b16 %v6154
        %v7581 = vunpack.c.l.b16 %v6155
        %v7582 = vunpack.c.h.b16 %v6155
        %v7583 = vunpack.c.l.b16 %v6156
        %v7584 = vunpack.c.h.b16 %v6156
        %v7585 = vunpack.c.l.b16 %v6157
        %v7586 = vunpack.c.h.b16 %v6157
        %v7587 = vunpack.c.l.b16 %v6158
        %v7588 = vunpack.c.h.b16 %v6158
        %v7589 = vunpack.c.l.b16 %v6159
        %v7590 = vunpack.c.h.b16 %v6159
        %v7591 = vunpack.c.l.b16 %v6160
        %v7592 = vunpack.c.h.b16 %v6160
        %v7593 = vunpack.c.l.b16 %v6161
        %v7594 = vunpack.c.h.b16 %v6161
        %v7595 = vunpack.c.l.b16 %v6162
        %v7596 = vunpack.c.h.b16 %v6162
        %v7597 = vunpack.c.l.b16 %v6163
        %v7598 = vunpack.c.h.b16 %v6163
        %v7599 = vunpack.c.l.b16 %v6164
        %v7600 = vunpack.c.h.b16 %v6164
        %v7601 = vunpack.c.l.b16 %v6165
        %v7602 = vunpack.c.h.b16 %v6165
        %v7603 = vunpack.c.l.b16 %v6166
        %v7604 = vunpack.c.h.b16 %v6166
        %v7605 = vunpack.c.l.b16 %v6167
        %v7606 = vunpack.c.h.b16 %v6167
        %v7607 = vunpack.c.l.b16 %v6168
        %v7608 = vunpack.c.h.b16 %v6168
        %v7609 = vunpack.c.l.b16 %v6169
        %v7610 = vunpack.c.h.b16 %v6169
        %v7611 = vunpack.c.l.b16 %v6170
        %v7612 = vunpack.c.h.b16 %v6170
        %v7613 = vunpack.c.l.b16 %v6171
        %v7614 = vunpack.c.h.b16 %v6171
        %v7615 = vunpack.c.l.b16 %v6172
        %v7616 = vunpack.c.h.b16 %v6172
        %v7617 = vunpack.c.l.b16 %v6173
        %v7618 = vunpack.c.h.b16 %v6173
        %v7619 = vunpack.c.l.b16 %v6174
        %v7620 = vunpack.c.h.b16 %v6174
        %v7621 = vunpack.c.l.b16 %v6175
        %v7622 = vunpack.c.h.b16 %v6175
        %v7623 = vunpack.c.l.b16 %v6176
        %v7624 = vunpack.c.h.b16 %v6176
        %v7625 = vunpack.c.l.b16 %v6177
        %v7626 = vunpack.c.h.b16 %v6177
        %v7627 = vunpack.c.l.b16 %v6178
        %v7628 = vunpack.c.h.b16 %v6178
        %v7629 = vunpack.c.l.b16 %v6179
        %v7630 = vunpack.c.h.b16 %v6179
        %v7631 = vunpack.c.l.b16 %v6180
        %v7632 = vunpack.c.h.b16 %v6180
        %v7633 = vunpack.c.l.b16 %v6181
        %v7634 = vunpack.c.h.b16 %v6181
        %v7635 = vunpack.c.l.b16 %v6182
        %v7636 = vunpack.c.h.b16 %v6182
        %v7637 = vunpack.c.l.b16 %v6183
        %v7638 = vunpack.c.h.b16 %v6183
        %v7639 = vunpack.c.l.b16 %v6184
        %v7640 = vunpack.c.h.b16 %v6184
        %v7641 = vunpack.c.l.b16 %v6185
        %v7642 = vunpack.c.h.b16 %v6185
        %v7643 = vunpack.c.l.b16 %v6186
        %v7644 = vunpack.c.h.b16 %v6186
        %v7645 = vunpack.c.l.b16 %v6187
        %v7646 = vunpack.c.h.b16 %v6187
        %v7647 = vunpack.c.l.b16 %v6188
        %v7648 = vunpack.c.h.b16 %v6188
        %v7649 = vunpack.c.l.b16 %v6189
        %v7650 = vunpack.c.h.b16 %v6189
        %v7651 = vunpack.c.l.b16 %v6190
        %v7652 = vunpack.c.h.b16 %v6190
        %v7653 = vunpack.c.l.b16 %v6191
        %v7654 = vunpack.c.h.b16 %v6191
        %v7655 = vunpack.c.l.b16 %v6192
        %v7656 = vunpack.c.h.b16 %v6192
        %v7657 = vunpack.c.l.b16 %v6193
        %v7658 = vunpack.c.h.b16 %v6193
        %v7659 = vunpack.c.l.b16 %v6194
        %v7660 = vunpack.c.h.b16 %v6194
        %v7661 = vunpack.c.l.b16 %v6195
        %v7662 = vunpack.c.h.b16 %v6195
        %v7663 = vunpack.c.l.b16 %v6196
        %v7664 = vunpack.c.h.b16 %v6196
        %v7665 = vunpack.c.l.b16 %v6197
        %v7666 = vunpack.c.h.b16 %v6197
        %v7667 = vunpack.c.l.b16 %v6198
        %v7668 = vunpack.c.h.b16 %v6198
        %v7669 = vunpack.c.l.b16 %v6199
        %v7670 = vunpack.c.h.b16 %v6199
        %v7671 = vunpack.c.l.b16 %v6200
        %v7672 = vunpack.c.h.b16 %v6200
        %v7673 = vunpack.c.l.b16 %v6201
        %v7674 = vunpack.c.h.b16 %v6201
        %v7675 = vunpack.c.l.b16 %v6202
        %v7676 = vunpack.c.h.b16 %v6202
        %v7677 = vunpack.c.l.b16 %v6203
        %v7678 = vunpack.c.h.b16 %v6203
        %v7679 = vunpack.c.l.b16 %v6204
        %v7680 = vunpack.c.h.b16 %v6204
        %v7681 = vunpack.c.l.b16 %v6205
        %v7682 = vunpack.c.h.b16 %v6205
        %v7683 = vunpack.c.l.b16 %v6206
        %v7684 = vunpack.c.h.b16 %v6206
        %v7685 = vunpack.c.l.b16 %v6207
        %v7686 = vunpack.c.h.b16 %v6207
        %v7687 = vunpack.c.l.b16 %v6208
        %v7688 = vunpack.c.h.b16 %v6208
        %v7689 = vunpack.c.l.b16 %v6209
        %v7690 = vunpack.c.h.b16 %v6209
        %v7691 = vunpack.c.l.b16 %v6210
        %v7692 = vunpack.c.h.b16 %v6210
        %v7693 = vunpack.c.l.b16 %v6211
        %v7694 = vunpack.c.h.b16 %v6211
        %v7695 = vunpack.c.l.b16 %v6212
        %v7696 = vunpack.c.h.b16 %v6212
        %v7697 = vunpack.c.l.b16 %v6213
        %v7698 = vunpack.c.h.b16 %v6213
        %v7699 = vunpack.c.l.b16 %v6214
        %v7700 = vunpack.c.h.b16 %v6214
        %v7701 = vunpack.c.l.b16 %v6215
        %v7702 = vunpack.c.h.b16 %v6215
        %v7703 = vunpack.c.l.b16 %v6216
        %v7704 = vunpack.c.h.b16 %v6216
        %v7705 = vunpack.c.l.b16 %v6217
        %v7706 = vunpack.c.h.b16 %v6217
        %v7707 = vunpack.c.l.b16 %v6218
        %v7708 = vunpack.c.h.b16 %v6218
        %v7709 = vunpack.c.l.b16 %v6219
        %v7710 = vunpack.c.h.b16 %v6219
        %v7711 = vunpack.c.l.b16 %v6220
        %v7712 = vunpack.c.h.b16 %v6220
        %v7713 = vunpack.c.l.b16 %v6221
        %v7714 = vunpack.c.h.b16 %v6221
        %v7715 = vunpack.c.l.b16 %v6222
        %v7716 = vunpack.c.h.b16 %v6222
        %v7717 = vunpack.c.l.b16 %v6223
        %v7718 = vunpack.c.h.b16 %v6223
        %v7719 = vunpack.c.l.b16 %v6224
        %v7720 = vunpack.c.h.b16 %v6224
        %v7721 = vunpack.c.l.b16 %v6225
        %v7722 = vunpack.c.h.b16 %v6225
        %v7723 = vunpack.c.l.b16 %v6226
        %v7724 = vunpack.c.h.b16 %v6226
        %v7725 = vunpack.c.l.b16 %v6227
        %v7726 = vunpack.c.h.b16 %v6227
        %v7727 = vunpack.c.l.b16 %v6228
        %v7728 = vunpack.c.h.b16 %v6228
        %v7729 = vunpack.c.l.b16 %v6229
        %v7730 = vunpack.c.h.b16 %v6229
        %v7731 = vunpack.c.l.b16 %v6230
        %v7732 = vunpack.c.h.b16 %v6230
        %v7733 = vunpack.c.l.b16 %v6231
        %v7734 = vunpack.c.h.b16 %v6231
        %v7735 = vunpack.c.l.b16 %v6232
        %v7736 = vunpack.c.h.b16 %v6232
        %v7737 = vunpack.c.l.b16 %v6233
        %v7738 = vunpack.c.h.b16 %v6233
        %v7739 = vunpack.c.l.b16 %v6234
        %v7740 = vunpack.c.h.b16 %v6234
        %v7741 = vunpack.c.l.b16 %v6235
        %v7742 = vunpack.c.h.b16 %v6235
        %v7743 = vunpack.c.l.b16 %v6236
        %v7744 = vunpack.c.h.b16 %v6236
        %v7745 = vunpack.c.l.b16 %v6237
        %v7746 = vunpack.c.h.b16 %v6237
        %v7747 = vunpack.c.l.b16 %v6238
        %v7748 = vunpack.c.h.b16 %v6238
        %v7749 = vunpack.c.l.b16 %v6239
        %v7750 = vunpack.c.h.b16 %v6239
        %v7751 = vunpack.c.l.b16 %v6240
        %v7752 = vunpack.c.h.b16 %v6240
        %v7753 = vunpack.c.l.b16 %v6241
        %v7754 = vunpack.c.h.b16 %v6241
        %v7755 = vunpack.c.l.b16 %v6242
        %v7756 = vunpack.c.h.b16 %v6242
        %v7757 = vunpack.c.l.b16 %v6243
        %v7758 = vunpack.c.h.b16 %v6243
        %v7759 = vunpack.c.l.b16 %v6244
        %v7760 = vunpack.c.h.b16 %v6244
        %v7761 = vunpack.c.l.b16 %v6245
        %v7762 = vunpack.c.h.b16 %v6245
        %v7763 = vunpack.c.l.b16 %v6246
        %v7764 = vunpack.c.h.b16 %v6246
        %v7765 = vunpack.c.l.b16 %v6247
        %v7766 = vunpack.c.h.b16 %v6247
        %v7767 = vunpack.c.l.b16 %v6248
        %v7768 = vunpack.c.h.b16 %v6248
        %v7769 = vunpack.c.l.b16 %v6249
        %v7770 = vunpack.c.h.b16 %v6249
        %v7771 = vunpack.c.l.b16 %v6250
        %v7772 = vunpack.c.h.b16 %v6250
        %v7773 = vunpack.c.l.b16 %v6251
        %v7774 = vunpack.c.h.b16 %v6251
        %v7775 = vunpack.c.l.b16 %v6252
        %v7776 = vunpack.c.h.b16 %v6252
        %v7777 = vunpack.c.l.b16 %v6253
        %v7778 = vunpack.c.h.b16 %v6253
        %v7779 = vunpack.c.l.b16 %v6254
        %v7780 = vunpack.c.h.b16 %v6254
        %v7781 = vunpack.c.l.b16 %v6255
        %v7782 = vunpack.c.h.b16 %v6255
        %v7783 = vunpack.c.l.b16 %v6256
        %v7784 = vunpack.c.h.b16 %v6256
        %v7785 = vunpack.c.l.b16 %v6257
        %v7786 = vunpack.c.h.b16 %v6257
        %v7787 = vunpack.c.l.b16 %v6258
        %v7788 = vunpack.c.h.b16 %v6258
        %v7789 = vunpack.c.l.b16 %v6259
        %v7790 = vunpack.c.h.b16 %v6259
        %v7791 = vunpack.c.l.b16 %v6260
        %v7792 = vunpack.c.h.b16 %v6260
        %v7793 = vunpack.c.l.b16 %v6261
        %v7794 = vunpack.c.h.b16 %v6261
        %v7795 = vunpack.c.l.b16 %v6262
        %v7796 = vunpack.c.h.b16 %v6262
        %v7797 = vunpack.c.l.b16 %v6263
        %v7798 = vunpack.c.h.b16 %v6263
        %v7799 = vunpack.c.l.b16 %v6264
        %v7800 = vunpack.c.h.b16 %v6264
        %v7801 = vunpack.c.l.b16 %v6265
        %v7802 = vunpack.c.h.b16 %v6265
        %v7803 = vunpack.c.l.b16 %v6266
        %v7804 = vunpack.c.h.b16 %v6266
        %v7805 = vunpack.c.l.b16 %v6267
        %v7806 = vunpack.c.h.b16 %v6267
        %v7807 = vunpack.c.l.b16 %v6268
        %v7808 = vunpack.c.h.b16 %v6268
        %v7809 = vunpack.c.l.b16 %v6269
        %v7810 = vunpack.c.h.b16 %v6269
        %v7811 = vunpack.c.l.b16 %v6270
        %v7812 = vunpack.c.h.b16 %v6270
        %v7813 = vunpack.c.l.b16 %v6271
        %v7814 = vunpack.c.h.b16 %v6271
        %v7815 = vunpack.c.l.b16 %v6272
        %v7816 = vunpack.c.h.b16 %v6272
        %v7817 = vunpack.c.l.b16 %v6273
        %v7818 = vunpack.c.h.b16 %v6273
        %v7819 = vunpack.c.l.b16 %v6274
        %v7820 = vunpack.c.h.b16 %v6274
        %v7821 = vunpack.c.l.b16 %v6275
        %v7822 = vunpack.c.h.b16 %v6275
        %v7823 = vunpack.c.l.b16 %v6276
        %v7824 = vunpack.c.h.b16 %v6276
        %v7825 = vunpack.c.l.b16 %v6277
        %v7826 = vunpack.c.h.b16 %v6277
        %v7827 = vunpack.c.l.b16 %v6278
        %v7828 = vunpack.c.h.b16 %v6278
        %v7829 = vunpack.c.l.b16 %v6279
        %v7830 = vunpack.c.h.b16 %v6279
        %v7831 = vunpack.c.l.b16 %v6280
        %v7832 = vunpack.c.h.b16 %v6280
        %v7833 = vpack.c.b16 %v6813, %v6809
        %v7834 = vpack.c.b16 %v6814, %v6810
        %v7835 = vpack.c.b16 %v6815, %v6811
        %v7836 = vpack.c.b16 %v6816, %v6812
        %v7837 = vpack.c.b16 %v6821, %v6817
        %v7838 = vpack.c.b16 %v6822, %v6818
        %v7839 = vpack.c.b16 %v6823, %v6819
        %v7840 = vpack.c.b16 %v6824, %v6820
        %v7841 = vpack.c.b16 %v6829, %v6825
        %v7842 = vpack.c.b16 %v6830, %v6826
        %v7843 = vpack.c.b16 %v6831, %v6827
        %v7844 = vpack.c.b16 %v6832, %v6828
        %v7845 = vpack.c.b16 %v6837, %v6833
        %v7846 = vpack.c.b16 %v6838, %v6834
        %v7847 = vpack.c.b16 %v6839, %v6835
        %v7848 = vpack.c.b16 %v6840, %v6836
        %v7849 = vpack.c.b16 %v6845, %v6841
        %v7850 = vpack.c.b16 %v6846, %v6842
        %v7851 = vpack.c.b16 %v6847, %v6843
        %v7852 = vpack.c.b16 %v6848, %v6844
        %v7853 = vpack.c.b16 %v6853, %v6849
        %v7854 = vpack.c.b16 %v6854, %v6850
        %v7855 = vpack.c.b16 %v6855, %v6851
        %v7856 = vpack.c.b16 %v6856, %v6852
        %v7857 = vpack.c.b16 %v6861, %v6857
        %v7858 = vpack.c.b16 %v6862, %v6858
        %v7859 = vpack.c.b16 %v6863, %v6859
        %v7860 = vpack.c.b16 %v6864, %v6860
        %v7861 = vpack.c.b16 %v6869, %v6865
        %v7862 = vpack.c.b16 %v6870, %v6866
        %v7863 = vpack.c.b16 %v6871, %v6867
        %v7864 = vpack.c.b16 %v6872, %v6868
        %v7865 = vpack.c.b16 %v6877, %v6873
        %v7866 = vpack.c.b16 %v6878, %v6874
        %v7867 = vpack.c.b16 %v6879, %v6875
        %v7868 = vpack.c.b16 %v6880, %v6876
        %v7869 = vpack.c.b16 %v6885, %v6881
        %v7870 = vpack.c.b16 %v6886, %v6882
        %v7871 = vpack.c.b16 %v6887, %v6883
        %v7872 = vpack.c.b16 %v6888, %v6884
        %v7873 = vpack.c.b16 %v6893, %v6889
        %v7874 = vpack.c.b16 %v6894, %v6890
        %v7875 = vpack.c.b16 %v6895, %v6891
        %v7876 = vpack.c.b16 %v6896, %v6892
        %v7877 = vpack.c.b16 %v6901, %v6897
        %v7878 = vpack.c.b16 %v6902, %v6898
        %v7879 = vpack.c.b16 %v6903, %v6899
        %v7880 = vpack.c.b16 %v6904, %v6900
        %v7881 = vpack.c.b16 %v6909, %v6905
        %v7882 = vpack.c.b16 %v6910, %v6906
        %v7883 = vpack.c.b16 %v6911, %v6907
        %v7884 = vpack.c.b16 %v6912, %v6908
        %v7885 = vpack.c.b16 %v6917, %v6913
        %v7886 = vpack.c.b16 %v6918, %v6914
        %v7887 = vpack.c.b16 %v6919, %v6915
        %v7888 = vpack.c.b16 %v6920, %v6916
        %v7889 = vpack.c.b16 %v6925, %v6921
        %v7890 = vpack.c.b16 %v6926, %v6922
        %v7891 = vpack.c.b16 %v6927, %v6923
        %v7892 = vpack.c.b16 %v6928, %v6924
        %v7893 = vpack.c.b16 %v6933, %v6929
        %v7894 = vpack.c.b16 %v6934, %v6930
        %v7895 = vpack.c.b16 %v6935, %v6931
        %v7896 = vpack.c.b16 %v6936, %v6932
        %v7897 = vpack.c.b16 %v6941, %v6937
        %v7898 = vpack.c.b16 %v6942, %v6938
        %v7899 = vpack.c.b16 %v6943, %v6939
        %v7900 = vpack.c.b16 %v6944, %v6940
        %v7901 = vpack.c.b16 %v6949, %v6945
        %v7902 = vpack.c.b16 %v6950, %v6946
        %v7903 = vpack.c.b16 %v6951, %v6947
        %v7904 = vpack.c.b16 %v6952, %v6948
        %v7905 = vpack.c.b16 %v6957, %v6953
        %v7906 = vpack.c.b16 %v6958, %v6954
        %v7907 = vpack.c.b16 %v6959, %v6955
        %v7908 = vpack.c.b16 %v6960, %v6956
        %v7909 = vpack.c.b16 %v6965, %v6961
        %v7910 = vpack.c.b16 %v6966, %v6962
        %v7911 = vpack.c.b16 %v6967, %v6963
        %v7912 = vpack.c.b16 %v6968, %v6964
        %v7913 = vpack.c.b16 %v6973, %v6969
        %v7914 = vpack.c.b16 %v6974, %v6970
        %v7915 = vpack.c.b16 %v6975, %v6971
        %v7916 = vpack.c.b16 %v6976, %v6972
        %v7917 = vpack.c.b16 %v6981, %v6977
        %v7918 = vpack.c.b16 %v6982, %v6978
        %v7919 = vpack.c.b16 %v6983, %v6979
        %v7920 = vpack.c.b16 %v6984, %v6980
        %v7921 = vpack.c.b16 %v6989, %v6985
        %v7922 = vpack.c.b16 %v6990, %v6986
        %v7923 = vpack.c.b16 %v6991, %v6987
        %v7924 = vpack.c.b16 %v6992, %v6988
        %v7925 = vpack.c.b16 %v6997, %v6993
        %v7926 = vpack.c.b16 %v6998, %v6994
        %v7927 = vpack.c.b16 %v6999, %v6995
        %v7928 = vpack.c.b16 %v7000, %v6996
        %v7929 = vpack.c.b16 %v7005, %v7001
        %v7930 = vpack.c.b16 %v7006, %v7002
        %v7931 = vpack.c.b16 %v7007, %v7003
        %v7932 = vpack.c.b16 %v7008, %v7004
        %v7933 = vpack.c.b16 %v7013, %v7009
        %v7934 = vpack.c.b16 %v7014, %v7010
        %v7935 = vpack.c.b16 %v7015, %v7011
        %v7936 = vpack.c.b16 %v7016, %v7012
        %v7937 = vpack.c.b16 %v7021, %v7017
        %v7938 = vpack.c.b16 %v7022, %v7018
        %v7939 = vpack.c.b16 %v7023, %v7019
        %v7940 = vpack.c.b16 %v7024, %v7020
        %v7941 = vpack.c.b16 %v7029, %v7025
        %v7942 = vpack.c.b16 %v7030, %v7026
        %v7943 = vpack.c.b16 %v7031, %v7027
        %v7944 = vpack.c.b16 %v7032, %v7028
        %v7945 = vpack.c.b16 %v7037, %v7033
        %v7946 = vpack.c.b16 %v7038, %v7034
        %v7947 = vpack.c.b16 %v7039, %v7035
        %v7948 = vpack.c.b16 %v7040, %v7036
        %v7949 = vpack.c.b16 %v7045, %v7041
        %v7950 = vpack.c.b16 %v7046, %v7042
        %v7951 = vpack.c.b16 %v7047, %v7043
        %v7952 = vpack.c.b16 %v7048, %v7044
        %v7953 = vpack.c.b16 %v7053, %v7049
        %v7954 = vpack.c.b16 %v7054, %v7050
        %v7955 = vpack.c.b16 %v7055, %v7051
        %v7956 = vpack.c.b16 %v7056, %v7052
        %v7957 = vpack.c.b16 %v7061, %v7057
        %v7958 = vpack.c.b16 %v7062, %v7058
        %v7959 = vpack.c.b16 %v7063, %v7059
        %v7960 = vpack.c.b16 %v7064, %v7060
        %v7961 = vpack.c.b16 %v7069, %v7065
        %v7962 = vpack.c.b16 %v7070, %v7066
        %v7963 = vpack.c.b16 %v7071, %v7067
        %v7964 = vpack.c.b16 %v7072, %v7068
        %v7965 = vpack.c.b16 %v7077, %v7073
        %v7966 = vpack.c.b16 %v7078, %v7074
        %v7967 = vpack.c.b16 %v7079, %v7075
        %v7968 = vpack.c.b16 %v7080, %v7076
        %v7969 = vpack.c.b16 %v7085, %v7081
        %v7970 = vpack.c.b16 %v7086, %v7082
        %v7971 = vpack.c.b16 %v7087, %v7083
        %v7972 = vpack.c.b16 %v7088, %v7084
        %v7973 = vpack.c.b16 %v7093, %v7089
        %v7974 = vpack.c.b16 %v7094, %v7090
        %v7975 = vpack.c.b16 %v7095, %v7091
        %v7976 = vpack.c.b16 %v7096, %v7092
        %v7977 = vpack.c.b16 %v7101, %v7097
        %v7978 = vpack.c.b16 %v7102, %v7098
        %v7979 = vpack.c.b16 %v7103, %v7099
        %v7980 = vpack.c.b16 %v7104, %v7100
        %v7981 = vpack.c.b16 %v7109, %v7105
        %v7982 = vpack.c.b16 %v7110, %v7106
        %v7983 = vpack.c.b16 %v7111, %v7107
        %v7984 = vpack.c.b16 %v7112, %v7108
        %v7985 = vpack.c.b16 %v7117, %v7113
        %v7986 = vpack.c.b16 %v7118, %v7114
        %v7987 = vpack.c.b16 %v7119, %v7115
        %v7988 = vpack.c.b16 %v7120, %v7116
        %v7989 = vpack.c.b16 %v7125, %v7121
        %v7990 = vpack.c.b16 %v7126, %v7122
        %v7991 = vpack.c.b16 %v7127, %v7123
        %v7992 = vpack.c.b16 %v7128, %v7124
        %v7993 = vpack.c.b16 %v7133, %v7129
        %v7994 = vpack.c.b16 %v7134, %v7130
        %v7995 = vpack.c.b16 %v7135, %v7131
        %v7996 = vpack.c.b16 %v7136, %v7132
        %v7997 = vpack.c.b16 %v7141, %v7137
        %v7998 = vpack.c.b16 %v7142, %v7138
        %v7999 = vpack.c.b16 %v7143, %v7139
        %v8000 = vpack.c.b16 %v7144, %v7140
        %v8001 = vpack.c.b16 %v7149, %v7145
        %v8002 = vpack.c.b16 %v7150, %v7146
        %v8003 = vpack.c.b16 %v7151, %v7147
        %v8004 = vpack.c.b16 %v7152, %v7148
        %v8005 = vpack.c.b16 %v7157, %v7153
        %v8006 = vpack.c.b16 %v7158, %v7154
        %v8007 = vpack.c.b16 %v7159, %v7155
        %v8008 = vpack.c.b16 %v7160, %v7156
        %v8009 = vpack.c.b16 %v7165, %v7161
        %v8010 = vpack.c.b16 %v7166, %v7162
        %v8011 = vpack.c.b16 %v7167, %v7163
        %v8012 = vpack.c.b16 %v7168, %v7164
        %v8013 = vpack.c.b16 %v7173, %v7169
        %v8014 = vpack.c.b16 %v7174, %v7170
        %v8015 = vpack.c.b16 %v7175, %v7171
        %v8016 = vpack.c.b16 %v7176, %v7172
        %v8017 = vpack.c.b16 %v7181, %v7177
        %v8018 = vpack.c.b16 %v7182, %v7178
        %v8019 = vpack.c.b16 %v7183, %v7179
        %v8020 = vpack.c.b16 %v7184, %v7180
        %v8021 = vpack.c.b16 %v7189, %v7185
        %v8022 = vpack.c.b16 %v7190, %v7186
        %v8023 = vpack.c.b16 %v7191, %v7187
        %v8024 = vpack.c.b16 %v7192, %v7188
        %v8025 = vpack.c.b16 %v7197, %v7193
        %v8026 = vpack.c.b16 %v7198, %v7194
        %v8027 = vpack.c.b16 %v7199, %v7195
        %v8028 = vpack.c.b16 %v7200, %v7196
        %v8029 = vpack.c.b16 %v7205, %v7201
        %v8030 = vpack.c.b16 %v7206, %v7202
        %v8031 = vpack.c.b16 %v7207, %v7203
        %v8032 = vpack.c.b16 %v7208, %v7204
        %v8033 = vpack.c.b16 %v7213, %v7209
        %v8034 = vpack.c.b16 %v7214, %v7210
        %v8035 = vpack.c.b16 %v7215, %v7211
        %v8036 = vpack.c.b16 %v7216, %v7212
        %v8037 = vpack.c.b16 %v7221, %v7217
        %v8038 = vpack.c.b16 %v7222, %v7218
        %v8039 = vpack.c.b16 %v7223, %v7219
        %v8040 = vpack.c.b16 %v7224, %v7220
        %v8041 = vpack.c.b16 %v7229, %v7225
        %v8042 = vpack.c.b16 %v7230, %v7226
        %v8043 = vpack.c.b16 %v7231, %v7227
        %v8044 = vpack.c.b16 %v7232, %v7228
        %v8045 = vpack.c.b16 %v7237, %v7233
        %v8046 = vpack.c.b16 %v7238, %v7234
        %v8047 = vpack.c.b16 %v7239, %v7235
        %v8048 = vpack.c.b16 %v7240, %v7236
        %v8049 = vpack.c.b16 %v7245, %v7241
        %v8050 = vpack.c.b16 %v7246, %v7242
        %v8051 = vpack.c.b16 %v7247, %v7243
        %v8052 = vpack.c.b16 %v7248, %v7244
        %v8053 = vpack.c.b16 %v7253, %v7249
        %v8054 = vpack.c.b16 %v7254, %v7250
        %v8055 = vpack.c.b16 %v7255, %v7251
        %v8056 = vpack.c.b16 %v7256, %v7252
        %v8057 = vpack.c.b16 %v7261, %v7257
        %v8058 = vpack.c.b16 %v7262, %v7258
        %v8059 = vpack.c.b16 %v7263, %v7259
        %v8060 = vpack.c.b16 %v7264, %v7260
        %v8061 = vpack.c.b16 %v7269, %v7265
        %v8062 = vpack.c.b16 %v7270, %v7266
        %v8063 = vpack.c.b16 %v7271, %v7267
        %v8064 = vpack.c.b16 %v7272, %v7268
        %v8065 = vpack.c.b16 %v7277, %v7273
        %v8066 = vpack.c.b16 %v7278, %v7274
        %v8067 = vpack.c.b16 %v7279, %v7275
        %v8068 = vpack.c.b16 %v7280, %v7276
        %v8069 = vpack.c.b16 %v7285, %v7281
        %v8070 = vpack.c.b16 %v7286, %v7282
        %v8071 = vpack.c.b16 %v7287, %v7283
        %v8072 = vpack.c.b16 %v7288, %v7284
        %v8073 = vpack.c.b16 %v7293, %v7289
        %v8074 = vpack.c.b16 %v7294, %v7290
        %v8075 = vpack.c.b16 %v7295, %v7291
        %v8076 = vpack.c.b16 %v7296, %v7292
        %v8077 = vpack.c.b16 %v7301, %v7297
        %v8078 = vpack.c.b16 %v7302, %v7298
        %v8079 = vpack.c.b16 %v7303, %v7299
        %v8080 = vpack.c.b16 %v7304, %v7300
        %v8081 = vpack.c.b16 %v7309, %v7305
        %v8082 = vpack.c.b16 %v7310, %v7306
        %v8083 = vpack.c.b16 %v7311, %v7307
        %v8084 = vpack.c.b16 %v7312, %v7308
        %v8085 = vpack.c.b16 %v7317, %v7313
        %v8086 = vpack.c.b16 %v7318, %v7314
        %v8087 = vpack.c.b16 %v7319, %v7315
        %v8088 = vpack.c.b16 %v7320, %v7316
        %v8089 = vpack.c.b16 %v7325, %v7321
        %v8090 = vpack.c.b16 %v7326, %v7322
        %v8091 = vpack.c.b16 %v7327, %v7323
        %v8092 = vpack.c.b16 %v7328, %v7324
        %v8093 = vpack.c.b16 %v7333, %v7329
        %v8094 = vpack.c.b16 %v7334, %v7330
        %v8095 = vpack.c.b16 %v7335, %v7331
        %v8096 = vpack.c.b16 %v7336, %v7332
        %v8097 = vpack.c.b16 %v7341, %v7337
        %v8098 = vpack.c.b16 %v7342, %v7338
        %v8099 = vpack.c.b16 %v7343, %v7339
        %v8100 = vpack.c.b16 %v7344, %v7340
        %v8101 = vpack.c.b16 %v7349, %v7345
        %v8102 = vpack.c.b16 %v7350, %v7346
        %v8103 = vpack.c.b16 %v7351, %v7347
        %v8104 = vpack.c.b16 %v7352, %v7348
        %v8105 = vpack.c.b16 %v7357, %v7353
        %v8106 = vpack.c.b16 %v7358, %v7354
        %v8107 = vpack.c.b16 %v7359, %v7355
        %v8108 = vpack.c.b16 %v7360, %v7356
        %v8109 = vpack.c.b16 %v7365, %v7361
        %v8110 = vpack.c.b16 %v7366, %v7362
        %v8111 = vpack.c.b16 %v7367, %v7363
        %v8112 = vpack.c.b16 %v7368, %v7364
        %v8113 = vpack.c.b16 %v7373, %v7369
        %v8114 = vpack.c.b16 %v7374, %v7370
        %v8115 = vpack.c.b16 %v7375, %v7371
        %v8116 = vpack.c.b16 %v7376, %v7372
        %v8117 = vpack.c.b16 %v7381, %v7377
        %v8118 = vpack.c.b16 %v7382, %v7378
        %v8119 = vpack.c.b16 %v7383, %v7379
        %v8120 = vpack.c.b16 %v7384, %v7380
        %v8121 = vpack.c.b16 %v7389, %v7385
        %v8122 = vpack.c.b16 %v7390, %v7386
        %v8123 = vpack.c.b16 %v7391, %v7387
        %v8124 = vpack.c.b16 %v7392, %v7388
        %v8125 = vpack.c.b16 %v7397, %v7393
        %v8126 = vpack.c.b16 %v7398, %v7394
        %v8127 = vpack.c.b16 %v7399, %v7395
        %v8128 = vpack.c.b16 %v7400, %v7396
        %v8129 = vpack.c.b16 %v7405, %v7401
        %v8130 = vpack.c.b16 %v7406, %v7402
        %v8131 = vpack.c.b16 %v7407, %v7403
        %v8132 = vpack.c.b16 %v7408, %v7404
        %v8133 = vpack.c.b16 %v7413, %v7409
        %v8134 = vpack.c.b16 %v7414, %v7410
        %v8135 = vpack.c.b16 %v7415, %v7411
        %v8136 = vpack.c.b16 %v7416, %v7412
        %v8137 = vpack.c.b16 %v7421, %v7417
        %v8138 = vpack.c.b16 %v7422, %v7418
        %v8139 = vpack.c.b16 %v7423, %v7419
        %v8140 = vpack.c.b16 %v7424, %v7420
        %v8141 = vpack.c.b16 %v7429, %v7425
        %v8142 = vpack.c.b16 %v7430, %v7426
        %v8143 = vpack.c.b16 %v7431, %v7427
        %v8144 = vpack.c.b16 %v7432, %v7428
        %v8145 = vpack.c.b16 %v7437, %v7433
        %v8146 = vpack.c.b16 %v7438, %v7434
        %v8147 = vpack.c.b16 %v7439, %v7435
        %v8148 = vpack.c.b16 %v7440, %v7436
        %v8149 = vpack.c.b16 %v7445, %v7441
        %v8150 = vpack.c.b16 %v7446, %v7442
        %v8151 = vpack.c.b16 %v7447, %v7443
        %v8152 = vpack.c.b16 %v7448, %v7444
        %v8153 = vpack.c.b16 %v7453, %v7449
        %v8154 = vpack.c.b16 %v7454, %v7450
        %v8155 = vpack.c.b16 %v7455, %v7451
        %v8156 = vpack.c.b16 %v7456, %v7452
        %v8157 = vpack.c.b16 %v7461, %v7457
        %v8158 = vpack.c.b16 %v7462, %v7458
        %v8159 = vpack.c.b16 %v7463, %v7459
        %v8160 = vpack.c.b16 %v7464, %v7460
        %v8161 = vpack.c.b16 %v7469, %v7465
        %v8162 = vpack.c.b16 %v7470, %v7466
        %v8163 = vpack.c.b16 %v7471, %v7467
        %v8164 = vpack.c.b16 %v7472, %v7468
        %v8165 = vpack.c.b16 %v7477, %v7473
        %v8166 = vpack.c.b16 %v7478, %v7474
        %v8167 = vpack.c.b16 %v7479, %v7475
        %v8168 = vpack.c.b16 %v7480, %v7476
        %v8169 = vpack.c.b16 %v7485, %v7481
        %v8170 = vpack.c.b16 %v7486, %v7482
        %v8171 = vpack.c.b16 %v7487, %v7483
        %v8172 = vpack.c.b16 %v7488, %v7484
        %v8173 = vpack.c.b16 %v7493, %v7489
        %v8174 = vpack.c.b16 %v7494, %v7490
        %v8175 = vpack.c.b16 %v7495, %v7491
        %v8176 = vpack.c.b16 %v7496, %v7492
        %v8177 = vpack.c.b16 %v7501, %v7497
        %v8178 = vpack.c.b16 %v7502, %v7498
        %v8179 = vpack.c.b16 %v7503, %v7499
        %v8180 = vpack.c.b16 %v7504, %v7500
        %v8181 = vpack.c.b16 %v7509, %v7505
        %v8182 = vpack.c.b16 %v7510, %v7506
        %v8183 = vpack.c.b16 %v7511, %v7507
        %v8184 = vpack.c.b16 %v7512, %v7508
        %v8185 = vpack.c.b16 %v7517, %v7513
        %v8186 = vpack.c.b16 %v7518, %v7514
        %v8187 = vpack.c.b16 %v7519, %v7515
        %v8188 = vpack.c.b16 %v7520, %v7516
        %v8189 = vpack.c.b16 %v7525, %v7521
        %v8190 = vpack.c.b16 %v7526, %v7522
        %v8191 = vpack.c.b16 %v7527, %v7523
        %v8192 = vpack.c.b16 %v7528, %v7524
        %v8193 = vpack.c.b16 %v7533, %v7529
        %v8194 = vpack.c.b16 %v7534, %v7530
        %v8195 = vpack.c.b16 %v7535, %v7531
        %v8196 = vpack.c.b16 %v7536, %v7532
        %v8197 = vpack.c.b16 %v7541, %v7537
        %v8198 = vpack.c.b16 %v7542, %v7538
        %v8199 = vpack.c.b16 %v7543, %v7539
        %v8200 = vpack.c.b16 %v7544, %v7540
        %v8201 = vpack.c.b16 %v7549, %v7545
        %v8202 = vpack.c.b16 %v7550, %v7546
        %v8203 = vpack.c.b16 %v7551, %v7547
        %v8204 = vpack.c.b16 %v7552, %v7548
        %v8205 = vpack.c.b16 %v7557, %v7553
        %v8206 = vpack.c.b16 %v7558, %v7554
        %v8207 = vpack.c.b16 %v7559, %v7555
        %v8208 = vpack.c.b16 %v7560, %v7556
        %v8209 = vpack.c.b16 %v7565, %v7561
        %v8210 = vpack.c.b16 %v7566, %v7562
        %v8211 = vpack.c.b16 %v7567, %v7563
        %v8212 = vpack.c.b16 %v7568, %v7564
        %v8213 = vpack.c.b16 %v7573, %v7569
        %v8214 = vpack.c.b16 %v7574, %v7570
        %v8215 = vpack.c.b16 %v7575, %v7571
        %v8216 = vpack.c.b16 %v7576, %v7572
        %v8217 = vpack.c.b16 %v7581, %v7577
        %v8218 = vpack.c.b16 %v7582, %v7578
        %v8219 = vpack.c.b16 %v7583, %v7579
        %v8220 = vpack.c.b16 %v7584, %v7580
        %v8221 = vpack.c.b16 %v7589, %v7585
        %v8222 = vpack.c.b16 %v7590, %v7586
        %v8223 = vpack.c.b16 %v7591, %v7587
        %v8224 = vpack.c.b16 %v7592, %v7588
        %v8225 = vpack.c.b16 %v7597, %v7593
        %v8226 = vpack.c.b16 %v7598, %v7594
        %v8227 = vpack.c.b16 %v7599, %v7595
        %v8228 = vpack.c.b16 %v7600, %v7596
        %v8229 = vpack.c.b16 %v7605, %v7601
        %v8230 = vpack.c.b16 %v7606, %v7602
        %v8231 = vpack.c.b16 %v7607, %v7603
        %v8232 = vpack.c.b16 %v7608, %v7604
        %v8233 = vpack.c.b16 %v7613, %v7609
        %v8234 = vpack.c.b16 %v7614, %v7610
        %v8235 = vpack.c.b16 %v7615, %v7611
        %v8236 = vpack.c.b16 %v7616, %v7612
        %v8237 = vpack.c.b16 %v7621, %v7617
        %v8238 = vpack.c.b16 %v7622, %v7618
        %v8239 = vpack.c.b16 %v7623, %v7619
        %v8240 = vpack.c.b16 %v7624, %v7620
        %v8241 = vpack.c.b16 %v7629, %v7625
        %v8242 = vpack.c.b16 %v7630, %v7626
        %v8243 = vpack.c.b16 %v7631, %v7627
        %v8244 = vpack.c.b16 %v7632, %v7628
        %v8245 = vpack.c.b16 %v7637, %v7633
        %v8246 = vpack.c.b16 %v7638, %v7634
        %v8247 = vpack.c.b16 %v7639, %v7635
        %v8248 = vpack.c.b16 %v7640, %v7636
        %v8249 = vpack.c.b16 %v7645, %v7641
        %v8250 = vpack.c.b16 %v7646, %v7642
        %v8251 = vpack.c.b16 %v7647, %v7643
        %v8252 = vpack.c.b16 %v7648, %v7644
        %v8253 = vpack.c.b16 %v7653, %v7649
        %v8254 = vpack.c.b16 %v7654, %v7650
        %v8255 = vpack.c.b16 %v7655, %v7651
        %v8256 = vpack.c.b16 %v7656, %v7652
        %v8257 = vpack.c.b16 %v7661, %v7657
        %v8258 = vpack.c.b16 %v7662, %v7658
        %v8259 = vpack.c.b16 %v7663, %v7659
        %v8260 = vpack.c.b16 %v7664, %v7660
        %v8261 = vpack.c.b16 %v7669, %v7665
        %v8262 = vpack.c.b16 %v7670, %v7666
        %v8263 = vpack.c.b16 %v7671, %v7667
        %v8264 = vpack.c.b16 %v7672, %v7668
        %v8265 = vpack.c.b16 %v7677, %v7673
        %v8266 = vpack.c.b16 %v7678, %v7674
        %v8267 = vpack.c.b16 %v7679, %v7675
        %v8268 = vpack.c.b16 %v7680, %v7676
        %v8269 = vpack.c.b16 %v7685, %v7681
        %v8270 = vpack.c.b16 %v7686, %v7682
        %v8271 = vpack.c.b16 %v7687, %v7683
        %v8272 = vpack.c.b16 %v7688, %v7684
        %v8273 = vpack.c.b16 %v7693, %v7689
        %v8274 = vpack.c.b16 %v7694, %v7690
        %v8275 = vpack.c.b16 %v7695, %v7691
        %v8276 = vpack.c.b16 %v7696, %v7692
        %v8277 = vpack.c.b16 %v7701, %v7697
        %v8278 = vpack.c.b16 %v7702, %v7698
        %v8279 = vpack.c.b16 %v7703, %v7699
        %v8280 = vpack.c.b16 %v7704, %v7700
        %v8281 = vpack.c.b16 %v7709, %v7705
        %v8282 = vpack.c.b16 %v7710, %v7706
        %v8283 = vpack.c.b16 %v7711, %v7707
        %v8284 = vpack.c.b16 %v7712, %v7708
        %v8285 = vpack.c.b16 %v7717, %v7713
        %v8286 = vpack.c.b16 %v7718, %v7714
        %v8287 = vpack.c.b16 %v7719, %v7715
        %v8288 = vpack.c.b16 %v7720, %v7716
        %v8289 = vpack.c.b16 %v7725, %v7721
        %v8290 = vpack.c.b16 %v7726, %v7722
        %v8291 = vpack.c.b16 %v7727, %v7723
        %v8292 = vpack.c.b16 %v7728, %v7724
        %v8293 = vpack.c.b16 %v7733, %v7729
        %v8294 = vpack.c.b16 %v7734, %v7730
        %v8295 = vpack.c.b16 %v7735, %v7731
        %v8296 = vpack.c.b16 %v7736, %v7732
        %v8297 = vpack.c.b16 %v7741, %v7737
        %v8298 = vpack.c.b16 %v7742, %v7738
        %v8299 = vpack.c.b16 %v7743, %v7739
        %v8300 = vpack.c.b16 %v7744, %v7740
        %v8301 = vpack.c.b16 %v7749, %v7745
        %v8302 = vpack.c.b16 %v7750, %v7746
        %v8303 = vpack.c.b16 %v7751, %v7747
        %v8304 = vpack.c.b16 %v7752, %v7748
        %v8305 = vpack.c.b16 %v7757, %v7753
        %v8306 = vpack.c.b16 %v7758, %v7754
        %v8307 = vpack.c.b16 %v7759, %v7755
        %v8308 = vpack.c.b16 %v7760, %v7756
        %v8309 = vpack.c.b16 %v7765, %v7761
        %v8310 = vpack.c.b16 %v7766, %v7762
        %v8311 = vpack.c.b16 %v7767, %v7763
        %v8312 = vpack.c.b16 %v7768, %v7764
        %v8313 = vpack.c.b16 %v7773, %v7769
        %v8314 = vpack.c.b16 %v7774, %v7770
        %v8315 = vpack.c.b16 %v7775, %v7771
        %v8316 = vpack.c.b16 %v7776, %v7772
        %v8317 = vpack.c.b16 %v7781, %v7777
        %v8318 = vpack.c.b16 %v7782, %v7778
        %v8319 = vpack.c.b16 %v7783, %v7779
        %v8320 = vpack.c.b16 %v7784, %v7780
        %v8321 = vpack.c.b16 %v7789, %v7785
        %v8322 = vpack.c.b16 %v7790, %v7786
        %v8323 = vpack.c.b16 %v7791, %v7787
        %v8324 = vpack.c.b16 %v7792, %v7788
        %v8325 = vpack.c.b16 %v7797, %v7793
        %v8326 = vpack.c.b16 %v7798, %v7794
        %v8327 = vpack.c.b16 %v7799, %v7795
        %v8328 = vpack.c.b16 %v7800, %v7796
        %v8329 = vpack.c.b16 %v7805, %v7801
        %v8330 = vpack.c.b16 %v7806, %v7802
        %v8331 = vpack.c.b16 %v7807, %v7803
        %v8332 = vpack.c.b16 %v7808, %v7804
        %v8333 = vpack.c.b16 %v7813, %v7809
        %v8334 = vpack.c.b16 %v7814, %v7810
        %v8335 = vpack.c.b16 %v7815, %v7811
        %v8336 = vpack.c.b16 %v7816, %v7812
        %v8337 = vpack.c.b16 %v7821, %v7817
        %v8338 = vpack.c.b16 %v7822, %v7818
        %v8339 = vpack.c.b16 %v7823, %v7819
        %v8340 = vpack.c.b16 %v7824, %v7820
        %v8341 = vpack.c.b16 %v7829, %v7825
        %v8342 = vpack.c.b16 %v7830, %v7826
        %v8343 = vpack.c.b16 %v7831, %v7827
        %v8344 = vpack.c.b16 %v7832, %v7828
        %8857 = vmatprep.subr.bf16.mxu0 %v7834
        %8858 = vmatpush1.bf16.msra.mxu0 %v7833
        %8859 = vmatprep.subr.bf16.mxu0 %v7838
        %8860 = vmatpush1.bf16.msra.mxu0 %v7837
        %8861 = vmatprep.subr.bf16.mxu0 %v7842
        %8862 = vmatpush1.bf16.msra.mxu0 %v7841
        %8863 = vmatprep.subr.bf16.mxu0 %v7846
        %8864 = vmatpush1.bf16.msra.mxu0 %v7845
        %8865 = vmatprep.subr.bf16.mxu0 %v7850
        %8866 = vmatpush1.bf16.msra.mxu0 %v7849
        %8867 = vmatprep.subr.bf16.mxu0 %v7854
        %8868 = vmatpush1.bf16.msra.mxu0 %v7853
        %8869 = vmatprep.subr.bf16.mxu0 %v7858
        %8870 = vmatpush1.bf16.msra.mxu0 %v7857
        %8871 = vmatprep.subr.bf16.mxu0 %v7862
        %8872 = vmatpush1.bf16.msra.mxu0 %v7861
        %8873 = vmatprep.subr.bf16.mxu0 %v7866
        %8874 = vmatpush1.bf16.msra.mxu0 %v7865
        %8875 = vmatprep.subr.bf16.mxu0 %v7870
        %8876 = vmatpush1.bf16.msra.mxu0 %v7869
        %8877 = vmatprep.subr.bf16.mxu0 %v7874
        %8878 = vmatpush1.bf16.msra.mxu0 %v7873
        %8879 = vmatprep.subr.bf16.mxu0 %v7878
        %8880 = vmatpush1.bf16.msra.mxu0 %v7877
        %8881 = vmatprep.subr.bf16.mxu0 %v7882
        %8882 = vmatpush1.bf16.msra.mxu0 %v7881
        %8883 = vmatprep.subr.bf16.mxu0 %v7886
        %8884 = vmatpush1.bf16.msra.mxu0 %v7885
        %8885 = vmatprep.subr.bf16.mxu0 %v7890
        %8886 = vmatpush1.bf16.msra.mxu0 %v7889
        %8887 = vmatprep.subr.bf16.mxu0 %v7894
        %8888 = vmatpush1.bf16.msra.mxu0 %v7893
        %8889 = vmatprep.mubr.bf16.mxu0 %v5754
        %8890 = vmatmul.mubr.bf16.gmra.mrb[0].mxu0 %v5753
        %v8891 = vpop.f32.mrb[0].mxu0
        %v8892 = vadd.f32 %v6284, %v8891
        %v8893 = vpop.f32.mrb[0].mxu0
        %v8894 = vadd.f32 %v6288, %v8893
        %v8895 = vpop.f32.mrb[0].mxu0
        %v8896 = vpop.f32.mrb[0].mxu0
        %8897 = vdwg.mxu0
        %8898 = vmatprep.subr.bf16.mxu0 %v7898
        %8899 = vmatpush1.bf16.msra.mxu0 %v7897
        %8900 = vmatprep.subr.bf16.mxu0 %v7902
        %8901 = vmatpush1.bf16.msra.mxu0 %v7901
        %8902 = vmatprep.subr.bf16.mxu0 %v7906
        %8903 = vmatpush1.bf16.msra.mxu0 %v7905
        %8904 = vmatprep.subr.bf16.mxu0 %v7910
        %8905 = vmatpush1.bf16.msra.mxu0 %v7909
        %8906 = vmatprep.subr.bf16.mxu0 %v7914
        %8907 = vmatpush1.bf16.msra.mxu0 %v7913
        %8908 = vmatprep.subr.bf16.mxu0 %v7918
        %8909 = vmatpush1.bf16.msra.mxu0 %v7917
        %8910 = vmatprep.subr.bf16.mxu0 %v7922
        %8911 = vmatpush1.bf16.msra.mxu0 %v7921
        %8912 = vmatprep.subr.bf16.mxu0 %v7926
        %8913 = vmatpush1.bf16.msra.mxu0 %v7925
        %8914 = vmatprep.subr.bf16.mxu0 %v7930
        %8915 = vmatpush1.bf16.msra.mxu0 %v7929
        %8916 = vmatprep.subr.bf16.mxu0 %v7934
        %8917 = vmatpush1.bf16.msra.mxu0 %v7933
        %8918 = vmatprep.subr.bf16.mxu0 %v7938
        %8919 = vmatpush1.bf16.msra.mxu0 %v7937
        %8920 = vmatprep.subr.bf16.mxu0 %v7942
        %8921 = vmatpush1.bf16.msra.mxu0 %v7941
        %8922 = vmatprep.subr.bf16.mxu0 %v7946
        %8923 = vmatpush1.bf16.msra.mxu0 %v7945
        %8924 = vmatprep.subr.bf16.mxu0 %v7950
        %8925 = vmatpush1.bf16.msra.mxu0 %v7949
        %8926 = vmatprep.subr.bf16.mxu0 %v7954
        %8927 = vmatpush1.bf16.msra.mxu0 %v7953
        %8928 = vmatprep.subr.bf16.mxu0 %v7958
        %8929 = vmatpush1.bf16.msra.mxu0 %v7957
        %8930 = vmatprep.mubr.bf16.mxu0 %v5756
        %8931 = vmatmul.mubr.bf16.gmra.mrb[0].mxu0 %v5755
        %v8932 = vpop.f32.mrb[0].mxu0
        %v8933 = vadd.f32 %v8892, %v8932
        %v8934 = vpop.f32.mrb[0].mxu0
        %v8935 = vadd.f32 %v8894, %v8934
        %v8936 = vpop.f32.mrb[0].mxu0
        %v8937 = vpop.f32.mrb[0].mxu0
        %8938 = vdwg.mxu0
        %8939 = vmatprep.subr.bf16.mxu0 %v7962
        %8940 = vmatpush1.bf16.msra.mxu0 %v7961
        %8941 = vmatprep.subr.bf16.mxu0 %v7966
        %8942 = vmatpush1.bf16.msra.mxu0 %v7965
        %8943 = vmatprep.subr.bf16.mxu0 %v7970
        %8944 = vmatpush1.bf16.msra.mxu0 %v7969
        %8945 = vmatprep.subr.bf16.mxu0 %v7974
        %8946 = vmatpush1.bf16.msra.mxu0 %v7973
        %8947 = vmatprep.subr.bf16.mxu0 %v7978
        %8948 = vmatpush1.bf16.msra.mxu0 %v7977
        %8949 = vmatprep.subr.bf16.mxu0 %v7982
        %8950 = vmatpush1.bf16.msra.mxu0 %v7981
        %8951 = vmatprep.subr.bf16.mxu0 %v7986
        %8952 = vmatpush1.bf16.msra.mxu0 %v7985
        %8953 = vmatprep.subr.bf16.mxu0 %v7990
        %8954 = vmatpush1.bf16.msra.mxu0 %v7989
        %8955 = vmatprep.subr.bf16.mxu0 %v7994
        %8956 = vmatpush1.bf16.msra.mxu0 %v7993
        %8957 = vmatprep.subr.bf16.mxu0 %v7998
        %8958 = vmatpush1.bf16.msra.mxu0 %v7997
        %8959 = vmatprep.subr.bf16.mxu0 %v8002
        %8960 = vmatpush1.bf16.msra.mxu0 %v8001
        %8961 = vmatprep.subr.bf16.mxu0 %v8006
        %8962 = vmatpush1.bf16.msra.mxu0 %v8005
        %8963 = vmatprep.subr.bf16.mxu0 %v8010
        %8964 = vmatpush1.bf16.msra.mxu0 %v8009
        %8965 = vmatprep.subr.bf16.mxu0 %v8014
        %8966 = vmatpush1.bf16.msra.mxu0 %v8013
        %8967 = vmatprep.subr.bf16.mxu0 %v8018
        %8968 = vmatpush1.bf16.msra.mxu0 %v8017
        %8969 = vmatprep.subr.bf16.mxu0 %v8022
        %8970 = vmatpush1.bf16.msra.mxu0 %v8021
        %8971 = vmatprep.mubr.bf16.mxu0 %v5758
        %8972 = vmatmul.mubr.bf16.gmra.mrb[0].mxu0 %v5757
        %v8973 = vpop.f32.mrb[0].mxu0
        %v8974 = vadd.f32 %v8933, %v8973
        %v8975 = vpop.f32.mrb[0].mxu0
        %v8976 = vadd.f32 %v8935, %v8975
        %v8977 = vpop.f32.mrb[0].mxu0
        %v8978 = vpop.f32.mrb[0].mxu0
        %8979 = vdwg.mxu0
        %8980 = vmatprep.subr.bf16.mxu0 %v8026
        %8981 = vmatpush1.bf16.msra.mxu0 %v8025
        %8982 = vmatprep.subr.bf16.mxu0 %v8030
        %8983 = vmatpush1.bf16.msra.mxu0 %v8029
        %8984 = vmatprep.subr.bf16.mxu0 %v8034
        %8985 = vmatpush1.bf16.msra.mxu0 %v8033
        %8986 = vmatprep.subr.bf16.mxu0 %v8038
        %8987 = vmatpush1.bf16.msra.mxu0 %v8037
        %8988 = vmatprep.subr.bf16.mxu0 %v8042
        %8989 = vmatpush1.bf16.msra.mxu0 %v8041
        %8990 = vmatprep.subr.bf16.mxu0 %v8046
        %8991 = vmatpush1.bf16.msra.mxu0 %v8045
        %8992 = vmatprep.subr.bf16.mxu0 %v8050
        %8993 = vmatpush1.bf16.msra.mxu0 %v8049
        %8994 = vmatprep.subr.bf16.mxu0 %v8054
        %8995 = vmatpush1.bf16.msra.mxu0 %v8053
        %8996 = vmatprep.subr.bf16.mxu0 %v8058
        %8997 = vmatpush1.bf16.msra.mxu0 %v8057
        %8998 = vmatprep.subr.bf16.mxu0 %v8062
        %8999 = vmatpush1.bf16.msra.mxu0 %v8061
        %9000 = vmatprep.subr.bf16.mxu0 %v8066
        %9001 = vmatpush1.bf16.msra.mxu0 %v8065
        %9002 = vmatprep.subr.bf16.mxu0 %v8070
        %9003 = vmatpush1.bf16.msra.mxu0 %v8069
        %9004 = vmatprep.subr.bf16.mxu0 %v8074
        %9005 = vmatpush1.bf16.msra.mxu0 %v8073
        %9006 = vmatprep.subr.bf16.mxu0 %v8078
        %9007 = vmatpush1.bf16.msra.mxu0 %v8077
        %9008 = vmatprep.subr.bf16.mxu0 %v8082
        %9009 = vmatpush1.bf16.msra.mxu0 %v8081
        %9010 = vmatprep.subr.bf16.mxu0 %v8086
        %9011 = vmatpush1.bf16.msra.mxu0 %v8085
        %9012 = vmatprep.mubr.bf16.mxu0 %v5760
        %9013 = vmatmul.mubr.bf16.gmra.mrb[0].mxu0 %v5759
        %v9014 = vpop.f32.mrb[0].mxu0
        %v9015 = vadd.f32 %v8974, %v9014
        %v9016 = vpop.f32.mrb[0].mxu0
        %v9017 = vadd.f32 %v8976, %v9016
        %v9018 = vpop.f32.mrb[0].mxu0
        %v9019 = vpop.f32.mrb[0].mxu0
        %9020 = vdwg.mxu0
        %9021 = vmatprep.subr.bf16.mxu0 %v8090
        %9022 = vmatpush1.bf16.msra.mxu0 %v8089
        %9023 = vmatprep.subr.bf16.mxu0 %v8094
        %9024 = vmatpush1.bf16.msra.mxu0 %v8093
        %9025 = vmatprep.subr.bf16.mxu0 %v8098
        %9026 = vmatpush1.bf16.msra.mxu0 %v8097
        %9027 = vmatprep.subr.bf16.mxu0 %v8102
        %9028 = vmatpush1.bf16.msra.mxu0 %v8101
        %9029 = vmatprep.subr.bf16.mxu0 %v8106
        %9030 = vmatpush1.bf16.msra.mxu0 %v8105
        %9031 = vmatprep.subr.bf16.mxu0 %v8110
        %9032 = vmatpush1.bf16.msra.mxu0 %v8109
        %9033 = vmatprep.subr.bf16.mxu0 %v8114
        %9034 = vmatpush1.bf16.msra.mxu0 %v8113
        %9035 = vmatprep.subr.bf16.mxu0 %v8118
        %9036 = vmatpush1.bf16.msra.mxu0 %v8117
        %9037 = vmatprep.subr.bf16.mxu0 %v8122
        %9038 = vmatpush1.bf16.msra.mxu0 %v8121
        %9039 = vmatprep.subr.bf16.mxu0 %v8126
        %9040 = vmatpush1.bf16.msra.mxu0 %v8125
        %9041 = vmatprep.subr.bf16.mxu0 %v8130
        %9042 = vmatpush1.bf16.msra.mxu0 %v8129
        %9043 = vmatprep.subr.bf16.mxu0 %v8134
        %9044 = vmatpush1.bf16.msra.mxu0 %v8133
        %9045 = vmatprep.subr.bf16.mxu0 %v8138
        %9046 = vmatpush1.bf16.msra.mxu0 %v8137
        %9047 = vmatprep.subr.bf16.mxu0 %v8142
        %9048 = vmatpush1.bf16.msra.mxu0 %v8141
        %9049 = vmatprep.subr.bf16.mxu0 %v8146
        %9050 = vmatpush1.bf16.msra.mxu0 %v8145
        %9051 = vmatprep.subr.bf16.mxu0 %v8150
        %9052 = vmatpush1.bf16.msra.mxu0 %v8149
        %9053 = vmatprep.mubr.bf16.mxu0 %v5762
        %9054 = vmatmul.mubr.bf16.gmra.mrb[0].mxu0 %v5761
        %v9055 = vpop.f32.mrb[0].mxu0
        %v9056 = vadd.f32 %v9015, %v9055
        %v9057 = vpop.f32.mrb[0].mxu0
        %v9058 = vadd.f32 %v9017, %v9057
        %v9059 = vpop.f32.mrb[0].mxu0
        %v9060 = vpop.f32.mrb[0].mxu0
        %9061 = vdwg.mxu0
        %9062 = vmatprep.subr.bf16.mxu0 %v8154
        %9063 = vmatpush1.bf16.msra.mxu0 %v8153
        %9064 = vmatprep.subr.bf16.mxu0 %v8158
        %9065 = vmatpush1.bf16.msra.mxu0 %v8157
        %9066 = vmatprep.subr.bf16.mxu0 %v8162
        %9067 = vmatpush1.bf16.msra.mxu0 %v8161
        %9068 = vmatprep.subr.bf16.mxu0 %v8166
        %9069 = vmatpush1.bf16.msra.mxu0 %v8165
        %9070 = vmatprep.subr.bf16.mxu0 %v8170
        %9071 = vmatpush1.bf16.msra.mxu0 %v8169
        %9072 = vmatprep.subr.bf16.mxu0 %v8174
        %9073 = vmatpush1.bf16.msra.mxu0 %v8173
        %9074 = vmatprep.subr.bf16.mxu0 %v8178
        %9075 = vmatpush1.bf16.msra.mxu0 %v8177
        %9076 = vmatprep.subr.bf16.mxu0 %v8182
        %9077 = vmatpush1.bf16.msra.mxu0 %v8181
        %9078 = vmatprep.subr.bf16.mxu0 %v8186
        %9079 = vmatpush1.bf16.msra.mxu0 %v8185
        %9080 = vmatprep.subr.bf16.mxu0 %v8190
        %9081 = vmatpush1.bf16.msra.mxu0 %v8189
        %9082 = vmatprep.subr.bf16.mxu0 %v8194
        %9083 = vmatpush1.bf16.msra.mxu0 %v8193
        %9084 = vmatprep.subr.bf16.mxu0 %v8198
        %9085 = vmatpush1.bf16.msra.mxu0 %v8197
        %9086 = vmatprep.subr.bf16.mxu0 %v8202
        %9087 = vmatpush1.bf16.msra.mxu0 %v8201
        %9088 = vmatprep.subr.bf16.mxu0 %v8206
        %9089 = vmatpush1.bf16.msra.mxu0 %v8205
        %9090 = vmatprep.subr.bf16.mxu0 %v8210
        %9091 = vmatpush1.bf16.msra.mxu0 %v8209
        %9092 = vmatprep.subr.bf16.mxu0 %v8214
        %9093 = vmatpush1.bf16.msra.mxu0 %v8213
        %9094 = vmatprep.mubr.bf16.mxu0 %v5764
        %9095 = vmatmul.mubr.bf16.gmra.mrb[0].mxu0 %v5763
        %v9096 = vpop.f32.mrb[0].mxu0
        %v9097 = vadd.f32 %v9056, %v9096
        %v9098 = vpop.f32.mrb[0].mxu0
        %v9099 = vadd.f32 %v9058, %v9098
        %v9100 = vpop.f32.mrb[0].mxu0
        %v9101 = vpop.f32.mrb[0].mxu0
        %9102 = vdwg.mxu0
        %9103 = vmatprep.subr.bf16.mxu0 %v8218
        %9104 = vmatpush1.bf16.msra.mxu0 %v8217
        %9105 = vmatprep.subr.bf16.mxu0 %v8222
        %9106 = vmatpush1.bf16.msra.mxu0 %v8221
        %9107 = vmatprep.subr.bf16.mxu0 %v8226
        %9108 = vmatpush1.bf16.msra.mxu0 %v8225
        %9109 = vmatprep.subr.bf16.mxu0 %v8230
        %9110 = vmatpush1.bf16.msra.mxu0 %v8229
        %9111 = vmatprep.subr.bf16.mxu0 %v8234
        %9112 = vmatpush1.bf16.msra.mxu0 %v8233
        %9113 = vmatprep.subr.bf16.mxu0 %v8238
        %9114 = vmatpush1.bf16.msra.mxu0 %v8237
        %9115 = vmatprep.subr.bf16.mxu0 %v8242
        %9116 = vmatpush1.bf16.msra.mxu0 %v8241
        %9117 = vmatprep.subr.bf16.mxu0 %v8246
        %9118 = vmatpush1.bf16.msra.mxu0 %v8245
        %9119 = vmatprep.subr.bf16.mxu0 %v8250
        %9120 = vmatpush1.bf16.msra.mxu0 %v8249
        %9121 = vmatprep.subr.bf16.mxu0 %v8254
        %9122 = vmatpush1.bf16.msra.mxu0 %v8253
        %9123 = vmatprep.subr.bf16.mxu0 %v8258
        %9124 = vmatpush1.bf16.msra.mxu0 %v8257
        %9125 = vmatprep.subr.bf16.mxu0 %v8262
        %9126 = vmatpush1.bf16.msra.mxu0 %v8261
        %9127 = vmatprep.subr.bf16.mxu0 %v8266
        %9128 = vmatpush1.bf16.msra.mxu0 %v8265
        %9129 = vmatprep.subr.bf16.mxu0 %v8270
        %9130 = vmatpush1.bf16.msra.mxu0 %v8269
        %9131 = vmatprep.subr.bf16.mxu0 %v8274
        %9132 = vmatpush1.bf16.msra.mxu0 %v8273
        %9133 = vmatprep.subr.bf16.mxu0 %v8278
        %9134 = vmatpush1.bf16.msra.mxu0 %v8277
        %9135 = vmatprep.mubr.bf16.mxu0 %v5766
        %9136 = vmatmul.mubr.bf16.gmra.mrb[0].mxu0 %v5765
        %v9137 = vpop.f32.mrb[0].mxu0
        %v9138 = vadd.f32 %v9097, %v9137
        %v9139 = vpop.f32.mrb[0].mxu0
        %v9140 = vadd.f32 %v9099, %v9139
        %v9141 = vpop.f32.mrb[0].mxu0
        %v9142 = vpop.f32.mrb[0].mxu0
        %9143 = vdwg.mxu0
        %9144 = vmatprep.subr.bf16.mxu0 %v8282
        %9145 = vmatpush1.bf16.msra.mxu0 %v8281
        %9146 = vmatprep.subr.bf16.mxu0 %v8286
        %9147 = vmatpush1.bf16.msra.mxu0 %v8285
        %9148 = vmatprep.subr.bf16.mxu0 %v8290
        %9149 = vmatpush1.bf16.msra.mxu0 %v8289
        %9150 = vmatprep.subr.bf16.mxu0 %v8294
        %9151 = vmatpush1.bf16.msra.mxu0 %v8293
        %9152 = vmatprep.subr.bf16.mxu0 %v8298
        %9153 = vmatpush1.bf16.msra.mxu0 %v8297
        %9154 = vmatprep.subr.bf16.mxu0 %v8302
        %9155 = vmatpush1.bf16.msra.mxu0 %v8301
        %9156 = vmatprep.subr.bf16.mxu0 %v8306
        %9157 = vmatpush1.bf16.msra.mxu0 %v8305
        %9158 = vmatprep.subr.bf16.mxu0 %v8310
        %9159 = vmatpush1.bf16.msra.mxu0 %v8309
        %9160 = vmatprep.subr.bf16.mxu0 %v8314
        %9161 = vmatpush1.bf16.msra.mxu0 %v8313
        %9162 = vmatprep.subr.bf16.mxu0 %v8318
        %9163 = vmatpush1.bf16.msra.mxu0 %v8317
        %9164 = vmatprep.subr.bf16.mxu0 %v8322
        %9165 = vmatpush1.bf16.msra.mxu0 %v8321
        %9166 = vmatprep.subr.bf16.mxu0 %v8326
        %9167 = vmatpush1.bf16.msra.mxu0 %v8325
        %9168 = vmatprep.subr.bf16.mxu0 %v8330
        %9169 = vmatpush1.bf16.msra.mxu0 %v8329
        %9170 = vmatprep.subr.bf16.mxu0 %v8334
        %9171 = vmatpush1.bf16.msra.mxu0 %v8333
        %9172 = vmatprep.subr.bf16.mxu0 %v8338
        %9173 = vmatpush1.bf16.msra.mxu0 %v8337
        %9174 = vmatprep.subr.bf16.mxu0 %v8342
        %9175 = vmatpush1.bf16.msra.mxu0 %v8341
        %9176 = vmatprep.mubr.bf16.mxu0 %v5768
        %9177 = vmatmul.mubr.bf16.gmra.mrb[0].mxu0 %v5767
        %v9178 = vpop.f32.mrb[0].mxu0
        %v9179 = vadd.f32 %v9138, %v9178
        %v9180 = vpop.f32.mrb[0].mxu0
        %v9181 = vadd.f32 %v9140, %v9180
        %v9182 = vpop.f32.mrb[0].mxu0
        %v9183 = vpop.f32.mrb[0].mxu0
        %9184 = vdwg.mxu0
        %9185 = vmatprep.subr.bf16.mxu0 %v7836
        %9186 = vmatpush1.bf16.msra.mxu0 %v7835
        %9187 = vmatprep.subr.bf16.mxu0 %v7840
        %9188 = vmatpush1.bf16.msra.mxu0 %v7839
        %9189 = vmatprep.subr.bf16.mxu0 %v7844
        %9190 = vmatpush1.bf16.msra.mxu0 %v7843
        %9191 = vmatprep.subr.bf16.mxu0 %v7848
        %9192 = vmatpush1.bf16.msra.mxu0 %v7847
        %9193 = vmatprep.subr.bf16.mxu0 %v7852
        %9194 = vmatpush1.bf16.msra.mxu0 %v7851
        %9195 = vmatprep.subr.bf16.mxu0 %v7856
        %9196 = vmatpush1.bf16.msra.mxu0 %v7855
        %9197 = vmatprep.subr.bf16.mxu0 %v7860
        %9198 = vmatpush1.bf16.msra.mxu0 %v7859
        %9199 = vmatprep.subr.bf16.mxu0 %v7864
        %9200 = vmatpush1.bf16.msra.mxu0 %v7863
        %9201 = vmatprep.subr.bf16.mxu0 %v7868
        %9202 = vmatpush1.bf16.msra.mxu0 %v7867
        %9203 = vmatprep.subr.bf16.mxu0 %v7872
        %9204 = vmatpush1.bf16.msra.mxu0 %v7871
        %9205 = vmatprep.subr.bf16.mxu0 %v7876
        %9206 = vmatpush1.bf16.msra.mxu0 %v7875
        %9207 = vmatprep.subr.bf16.mxu0 %v7880
        %9208 = vmatpush1.bf16.msra.mxu0 %v7879
        %9209 = vmatprep.subr.bf16.mxu0 %v7884
        %9210 = vmatpush1.bf16.msra.mxu0 %v7883
        %9211 = vmatprep.subr.bf16.mxu0 %v7888
        %9212 = vmatpush1.bf16.msra.mxu0 %v7887
        %9213 = vmatprep.subr.bf16.mxu0 %v7892
        %9214 = vmatpush1.bf16.msra.mxu0 %v7891
        %9215 = vmatprep.subr.bf16.mxu0 %v7896
        %9216 = vmatpush1.bf16.msra.mxu0 %v7895
        %9217 = vmatprep.mubr.bf16.mxu0 %v5754
        %9218 = vmatmul.mubr.bf16.gmra.mrb[0].mxu0 %v5753
        %v9219 = vpop.f32.mrb[0].mxu0
        %v9220 = vadd.f32 %v6292, %v9219
        %v9221 = vpop.f32.mrb[0].mxu0
        %v9222 = vadd.f32 %v6296, %v9221
        %v9223 = vpop.f32.mrb[0].mxu0
        %v9224 = vpop.f32.mrb[0].mxu0
        %9225 = vdwg.mxu0
        %9226 = vmatprep.subr.bf16.mxu0 %v7900
        %9227 = vmatpush1.bf16.msra.mxu0 %v7899
        %9228 = vmatprep.subr.bf16.mxu0 %v7904
        %9229 = vmatpush1.bf16.msra.mxu0 %v7903
        %9230 = vmatprep.subr.bf16.mxu0 %v7908
        %9231 = vmatpush1.bf16.msra.mxu0 %v7907
        %9232 = vmatprep.subr.bf16.mxu0 %v7912
        %9233 = vmatpush1.bf16.msra.mxu0 %v7911
        %9234 = vmatprep.subr.bf16.mxu0 %v7916
        %9235 = vmatpush1.bf16.msra.mxu0 %v7915
        %9236 = vmatprep.subr.bf16.mxu0 %v7920
        %9237 = vmatpush1.bf16.msra.mxu0 %v7919
        %9238 = vmatprep.subr.bf16.mxu0 %v7924
        %9239 = vmatpush1.bf16.msra.mxu0 %v7923
        %9240 = vmatprep.subr.bf16.mxu0 %v7928
        %9241 = vmatpush1.bf16.msra.mxu0 %v7927
        %9242 = vmatprep.subr.bf16.mxu0 %v7932
        %9243 = vmatpush1.bf16.msra.mxu0 %v7931
        %9244 = vmatprep.subr.bf16.mxu0 %v7936
        %9245 = vmatpush1.bf16.msra.mxu0 %v7935
        %9246 = vmatprep.subr.bf16.mxu0 %v7940
        %9247 = vmatpush1.bf16.msra.mxu0 %v7939
        %9248 = vmatprep.subr.bf16.mxu0 %v7944
        %9249 = vmatpush1.bf16.msra.mxu0 %v7943
        %9250 = vmatprep.subr.bf16.mxu0 %v7948
        %9251 = vmatpush1.bf16.msra.mxu0 %v7947
        %9252 = vmatprep.subr.bf16.mxu0 %v7952
        %9253 = vmatpush1.bf16.msra.mxu0 %v7951
        %9254 = vmatprep.subr.bf16.mxu0 %v7956
        %9255 = vmatpush1.bf16.msra.mxu0 %v7955
        %9256 = vmatprep.subr.bf16.mxu0 %v7960
        %9257 = vmatpush1.bf16.msra.mxu0 %v7959
        %9258 = vmatprep.mubr.bf16.mxu0 %v5756
        %9259 = vmatmul.mubr.bf16.gmra.mrb[0].mxu0 %v5755
        %v9260 = vpop.f32.mrb[0].mxu0
        %v9261 = vadd.f32 %v9220, %v9260
        %v9262 = vpop.f32.mrb[0].mxu0
        %v9263 = vadd.f32 %v9222, %v9262
        %v9264 = vpop.f32.mrb[0].mxu0
        %v9265 = vpop.f32.mrb[0].mxu0
        %9266 = vdwg.mxu0
        %9267 = vmatprep.subr.bf16.mxu0 %v7964
        %9268 = vmatpush1.bf16.msra.mxu0 %v7963
        %9269 = vmatprep.subr.bf16.mxu0 %v7968
        %9270 = vmatpush1.bf16.msra.mxu0 %v7967
        %9271 = vmatprep.subr.bf16.mxu0 %v7972
        %9272 = vmatpush1.bf16.msra.mxu0 %v7971
        %9273 = vmatprep.subr.bf16.mxu0 %v7976
        %9274 = vmatpush1.bf16.msra.mxu0 %v7975
        %9275 = vmatprep.subr.bf16.mxu0 %v7980
        %9276 = vmatpush1.bf16.msra.mxu0 %v7979
        %9277 = vmatprep.subr.bf16.mxu0 %v7984
        %9278 = vmatpush1.bf16.msra.mxu0 %v7983
        %9279 = vmatprep.subr.bf16.mxu0 %v7988
        %9280 = vmatpush1.bf16.msra.mxu0 %v7987
        %9281 = vmatprep.subr.bf16.mxu0 %v7992
        %9282 = vmatpush1.bf16.msra.mxu0 %v7991
        %9283 = vmatprep.subr.bf16.mxu0 %v7996
        %9284 = vmatpush1.bf16.msra.mxu0 %v7995
        %9285 = vmatprep.subr.bf16.mxu0 %v8000
        %9286 = vmatpush1.bf16.msra.mxu0 %v7999
        %9287 = vmatprep.subr.bf16.mxu0 %v8004
        %9288 = vmatpush1.bf16.msra.mxu0 %v8003
        %9289 = vmatprep.subr.bf16.mxu0 %v8008
        %9290 = vmatpush1.bf16.msra.mxu0 %v8007
        %9291 = vmatprep.subr.bf16.mxu0 %v8012
        %9292 = vmatpush1.bf16.msra.mxu0 %v8011
        %9293 = vmatprep.subr.bf16.mxu0 %v8016
        %9294 = vmatpush1.bf16.msra.mxu0 %v8015
        %9295 = vmatprep.subr.bf16.mxu0 %v8020
        %9296 = vmatpush1.bf16.msra.mxu0 %v8019
        %9297 = vmatprep.subr.bf16.mxu0 %v8024
        %9298 = vmatpush1.bf16.msra.mxu0 %v8023
        %9299 = vmatprep.mubr.bf16.mxu0 %v5758
        %9300 = vmatmul.mubr.bf16.gmra.mrb[0].mxu0 %v5757
        %v9301 = vpop.f32.mrb[0].mxu0
        %v9302 = vadd.f32 %v9261, %v9301
        %v9303 = vpop.f32.mrb[0].mxu0
        %v9304 = vadd.f32 %v9263, %v9303
        %v9305 = vpop.f32.mrb[0].mxu0
        %v9306 = vpop.f32.mrb[0].mxu0
        %9307 = vdwg.mxu0
        %9308 = vmatprep.subr.bf16.mxu0 %v8028
        %9309 = vmatpush1.bf16.msra.mxu0 %v8027
        %9310 = vmatprep.subr.bf16.mxu0 %v8032
        %9311 = vmatpush1.bf16.msra.mxu0 %v8031
        %9312 = vmatprep.subr.bf16.mxu0 %v8036
        %9313 = vmatpush1.bf16.msra.mxu0 %v8035
        %9314 = vmatprep.subr.bf16.mxu0 %v8040
        %9315 = vmatpush1.bf16.msra.mxu0 %v8039
        %9316 = vmatprep.subr.bf16.mxu0 %v8044
        %9317 = vmatpush1.bf16.msra.mxu0 %v8043
        %9318 = vmatprep.subr.bf16.mxu0 %v8048
        %9319 = vmatpush1.bf16.msra.mxu0 %v8047
        %9320 = vmatprep.subr.bf16.mxu0 %v8052
        %9321 = vmatpush1.bf16.msra.mxu0 %v8051
        %9322 = vmatprep.subr.bf16.mxu0 %v8056
        %9323 = vmatpush1.bf16.msra.mxu0 %v8055
        %9324 = vmatprep.subr.bf16.mxu0 %v8060
        %9325 = vmatpush1.bf16.msra.mxu0 %v8059
        %9326 = vmatprep.subr.bf16.mxu0 %v8064
        %9327 = vmatpush1.bf16.msra.mxu0 %v8063
        %9328 = vmatprep.subr.bf16.mxu0 %v8068
        %9329 = vmatpush1.bf16.msra.mxu0 %v8067
        %9330 = vmatprep.subr.bf16.mxu0 %v8072
        %9331 = vmatpush1.bf16.msra.mxu0 %v8071
        %9332 = vmatprep.subr.bf16.mxu0 %v8076
        %9333 = vmatpush1.bf16.msra.mxu0 %v8075
        %9334 = vmatprep.subr.bf16.mxu0 %v8080
        %9335 = vmatpush1.bf16.msra.mxu0 %v8079
        %9336 = vmatprep.subr.bf16.mxu0 %v8084
        %9337 = vmatpush1.bf16.msra.mxu0 %v8083
        %9338 = vmatprep.subr.bf16.mxu0 %v8088
        %9339 = vmatpush1.bf16.msra.mxu0 %v8087
        %9340 = vmatprep.mubr.bf16.mxu0 %v5760
        %9341 = vmatmul.mubr.bf16.gmra.mrb[0].mxu0 %v5759
        %v9342 = vpop.f32.mrb[0].mxu0
        %v9343 = vadd.f32 %v9302, %v9342
        %v9344 = vpop.f32.mrb[0].mxu0
        %v9345 = vadd.f32 %v9304, %v9344
        %v9346 = vpop.f32.mrb[0].mxu0
        %v9347 = vpop.f32.mrb[0].mxu0
        %9348 = vdwg.mxu0
        %9349 = vmatprep.subr.bf16.mxu0 %v8092
        %9350 = vmatpush1.bf16.msra.mxu0 %v8091
        %9351 = vmatprep.subr.bf16.mxu0 %v8096
        %9352 = vmatpush1.bf16.msra.mxu0 %v8095
        %9353 = vmatprep.subr.bf16.mxu0 %v8100
        %9354 = vmatpush1.bf16.msra.mxu0 %v8099
        %9355 = vmatprep.subr.bf16.mxu0 %v8104
        %9356 = vmatpush1.bf16.msra.mxu0 %v8103
        %9357 = vmatprep.subr.bf16.mxu0 %v8108
        %9358 = vmatpush1.bf16.msra.mxu0 %v8107
        %9359 = vmatprep.subr.bf16.mxu0 %v8112
        %9360 = vmatpush1.bf16.msra.mxu0 %v8111
        %9361 = vmatprep.subr.bf16.mxu0 %v8116
        %9362 = vmatpush1.bf16.msra.mxu0 %v8115
        %9363 = vmatprep.subr.bf16.mxu0 %v8120
        %9364 = vmatpush1.bf16.msra.mxu0 %v8119
        %9365 = vmatprep.subr.bf16.mxu0 %v8124
        %9366 = vmatpush1.bf16.msra.mxu0 %v8123
        %9367 = vmatprep.subr.bf16.mxu0 %v8128
        %9368 = vmatpush1.bf16.msra.mxu0 %v8127
        %9369 = vmatprep.subr.bf16.mxu0 %v8132
        %9370 = vmatpush1.bf16.msra.mxu0 %v8131
        %9371 = vmatprep.subr.bf16.mxu0 %v8136
        %9372 = vmatpush1.bf16.msra.mxu0 %v8135
        %9373 = vmatprep.subr.bf16.mxu0 %v8140
        %9374 = vmatpush1.bf16.msra.mxu0 %v8139
        %9375 = vmatprep.subr.bf16.mxu0 %v8144
        %9376 = vmatpush1.bf16.msra.mxu0 %v8143
        %9377 = vmatprep.subr.bf16.mxu0 %v8148
        %9378 = vmatpush1.bf16.msra.mxu0 %v8147
        %9379 = vmatprep.subr.bf16.mxu0 %v8152
        %9380 = vmatpush1.bf16.msra.mxu0 %v8151
        %9381 = vmatprep.mubr.bf16.mxu0 %v5762
        %9382 = vmatmul.mubr.bf16.gmra.mrb[0].mxu0 %v5761
        %v9383 = vpop.f32.mrb[0].mxu0
        %v9384 = vadd.f32 %v9343, %v9383
        %v9385 = vpop.f32.mrb[0].mxu0
        %v9386 = vadd.f32 %v9345, %v9385
        %v9387 = vpop.f32.mrb[0].mxu0
        %v9388 = vpop.f32.mrb[0].mxu0
        %9389 = vdwg.mxu0
        %9390 = vmatprep.subr.bf16.mxu0 %v8156
        %9391 = vmatpush1.bf16.msra.mxu0 %v8155
        %9392 = vmatprep.subr.bf16.mxu0 %v8160
        %9393 = vmatpush1.bf16.msra.mxu0 %v8159
        %9394 = vmatprep.subr.bf16.mxu0 %v8164
        %9395 = vmatpush1.bf16.msra.mxu0 %v8163
        %9396 = vmatprep.subr.bf16.mxu0 %v8168
        %9397 = vmatpush1.bf16.msra.mxu0 %v8167
        %9398 = vmatprep.subr.bf16.mxu0 %v8172
        %9399 = vmatpush1.bf16.msra.mxu0 %v8171
        %9400 = vmatprep.subr.bf16.mxu0 %v8176
        %9401 = vmatpush1.bf16.msra.mxu0 %v8175
        %9402 = vmatprep.subr.bf16.mxu0 %v8180
        %9403 = vmatpush1.bf16.msra.mxu0 %v8179
        %9404 = vmatprep.subr.bf16.mxu0 %v8184
        %9405 = vmatpush1.bf16.msra.mxu0 %v8183
        %9406 = vmatprep.subr.bf16.mxu0 %v8188
        %9407 = vmatpush1.bf16.msra.mxu0 %v8187
        %9408 = vmatprep.subr.bf16.mxu0 %v8192
        %9409 = vmatpush1.bf16.msra.mxu0 %v8191
        %9410 = vmatprep.subr.bf16.mxu0 %v8196
        %9411 = vmatpush1.bf16.msra.mxu0 %v8195
        %9412 = vmatprep.subr.bf16.mxu0 %v8200
        %9413 = vmatpush1.bf16.msra.mxu0 %v8199
        %9414 = vmatprep.subr.bf16.mxu0 %v8204
        %9415 = vmatpush1.bf16.msra.mxu0 %v8203
        %9416 = vmatprep.subr.bf16.mxu0 %v8208
        %9417 = vmatpush1.bf16.msra.mxu0 %v8207
        %9418 = vmatprep.subr.bf16.mxu0 %v8212
        %9419 = vmatpush1.bf16.msra.mxu0 %v8211
        %9420 = vmatprep.subr.bf16.mxu0 %v8216
        %9421 = vmatpush1.bf16.msra.mxu0 %v8215
        %9422 = vmatprep.mubr.bf16.mxu0 %v5764
        %9423 = vmatmul.mubr.bf16.gmra.mrb[0].mxu0 %v5763
        %v9424 = vpop.f32.mrb[0].mxu0
        %v9425 = vadd.f32 %v9384, %v9424
        %v9426 = vpop.f32.mrb[0].mxu0
        %v9427 = vadd.f32 %v9386, %v9426
        %v9428 = vpop.f32.mrb[0].mxu0
        %v9429 = vpop.f32.mrb[0].mxu0
        %9430 = vdwg.mxu0
        %9431 = vmatprep.subr.bf16.mxu0 %v8220
        %9432 = vmatpush1.bf16.msra.mxu0 %v8219
        %9433 = vmatprep.subr.bf16.mxu0 %v8224
        %9434 = vmatpush1.bf16.msra.mxu0 %v8223
        %9435 = vmatprep.subr.bf16.mxu0 %v8228
        %9436 = vmatpush1.bf16.msra.mxu0 %v8227
        %9437 = vmatprep.subr.bf16.mxu0 %v8232
        %9438 = vmatpush1.bf16.msra.mxu0 %v8231
        %9439 = vmatprep.subr.bf16.mxu0 %v8236
        %9440 = vmatpush1.bf16.msra.mxu0 %v8235
        %9441 = vmatprep.subr.bf16.mxu0 %v8240
        %9442 = vmatpush1.bf16.msra.mxu0 %v8239
        %9443 = vmatprep.subr.bf16.mxu0 %v8244
        %9444 = vmatpush1.bf16.msra.mxu0 %v8243
        %9445 = vmatprep.subr.bf16.mxu0 %v8248
        %9446 = vmatpush1.bf16.msra.mxu0 %v8247
        %9447 = vmatprep.subr.bf16.mxu0 %v8252
        %9448 = vmatpush1.bf16.msra.mxu0 %v8251
        %9449 = vmatprep.subr.bf16.mxu0 %v8256
        %9450 = vmatpush1.bf16.msra.mxu0 %v8255
        %9451 = vmatprep.subr.bf16.mxu0 %v8260
        %9452 = vmatpush1.bf16.msra.mxu0 %v8259
        %9453 = vmatprep.subr.bf16.mxu0 %v8264
        %9454 = vmatpush1.bf16.msra.mxu0 %v8263
        %9455 = vmatprep.subr.bf16.mxu0 %v8268
        %9456 = vmatpush1.bf16.msra.mxu0 %v8267
        %9457 = vmatprep.subr.bf16.mxu0 %v8272
        %9458 = vmatpush1.bf16.msra.mxu0 %v8271
        %9459 = vmatprep.subr.bf16.mxu0 %v8276
        %9460 = vmatpush1.bf16.msra.mxu0 %v8275
        %9461 = vmatprep.subr.bf16.mxu0 %v8280
        %9462 = vmatpush1.bf16.msra.mxu0 %v8279
        %9463 = vmatprep.mubr.bf16.mxu0 %v5766
        %9464 = vmatmul.mubr.bf16.gmra.mrb[0].mxu0 %v5765
        %v9465 = vpop.f32.mrb[0].mxu0
        %v9466 = vadd.f32 %v9425, %v9465
        %v9467 = vpop.f32.mrb[0].mxu0
        %v9468 = vadd.f32 %v9427, %v9467
        %v9469 = vpop.f32.mrb[0].mxu0
        %v9470 = vpop.f32.mrb[0].mxu0
        %9471 = vdwg.mxu0
        %9472 = vmatprep.subr.bf16.mxu0 %v8284
        %9473 = vmatpush1.bf16.msra.mxu0 %v8283
        %9474 = vmatprep.subr.bf16.mxu0 %v8288
        %9475 = vmatpush1.bf16.msra.mxu0 %v8287
        %9476 = vmatprep.subr.bf16.mxu0 %v8292
        %9477 = vmatpush1.bf16.msra.mxu0 %v8291
        %9478 = vmatprep.subr.bf16.mxu0 %v8296
        %9479 = vmatpush1.bf16.msra.mxu0 %v8295
        %9480 = vmatprep.subr.bf16.mxu0 %v8300
        %9481 = vmatpush1.bf16.msra.mxu0 %v8299
        %9482 = vmatprep.subr.bf16.mxu0 %v8304
        %9483 = vmatpush1.bf16.msra.mxu0 %v8303
        %9484 = vmatprep.subr.bf16.mxu0 %v8308
        %9485 = vmatpush1.bf16.msra.mxu0 %v8307
        %9486 = vmatprep.subr.bf16.mxu0 %v8312
        %9487 = vmatpush1.bf16.msra.mxu0 %v8311
        %9488 = vmatprep.subr.bf16.mxu0 %v8316
        %9489 = vmatpush1.bf16.msra.mxu0 %v8315
        %9490 = vmatprep.subr.bf16.mxu0 %v8320
        %9491 = vmatpush1.bf16.msra.mxu0 %v8319
        %9492 = vmatprep.subr.bf16.mxu0 %v8324
        %9493 = vmatpush1.bf16.msra.mxu0 %v8323
        %9494 = vmatprep.subr.bf16.mxu0 %v8328
        %9495 = vmatpush1.bf16.msra.mxu0 %v8327
        %9496 = vmatprep.subr.bf16.mxu0 %v8332
        %9497 = vmatpush1.bf16.msra.mxu0 %v8331
        %9498 = vmatprep.subr.bf16.mxu0 %v8336
        %9499 = vmatpush1.bf16.msra.mxu0 %v8335
        %9500 = vmatprep.subr.bf16.mxu0 %v8340
        %9501 = vmatpush1.bf16.msra.mxu0 %v8339
        %9502 = vmatprep.subr.bf16.mxu0 %v8344
        %9503 = vmatpush1.bf16.msra.mxu0 %v8343
        %9504 = vmatprep.mubr.bf16.mxu0 %v5768
        %9505 = vmatmul.mubr.bf16.gmra.mrb[0].mxu0 %v5767
        %v9506 = vpop.f32.mrb[0].mxu0
        %v9507 = vadd.f32 %v9466, %v9506
        %v9508 = vpop.f32.mrb[0].mxu0
        %v9509 = vadd.f32 %v9468, %v9508
        %v9510 = vpop.f32.mrb[0].mxu0
        %v9511 = vpop.f32.mrb[0].mxu0
        %9512 = vdwg.mxu0
        %v9513 = vadd.f32 %v1917, %v9179
        %v9514 = vadd.f32 %v1918, %v9181
        %v9515 = vadd.f32 %v1919, %v9507
        %v9516 = vadd.f32 %v1920, %v9509
        %v9517 = vadd.f32 %v9513, %v9514
        %v9518 = vadd.f32 %v9517, %v9515
        %v9519 = vadd.f32 %v9518, %v9516
        %9520 = vadd.xlane.f32.xlu0 %v9519
        %v9521 = vpop.xlane.xlu0 %9520
        %v9522 = vmul.f32 %v9521, %v1859
        %v9523 = vsub.f32 %v9513, %v9522
        %v9524 = vsub.f32 %v9514, %v9522
        %v9525 = vsub.f32 %v9515, %v9522
        %v9526 = vsub.f32 %v9516, %v9522
        %v9527 = vmul.f32 %v9523, %v9523
        %v9528 = vmul.f32 %v9524, %v9524
        %v9529 = vmul.f32 %v9525, %v9525
        %v9530 = vmul.f32 %v9526, %v9526
        %v9531 = vadd.f32 %v9527, %v9528
        %v9532 = vadd.f32 %v9531, %v9529
        %v9533 = vadd.f32 %v9532, %v9530
        %9534 = vadd.xlane.f32.xlu0 %v9533
        %v9535 = vpop.xlane.xlu0 %9534
        %v9536 = vmul.f32 %v9535, %v1859
        %v9537 = vadd.f32 %v9536, 1e-05
        %v9538 = vrsqrt.pop %v9537
        %v9539 = vmul.f32 %v9523, %v9538
        %v9540 = vmul.f32 %v9524, %v9538
        %v9541 = vmul.f32 %v9525, %v9538
        %v9542 = vmul.f32 %v9526, %v9538
        %v9543 = vlaneseq
        %v9544 = vshrl.u32 %v9543, 7
        %v9545 = vsub.s32 4, %v9544
        %v9546 = vrot.slane %v894, %v9545
        %v9547 = vlaneseq
        %v9548 = vshrl.u32 %v9547, 7
        %v9549 = vsub.s32 4, %v9548
        %v9550 = vrot.slane %v895, %v9549
        %v9551 = vlaneseq
        %v9552 = vshrl.u32 %v9551, 7
        %v9553 = vsub.s32 4, %v9552
        %v9554 = vrot.slane %v896, %v9553
        %v9555 = vlaneseq
        %v9556 = vshrl.u32 %v9555, 7
        %v9557 = vsub.s32 4, %v9556
        %v9558 = vrot.slane %v897, %v9557
        %v9559 = vmul.f32 %v9539, %v9546
        %v9560 = vmul.f32 %v9540, %v9550
        %v9561 = vmul.f32 %v9541, %v9554
        %v9562 = vmul.f32 %v9542, %v9558
        %v9563 = vlaneseq
        %v9564 = vshrl.u32 %v9563, 7
        %v9565 = vsub.s32 5, %v9564
        %v9566 = vrot.slane %v894, %v9565
        %v9567 = vlaneseq
        %v9568 = vshrl.u32 %v9567, 7
        %v9569 = vsub.s32 5, %v9568
        %v9570 = vrot.slane %v895, %v9569
        %v9571 = vlaneseq
        %v9572 = vshrl.u32 %v9571, 7
        %v9573 = vsub.s32 5, %v9572
        %v9574 = vrot.slane %v896, %v9573
        %v9575 = vlaneseq
        %v9576 = vshrl.u32 %v9575, 7
        %v9577 = vsub.s32 5, %v9576
        %v9578 = vrot.slane %v897, %v9577
        %v9579 = vadd.f32 %v9559, %v9566
        %v9580 = vadd.f32 %v9560, %v9570
        %v9581 = vadd.f32 %v9561, %v9574
        %v9582 = vadd.f32 %v9562, %v9578
        %9583 = vst [vmem:[#allocation2] sm:$0xff] %v9579
        %9584 = vst [vmem:[#allocation2 + $0x8] sm:$0xff] %v9580
        %9585 = vst [vmem:[#allocation2 + $0x10] sm:$0xff] %v9581
        %9586 = vst [vmem:[#allocation2 + $0x18] sm:$0xff] %v9582
        %p9587 = scmp.eq.s32.totalorder %s34, 5
        // Predicated region
        $region105: #{tpu_custom_call.1} parent=59 // pred_check
          %p9588 = pneg %p9587
        $region106: #{tpu_custom_call.1} parent=59 // pred_check_branch
          %9590 = sbr.rel (%p9588) target = $region108
        $region107: #{tpu_custom_call.1} parent=59 // pred_region
          %v9591 = vpack.c.bf16 %v9579, %v9579
          %v9592 = vpack.c.bf16 %v9580, %v9580
          %v9593 = vpack.c.bf16 %v9581, %v9581
          %v9594 = vpack.c.bf16 %v9582, %v9582
          %v9595 = vld [vmem:[#allocation17] sm:$0xf]
          %v9596 = vld [vmem:[#allocation17 + $0x4] sm:$0xf]
          %v9597 = vld [vmem:[#allocation17 + $0x8] sm:$0xf]
          %v9598 = vld [vmem:[#allocation17 + $0xc] sm:$0xf]
          %v9599 = vld [vmem:[#allocation17 + $0x10] sm:$0xf]
          %v9600 = vld [vmem:[#allocation17 + $0x14] sm:$0xf]
          %v9601 = vld [vmem:[#allocation17 + $0x18] sm:$0xf]
          %v9602 = vld [vmem:[#allocation17 + $0x1c] sm:$0xf]
          %v9603 = vld [vmem:[#allocation17 + $0x20] sm:$0xf]
          %v9604 = vld [vmem:[#allocation17 + $0x24] sm:$0xf]
          %v9605 = vld [vmem:[#allocation17 + $0x28] sm:$0xf]
          %v9606 = vld [vmem:[#allocation17 + $0x2c] sm:$0xf]
          %v9607 = vld [vmem:[#allocation17 + $0x30] sm:$0xf]
          %v9608 = vld [vmem:[#allocation17 + $0x34] sm:$0xf]
          %v9609 = vld [vmem:[#allocation17 + $0x38] sm:$0xf]
          %v9610 = vld [vmem:[#allocation17 + $0x3c] sm:$0xf]
          %v9611 = vld [vmem:[#allocation17 + $0x40] sm:$0xf]
          %v9612 = vld [vmem:[#allocation17 + $0x44] sm:$0xf]
          %v9613 = vld [vmem:[#allocation17 + $0x48] sm:$0xf]
          %v9614 = vld [vmem:[#allocation17 + $0x4c] sm:$0xf]
          %v9615 = vld [vmem:[#allocation17 + $0x50] sm:$0xf]
          %v9616 = vld [vmem:[#allocation17 + $0x54] sm:$0xf]
          %v9617 = vld [vmem:[#allocation17 + $0x58] sm:$0xf]
          %v9618 = vld [vmem:[#allocation17 + $0x5c] sm:$0xf]
          %v9619 = vld [vmem:[#allocation17 + $0x60] sm:$0xf]
          %v9620 = vld [vmem:[#allocation17 + $0x64] sm:$0xf]
          %v9621 = vld [vmem:[#allocation17 + $0x68] sm:$0xf]
          %v9622 = vld [vmem:[#allocation17 + $0x6c] sm:$0xf]
          %v9623 = vld [vmem:[#allocation17 + $0x70] sm:$0xf]
          %v9624 = vld [vmem:[#allocation17 + $0x74] sm:$0xf]
          %v9625 = vld [vmem:[#allocation17 + $0x78] sm:$0xf]
          %v9626 = vld [vmem:[#allocation17 + $0x7c] sm:$0xf]
          %v9627 = vld [vmem:[#allocation17 + $0x80] sm:$0xf]
          %v9628 = vld [vmem:[#allocation17 + $0x84] sm:$0xf]
          %v9629 = vld [vmem:[#allocation17 + $0x88] sm:$0xf]
          %v9630 = vld [vmem:[#allocation17 + $0x8c] sm:$0xf]
          %v9631 = vld [vmem:[#allocation17 + $0x90] sm:$0xf]
          %v9632 = vld [vmem:[#allocation17 + $0x94] sm:$0xf]
          %v9633 = vld [vmem:[#allocation17 + $0x98] sm:$0xf]
          %v9634 = vld [vmem:[#allocation17 + $0x9c] sm:$0xf]
          %v9635 = vld [vmem:[#allocation17 + $0xa0] sm:$0xf]
          %v9636 = vld [vmem:[#allocation17 + $0xa4] sm:$0xf]
          %v9637 = vld [vmem:[#allocation17 + $0xa8] sm:$0xf]
          %v9638 = vld [vmem:[#allocation17 + $0xac] sm:$0xf]
          %v9639 = vld [vmem:[#allocation17 + $0xb0] sm:$0xf]
          %v9640 = vld [vmem:[#allocation17 + $0xb4] sm:$0xf]
          %v9641 = vld [vmem:[#allocation17 + $0xb8] sm:$0xf]
          %v9642 = vld [vmem:[#allocation17 + $0xbc] sm:$0xf]
          %v9643 = vld [vmem:[#allocation17 + $0xc0] sm:$0xf]
          %v9644 = vld [vmem:[#allocation17 + $0xc4] sm:$0xf]
          %v9645 = vld [vmem:[#allocation17 + $0xc8] sm:$0xf]
          %v9646 = vld [vmem:[#allocation17 + $0xcc] sm:$0xf]
          %v9647 = vld [vmem:[#allocation17 + $0xd0] sm:$0xf]
          %v9648 = vld [vmem:[#allocation17 + $0xd4] sm:$0xf]
          %v9649 = vld [vmem:[#allocation17 + $0xd8] sm:$0xf]
          %v9650 = vld [vmem:[#allocation17 + $0xdc] sm:$0xf]
          %v9651 = vld [vmem:[#allocation17 + $0xe0] sm:$0xf]
          %v9652 = vld [vmem:[#allocation17 + $0xe4] sm:$0xf]
          %v9653 = vld [vmem:[#allocation17 + $0xe8] sm:$0xf]
          %v9654 = vld [vmem:[#allocation17 + $0xec] sm:$0xf]
          %v9655 = vld [vmem:[#allocation17 + $0xf0] sm:$0xf]
          %v9656 = vld [vmem:[#allocation17 + $0xf4] sm:$0xf]
          %v9657 = vld [vmem:[#allocation17 + $0xf8] sm:$0xf]
          %v9658 = vld [vmem:[#allocation17 + $0xfc] sm:$0xf]
          %v9659 = vld [vmem:[#allocation18] sm:$0x1]
          %v9661 = vlaneseq
          %v9662 = vshrl.u32 %v9661, 7
          %v9663 = vsub.s32 0, %v9662
          %v9664 = vrot.slane %v9659, %v9663
          %v9730 = vunpack.c.l.b16 %v9595
          %v9731 = vunpack.c.l.b16 %v9596
          %v9732 = vunpack.c.l.b16 %v9597
          %v9733 = vunpack.c.l.b16 %v9598
          %v9734 = vunpack.c.l.b16 %v9599
          %v9735 = vunpack.c.l.b16 %v9600
          %v9736 = vunpack.c.l.b16 %v9601
          %v9737 = vunpack.c.l.b16 %v9602
          %v9738 = vunpack.c.l.b16 %v9603
          %v9739 = vunpack.c.l.b16 %v9604
          %v9740 = vunpack.c.l.b16 %v9605
          %v9741 = vunpack.c.l.b16 %v9606
          %v9742 = vunpack.c.l.b16 %v9607
          %v9743 = vunpack.c.l.b16 %v9608
          %v9744 = vunpack.c.l.b16 %v9609
          %v9745 = vunpack.c.l.b16 %v9610
          %v9746 = vunpack.c.l.b16 %v9611
          %v9747 = vunpack.c.l.b16 %v9612
          %v9748 = vunpack.c.l.b16 %v9613
          %v9749 = vunpack.c.l.b16 %v9614
          %v9750 = vunpack.c.l.b16 %v9615
          %v9751 = vunpack.c.l.b16 %v9616
          %v9752 = vunpack.c.l.b16 %v9617
          %v9753 = vunpack.c.l.b16 %v9618
          %v9754 = vunpack.c.l.b16 %v9619
          %v9755 = vunpack.c.l.b16 %v9620
          %v9756 = vunpack.c.l.b16 %v9621
          %v9757 = vunpack.c.l.b16 %v9622
          %v9758 = vunpack.c.l.b16 %v9623
          %v9759 = vunpack.c.l.b16 %v9624
          %v9760 = vunpack.c.l.b16 %v9625
          %v9761 = vunpack.c.l.b16 %v9626
          %v9762 = vunpack.c.l.b16 %v9627
          %v9763 = vunpack.c.l.b16 %v9628
          %v9764 = vunpack.c.l.b16 %v9629
          %v9765 = vunpack.c.l.b16 %v9630
          %v9766 = vunpack.c.l.b16 %v9631
          %v9767 = vunpack.c.l.b16 %v9632
          %v9768 = vunpack.c.l.b16 %v9633
          %v9769 = vunpack.c.l.b16 %v9634
          %v9770 = vunpack.c.l.b16 %v9635
          %v9771 = vunpack.c.l.b16 %v9636
          %v9772 = vunpack.c.l.b16 %v9637
          %v9773 = vunpack.c.l.b16 %v9638
          %v9774 = vunpack.c.l.b16 %v9639
          %v9775 = vunpack.c.l.b16 %v9640
          %v9776 = vunpack.c.l.b16 %v9641
          %v9777 = vunpack.c.l.b16 %v9642
          %v9778 = vunpack.c.l.b16 %v9643
          %v9779 = vunpack.c.l.b16 %v9644
          %v9780 = vunpack.c.l.b16 %v9645
          %v9781 = vunpack.c.l.b16 %v9646
          %v9782 = vunpack.c.l.b16 %v9647
          %v9783 = vunpack.c.l.b16 %v9648
          %v9784 = vunpack.c.l.b16 %v9649
          %v9785 = vunpack.c.l.b16 %v9650
          %v9786 = vunpack.c.l.b16 %v9651
          %v9787 = vunpack.c.l.b16 %v9652
          %v9788 = vunpack.c.l.b16 %v9653
          %v9789 = vunpack.c.l.b16 %v9654
          %v9790 = vunpack.c.l.b16 %v9655
          %v9791 = vunpack.c.l.b16 %v9656
          %v9792 = vunpack.c.l.b16 %v9657
          %v9793 = vunpack.c.l.b16 %v9658
          %v9794 = vpack.c.b16 %v9731, %v9730
          %v9795 = vpack.c.b16 %v9733, %v9732
          %v9796 = vpack.c.b16 %v9735, %v9734
          %v9797 = vpack.c.b16 %v9737, %v9736
          %v9798 = vpack.c.b16 %v9739, %v9738
          %v9799 = vpack.c.b16 %v9741, %v9740
          %v9800 = vpack.c.b16 %v9743, %v9742
          %v9801 = vpack.c.b16 %v9745, %v9744
          %v9802 = vpack.c.b16 %v9747, %v9746
          %v9803 = vpack.c.b16 %v9749, %v9748
          %v9804 = vpack.c.b16 %v9751, %v9750
          %v9805 = vpack.c.b16 %v9753, %v9752
          %v9806 = vpack.c.b16 %v9755, %v9754
          %v9807 = vpack.c.b16 %v9757, %v9756
          %v9808 = vpack.c.b16 %v9759, %v9758
          %v9809 = vpack.c.b16 %v9761, %v9760
          %v9810 = vpack.c.b16 %v9763, %v9762
          %v9811 = vpack.c.b16 %v9765, %v9764
          %v9812 = vpack.c.b16 %v9767, %v9766
          %v9813 = vpack.c.b16 %v9769, %v9768
          %v9814 = vpack.c.b16 %v9771, %v9770
          %v9815 = vpack.c.b16 %v9773, %v9772
          %v9816 = vpack.c.b16 %v9775, %v9774
          %v9817 = vpack.c.b16 %v9777, %v9776
          %v9818 = vpack.c.b16 %v9779, %v9778
          %v9819 = vpack.c.b16 %v9781, %v9780
          %v9820 = vpack.c.b16 %v9783, %v9782
          %v9821 = vpack.c.b16 %v9785, %v9784
          %v9822 = vpack.c.b16 %v9787, %v9786
          %v9823 = vpack.c.b16 %v9789, %v9788
          %v9824 = vpack.c.b16 %v9791, %v9790
          %v9825 = vpack.c.b16 %v9793, %v9792
          %9858 = vmatprep.subr.bf16.mxu0 0
          %9859 = vmatpush1.bf16.msra.mxu0 %v9794
          %9860 = vmatprep.subr.bf16.mxu0 0
          %9861 = vmatpush1.bf16.msra.mxu0 %v9795
          %9862 = vmatprep.subr.bf16.mxu0 0
          %9863 = vmatpush1.bf16.msra.mxu0 %v9796
          %9864 = vmatprep.subr.bf16.mxu0 0
          %9865 = vmatpush1.bf16.msra.mxu0 %v9797
          %9866 = vmatprep.subr.bf16.mxu0 0
          %9867 = vmatpush1.bf16.msra.mxu0 %v9798
          %9868 = vmatprep.subr.bf16.mxu0 0
          %9869 = vmatpush1.bf16.msra.mxu0 %v9799
          %9870 = vmatprep.subr.bf16.mxu0 0
          %9871 = vmatpush1.bf16.msra.mxu0 %v9800
          %9872 = vmatprep.subr.bf16.mxu0 0
          %9873 = vmatpush1.bf16.msra.mxu0 %v9801
          %9874 = vmatprep.subr.bf16.mxu0 0
          %9875 = vmatpush1.bf16.msra.mxu0 %v9802
          %9876 = vmatprep.subr.bf16.mxu0 0
          %9877 = vmatpush1.bf16.msra.mxu0 %v9803
          %9878 = vmatprep.subr.bf16.mxu0 0
          %9879 = vmatpush1.bf16.msra.mxu0 %v9804
          %9880 = vmatprep.subr.bf16.mxu0 0
          %9881 = vmatpush1.bf16.msra.mxu0 %v9805
          %9882 = vmatprep.subr.bf16.mxu0 0
          %9883 = vmatpush1.bf16.msra.mxu0 %v9806
          %9884 = vmatprep.subr.bf16.mxu0 0
          %9885 = vmatpush1.bf16.msra.mxu0 %v9807
          %9886 = vmatprep.subr.bf16.mxu0 0
          %9887 = vmatpush1.bf16.msra.mxu0 %v9808
          %9888 = vmatprep.subr.bf16.mxu0 0
          %9889 = vmatpush1.bf16.msra.mxu0 %v9809
          %9890 = vmatprep.mubr.bf16.mxu0 %v9592
          %9891 = vmatmul.mubr.bf16.gmra.mrb[0].mxu0 %v9591
          %v9892 = vpop.f32.mrb[0].mxu0
          %v9893 = vadd.f32 %v9664, %v9892
          %v9894 = vpop.f32.mrb[0].mxu0
          %v9895 = vpop.f32.mrb[0].mxu0
          %v9896 = vpop.f32.mrb[0].mxu0
          %9897 = vdwg.mxu0
          %9898 = vmatprep.subr.bf16.mxu0 0
          %9899 = vmatpush1.bf16.msra.mxu0 %v9810
          %9900 = vmatprep.subr.bf16.mxu0 0
          %9901 = vmatpush1.bf16.msra.mxu0 %v9811
          %9902 = vmatprep.subr.bf16.mxu0 0
          %9903 = vmatpush1.bf16.msra.mxu0 %v9812
          %9904 = vmatprep.subr.bf16.mxu0 0
          %9905 = vmatpush1.bf16.msra.mxu0 %v9813
          %9906 = vmatprep.subr.bf16.mxu0 0
          %9907 = vmatpush1.bf16.msra.mxu0 %v9814
          %9908 = vmatprep.subr.bf16.mxu0 0
          %9909 = vmatpush1.bf16.msra.mxu0 %v9815
          %9910 = vmatprep.subr.bf16.mxu0 0
          %9911 = vmatpush1.bf16.msra.mxu0 %v9816
          %9912 = vmatprep.subr.bf16.mxu0 0
          %9913 = vmatpush1.bf16.msra.mxu0 %v9817
          %9914 = vmatprep.subr.bf16.mxu0 0
          %9915 = vmatpush1.bf16.msra.mxu0 %v9818
          %9916 = vmatprep.subr.bf16.mxu0 0
          %9917 = vmatpush1.bf16.msra.mxu0 %v9819
          %9918 = vmatprep.subr.bf16.mxu0 0
          %9919 = vmatpush1.bf16.msra.mxu0 %v9820
          %9920 = vmatprep.subr.bf16.mxu0 0
          %9921 = vmatpush1.bf16.msra.mxu0 %v9821
          %9922 = vmatprep.subr.bf16.mxu0 0
          %9923 = vmatpush1.bf16.msra.mxu0 %v9822
          %9924 = vmatprep.subr.bf16.mxu0 0
          %9925 = vmatpush1.bf16.msra.mxu0 %v9823
          %9926 = vmatprep.subr.bf16.mxu0 0
          %9927 = vmatpush1.bf16.msra.mxu0 %v9824
          %9928 = vmatprep.subr.bf16.mxu0 0
          %9929 = vmatpush1.bf16.msra.mxu0 %v9825
          %9930 = vmatprep.mubr.bf16.mxu0 %v9594
          %9931 = vmatmul.mubr.bf16.gmra.mrb[0].mxu0 %v9593
          %v9932 = vpop.f32.mrb[0].mxu0
          %v9933 = vadd.f32 %v9893, %v9932
          %v9934 = vpop.f32.mrb[0].mxu0
          %v9935 = vpop.f32.mrb[0].mxu0
          %v9936 = vpop.f32.mrb[0].mxu0
          %9937 = vdwg.mxu0
          %9938 = vst [vmem:[#allocation20] sm:$0xff] %v9933
        $region108: #{tpu_custom_call.1} parent=59 // pred_fallthru
          _
        // Predicated region
        $region109: #{tpu_custom_call.1} parent=59 // pred_check
          %p9939 = pneg %p282
        $region110: #{tpu_custom_call.1} parent=59 // pred_check_branch
          %9941 = sbr.rel (%p9939) target = $region112
        $region111: #{tpu_custom_call.1} parent=59 // pred_region
          %s9943 = ssub.s32 128, 128
          %9944 = vsyncadd [#allocation5], %s9943
          %s9946 = sshll.u32 [#allocation20], 4
          %s9947 = int_to_ptr.vmem [resolvable:$true] %s9946
          %9949 = dma.vmem_to_hbm [thread:$0]  %s9947, 128, %s10, [#allocation5]
        $region112: #{tpu_custom_call.1} parent=59 // pred_fallthru
          _
        // Predicated region
        $region113: #{tpu_custom_call.1} parent=59 // pred_check
          %p9950 = pneg %p282
        $region114: #{tpu_custom_call.1} parent=59 // pred_check_branch
          %9952 = sbr.rel (%p9950) target = $region116
        $region115: #{tpu_custom_call.1} parent=59 // pred_region
          %9953 = dma.done [#allocation5], 128
        $region116: #{tpu_custom_call.1} parent=59 // pred_fallthru
          _
      $region60: #{tpu_custom_call.1} parent=5 // pred_fallthru
        _
      %p9954 = scmp.le.s32.totalorder 2, %s29
      // Predicated region
      $region117: #{tpu_custom_call.1} parent=5 // pred_check
        %p9955 = pneg %p9954
      $region118: #{tpu_custom_call.1} parent=5 // pred_check_branch
        %9957 = sbr.rel (%p9955) target = $region120
      $region119: #{tpu_custom_call.1} parent=5 // pred_region
        %s9958 = ssub.s32 %s29, 2
      $region120: #{tpu_custom_call.1} parent=5 // pred_fallthru
        _
    $region6: #{tpu_custom_call.1} parent=1 // loop_footer
      %s33 = sadd.s32 1, %s29
    $region7: #{tpu_custom_call.1} parent=1 // loop_footer_branch
      %28 = sbr.rel target = $region3
    $region8: #{tpu_custom_call.1} parent=1 // loop_exit
      _
    %9959 = vsyncpa [#allocation4], 1
    %s9960 = scalar_lea.sflag [#allocation4], 1
    %9961 = vsyncpa %s9960, 1
    %9962 = vsyncpa [#allocation7], 1
    %9963 = vsyncpa [#allocation10], 1
    %s9964 = scalar_lea.sflag [#allocation10], 1
    %9965 = vsyncpa %s9964, 1
    %9966 = vsyncpa [#allocation13], 1
    %s9967 = scalar_lea.sflag [#allocation13], 1
    %9968 = vsyncpa %s9967, 1
    %9969 = vsyncpa [#allocation16], 1
    %s9970 = scalar_lea.sflag [#allocation16], 1
    %9971 = vsyncpa %s9970, 1
    %9972 = vsyncpa [#allocation19], 1
    %9973 = vsyncpa [#allocation5], 1
    %s9974 = scalar_lea.sflag [#allocation5], 1
    %9975 = vsyncpa %s9974, 1

</llo_original>
